<compile_context>
chip_gen: v6e
topology: v6e:2x2x1
jax: 0.10.0
libtpu: 0.0.40
codegen_flags: <defaults>
</compile_context>

<pallas_src>
import functools
import math

import jax
import jax.numpy as jnp
from jax.experimental import pallas as pl
from jax.experimental.pallas import tpu as pltpu


# ----------------------------------------------------------------------------
# Pallas kernel: Bt batch elements' full block forward per grid step.
# ----------------------------------------------------------------------------
def _block_kernel(n_head, scale, fast_heads,
                  x_ref,
                  ln1w_ref, ln1b_ref,
                  wqkv_ref, bqkv_ref,
                  wo_ref, bo_ref,
                  ln2w_ref, ln2b_ref,
                  wfc_ref, bfc_ref, wpr_ref, bpr_ref,
                  lnaw_ref, lnab_ref,
                  wdn_ref, bdn_ref, wup_ref, bup_ref,
                  out_ref):
    f32 = jnp.float32
    bf16 = jnp.bfloat16

    x3 = x_ref[...].astype(f32)                 # (L, Bt, D) seq-first block
    L, Bt, D = x3.shape
    H = n_head
    hd = D // H
    R = L * Bt
    x = x3.reshape(R, D)                        # rows ordered (seq, batch)

    def layernorm(v, w_ref, b_ref, eps=1e-5):
        mu = jnp.mean(v, axis=-1, keepdims=True)
        var = jnp.mean(jnp.square(v - mu), axis=-1, keepdims=True)
        return (v - mu) * jax.lax.rsqrt(var + eps) * w_ref[...] + b_ref[...]

    def split_heads(t):                          # (R, D) -> (Bt*H, L, hd)
        if fast_heads:
            t4 = t.reshape(L, Bt, H, hd)
            t4 = jnp.transpose(t4, (1, 2, 0, 3))   # (Bt, H, L, hd), lane dim untouched
            return t4.reshape(Bt * H, L, hd)
        # conservative fallback: explicit per-(batch, head) lane slices
        t3 = t.reshape(L, Bt, D)
        return jnp.stack([t3[:, b, h * hd:(h + 1) * hd]
                          for b in range(Bt) for h in range(H)], axis=0)

    def merge_heads(o):                          # (Bt*H, L, hd) -> (R, D)
        if fast_heads:
            o4 = o.reshape(Bt, H, L, hd)
            o4 = jnp.transpose(o4, (2, 0, 1, 3))   # (L, Bt, H, hd)
            return o4.reshape(R, D)
        per_b = [jnp.concatenate([o[b * H + h] for h in range(H)], axis=-1)
                 for b in range(Bt)]               # Bt x (L, D)
        return jnp.stack(per_b, axis=1).reshape(R, D)

    # ---- attention branch: ln_1 -> fused QKV -> batched-head attention ----
    h1 = layernorm(x, ln1w_ref, ln1b_ref)
    qkv = jnp.dot(h1.astype(bf16), wqkv_ref[...],
                  preferred_element_type=f32) + bqkv_ref[...]      # (R, 3D)
    q = qkv[:, :D] * scale        # f32 post-matmul scaling (matches torch MHA)
    k = qkv[:, D:2 * D]
    v = qkv[:, 2 * D:]

    qh = split_heads(q).astype(bf16)              # (G, L, hd), G = Bt*H
    kh = split_heads(k).astype(bf16)
    vh = split_heads(v).astype(bf16)

    s = jnp.einsum("gqd,gkd->gqk", qh, kh,
                   preferred_element_type=f32)    # (G, L, L)
    s = s - jnp.max(s, axis=-1, keepdims=True)
    p = jnp.exp(s)
    p = p / jnp.sum(p, axis=-1, keepdims=True)    # exact softmax (torch parity)
    o = jnp.einsum("gqk,gkd->gqd", p.astype(bf16), vh,
                   preferred_element_type=f32)    # (G, L, hd)

    attn = jnp.dot(merge_heads(o).astype(bf16), wo_ref[...],
                   preferred_element_type=f32) + bo_ref[...]
    att_out = x + attn

    # ---- MLP branch: ln_2 -> c_fc -> QuickGELU -> c_proj ----
    h2 = layernorm(att_out, ln2w_ref, ln2b_ref)
    fc = jnp.dot(h2.astype(bf16), wfc_ref[...],
                 preferred_element_type=f32) + bfc_ref[...]        # (R, 4D)
    fc = fc * jax.nn.sigmoid(1.702 * fc)                           # QuickGELU (f32)
    mlp_out = jnp.dot(fc.astype(bf16), wpr_ref[...],
                      preferred_element_type=f32) + bpr_ref[...]

    # ---- Adapter ('hard'): input = att_out + mlp_out, residual = mlp_out ----
    ada_in = att_out + mlp_out
    ha = layernorm(ada_in, lnaw_ref, lnab_ref)
    down = jnp.maximum(
        jnp.dot(ha.astype(bf16), wdn_ref[...],
                preferred_element_type=f32) + bdn_ref[...], 0.0)   # (R, ds_pad)
    up = jnp.dot(down.astype(bf16), wup_ref[...],
                 preferred_element_type=f32) + bup_ref[...]

    out_ref[...] = (att_out + up + mlp_out).reshape(L, Bt, D).astype(out_ref.dtype)


# ----------------------------------------------------------------------------
# Tiling / call construction helpers.
# ----------------------------------------------------------------------------
def _pick_batch_tile(N, L, D, H, act_budget_bytes):
    """Largest batch tile (layout-legal divisor of N) that fits the VMEM budget,
    preferring >=256 rows per grid step for MXU utilization."""
    per_elem = 4 * (18 * L * D + 3 * H * L * L)   # rough f32 activation bytes / element
    cands = [b for b in range(1, N + 1)
             if N % b == 0 and (b % 8 == 0 or b == N)]   # (8,128) layout constraint
    fits = [b for b in cands if b * per_elem <= act_budget_bytes]
    if not fits:
        return min(cands)
    good = [b for b in fits if b * L >= 256]
    return min(good) if good else max(fits)


def _build_call(args, n_head, scale, L, N, D, Bt, out_dtype, vmem_limit, cost,
                optimized):
    def resident(a):
        # Full-array block with constant block index: DMA'd once, stays in VMEM.
        if optimized:
            return pl.BlockSpec(a.shape, lambda b, nd=a.ndim: (0,) * nd,
                                pipeline_mode=pl.Buffered(1))   # single buffer
        return pl.BlockSpec(a.shape, lambda b, nd=a.ndim: (0,) * nd)

    in_specs = [pl.BlockSpec((L, Bt, D), lambda b: (0, b, 0))]
    in_specs += [resident(a) for a in args[1:]]
    out_specs = pl.BlockSpec((L, Bt, D), lambda b: (0, b, 0))

    return pl.pallas_call(
        functools.partial(_block_kernel, n_head, scale, optimized),
        grid=(N // Bt,),
        in_specs=in_specs,
        out_specs=out_specs,
        out_shape=jax.ShapeDtypeStruct((L, N, D), out_dtype),
        compiler_params=pltpu.CompilerParams(
            dimension_semantics=("parallel",),      # shard batch tiles across TCs
            vmem_limit_bytes=vmem_limit),
        cost_estimate=cost,
    )


# ----------------------------------------------------------------------------
# Wrapper: packs / pads parameters, builds grid + BlockSpecs, calls the kernel.
# ----------------------------------------------------------------------------
def residual_attention_block_adapters(x_lnd, params, n_head):
    """x_lnd: (L, N, D) float32, seq-first (PyTorch MHA convention)."""
    L, N, D = x_lnd.shape
    assert D % n_head == 0
    hd = D // n_head
    scale = 1.0 / math.sqrt(hd)
    bf16, f32 = jnp.bfloat16, jnp.float32

    # Fused QKV projection (scale applied in-kernel, post-matmul, in f32).
    wqkv = jnp.concatenate(
        [params["wq"], params["wk"], params["wv"]], axis=1).astype(bf16)
    bqkv = jnp.concatenate(
        [params["bq"], params["bk"], params["bv"]], axis=1).astype(f32)

    # Pad the adapter bottleneck to a 128-lane multiple (exact math: padded down
    # columns produce relu(0)=0 and the padded up rows are zero).
    ds = params["wdown"].shape[1]
    ds_pad = max(128, ((ds + 127) // 128) * 128)
    wdown = jnp.zeros((D, ds_pad), f32).at[:, :ds].set(params["wdown"]).astype(bf16)
    bdown = jnp.zeros((1, ds_pad), f32).at[:, :ds].set(params["bdown"])
    wup = jnp.zeros((ds_pad, D), f32).at[:ds, :].set(params["wup"]).astype(bf16)

    args = (
        x_lnd,
        params["ln1_w"], params["ln1_b"],
        wqkv, bqkv,
        params["wo"].astype(bf16), params["bo"],
        params["ln2_w"], params["ln2_b"],
        params["wfc"].astype(bf16), params["bfc"],
        params["wproj"].astype(bf16), params["bproj"],
        params["lna_w"], params["lna_b"],
        wdown, bdown, wup, params["bup"],
    )

    # Generation-aware VMEM budget (v5e/v6e 128 MiB, v7x 64 MiB).
    try:
        vmem_cap = int(pltpu.get_tpu_info().vmem_capacity_bytes)
    except Exception:
        vmem_cap = 64 << 20                      # v7x-safe fallback
    vmem_limit = min(max((vmem_cap * 3) // 4, 32 << 20), 100 << 20)

    weight_bytes = sum(int(a.size) * a.dtype.itemsize for a in args[1:])
    act_budget = max(vmem_limit - 2 * weight_bytes - (4 << 20), 2 << 20)
    Bt = _pick_batch_tile(N, L, D, n_head, act_budget)

    # Advisory cost estimate (matmuls + attention, exp/sigmoid/rsqrt, all I/O).
    rows, G = N * L, N * n_head
    flops = int(2 * rows * D * (12 * D + 2 * ds_pad) + 4 * G * L * L * hd)
    transcendentals = int(rows * 4 * D + G * L * L + 3 * rows)
    bytes_accessed = int(sum(int(a.size) * a.dtype.itemsize for a in args)
                         + rows * D * x_lnd.dtype.itemsize)       # + output write
    cost = pl.CostEstimate(flops=flops, transcendentals=transcendentals,
                           bytes_accessed=bytes_accessed)

    try:
        f = _build_call(args, n_head, scale, L, N, D, Bt, x_lnd.dtype,
                        vmem_limit, cost, optimized=True)
        return jax.block_until_ready(f(*args))
    except Exception:
        # Fallback for toolchains without Buffered(1) / lane-split reshape support.
        f = _build_call(args, n_head, scale, L, N, D, Bt, x_lnd.dtype,
                        vmem_limit, cost, optimized=False)
        return f(*args)


# ----------------------------------------------------------------------------
# Deterministic parameter init (synthetic; mirrors module shapes).
# ----------------------------------------------------------------------------
def init_params(key, d_model, down_sample):
    ks = list(jax.random.split(key, 20))

    def w(shape, scale=0.02):
        return (scale * jax.random.normal(ks.pop(), shape)).astype(jnp.float32)

    ones = lambda n: jnp.ones((1, n), jnp.float32)
    zeros = lambda n: jnp.zeros((1, n), jnp.float32)
    return {
        # ln_1
        "ln1_w": ones(d_model), "ln1_b": zeros(d_model),
        # attn in_proj (stored (in, out)) + biases
        "wq": w((d_model, d_model)), "wk": w((d_model, d_model)), "wv": w((d_model, d_model)),
        "bq": w((1, d_model)), "bk": w((1, d_model)), "bv": w((1, d_model)),
        # attn out_proj
        "wo": w((d_model, d_model)), "bo": w((1, d_model)),
        # ln_2
        "ln2_w": ones(d_model), "ln2_b": zeros(d_model),
        # mlp c_fc / c_proj
        "wfc": w((d_model, 4 * d_model)), "bfc": w((1, 4 * d_model)),
        "wproj": w((4 * d_model, d_model)), "bproj": w((1, d_model)),
        # adapter: LN before, down, up  (init_bert_weights ~ N(0, 0.02), zero bias)
        "lna_w": ones(d_model), "lna_b": zeros(d_model),
        "wdown": w((d_model, down_sample)), "bdown": zeros(down_sample),
        "wup": w((down_sample, d_model)), "bup": zeros(d_model),
    }


# ----------------------------------------------------------------------------
# Pure-JAX reference (same math, f32) for correctness checking.
# ----------------------------------------------------------------------------
def ref_forward(x_lnd, p, n_head):
    L, N, D = x_lnd.shape
    hd = D // n_head

    def ln(v, w, b, eps=1e-5):
        mu = v.mean(-1, keepdims=True)
        var = ((v - mu) ** 2).mean(-1, keepdims=True)
        return (v - mu) / jnp.sqrt(var + eps) * w[0] + b[0]

    x = x_lnd.astype(jnp.float32)
    h1 = ln(x, p["ln1_w"], p["ln1_b"])
    q = h1 @ p["wq"] + p["bq"][0]
    k = h1 @ p["wk"] + p["bk"][0]
    v = h1 @ p["wv"] + p["bv"][0]
    qh = q.reshape(L, N, n_head, hd)
    kh = k.reshape(L, N, n_head, hd)
    vh = v.reshape(L, N, n_head, hd)
    s = jnp.einsum("qnhd,knhd->nhqk", qh, kh) / math.sqrt(hd)
    prob = jax.nn.softmax(s, axis=-1)
    o = jnp.einsum("nhqk,knhd->qnhd", prob, vh).reshape(L, N, D)
    att_out = x + (o @ p["wo"] + p["bo"][0])

    h2 = ln(att_out, p["ln2_w"], p["ln2_b"])
    fc = h2 @ p["wfc"] + p["bfc"][0]
    fc = fc * jax.nn.sigmoid(1.702 * fc)
    mlp_out = fc @ p["wproj"] + p["bproj"][0]

    ha = ln(att_out + mlp_out, p["lna_w"], p["lna_b"])
    down = jnp.maximum(ha @ p["wdown"] + p["bdown"][0], 0.0)
    up = down @ p["wup"] + p["bup"][0]
    return att_out + up + mlp_out


if __name__ == "__main__":
    L, N = 8, 2                 # seq, batch
    d_model, n_head = 128, 4    # lane-aligned width, head_dim = 32
    down_sample = 32

    key = jax.random.PRNGKey(0)
    kx, kp = jax.random.split(key)
    x = jax.random.normal(kx, (L, N, d_model), dtype=jnp.float32)
    params = init_params(kp, d_model, down_sample)

    out = residual_attention_block_adapters(x, params, n_head)
    out = jax.block_until_ready(out)

    ref = jax.block_until_ready(ref_forward(x, params, n_head))
    assert out.shape == (L, N, d_model)
    # bf16 MXU operands (f32 accumulate) vs f32 reference: loosen tolerance.
    assert jnp.allclose(out, ref, rtol=2e-2, atol=2e-2), (
        float(jnp.max(jnp.abs(out - ref))))

    print("KERNEL_OK")
</pallas_src>

<mosaic_0001>
module attributes {stable_mosaic.version = 11 : i64} {
  func.func @_block_kernel(%arg0: i32, %arg1: memref<8x2x128xf32, #tpu.memory_space<vmem>>, %arg2: memref<1x128xf32, #tpu.memory_space<vmem>>, %arg3: memref<1x128xf32, #tpu.memory_space<vmem>>, %arg4: memref<128x384xbf16, #tpu.memory_space<vmem>>, %arg5: memref<1x384xf32, #tpu.memory_space<vmem>>, %arg6: memref<128x128xbf16, #tpu.memory_space<vmem>>, %arg7: memref<1x128xf32, #tpu.memory_space<vmem>>, %arg8: memref<1x128xf32, #tpu.memory_space<vmem>>, %arg9: memref<1x128xf32, #tpu.memory_space<vmem>>, %arg10: memref<128x512xbf16, #tpu.memory_space<vmem>>, %arg11: memref<1x512xf32, #tpu.memory_space<vmem>>, %arg12: memref<512x128xbf16, #tpu.memory_space<vmem>>, %arg13: memref<1x128xf32, #tpu.memory_space<vmem>>, %arg14: memref<1x128xf32, #tpu.memory_space<vmem>>, %arg15: memref<1x128xf32, #tpu.memory_space<vmem>>, %arg16: memref<128x128xbf16, #tpu.memory_space<vmem>>, %arg17: memref<1x128xf32, #tpu.memory_space<vmem>>, %arg18: memref<128x128xbf16, #tpu.memory_space<vmem>>, %arg19: memref<1x128xf32, #tpu.memory_space<vmem>>, %arg20: memref<8x2x128xf32, #tpu.memory_space<vmem>>) attributes {dimension_semantics = [#tpu.dimension_semantics<parallel>], iteration_bounds = array<i64: 1>, scalar_prefetch = 0 : i64, scratch_operands = 0 : i64, tpu.core_type = #tpu.core_type<tc>, window_params = [{transform_indices = @transform_0, window_bounds = array<i64: 8, 2, 128>}, {pipeline_mode = #tpu.pipeline_mode<synchronous>, transform_indices = @transform_1, window_bounds = array<i64: 1, 128>}, {pipeline_mode = #tpu.pipeline_mode<synchronous>, transform_indices = @transform_2, window_bounds = array<i64: 1, 128>}, {pipeline_mode = #tpu.pipeline_mode<synchronous>, transform_indices = @transform_3, window_bounds = array<i64: 128, 384>}, {pipeline_mode = #tpu.pipeline_mode<synchronous>, transform_indices = @transform_4, window_bounds = array<i64: 1, 384>}, {pipeline_mode = #tpu.pipeline_mode<synchronous>, transform_indices = @transform_5, window_bounds = array<i64: 128, 128>}, {pipeline_mode = #tpu.pipeline_mode<synchronous>, transform_indices = @transform_6, window_bounds = array<i64: 1, 128>}, {pipeline_mode = #tpu.pipeline_mode<synchronous>, transform_indices = @transform_7, window_bounds = array<i64: 1, 128>}, {pipeline_mode = #tpu.pipeline_mode<synchronous>, transform_indices = @transform_8, window_bounds = array<i64: 1, 128>}, {pipeline_mode = #tpu.pipeline_mode<synchronous>, transform_indices = @transform_9, window_bounds = array<i64: 128, 512>}, {pipeline_mode = #tpu.pipeline_mode<synchronous>, transform_indices = @transform_10, window_bounds = array<i64: 1, 512>}, {pipeline_mode = #tpu.pipeline_mode<synchronous>, transform_indices = @transform_11, window_bounds = array<i64: 512, 128>}, {pipeline_mode = #tpu.pipeline_mode<synchronous>, transform_indices = @transform_12, window_bounds = array<i64: 1, 128>}, {pipeline_mode = #tpu.pipeline_mode<synchronous>, transform_indices = @transform_13, window_bounds = array<i64: 1, 128>}, {pipeline_mode = #tpu.pipeline_mode<synchronous>, transform_indices = @transform_14, window_bounds = array<i64: 1, 128>}, {pipeline_mode = #tpu.pipeline_mode<synchronous>, transform_indices = @transform_15, window_bounds = array<i64: 128, 128>}, {pipeline_mode = #tpu.pipeline_mode<synchronous>, transform_indices = @transform_16, window_bounds = array<i64: 1, 128>}, {pipeline_mode = #tpu.pipeline_mode<synchronous>, transform_indices = @transform_17, window_bounds = array<i64: 128, 128>}, {pipeline_mode = #tpu.pipeline_mode<synchronous>, transform_indices = @transform_18, window_bounds = array<i64: 1, 128>}, {transform_indices = @transform_19, window_bounds = array<i64: 8, 2, 128>}]} {
    %c0 = arith.constant 0 : index
    %c0_0 = arith.constant 0 : index
    %c0_1 = arith.constant 0 : index
    %0 = vector.load %arg1[%c0, %c0_0, %c0_1] : memref<8x2x128xf32, #tpu.memory_space<vmem>>, vector<8x2x128xf32>
    %1 = vector.shape_cast %0 : vector<8x2x128xf32> to vector<16x128xf32>
    %cst = arith.constant dense<0.000000e+00> : vector<16xf32>
    %2 = vector.multi_reduction <add>, %1, %cst [1] : vector<16x128xf32> to vector<16xf32>
    %3 = vector.shape_cast %2 : vector<16xf32> to vector<16x1xf32>
    %cst_2 = arith.constant 1.280000e+02 : f32
    %4 = vector.broadcast %cst_2 : f32 to vector<16x1xf32>
    %5 = arith.divf %3, %4 : vector<16x1xf32>
    %6 = vector.broadcast %5 : vector<16x1xf32> to vector<16x128xf32>
    %7 = arith.subf %1, %6 : vector<16x128xf32>
    %8 = arith.mulf %7, %7 : vector<16x128xf32>
    %cst_3 = arith.constant dense<0.000000e+00> : vector<16xf32>
    %9 = vector.multi_reduction <add>, %8, %cst_3 [1] : vector<16x128xf32> to vector<16xf32>
    %10 = vector.shape_cast %9 : vector<16xf32> to vector<16x1xf32>
    %cst_4 = arith.constant 1.280000e+02 : f32
    %11 = vector.broadcast %cst_4 : f32 to vector<16x1xf32>
    %12 = arith.divf %10, %11 : vector<16x1xf32>
    %13 = vector.broadcast %5 : vector<16x1xf32> to vector<16x128xf32>
    %14 = arith.subf %1, %13 : vector<16x128xf32>
    %cst_5 = arith.constant 9.99999974E-6 : f32
    %15 = vector.broadcast %cst_5 : f32 to vector<16x1xf32>
    %16 = arith.addf %12, %15 : vector<16x1xf32>
    %17 = math.rsqrt %16 : vector<16x1xf32>
    %18 = vector.broadcast %17 : vector<16x1xf32> to vector<16x128xf32>
    %19 = arith.mulf %14, %18 : vector<16x128xf32>
    %c0_6 = arith.constant 0 : index
    %c0_7 = arith.constant 0 : index
    %20 = vector.load %arg2[%c0_6, %c0_7] : memref<1x128xf32, #tpu.memory_space<vmem>>, vector<1x128xf32>
    %21 = vector.broadcast %20 : vector<1x128xf32> to vector<16x128xf32>
    %22 = arith.mulf %19, %21 : vector<16x128xf32>
    %c0_8 = arith.constant 0 : index
    %c0_9 = arith.constant 0 : index
    %23 = vector.load %arg3[%c0_8, %c0_9] : memref<1x128xf32, #tpu.memory_space<vmem>>, vector<1x128xf32>
    %24 = vector.broadcast %23 : vector<1x128xf32> to vector<16x128xf32>
    %25 = arith.addf %22, %24 : vector<16x128xf32>
    %26 = arith.truncf %25 : vector<16x128xf32> to vector<16x128xbf16>
    %c0_10 = arith.constant 0 : index
    %c0_11 = arith.constant 0 : index
    %27 = vector.load %arg4[%c0_10, %c0_11] : memref<128x384xbf16, #tpu.memory_space<vmem>>, vector<128x384xbf16>
    %cst_12 = arith.constant dense<0.000000e+00> : vector<16x384xf32>
    %28 = tpu.matmul %26, %27, %cst_12 {dimension_numbers = #tpu.dot_dimension_numbers<[1], [0], [0], [1], [0, 0, 1, 1], [], []>} : vector<16x128xbf16>, vector<128x384xbf16>, vector<16x384xf32> -> vector<16x384xf32>
    %c0_13 = arith.constant 0 : index
    %c0_14 = arith.constant 0 : index
    %29 = vector.load %arg5[%c0_13, %c0_14] : memref<1x384xf32, #tpu.memory_space<vmem>>, vector<1x384xf32>
    %30 = vector.broadcast %29 : vector<1x384xf32> to vector<16x384xf32>
    %31 = arith.addf %28, %30 : vector<16x384xf32>
    %32 = vector.extract_strided_slice %31 {offsets = [0, 0], sizes = [16, 128], strides = [1, 1]} : vector<16x384xf32> to vector<16x128xf32>
    %cst_15 = arith.constant 0.176776692 : f32
    %33 = vector.broadcast %cst_15 : f32 to vector<16x128xf32>
    %34 = arith.mulf %32, %33 : vector<16x128xf32>
    %35 = vector.extract_strided_slice %31 {offsets = [0, 128], sizes = [16, 128], strides = [1, 1]} : vector<16x384xf32> to vector<16x128xf32>
    %36 = vector.extract_strided_slice %31 {offsets = [0, 256], sizes = [16, 128], strides = [1, 1]} : vector<16x384xf32> to vector<16x128xf32>
    %37 = vector.shape_cast %34 : vector<16x128xf32> to vector<8x2x4x32xf32>
    %38 = tpu.transpose %37, [1, 2, 0, 3] : vector<8x2x4x32xf32> -> vector<2x4x8x32xf32>
    %39 = vector.shape_cast %38 : vector<2x4x8x32xf32> to vector<8x8x32xf32>
    %40 = arith.truncf %39 : vector<8x8x32xf32> to vector<8x8x32xbf16>
    %41 = vector.shape_cast %35 : vector<16x128xf32> to vector<8x2x4x32xf32>
    %42 = tpu.transpose %41, [1, 2, 0, 3] : vector<8x2x4x32xf32> -> vector<2x4x8x32xf32>
    %43 = vector.shape_cast %42 : vector<2x4x8x32xf32> to vector<8x8x32xf32>
    %44 = arith.truncf %43 : vector<8x8x32xf32> to vector<8x8x32xbf16>
    %45 = vector.shape_cast %36 : vector<16x128xf32> to vector<8x2x4x32xf32>
    %46 = tpu.transpose %45, [1, 2, 0, 3] : vector<8x2x4x32xf32> -> vector<2x4x8x32xf32>
    %47 = vector.shape_cast %46 : vector<2x4x8x32xf32> to vector<8x8x32xf32>
    %48 = arith.truncf %47 : vector<8x8x32xf32> to vector<8x8x32xbf16>
    "tpu.trace_start"() <{level = 10 : i32, message = "gqd,gkd->gqk"}> : () -> ()
    %cst_16 = arith.constant dense<0.000000e+00> : vector<8x8x8xf32>
    %49 = tpu.matmul %40, %44, %cst_16 {dimension_numbers = #tpu.dot_dimension_numbers<[2], [2], [1], [1], [0, 0, 0, 1, 1, 1], [0], [0]>} : vector<8x8x32xbf16>, vector<8x8x32xbf16>, vector<8x8x8xf32> -> vector<8x8x8xf32>
    "tpu.trace_stop"() : () -> ()
    %cst_17 = arith.constant dense<0xFF800000> : vector<8x8xf32>
    %50 = vector.multi_reduction <maximumf>, %49, %cst_17 [2] : vector<8x8x8xf32> to vector<8x8xf32>
    %51 = vector.shape_cast %50 : vector<8x8xf32> to vector<8x8x1xf32>
    %52 = vector.broadcast %51 : vector<8x8x1xf32> to vector<8x8x8xf32>
    %53 = arith.subf %49, %52 : vector<8x8x8xf32>
    %54 = math.exp %53 : vector<8x8x8xf32>
    %cst_18 = arith.constant dense<0.000000e+00> : vector<8x8xf32>
    %55 = vector.multi_reduction <add>, %54, %cst_18 [2] : vector<8x8x8xf32> to vector<8x8xf32>
    %56 = vector.shape_cast %55 : vector<8x8xf32> to vector<8x8x1xf32>
    %57 = vector.broadcast %56 : vector<8x8x1xf32> to vector<8x8x8xf32>
    %58 = arith.divf %54, %57 : vector<8x8x8xf32>
    %59 = arith.truncf %58 : vector<8x8x8xf32> to vector<8x8x8xbf16>
    "tpu.trace_start"() <{level = 10 : i32, message = "gqk,gkd->gqd"}> : () -> ()
    %cst_19 = arith.constant dense<0.000000e+00> : vector<8x8x32xf32>
    %60 = tpu.matmul %59, %48, %cst_19 {dimension_numbers = #tpu.dot_dimension_numbers<[2], [1], [1], [2], [0, 0, 0, 1, 1, 2], [0], [0]>} : vector<8x8x8xbf16>, vector<8x8x32xbf16>, vector<8x8x32xf32> -> vector<8x8x32xf32>
    "tpu.trace_stop"() : () -> ()
    %61 = vector.shape_cast %60 : vector<8x8x32xf32> to vector<2x4x8x32xf32>
    %62 = tpu.transpose %61, [2, 0, 1, 3] : vector<2x4x8x32xf32> -> vector<8x2x4x32xf32>
    %63 = vector.shape_cast %62 : vector<8x2x4x32xf32> to vector<16x128xf32>
    %64 = arith.truncf %63 : vector<16x128xf32> to vector<16x128xbf16>
    %c0_20 = arith.constant 0 : index
    %c0_21 = arith.constant 0 : index
    %65 = vector.load %arg6[%c0_20, %c0_21] : memref<128x128xbf16, #tpu.memory_space<vmem>>, vector<128x128xbf16>
    %cst_22 = arith.constant dense<0.000000e+00> : vector<16x128xf32>
    %66 = tpu.matmul %64, %65, %cst_22 {dimension_numbers = #tpu.dot_dimension_numbers<[1], [0], [0], [1], [0, 0, 1, 1], [], []>} : vector<16x128xbf16>, vector<128x128xbf16>, vector<16x128xf32> -> vector<16x128xf32>
    %c0_23 = arith.constant 0 : index
    %c0_24 = arith.constant 0 : index
    %67 = vector.load %arg7[%c0_23, %c0_24] : memref<1x128xf32, #tpu.memory_space<vmem>>, vector<1x128xf32>
    %68 = vector.broadcast %67 : vector<1x128xf32> to vector<16x128xf32>
    %69 = arith.addf %66, %68 : vector<16x128xf32>
    %70 = arith.addf %1, %69 : vector<16x128xf32>
    %cst_25 = arith.constant dense<0.000000e+00> : vector<16xf32>
    %71 = vector.multi_reduction <add>, %70, %cst_25 [1] : vector<16x128xf32> to vector<16xf32>
    %72 = vector.shape_cast %71 : vector<16xf32> to vector<16x1xf32>
    %cst_26 = arith.constant 1.280000e+02 : f32
    %73 = vector.broadcast %cst_26 : f32 to vector<16x1xf32>
    %74 = arith.divf %72, %73 : vector<16x1xf32>
    %75 = vector.broadcast %74 : vector<16x1xf32> to vector<16x128xf32>
    %76 = arith.subf %70, %75 : vector<16x128xf32>
    %77 = arith.mulf %76, %76 : vector<16x128xf32>
    %cst_27 = arith.constant dense<0.000000e+00> : vector<16xf32>
    %78 = vector.multi_reduction <add>, %77, %cst_27 [1] : vector<16x128xf32> to vector<16xf32>
    %79 = vector.shape_cast %78 : vector<16xf32> to vector<16x1xf32>
    %cst_28 = arith.constant 1.280000e+02 : f32
    %80 = vector.broadcast %cst_28 : f32 to vector<16x1xf32>
    %81 = arith.divf %79, %80 : vector<16x1xf32>
    %82 = vector.broadcast %74 : vector<16x1xf32> to vector<16x128xf32>
    %83 = arith.subf %70, %82 : vector<16x128xf32>
    %cst_29 = arith.constant 9.99999974E-6 : f32
    %84 = vector.broadcast %cst_29 : f32 to vector<16x1xf32>
    %85 = arith.addf %81, %84 : vector<16x1xf32>
    %86 = math.rsqrt %85 : vector<16x1xf32>
    %87 = vector.broadcast %86 : vector<16x1xf32> to vector<16x128xf32>
    %88 = arith.mulf %83, %87 : vector<16x128xf32>
    %c0_30 = arith.constant 0 : index
    %c0_31 = arith.constant 0 : index
    %89 = vector.load %arg8[%c0_30, %c0_31] : memref<1x128xf32, #tpu.memory_space<vmem>>, vector<1x128xf32>
    %90 = vector.broadcast %89 : vector<1x128xf32> to vector<16x128xf32>
    %91 = arith.mulf %88, %90 : vector<16x128xf32>
    %c0_32 = arith.constant 0 : index
    %c0_33 = arith.constant 0 : index
    %92 = vector.load %arg9[%c0_32, %c0_33] : memref<1x128xf32, #tpu.memory_space<vmem>>, vector<1x128xf32>
    %93 = vector.broadcast %92 : vector<1x128xf32> to vector<16x128xf32>
    %94 = arith.addf %91, %93 : vector<16x128xf32>
    %95 = arith.truncf %94 : vector<16x128xf32> to vector<16x128xbf16>
    %c0_34 = arith.constant 0 : index
    %c0_35 = arith.constant 0 : index
    %96 = vector.load %arg10[%c0_34, %c0_35] : memref<128x512xbf16, #tpu.memory_space<vmem>>, vector<128x512xbf16>
    %cst_36 = arith.constant dense<0.000000e+00> : vector<16x512xf32>
    %97 = tpu.matmul %95, %96, %cst_36 {dimension_numbers = #tpu.dot_dimension_numbers<[1], [0], [0], [1], [0, 0, 1, 1], [], []>} : vector<16x128xbf16>, vector<128x512xbf16>, vector<16x512xf32> -> vector<16x512xf32>
    %c0_37 = arith.constant 0 : index
    %c0_38 = arith.constant 0 : index
    %98 = vector.load %arg11[%c0_37, %c0_38] : memref<1x512xf32, #tpu.memory_space<vmem>>, vector<1x512xf32>
    %99 = vector.broadcast %98 : vector<1x512xf32> to vector<16x512xf32>
    %100 = arith.addf %97, %99 : vector<16x512xf32>
    %cst_39 = arith.constant 1.702000e+00 : f32
    %101 = vector.broadcast %cst_39 : f32 to vector<16x512xf32>
    %102 = arith.mulf %101, %100 : vector<16x512xf32>
    %103 = arith.negf %102 : vector<16x512xf32>
    %104 = math.exp %103 : vector<16x512xf32>
    %cst_40 = arith.constant 1.000000e+00 : f32
    %105 = vector.broadcast %cst_40 : f32 to vector<16x512xf32>
    %106 = arith.addf %105, %104 : vector<16x512xf32>
    %107 = arith.divf %105, %106 : vector<16x512xf32>
    %108 = arith.mulf %100, %107 : vector<16x512xf32>
    %109 = arith.truncf %108 : vector<16x512xf32> to vector<16x512xbf16>
    %c0_41 = arith.constant 0 : index
    %c0_42 = arith.constant 0 : index
    %110 = vector.load %arg12[%c0_41, %c0_42] : memref<512x128xbf16, #tpu.memory_space<vmem>>, vector<512x128xbf16>
    %cst_43 = arith.constant dense<0.000000e+00> : vector<16x128xf32>
    %111 = tpu.matmul %109, %110, %cst_43 {dimension_numbers = #tpu.dot_dimension_numbers<[1], [0], [0], [1], [0, 0, 1, 1], [], []>} : vector<16x512xbf16>, vector<512x128xbf16>, vector<16x128xf32> -> vector<16x128xf32>
    %c0_44 = arith.constant 0 : index
    %c0_45 = arith.constant 0 : index
    %112 = vector.load %arg13[%c0_44, %c0_45] : memref<1x128xf32, #tpu.memory_space<vmem>>, vector<1x128xf32>
    %113 = vector.broadcast %112 : vector<1x128xf32> to vector<16x128xf32>
    %114 = arith.addf %111, %113 : vector<16x128xf32>
    %115 = arith.addf %70, %114 : vector<16x128xf32>
    %cst_46 = arith.constant dense<0.000000e+00> : vector<16xf32>
    %116 = vector.multi_reduction <add>, %115, %cst_46 [1] : vector<16x128xf32> to vector<16xf32>
    %117 = vector.shape_cast %116 : vector<16xf32> to vector<16x1xf32>
    %cst_47 = arith.constant 1.280000e+02 : f32
    %118 = vector.broadcast %cst_47 : f32 to vector<16x1xf32>
    %119 = arith.divf %117, %118 : vector<16x1xf32>
    %120 = vector.broadcast %119 : vector<16x1xf32> to vector<16x128xf32>
    %121 = arith.subf %115, %120 : vector<16x128xf32>
    %122 = arith.mulf %121, %121 : vector<16x128xf32>
    %cst_48 = arith.constant dense<0.000000e+00> : vector<16xf32>
    %123 = vector.multi_reduction <add>, %122, %cst_48 [1] : vector<16x128xf32> to vector<16xf32>
    %124 = vector.shape_cast %123 : vector<16xf32> to vector<16x1xf32>
    %cst_49 = arith.constant 1.280000e+02 : f32
    %125 = vector.broadcast %cst_49 : f32 to vector<16x1xf32>
    %126 = arith.divf %124, %125 : vector<16x1xf32>
    %127 = vector.broadcast %119 : vector<16x1xf32> to vector<16x128xf32>
    %128 = arith.subf %115, %127 : vector<16x128xf32>
    %cst_50 = arith.constant 9.99999974E-6 : f32
    %129 = vector.broadcast %cst_50 : f32 to vector<16x1xf32>
    %130 = arith.addf %126, %129 : vector<16x1xf32>
    %131 = math.rsqrt %130 : vector<16x1xf32>
    %132 = vector.broadcast %131 : vector<16x1xf32> to vector<16x128xf32>
    %133 = arith.mulf %128, %132 : vector<16x128xf32>
    %c0_51 = arith.constant 0 : index
    %c0_52 = arith.constant 0 : index
    %134 = vector.load %arg14[%c0_51, %c0_52] : memref<1x128xf32, #tpu.memory_space<vmem>>, vector<1x128xf32>
    %135 = vector.broadcast %134 : vector<1x128xf32> to vector<16x128xf32>
    %136 = arith.mulf %133, %135 : vector<16x128xf32>
    %c0_53 = arith.constant 0 : index
    %c0_54 = arith.constant 0 : index
    %137 = vector.load %arg15[%c0_53, %c0_54] : memref<1x128xf32, #tpu.memory_space<vmem>>, vector<1x128xf32>
    %138 = vector.broadcast %137 : vector<1x128xf32> to vector<16x128xf32>
    %139 = arith.addf %136, %138 : vector<16x128xf32>
    %140 = arith.truncf %139 : vector<16x128xf32> to vector<16x128xbf16>
    %c0_55 = arith.constant 0 : index
    %c0_56 = arith.constant 0 : index
    %141 = vector.load %arg16[%c0_55, %c0_56] : memref<128x128xbf16, #tpu.memory_space<vmem>>, vector<128x128xbf16>
    %cst_57 = arith.constant dense<0.000000e+00> : vector<16x128xf32>
    %142 = tpu.matmul %140, %141, %cst_57 {dimension_numbers = #tpu.dot_dimension_numbers<[1], [0], [0], [1], [0, 0, 1, 1], [], []>} : vector<16x128xbf16>, vector<128x128xbf16>, vector<16x128xf32> -> vector<16x128xf32>
    %c0_58 = arith.constant 0 : index
    %c0_59 = arith.constant 0 : index
    %143 = vector.load %arg17[%c0_58, %c0_59] : memref<1x128xf32, #tpu.memory_space<vmem>>, vector<1x128xf32>
    %144 = vector.broadcast %143 : vector<1x128xf32> to vector<16x128xf32>
    %145 = arith.addf %142, %144 : vector<16x128xf32>
    %cst_60 = arith.constant 0.000000e+00 : f32
    %146 = vector.broadcast %cst_60 : f32 to vector<16x128xf32>
    %147 = arith.maximumf %145, %146 : vector<16x128xf32>
    %148 = arith.truncf %147 : vector<16x128xf32> to vector<16x128xbf16>
    %c0_61 = arith.constant 0 : index
    %c0_62 = arith.constant 0 : index
    %149 = vector.load %arg18[%c0_61, %c0_62] : memref<128x128xbf16, #tpu.memory_space<vmem>>, vector<128x128xbf16>
    %cst_63 = arith.constant dense<0.000000e+00> : vector<16x128xf32>
    %150 = tpu.matmul %148, %149, %cst_63 {dimension_numbers = #tpu.dot_dimension_numbers<[1], [0], [0], [1], [0, 0, 1, 1], [], []>} : vector<16x128xbf16>, vector<128x128xbf16>, vector<16x128xf32> -> vector<16x128xf32>
    %c0_64 = arith.constant 0 : index
    %c0_65 = arith.constant 0 : index
    %151 = vector.load %arg19[%c0_64, %c0_65] : memref<1x128xf32, #tpu.memory_space<vmem>>, vector<1x128xf32>
    %152 = vector.broadcast %151 : vector<1x128xf32> to vector<16x128xf32>
    %153 = arith.addf %150, %152 : vector<16x128xf32>
    %154 = arith.addf %70, %153 : vector<16x128xf32>
    %155 = arith.addf %154, %114 : vector<16x128xf32>
    %156 = vector.shape_cast %155 : vector<16x128xf32> to vector<8x2x128xf32>
    %c0_66 = arith.constant 0 : index
    %c0_67 = arith.constant 0 : index
    %c0_68 = arith.constant 0 : index
    %157 = vector.load %arg20[%c0_66, %c0_67, %c0_68] : memref<8x2x128xf32, #tpu.memory_space<vmem>>, vector<8x2x128xf32>
    tpu.vector_store %arg20[%c0_66, %c0_67, %c0_68], %156 {strides = array<i32>} : memref<8x2x128xf32, #tpu.memory_space<vmem>>, vector<8x2x128xf32>,
    return
  }
  func.func @transform_0(%arg0: i32) -> (i32, i32, i32) {
    %c0_i32 = arith.constant 0 : i32
    %c0_i32_0 = arith.constant 0 : i32
    %c0_i32_1 = arith.constant 0 : i32
    return %c0_i32, %arg0, %c0_i32_0 : i32, i32, i32
  }
  func.func @transform_1(%arg0: i32) -> (i32, i32) {
    %c0_i32 = arith.constant 0 : i32
    %c0_i32_0 = arith.constant 0 : i32
    %c0_i32_1 = arith.constant 0 : i32
    return %c0_i32, %c0_i32_0 : i32, i32
  }
  func.func @transform_2(%arg0: i32) -> (i32, i32) {
    %c0_i32 = arith.constant 0 : i32
    %c0_i32_0 = arith.constant 0 : i32
    %c0_i32_1 = arith.constant 0 : i32
    return %c0_i32, %c0_i32_0 : i32, i32
  }
  func.func @transform_3(%arg0: i32) -> (i32, i32) {
    %c0_i32 = arith.constant 0 : i32
    %c0_i32_0 = arith.constant 0 : i32
    %c0_i32_1 = arith.constant 0 : i32
    return %c0_i32, %c0_i32_0 : i32, i32
  }
  func.func @transform_4(%arg0: i32) -> (i32, i32) {
    %c0_i32 = arith.constant 0 : i32
    %c0_i32_0 = arith.constant 0 : i32
    %c0_i32_1 = arith.constant 0 : i32
    return %c0_i32, %c0_i32_0 : i32, i32
  }
  func.func @transform_5(%arg0: i32) -> (i32, i32) {
    %c0_i32 = arith.constant 0 : i32
    %c0_i32_0 = arith.constant 0 : i32
    %c0_i32_1 = arith.constant 0 : i32
    return %c0_i32, %c0_i32_0 : i32, i32
  }
  func.func @transform_6(%arg0: i32) -> (i32, i32) {
    %c0_i32 = arith.constant 0 : i32
    %c0_i32_0 = arith.constant 0 : i32
    %c0_i32_1 = arith.constant 0 : i32
    return %c0_i32, %c0_i32_0 : i32, i32
  }
  func.func @transform_7(%arg0: i32) -> (i32, i32) {
    %c0_i32 = arith.constant 0 : i32
    %c0_i32_0 = arith.constant 0 : i32
    %c0_i32_1 = arith.constant 0 : i32
    return %c0_i32, %c0_i32_0 : i32, i32
  }
  func.func @transform_8(%arg0: i32) -> (i32, i32) {
    %c0_i32 = arith.constant 0 : i32
    %c0_i32_0 = arith.constant 0 : i32
    %c0_i32_1 = arith.constant 0 : i32
    return %c0_i32, %c0_i32_0 : i32, i32
  }
  func.func @transform_9(%arg0: i32) -> (i32, i32) {
    %c0_i32 = arith.constant 0 : i32
    %c0_i32_0 = arith.constant 0 : i32
    %c0_i32_1 = arith.constant 0 : i32
    return %c0_i32, %c0_i32_0 : i32, i32
  }
  func.func @transform_10(%arg0: i32) -> (i32, i32) {
    %c0_i32 = arith.constant 0 : i32
    %c0_i32_0 = arith.constant 0 : i32
    %c0_i32_1 = arith.constant 0 : i32
    return %c0_i32, %c0_i32_0 : i32, i32
  }
  func.func @transform_11(%arg0: i32) -> (i32, i32) {
    %c0_i32 = arith.constant 0 : i32
    %c0_i32_0 = arith.constant 0 : i32
    %c0_i32_1 = arith.constant 0 : i32
    return %c0_i32, %c0_i32_0 : i32, i32
  }
  func.func @transform_12(%arg0: i32) -> (i32, i32) {
    %c0_i32 = arith.constant 0 : i32
    %c0_i32_0 = arith.constant 0 : i32
    %c0_i32_1 = arith.constant 0 : i32
    return %c0_i32, %c0_i32_0 : i32, i32
  }
  func.func @transform_13(%arg0: i32) -> (i32, i32) {
    %c0_i32 = arith.constant 0 : i32
    %c0_i32_0 = arith.constant 0 : i32
    %c0_i32_1 = arith.constant 0 : i32
    return %c0_i32, %c0_i32_0 : i32, i32
  }
  func.func @transform_14(%arg0: i32) -> (i32, i32) {
    %c0_i32 = arith.constant 0 : i32
    %c0_i32_0 = arith.constant 0 : i32
    %c0_i32_1 = arith.constant 0 : i32
    return %c0_i32, %c0_i32_0 : i32, i32
  }
  func.func @transform_15(%arg0: i32) -> (i32, i32) {
    %c0_i32 = arith.constant 0 : i32
    %c0_i32_0 = arith.constant 0 : i32
    %c0_i32_1 = arith.constant 0 : i32
    return %c0_i32, %c0_i32_0 : i32, i32
  }
  func.func @transform_16(%arg0: i32) -> (i32, i32) {
    %c0_i32 = arith.constant 0 : i32
    %c0_i32_0 = arith.constant 0 : i32
    %c0_i32_1 = arith.constant 0 : i32
    return %c0_i32, %c0_i32_0 : i32, i32
  }
  func.func @transform_17(%arg0: i32) -> (i32, i32) {
    %c0_i32 = arith.constant 0 : i32
    %c0_i32_0 = arith.constant 0 : i32
    %c0_i32_1 = arith.constant 0 : i32
    return %c0_i32, %c0_i32_0 : i32, i32
  }
  func.func @transform_18(%arg0: i32) -> (i32, i32) {
    %c0_i32 = arith.constant 0 : i32
    %c0_i32_0 = arith.constant 0 : i32
    %c0_i32_1 = arith.constant 0 : i32
    return %c0_i32, %c0_i32_0 : i32, i32
  }
  func.func @transform_19(%arg0: i32) -> (i32, i32, i32) {
    %c0_i32 = arith.constant 0 : i32
    %c0_i32_0 = arith.constant 0 : i32
    %c0_i32_1 = arith.constant 0 : i32
    return %c0_i32, %arg0, %c0_i32_0 : i32, i32, i32
  }
}

module attributes {stable_mosaic.version = 11 : i64} {
  func.func @_block_kernel(%arg0: i32, %arg1: memref<8x2x128xf32, #tpu.memory_space<vmem>>, %arg2: memref<1x128xf32, #tpu.memory_space<vmem>>, %arg3: memref<1x128xf32, #tpu.memory_space<vmem>>, %arg4: memref<128x384xbf16, #tpu.memory_space<vmem>>, %arg5: memref<1x384xf32, #tpu.memory_space<vmem>>, %arg6: memref<128x128xbf16, #tpu.memory_space<vmem>>, %arg7: memref<1x128xf32, #tpu.memory_space<vmem>>, %arg8: memref<1x128xf32, #tpu.memory_space<vmem>>, %arg9: memref<1x128xf32, #tpu.memory_space<vmem>>, %arg10: memref<128x512xbf16, #tpu.memory_space<vmem>>, %arg11: memref<1x512xf32, #tpu.memory_space<vmem>>, %arg12: memref<512x128xbf16, #tpu.memory_space<vmem>>, %arg13: memref<1x128xf32, #tpu.memory_space<vmem>>, %arg14: memref<1x128xf32, #tpu.memory_space<vmem>>, %arg15: memref<1x128xf32, #tpu.memory_space<vmem>>, %arg16: memref<128x128xbf16, #tpu.memory_space<vmem>>, %arg17: memref<1x128xf32, #tpu.memory_space<vmem>>, %arg18: memref<128x128xbf16, #tpu.memory_space<vmem>>, %arg19: memref<1x128xf32, #tpu.memory_space<vmem>>, %arg20: memref<8x2x128xf32, #tpu.memory_space<vmem>>) attributes {dimension_semantics = [#tpu.dimension_semantics<parallel>], iteration_bounds = array<i64: 1>, scalar_prefetch = 0 : i64, scratch_operands = 0 : i64, tpu.core_type = #tpu.core_type<tc>, window_params = [{transform_indices = @transform_0, window_bounds = array<i64: 8, 2, 128>}, {pipeline_mode = #tpu.pipeline_mode<synchronous>, transform_indices = @transform_1, window_bounds = array<i64: 1, 128>}, {pipeline_mode = #tpu.pipeline_mode<synchronous>, transform_indices = @transform_2, window_bounds = array<i64: 1, 128>}, {pipeline_mode = #tpu.pipeline_mode<synchronous>, transform_indices = @transform_3, window_bounds = array<i64: 128, 384>}, {pipeline_mode = #tpu.pipeline_mode<synchronous>, transform_indices = @transform_4, window_bounds = array<i64: 1, 384>}, {pipeline_mode = #tpu.pipeline_mode<synchronous>, transform_indices = @transform_5, window_bounds = array<i64: 128, 128>}, {pipeline_mode = #tpu.pipeline_mode<synchronous>, transform_indices = @transform_6, window_bounds = array<i64: 1, 128>}, {pipeline_mode = #tpu.pipeline_mode<synchronous>, transform_indices = @transform_7, window_bounds = array<i64: 1, 128>}, {pipeline_mode = #tpu.pipeline_mode<synchronous>, transform_indices = @transform_8, window_bounds = array<i64: 1, 128>}, {pipeline_mode = #tpu.pipeline_mode<synchronous>, transform_indices = @transform_9, window_bounds = array<i64: 128, 512>}, {pipeline_mode = #tpu.pipeline_mode<synchronous>, transform_indices = @transform_10, window_bounds = array<i64: 1, 512>}, {pipeline_mode = #tpu.pipeline_mode<synchronous>, transform_indices = @transform_11, window_bounds = array<i64: 512, 128>}, {pipeline_mode = #tpu.pipeline_mode<synchronous>, transform_indices = @transform_12, window_bounds = array<i64: 1, 128>}, {pipeline_mode = #tpu.pipeline_mode<synchronous>, transform_indices = @transform_13, window_bounds = array<i64: 1, 128>}, {pipeline_mode = #tpu.pipeline_mode<synchronous>, transform_indices = @transform_14, window_bounds = array<i64: 1, 128>}, {pipeline_mode = #tpu.pipeline_mode<synchronous>, transform_indices = @transform_15, window_bounds = array<i64: 128, 128>}, {pipeline_mode = #tpu.pipeline_mode<synchronous>, transform_indices = @transform_16, window_bounds = array<i64: 1, 128>}, {pipeline_mode = #tpu.pipeline_mode<synchronous>, transform_indices = @transform_17, window_bounds = array<i64: 128, 128>}, {pipeline_mode = #tpu.pipeline_mode<synchronous>, transform_indices = @transform_18, window_bounds = array<i64: 1, 128>}, {transform_indices = @transform_19, window_bounds = array<i64: 8, 2, 128>}]} {
    %c0 = arith.constant 0 : index
    %c0_0 = arith.constant 0 : index
    %c0_1 = arith.constant 0 : index
    %0 = vector.load %arg1[%c0, %c0_0, %c0_1] : memref<8x2x128xf32, #tpu.memory_space<vmem>>, vector<8x2x128xf32>
    %1 = vector.shape_cast %0 : vector<8x2x128xf32> to vector<16x128xf32>
    %cst = arith.constant dense<0.000000e+00> : vector<16xf32>
    %2 = vector.multi_reduction <add>, %1, %cst [1] : vector<16x128xf32> to vector<16xf32>
    %3 = vector.shape_cast %2 : vector<16xf32> to vector<16x1xf32>
    %cst_2 = arith.constant 1.280000e+02 : f32
    %4 = vector.broadcast %cst_2 : f32 to vector<16x1xf32>
    %5 = arith.divf %3, %4 : vector<16x1xf32>
    %6 = vector.broadcast %5 : vector<16x1xf32> to vector<16x128xf32>
    %7 = arith.subf %1, %6 : vector<16x128xf32>
    %8 = arith.mulf %7, %7 : vector<16x128xf32>
    %cst_3 = arith.constant dense<0.000000e+00> : vector<16xf32>
    %9 = vector.multi_reduction <add>, %8, %cst_3 [1] : vector<16x128xf32> to vector<16xf32>
    %10 = vector.shape_cast %9 : vector<16xf32> to vector<16x1xf32>
    %cst_4 = arith.constant 1.280000e+02 : f32
    %11 = vector.broadcast %cst_4 : f32 to vector<16x1xf32>
    %12 = arith.divf %10, %11 : vector<16x1xf32>
    %13 = vector.broadcast %5 : vector<16x1xf32> to vector<16x128xf32>
    %14 = arith.subf %1, %13 : vector<16x128xf32>
    %cst_5 = arith.constant 9.99999974E-6 : f32
    %15 = vector.broadcast %cst_5 : f32 to vector<16x1xf32>
    %16 = arith.addf %12, %15 : vector<16x1xf32>
    %17 = math.rsqrt %16 : vector<16x1xf32>
    %18 = vector.broadcast %17 : vector<16x1xf32> to vector<16x128xf32>
    %19 = arith.mulf %14, %18 : vector<16x128xf32>
    %c0_6 = arith.constant 0 : index
    %c0_7 = arith.constant 0 : index
    %20 = vector.load %arg2[%c0_6, %c0_7] : memref<1x128xf32, #tpu.memory_space<vmem>>, vector<1x128xf32>
    %21 = vector.broadcast %20 : vector<1x128xf32> to vector<16x128xf32>
    %22 = arith.mulf %19, %21 : vector<16x128xf32>
    %c0_8 = arith.constant 0 : index
    %c0_9 = arith.constant 0 : index
    %23 = vector.load %arg3[%c0_8, %c0_9] : memref<1x128xf32, #tpu.memory_space<vmem>>, vector<1x128xf32>
    %24 = vector.broadcast %23 : vector<1x128xf32> to vector<16x128xf32>
    %25 = arith.addf %22, %24 : vector<16x128xf32>
    %26 = arith.truncf %25 : vector<16x128xf32> to vector<16x128xbf16>
    %c0_10 = arith.constant 0 : index
    %c0_11 = arith.constant 0 : index
    %27 = vector.load %arg4[%c0_10, %c0_11] : memref<128x384xbf16, #tpu.memory_space<vmem>>, vector<128x384xbf16>
    %cst_12 = arith.constant dense<0.000000e+00> : vector<16x384xf32>
    %28 = tpu.matmul %26, %27, %cst_12 {dimension_numbers = #tpu.dot_dimension_numbers<[1], [0], [0], [1], [0, 0, 1, 1], [], []>} : vector<16x128xbf16>, vector<128x384xbf16>, vector<16x384xf32> -> vector<16x384xf32>
    %c0_13 = arith.constant 0 : index
    %c0_14 = arith.constant 0 : index
    %29 = vector.load %arg5[%c0_13, %c0_14] : memref<1x384xf32, #tpu.memory_space<vmem>>, vector<1x384xf32>
    %30 = vector.broadcast %29 : vector<1x384xf32> to vector<16x384xf32>
    %31 = arith.addf %28, %30 : vector<16x384xf32>
    %32 = vector.extract_strided_slice %31 {offsets = [0, 0], sizes = [16, 128], strides = [1, 1]} : vector<16x384xf32> to vector<16x128xf32>
    %cst_15 = arith.constant 0.176776692 : f32
    %33 = vector.broadcast %cst_15 : f32 to vector<16x128xf32>
    %34 = arith.mulf %32, %33 : vector<16x128xf32>
    %35 = vector.extract_strided_slice %31 {offsets = [0, 128], sizes = [16, 128], strides = [1, 1]} : vector<16x384xf32> to vector<16x128xf32>
    %36 = vector.extract_strided_slice %31 {offsets = [0, 256], sizes = [16, 128], strides = [1, 1]} : vector<16x384xf32> to vector<16x128xf32>
    %37 = vector.shape_cast %34 : vector<16x128xf32> to vector<8x2x128xf32>
    %38 = vector.extract_strided_slice %37 {offsets = [0, 0, 0], sizes = [8, 1, 32], strides = [1, 1, 1]} : vector<8x2x128xf32> to vector<8x1x32xf32>
    %39 = vector.shape_cast %38 : vector<8x1x32xf32> to vector<8x32xf32>
    %40 = vector.extract_strided_slice %37 {offsets = [0, 0, 32], sizes = [8, 1, 32], strides = [1, 1, 1]} : vector<8x2x128xf32> to vector<8x1x32xf32>
    %41 = vector.shape_cast %40 : vector<8x1x32xf32> to vector<8x32xf32>
    %42 = vector.extract_strided_slice %37 {offsets = [0, 0, 64], sizes = [8, 1, 32], strides = [1, 1, 1]} : vector<8x2x128xf32> to vector<8x1x32xf32>
    %43 = vector.shape_cast %42 : vector<8x1x32xf32> to vector<8x32xf32>
    %44 = vector.extract_strided_slice %37 {offsets = [0, 0, 96], sizes = [8, 1, 32], strides = [1, 1, 1]} : vector<8x2x128xf32> to vector<8x1x32xf32>
    %45 = vector.shape_cast %44 : vector<8x1x32xf32> to vector<8x32xf32>
    %46 = vector.extract_strided_slice %37 {offsets = [0, 1, 0], sizes = [8, 1, 32], strides = [1, 1, 1]} : vector<8x2x128xf32> to vector<8x1x32xf32>
    %47 = vector.shape_cast %46 : vector<8x1x32xf32> to vector<8x32xf32>
    %48 = vector.extract_strided_slice %37 {offsets = [0, 1, 32], sizes = [8, 1, 32], strides = [1, 1, 1]} : vector<8x2x128xf32> to vector<8x1x32xf32>
    %49 = vector.shape_cast %48 : vector<8x1x32xf32> to vector<8x32xf32>
    %50 = vector.extract_strided_slice %37 {offsets = [0, 1, 64], sizes = [8, 1, 32], strides = [1, 1, 1]} : vector<8x2x128xf32> to vector<8x1x32xf32>
    %51 = vector.shape_cast %50 : vector<8x1x32xf32> to vector<8x32xf32>
    %52 = vector.extract_strided_slice %37 {offsets = [0, 1, 96], sizes = [8, 1, 32], strides = [1, 1, 1]} : vector<8x2x128xf32> to vector<8x1x32xf32>
    %53 = vector.shape_cast %52 : vector<8x1x32xf32> to vector<8x32xf32>
    %54 = vector.shape_cast %39 : vector<8x32xf32> to vector<1x8x32xf32>
    %55 = vector.shape_cast %41 : vector<8x32xf32> to vector<1x8x32xf32>
    %56 = vector.shape_cast %43 : vector<8x32xf32> to vector<1x8x32xf32>
    %57 = vector.shape_cast %45 : vector<8x32xf32> to vector<1x8x32xf32>
    %58 = vector.shape_cast %47 : vector<8x32xf32> to vector<1x8x32xf32>
    %59 = vector.shape_cast %49 : vector<8x32xf32> to vector<1x8x32xf32>
    %60 = vector.shape_cast %51 : vector<8x32xf32> to vector<1x8x32xf32>
    %61 = vector.shape_cast %53 : vector<8x32xf32> to vector<1x8x32xf32>
    %62 = tpu.concatenate %54, %55, %56, %57, %58, %59, %60, %61 in 0 : vector<1x8x32xf32>, vector<1x8x32xf32>, vector<1x8x32xf32>, vector<1x8x32xf32>, vector<1x8x32xf32>, vector<1x8x32xf32>, vector<1x8x32xf32>, vector<1x8x32xf32> -> vector<8x8x32xf32>
    %63 = arith.truncf %62 : vector<8x8x32xf32> to vector<8x8x32xbf16>
    %64 = vector.shape_cast %35 : vector<16x128xf32> to vector<8x2x128xf32>
    %65 = vector.extract_strided_slice %64 {offsets = [0, 0, 0], sizes = [8, 1, 32], strides = [1, 1, 1]} : vector<8x2x128xf32> to vector<8x1x32xf32>
    %66 = vector.shape_cast %65 : vector<8x1x32xf32> to vector<8x32xf32>
    %67 = vector.extract_strided_slice %64 {offsets = [0, 0, 32], sizes = [8, 1, 32], strides = [1, 1, 1]} : vector<8x2x128xf32> to vector<8x1x32xf32>
    %68 = vector.shape_cast %67 : vector<8x1x32xf32> to vector<8x32xf32>
    %69 = vector.extract_strided_slice %64 {offsets = [0, 0, 64], sizes = [8, 1, 32], strides = [1, 1, 1]} : vector<8x2x128xf32> to vector<8x1x32xf32>
    %70 = vector.shape_cast %69 : vector<8x1x32xf32> to vector<8x32xf32>
    %71 = vector.extract_strided_slice %64 {offsets = [0, 0, 96], sizes = [8, 1, 32], strides = [1, 1, 1]} : vector<8x2x128xf32> to vector<8x1x32xf32>
    %72 = vector.shape_cast %71 : vector<8x1x32xf32> to vector<8x32xf32>
    %73 = vector.extract_strided_slice %64 {offsets = [0, 1, 0], sizes = [8, 1, 32], strides = [1, 1, 1]} : vector<8x2x128xf32> to vector<8x1x32xf32>
    %74 = vector.shape_cast %73 : vector<8x1x32xf32> to vector<8x32xf32>
    %75 = vector.extract_strided_slice %64 {offsets = [0, 1, 32], sizes = [8, 1, 32], strides = [1, 1, 1]} : vector<8x2x128xf32> to vector<8x1x32xf32>
    %76 = vector.shape_cast %75 : vector<8x1x32xf32> to vector<8x32xf32>
    %77 = vector.extract_strided_slice %64 {offsets = [0, 1, 64], sizes = [8, 1, 32], strides = [1, 1, 1]} : vector<8x2x128xf32> to vector<8x1x32xf32>
    %78 = vector.shape_cast %77 : vector<8x1x32xf32> to vector<8x32xf32>
    %79 = vector.extract_strided_slice %64 {offsets = [0, 1, 96], sizes = [8, 1, 32], strides = [1, 1, 1]} : vector<8x2x128xf32> to vector<8x1x32xf32>
    %80 = vector.shape_cast %79 : vector<8x1x32xf32> to vector<8x32xf32>
    %81 = vector.shape_cast %66 : vector<8x32xf32> to vector<1x8x32xf32>
    %82 = vector.shape_cast %68 : vector<8x32xf32> to vector<1x8x32xf32>
    %83 = vector.shape_cast %70 : vector<8x32xf32> to vector<1x8x32xf32>
    %84 = vector.shape_cast %72 : vector<8x32xf32> to vector<1x8x32xf32>
    %85 = vector.shape_cast %74 : vector<8x32xf32> to vector<1x8x32xf32>
    %86 = vector.shape_cast %76 : vector<8x32xf32> to vector<1x8x32xf32>
    %87 = vector.shape_cast %78 : vector<8x32xf32> to vector<1x8x32xf32>
    %88 = vector.shape_cast %80 : vector<8x32xf32> to vector<1x8x32xf32>
    %89 = tpu.concatenate %81, %82, %83, %84, %85, %86, %87, %88 in 0 : vector<1x8x32xf32>, vector<1x8x32xf32>, vector<1x8x32xf32>, vector<1x8x32xf32>, vector<1x8x32xf32>, vector<1x8x32xf32>, vector<1x8x32xf32>, vector<1x8x32xf32> -> vector<8x8x32xf32>
    %90 = arith.truncf %89 : vector<8x8x32xf32> to vector<8x8x32xbf16>
    %91 = vector.shape_cast %36 : vector<16x128xf32> to vector<8x2x128xf32>
    %92 = vector.extract_strided_slice %91 {offsets = [0, 0, 0], sizes = [8, 1, 32], strides = [1, 1, 1]} : vector<8x2x128xf32> to vector<8x1x32xf32>
    %93 = vector.shape_cast %92 : vector<8x1x32xf32> to vector<8x32xf32>
    %94 = vector.extract_strided_slice %91 {offsets = [0, 0, 32], sizes = [8, 1, 32], strides = [1, 1, 1]} : vector<8x2x128xf32> to vector<8x1x32xf32>
    %95 = vector.shape_cast %94 : vector<8x1x32xf32> to vector<8x32xf32>
    %96 = vector.extract_strided_slice %91 {offsets = [0, 0, 64], sizes = [8, 1, 32], strides = [1, 1, 1]} : vector<8x2x128xf32> to vector<8x1x32xf32>
    %97 = vector.shape_cast %96 : vector<8x1x32xf32> to vector<8x32xf32>
    %98 = vector.extract_strided_slice %91 {offsets = [0, 0, 96], sizes = [8, 1, 32], strides = [1, 1, 1]} : vector<8x2x128xf32> to vector<8x1x32xf32>
    %99 = vector.shape_cast %98 : vector<8x1x32xf32> to vector<8x32xf32>
    %100 = vector.extract_strided_slice %91 {offsets = [0, 1, 0], sizes = [8, 1, 32], strides = [1, 1, 1]} : vector<8x2x128xf32> to vector<8x1x32xf32>
    %101 = vector.shape_cast %100 : vector<8x1x32xf32> to vector<8x32xf32>
    %102 = vector.extract_strided_slice %91 {offsets = [0, 1, 32], sizes = [8, 1, 32], strides = [1, 1, 1]} : vector<8x2x128xf32> to vector<8x1x32xf32>
    %103 = vector.shape_cast %102 : vector<8x1x32xf32> to vector<8x32xf32>
    %104 = vector.extract_strided_slice %91 {offsets = [0, 1, 64], sizes = [8, 1, 32], strides = [1, 1, 1]} : vector<8x2x128xf32> to vector<8x1x32xf32>
    %105 = vector.shape_cast %104 : vector<8x1x32xf32> to vector<8x32xf32>
    %106 = vector.extract_strided_slice %91 {offsets = [0, 1, 96], sizes = [8, 1, 32], strides = [1, 1, 1]} : vector<8x2x128xf32> to vector<8x1x32xf32>
    %107 = vector.shape_cast %106 : vector<8x1x32xf32> to vector<8x32xf32>
    %108 = vector.shape_cast %93 : vector<8x32xf32> to vector<1x8x32xf32>
    %109 = vector.shape_cast %95 : vector<8x32xf32> to vector<1x8x32xf32>
    %110 = vector.shape_cast %97 : vector<8x32xf32> to vector<1x8x32xf32>
    %111 = vector.shape_cast %99 : vector<8x32xf32> to vector<1x8x32xf32>
    %112 = vector.shape_cast %101 : vector<8x32xf32> to vector<1x8x32xf32>
    %113 = vector.shape_cast %103 : vector<8x32xf32> to vector<1x8x32xf32>
    %114 = vector.shape_cast %105 : vector<8x32xf32> to vector<1x8x32xf32>
    %115 = vector.shape_cast %107 : vector<8x32xf32> to vector<1x8x32xf32>
    %116 = tpu.concatenate %108, %109, %110, %111, %112, %113, %114, %115 in 0 : vector<1x8x32xf32>, vector<1x8x32xf32>, vector<1x8x32xf32>, vector<1x8x32xf32>, vector<1x8x32xf32>, vector<1x8x32xf32>, vector<1x8x32xf32>, vector<1x8x32xf32> -> vector<8x8x32xf32>
    %117 = arith.truncf %116 : vector<8x8x32xf32> to vector<8x8x32xbf16>
    "tpu.trace_start"() <{level = 10 : i32, message = "gqd,gkd->gqk"}> : () -> ()
    %cst_16 = arith.constant dense<0.000000e+00> : vector<8x8x8xf32>
    %118 = tpu.matmul %63, %90, %cst_16 {dimension_numbers = #tpu.dot_dimension_numbers<[2], [2], [1], [1], [0, 0, 0, 1, 1, 1], [0], [0]>} : vector<8x8x32xbf16>, vector<8x8x32xbf16>, vector<8x8x8xf32> -> vector<8x8x8xf32>
    "tpu.trace_stop"() : () -> ()
    %cst_17 = arith.constant dense<0xFF800000> : vector<8x8xf32>
    %119 = vector.multi_reduction <maximumf>, %118, %cst_17 [2] : vector<8x8x8xf32> to vector<8x8xf32>
    %120 = vector.shape_cast %119 : vector<8x8xf32> to vector<8x8x1xf32>
    %121 = vector.broadcast %120 : vector<8x8x1xf32> to vector<8x8x8xf32>
    %122 = arith.subf %118, %121 : vector<8x8x8xf32>
    %123 = math.exp %122 : vector<8x8x8xf32>
    %cst_18 = arith.constant dense<0.000000e+00> : vector<8x8xf32>
    %124 = vector.multi_reduction <add>, %123, %cst_18 [2] : vector<8x8x8xf32> to vector<8x8xf32>
    %125 = vector.shape_cast %124 : vector<8x8xf32> to vector<8x8x1xf32>
    %126 = vector.broadcast %125 : vector<8x8x1xf32> to vector<8x8x8xf32>
    %127 = arith.divf %123, %126 : vector<8x8x8xf32>
    %128 = arith.truncf %127 : vector<8x8x8xf32> to vector<8x8x8xbf16>
    "tpu.trace_start"() <{level = 10 : i32, message = "gqk,gkd->gqd"}> : () -> ()
    %cst_19 = arith.constant dense<0.000000e+00> : vector<8x8x32xf32>
    %129 = tpu.matmul %128, %117, %cst_19 {dimension_numbers = #tpu.dot_dimension_numbers<[2], [1], [1], [2], [0, 0, 0, 1, 1, 2], [0], [0]>} : vector<8x8x8xbf16>, vector<8x8x32xbf16>, vector<8x8x32xf32> -> vector<8x8x32xf32>
    "tpu.trace_stop"() : () -> ()
    %130 = vector.extract_strided_slice %129 {offsets = [0, 0, 0], sizes = [1, 8, 32], strides = [1, 1, 1]} : vector<8x8x32xf32> to vector<1x8x32xf32>
    %131 = vector.shape_cast %130 : vector<1x8x32xf32> to vector<8x32xf32>
    %132 = vector.extract_strided_slice %129 {offsets = [1, 0, 0], sizes = [1, 8, 32], strides = [1, 1, 1]} : vector<8x8x32xf32> to vector<1x8x32xf32>
    %133 = vector.shape_cast %132 : vector<1x8x32xf32> to vector<8x32xf32>
    %134 = vector.extract_strided_slice %129 {offsets = [2, 0, 0], sizes = [1, 8, 32], strides = [1, 1, 1]} : vector<8x8x32xf32> to vector<1x8x32xf32>
    %135 = vector.shape_cast %134 : vector<1x8x32xf32> to vector<8x32xf32>
    %136 = vector.extract_strided_slice %129 {offsets = [3, 0, 0], sizes = [1, 8, 32], strides = [1, 1, 1]} : vector<8x8x32xf32> to vector<1x8x32xf32>
    %137 = vector.shape_cast %136 : vector<1x8x32xf32> to vector<8x32xf32>
    %138 = tpu.concatenate %131, %133, %135, %137 in 1 : vector<8x32xf32>, vector<8x32xf32>, vector<8x32xf32>, vector<8x32xf32> -> vector<8x128xf32>
    %139 = vector.extract_strided_slice %129 {offsets = [4, 0, 0], sizes = [1, 8, 32], strides = [1, 1, 1]} : vector<8x8x32xf32> to vector<1x8x32xf32>
    %140 = vector.shape_cast %139 : vector<1x8x32xf32> to vector<8x32xf32>
    %141 = vector.extract_strided_slice %129 {offsets = [5, 0, 0], sizes = [1, 8, 32], strides = [1, 1, 1]} : vector<8x8x32xf32> to vector<1x8x32xf32>
    %142 = vector.shape_cast %141 : vector<1x8x32xf32> to vector<8x32xf32>
    %143 = vector.extract_strided_slice %129 {offsets = [6, 0, 0], sizes = [1, 8, 32], strides = [1, 1, 1]} : vector<8x8x32xf32> to vector<1x8x32xf32>
    %144 = vector.shape_cast %143 : vector<1x8x32xf32> to vector<8x32xf32>
    %145 = vector.extract_strided_slice %129 {offsets = [7, 0, 0], sizes = [1, 8, 32], strides = [1, 1, 1]} : vector<8x8x32xf32> to vector<1x8x32xf32>
    %146 = vector.shape_cast %145 : vector<1x8x32xf32> to vector<8x32xf32>
    %147 = tpu.concatenate %140, %142, %144, %146 in 1 : vector<8x32xf32>, vector<8x32xf32>, vector<8x32xf32>, vector<8x32xf32> -> vector<8x128xf32>
    %148 = vector.shape_cast %138 : vector<8x128xf32> to vector<8x1x128xf32>
    %149 = vector.shape_cast %147 : vector<8x128xf32> to vector<8x1x128xf32>
    %150 = tpu.concatenate %148, %149 in 1 : vector<8x1x128xf32>, vector<8x1x128xf32> -> vector<8x2x128xf32>
    %151 = vector.shape_cast %150 : vector<8x2x128xf32> to vector<16x128xf32>
    %152 = arith.truncf %151 : vector<16x128xf32> to vector<16x128xbf16>
    %c0_20 = arith.constant 0 : index
    %c0_21 = arith.constant 0 : index
    %153 = vector.load %arg6[%c0_20, %c0_21] : memref<128x128xbf16, #tpu.memory_space<vmem>>, vector<128x128xbf16>
    %cst_22 = arith.constant dense<0.000000e+00> : vector<16x128xf32>
    %154 = tpu.matmul %152, %153, %cst_22 {dimension_numbers = #tpu.dot_dimension_numbers<[1], [0], [0], [1], [0, 0, 1, 1], [], []>} : vector<16x128xbf16>, vector<128x128xbf16>, vector<16x128xf32> -> vector<16x128xf32>
    %c0_23 = arith.constant 0 : index
    %c0_24 = arith.constant 0 : index
    %155 = vector.load %arg7[%c0_23, %c0_24] : memref<1x128xf32, #tpu.memory_space<vmem>>, vector<1x128xf32>
    %156 = vector.broadcast %155 : vector<1x128xf32> to vector<16x128xf32>
    %157 = arith.addf %154, %156 : vector<16x128xf32>
    %158 = arith.addf %1, %157 : vector<16x128xf32>
    %cst_25 = arith.constant dense<0.000000e+00> : vector<16xf32>
    %159 = vector.multi_reduction <add>, %158, %cst_25 [1] : vector<16x128xf32> to vector<16xf32>
    %160 = vector.shape_cast %159 : vector<16xf32> to vector<16x1xf32>
    %cst_26 = arith.constant 1.280000e+02 : f32
    %161 = vector.broadcast %cst_26 : f32 to vector<16x1xf32>
    %162 = arith.divf %160, %161 : vector<16x1xf32>
    %163 = vector.broadcast %162 : vector<16x1xf32> to vector<16x128xf32>
    %164 = arith.subf %158, %163 : vector<16x128xf32>
    %165 = arith.mulf %164, %164 : vector<16x128xf32>
    %cst_27 = arith.constant dense<0.000000e+00> : vector<16xf32>
    %166 = vector.multi_reduction <add>, %165, %cst_27 [1] : vector<16x128xf32> to vector<16xf32>
    %167 = vector.shape_cast %166 : vector<16xf32> to vector<16x1xf32>
    %cst_28 = arith.constant 1.280000e+02 : f32
    %168 = vector.broadcast %cst_28 : f32 to vector<16x1xf32>
    %169 = arith.divf %167, %168 : vector<16x1xf32>
    %170 = vector.broadcast %162 : vector<16x1xf32> to vector<16x128xf32>
    %171 = arith.subf %158, %170 : vector<16x128xf32>
    %cst_29 = arith.constant 9.99999974E-6 : f32
    %172 = vector.broadcast %cst_29 : f32 to vector<16x1xf32>
    %173 = arith.addf %169, %172 : vector<16x1xf32>
    %174 = math.rsqrt %173 : vector<16x1xf32>
    %175 = vector.broadcast %174 : vector<16x1xf32> to vector<16x128xf32>
    %176 = arith.mulf %171, %175 : vector<16x128xf32>
    %c0_30 = arith.constant 0 : index
    %c0_31 = arith.constant 0 : index
    %177 = vector.load %arg8[%c0_30, %c0_31] : memref<1x128xf32, #tpu.memory_space<vmem>>, vector<1x128xf32>
    %178 = vector.broadcast %177 : vector<1x128xf32> to vector<16x128xf32>
    %179 = arith.mulf %176, %178 : vector<16x128xf32>
    %c0_32 = arith.constant 0 : index
    %c0_33 = arith.constant 0 : index
    %180 = vector.load %arg9[%c0_32, %c0_33] : memref<1x128xf32, #tpu.memory_space<vmem>>, vector<1x128xf32>
    %181 = vector.broadcast %180 : vector<1x128xf32> to vector<16x128xf32>
    %182 = arith.addf %179, %181 : vector<16x128xf32>
    %183 = arith.truncf %182 : vector<16x128xf32> to vector<16x128xbf16>
    %c0_34 = arith.constant 0 : index
    %c0_35 = arith.constant 0 : index
    %184 = vector.load %arg10[%c0_34, %c0_35] : memref<128x512xbf16, #tpu.memory_space<vmem>>, vector<128x512xbf16>
    %cst_36 = arith.constant dense<0.000000e+00> : vector<16x512xf32>
    %185 = tpu.matmul %183, %184, %cst_36 {dimension_numbers = #tpu.dot_dimension_numbers<[1], [0], [0], [1], [0, 0, 1, 1], [], []>} : vector<16x128xbf16>, vector<128x512xbf16>, vector<16x512xf32> -> vector<16x512xf32>
    %c0_37 = arith.constant 0 : index
    %c0_38 = arith.constant 0 : index
    %186 = vector.load %arg11[%c0_37, %c0_38] : memref<1x512xf32, #tpu.memory_space<vmem>>, vector<1x512xf32>
    %187 = vector.broadcast %186 : vector<1x512xf32> to vector<16x512xf32>
    %188 = arith.addf %185, %187 : vector<16x512xf32>
    %cst_39 = arith.constant 1.702000e+00 : f32
    %189 = vector.broadcast %cst_39 : f32 to vector<16x512xf32>
    %190 = arith.mulf %189, %188 : vector<16x512xf32>
    %191 = arith.negf %190 : vector<16x512xf32>
    %192 = math.exp %191 : vector<16x512xf32>
    %cst_40 = arith.constant 1.000000e+00 : f32
    %193 = vector.broadcast %cst_40 : f32 to vector<16x512xf32>
    %194 = arith.addf %193, %192 : vector<16x512xf32>
    %195 = arith.divf %193, %194 : vector<16x512xf32>
    %196 = arith.mulf %188, %195 : vector<16x512xf32>
    %197 = arith.truncf %196 : vector<16x512xf32> to vector<16x512xbf16>
    %c0_41 = arith.constant 0 : index
    %c0_42 = arith.constant 0 : index
    %198 = vector.load %arg12[%c0_41, %c0_42] : memref<512x128xbf16, #tpu.memory_space<vmem>>, vector<512x128xbf16>
    %cst_43 = arith.constant dense<0.000000e+00> : vector<16x128xf32>
    %199 = tpu.matmul %197, %198, %cst_43 {dimension_numbers = #tpu.dot_dimension_numbers<[1], [0], [0], [1], [0, 0, 1, 1], [], []>} : vector<16x512xbf16>, vector<512x128xbf16>, vector<16x128xf32> -> vector<16x128xf32>
    %c0_44 = arith.constant 0 : index
    %c0_45 = arith.constant 0 : index
    %200 = vector.load %arg13[%c0_44, %c0_45] : memref<1x128xf32, #tpu.memory_space<vmem>>, vector<1x128xf32>
    %201 = vector.broadcast %200 : vector<1x128xf32> to vector<16x128xf32>
    %202 = arith.addf %199, %201 : vector<16x128xf32>
    %203 = arith.addf %158, %202 : vector<16x128xf32>
    %cst_46 = arith.constant dense<0.000000e+00> : vector<16xf32>
    %204 = vector.multi_reduction <add>, %203, %cst_46 [1] : vector<16x128xf32> to vector<16xf32>
    %205 = vector.shape_cast %204 : vector<16xf32> to vector<16x1xf32>
    %cst_47 = arith.constant 1.280000e+02 : f32
    %206 = vector.broadcast %cst_47 : f32 to vector<16x1xf32>
    %207 = arith.divf %205, %206 : vector<16x1xf32>
    %208 = vector.broadcast %207 : vector<16x1xf32> to vector<16x128xf32>
    %209 = arith.subf %203, %208 : vector<16x128xf32>
    %210 = arith.mulf %209, %209 : vector<16x128xf32>
    %cst_48 = arith.constant dense<0.000000e+00> : vector<16xf32>
    %211 = vector.multi_reduction <add>, %210, %cst_48 [1] : vector<16x128xf32> to vector<16xf32>
    %212 = vector.shape_cast %211 : vector<16xf32> to vector<16x1xf32>
    %cst_49 = arith.constant 1.280000e+02 : f32
    %213 = vector.broadcast %cst_49 : f32 to vector<16x1xf32>
    %214 = arith.divf %212, %213 : vector<16x1xf32>
    %215 = vector.broadcast %207 : vector<16x1xf32> to vector<16x128xf32>
    %216 = arith.subf %203, %215 : vector<16x128xf32>
    %cst_50 = arith.constant 9.99999974E-6 : f32
    %217 = vector.broadcast %cst_50 : f32 to vector<16x1xf32>
    %218 = arith.addf %214, %217 : vector<16x1xf32>
    %219 = math.rsqrt %218 : vector<16x1xf32>
    %220 = vector.broadcast %219 : vector<16x1xf32> to vector<16x128xf32>
    %221 = arith.mulf %216, %220 : vector<16x128xf32>
    %c0_51 = arith.constant 0 : index
    %c0_52 = arith.constant 0 : index
    %222 = vector.load %arg14[%c0_51, %c0_52] : memref<1x128xf32, #tpu.memory_space<vmem>>, vector<1x128xf32>
    %223 = vector.broadcast %222 : vector<1x128xf32> to vector<16x128xf32>
    %224 = arith.mulf %221, %223 : vector<16x128xf32>
    %c0_53 = arith.constant 0 : index
    %c0_54 = arith.constant 0 : index
    %225 = vector.load %arg15[%c0_53, %c0_54] : memref<1x128xf32, #tpu.memory_space<vmem>>, vector<1x128xf32>
    %226 = vector.broadcast %225 : vector<1x128xf32> to vector<16x128xf32>
    %227 = arith.addf %224, %226 : vector<16x128xf32>
    %228 = arith.truncf %227 : vector<16x128xf32> to vector<16x128xbf16>
    %c0_55 = arith.constant 0 : index
    %c0_56 = arith.constant 0 : index
    %229 = vector.load %arg16[%c0_55, %c0_56] : memref<128x128xbf16, #tpu.memory_space<vmem>>, vector<128x128xbf16>
    %cst_57 = arith.constant dense<0.000000e+00> : vector<16x128xf32>
    %230 = tpu.matmul %228, %229, %cst_57 {dimension_numbers = #tpu.dot_dimension_numbers<[1], [0], [0], [1], [0, 0, 1, 1], [], []>} : vector<16x128xbf16>, vector<128x128xbf16>, vector<16x128xf32> -> vector<16x128xf32>
    %c0_58 = arith.constant 0 : index
    %c0_59 = arith.constant 0 : index
    %231 = vector.load %arg17[%c0_58, %c0_59] : memref<1x128xf32, #tpu.memory_space<vmem>>, vector<1x128xf32>
    %232 = vector.broadcast %231 : vector<1x128xf32> to vector<16x128xf32>
    %233 = arith.addf %230, %232 : vector<16x128xf32>
    %cst_60 = arith.constant 0.000000e+00 : f32
    %234 = vector.broadcast %cst_60 : f32 to vector<16x128xf32>
    %235 = arith.maximumf %233, %234 : vector<16x128xf32>
    %236 = arith.truncf %235 : vector<16x128xf32> to vector<16x128xbf16>
    %c0_61 = arith.constant 0 : index
    %c0_62 = arith.constant 0 : index
    %237 = vector.load %arg18[%c0_61, %c0_62] : memref<128x128xbf16, #tpu.memory_space<vmem>>, vector<128x128xbf16>
    %cst_63 = arith.constant dense<0.000000e+00> : vector<16x128xf32>
    %238 = tpu.matmul %236, %237, %cst_63 {dimension_numbers = #tpu.dot_dimension_numbers<[1], [0], [0], [1], [0, 0, 1, 1], [], []>} : vector<16x128xbf16>, vector<128x128xbf16>, vector<16x128xf32> -> vector<16x128xf32>
    %c0_64 = arith.constant 0 : index
    %c0_65 = arith.constant 0 : index
    %239 = vector.load %arg19[%c0_64, %c0_65] : memref<1x128xf32, #tpu.memory_space<vmem>>, vector<1x128xf32>
    %240 = vector.broadcast %239 : vector<1x128xf32> to vector<16x128xf32>
    %241 = arith.addf %238, %240 : vector<16x128xf32>
    %242 = arith.addf %158, %241 : vector<16x128xf32>
    %243 = arith.addf %242, %202 : vector<16x128xf32>
    %244 = vector.shape_cast %243 : vector<16x128xf32> to vector<8x2x128xf32>
    %c0_66 = arith.constant 0 : index
    %c0_67 = arith.constant 0 : index
    %c0_68 = arith.constant 0 : index
    %245 = vector.load %arg20[%c0_66, %c0_67, %c0_68] : memref<8x2x128xf32, #tpu.memory_space<vmem>>, vector<8x2x128xf32>
    tpu.vector_store %arg20[%c0_66, %c0_67, %c0_68], %244 {strides = array<i32>} : memref<8x2x128xf32, #tpu.memory_space<vmem>>, vector<8x2x128xf32>,
    return
  }
  func.func @transform_0(%arg0: i32) -> (i32, i32, i32) {
    %c0_i32 = arith.constant 0 : i32
    %c0_i32_0 = arith.constant 0 : i32
    %c0_i32_1 = arith.constant 0 : i32
    return %c0_i32, %arg0, %c0_i32_0 : i32, i32, i32
  }
  func.func @transform_1(%arg0: i32) -> (i32, i32) {
    %c0_i32 = arith.constant 0 : i32
    %c0_i32_0 = arith.constant 0 : i32
    %c0_i32_1 = arith.constant 0 : i32
    return %c0_i32, %c0_i32_0 : i32, i32
  }
  func.func @transform_2(%arg0: i32) -> (i32, i32) {
    %c0_i32 = arith.constant 0 : i32
    %c0_i32_0 = arith.constant 0 : i32
    %c0_i32_1 = arith.constant 0 : i32
    return %c0_i32, %c0_i32_0 : i32, i32
  }
  func.func @transform_3(%arg0: i32) -> (i32, i32) {
    %c0_i32 = arith.constant 0 : i32
    %c0_i32_0 = arith.constant 0 : i32
    %c0_i32_1 = arith.constant 0 : i32
    return %c0_i32, %c0_i32_0 : i32, i32
  }
  func.func @transform_4(%arg0: i32) -> (i32, i32) {
    %c0_i32 = arith.constant 0 : i32
    %c0_i32_0 = arith.constant 0 : i32
    %c0_i32_1 = arith.constant 0 : i32
    return %c0_i32, %c0_i32_0 : i32, i32
  }
  func.func @transform_5(%arg0: i32) -> (i32, i32) {
    %c0_i32 = arith.constant 0 : i32
    %c0_i32_0 = arith.constant 0 : i32
    %c0_i32_1 = arith.constant 0 : i32
    return %c0_i32, %c0_i32_0 : i32, i32
  }
  func.func @transform_6(%arg0: i32) -> (i32, i32) {
    %c0_i32 = arith.constant 0 : i32
    %c0_i32_0 = arith.constant 0 : i32
    %c0_i32_1 = arith.constant 0 : i32
    return %c0_i32, %c0_i32_0 : i32, i32
  }
  func.func @transform_7(%arg0: i32) -> (i32, i32) {
    %c0_i32 = arith.constant 0 : i32
    %c0_i32_0 = arith.constant 0 : i32
    %c0_i32_1 = arith.constant 0 : i32
    return %c0_i32, %c0_i32_0 : i32, i32
  }
  func.func @transform_8(%arg0: i32) -> (i32, i32) {
    %c0_i32 = arith.constant 0 : i32
    %c0_i32_0 = arith.constant 0 : i32
    %c0_i32_1 = arith.constant 0 : i32
    return %c0_i32, %c0_i32_0 : i32, i32
  }
  func.func @transform_9(%arg0: i32) -> (i32, i32) {
    %c0_i32 = arith.constant 0 : i32
    %c0_i32_0 = arith.constant 0 : i32
    %c0_i32_1 = arith.constant 0 : i32
    return %c0_i32, %c0_i32_0 : i32, i32
  }
  func.func @transform_10(%arg0: i32) -> (i32, i32) {
    %c0_i32 = arith.constant 0 : i32
    %c0_i32_0 = arith.constant 0 : i32
    %c0_i32_1 = arith.constant 0 : i32
    return %c0_i32, %c0_i32_0 : i32, i32
  }
  func.func @transform_11(%arg0: i32) -> (i32, i32) {
    %c0_i32 = arith.constant 0 : i32
    %c0_i32_0 = arith.constant 0 : i32
    %c0_i32_1 = arith.constant 0 : i32
    return %c0_i32, %c0_i32_0 : i32, i32
  }
  func.func @transform_12(%arg0: i32) -> (i32, i32) {
    %c0_i32 = arith.constant 0 : i32
    %c0_i32_0 = arith.constant 0 : i32
    %c0_i32_1 = arith.constant 0 : i32
    return %c0_i32, %c0_i32_0 : i32, i32
  }
  func.func @transform_13(%arg0: i32) -> (i32, i32) {
    %c0_i32 = arith.constant 0 : i32
    %c0_i32_0 = arith.constant 0 : i32
    %c0_i32_1 = arith.constant 0 : i32
    return %c0_i32, %c0_i32_0 : i32, i32
  }
  func.func @transform_14(%arg0: i32) -> (i32, i32) {
    %c0_i32 = arith.constant 0 : i32
    %c0_i32_0 = arith.constant 0 : i32
    %c0_i32_1 = arith.constant 0 : i32
    return %c0_i32, %c0_i32_0 : i32, i32
  }
  func.func @transform_15(%arg0: i32) -> (i32, i32) {
    %c0_i32 = arith.constant 0 : i32
    %c0_i32_0 = arith.constant 0 : i32
    %c0_i32_1 = arith.constant 0 : i32
    return %c0_i32, %c0_i32_0 : i32, i32
  }
  func.func @transform_16(%arg0: i32) -> (i32, i32) {
    %c0_i32 = arith.constant 0 : i32
    %c0_i32_0 = arith.constant 0 : i32
    %c0_i32_1 = arith.constant 0 : i32
    return %c0_i32, %c0_i32_0 : i32, i32
  }
  func.func @transform_17(%arg0: i32) -> (i32, i32) {
    %c0_i32 = arith.constant 0 : i32
    %c0_i32_0 = arith.constant 0 : i32
    %c0_i32_1 = arith.constant 0 : i32
    return %c0_i32, %c0_i32_0 : i32, i32
  }
  func.func @transform_18(%arg0: i32) -> (i32, i32) {
    %c0_i32 = arith.constant 0 : i32
    %c0_i32_0 = arith.constant 0 : i32
    %c0_i32_1 = arith.constant 0 : i32
    return %c0_i32, %c0_i32_0 : i32, i32
  }
  func.func @transform_19(%arg0: i32) -> (i32, i32, i32) {
    %c0_i32 = arith.constant 0 : i32
    %c0_i32_0 = arith.constant 0 : i32
    %c0_i32_1 = arith.constant 0 : i32
    return %c0_i32, %arg0, %c0_i32_0 : i32, i32, i32
  }
}

</mosaic_0001>

<llo_original>
// kernel: tpu_custom_call.1
$region0: #{tpu_custom_call.1}
  #allocation0 [shape = 'u32[]', space=smem, size = 0x4, offset = 0x4, fixed_abs, tag = 'smem constant byte address 0x4 - core index']
  #allocation1 [shape = 'u32[144,128]{1,0:T(1,128)}', space=vmem, size = 0x12000, scoped, tag = 'internal scratch']
  %s0 = inlined_call_operand.hbm [shape: f32[8,2,128], index: 0, kind: input, shape index: {}]
  %s1 = inlined_call_operand.hbm [shape: f32[1,128], index: 1, kind: input, shape index: {}]
  %s2 = inlined_call_operand.hbm [shape: f32[1,128], index: 2, kind: input, shape index: {}]
  %s3 = inlined_call_operand.hbm [shape: bf16[128,384], index: 3, kind: input, shape index: {}]
  %s4 = inlined_call_operand.vmem [shape: f32[1,384], index: 4, kind: input, shape index: {}]
  %s5 = inlined_call_operand.hbm [shape: bf16[128,128], index: 5, kind: input, shape index: {}]
  %s6 = inlined_call_operand.vmem [shape: f32[1,128], index: 6, kind: input, shape index: {}]
  %s7 = inlined_call_operand.vmem [shape: f32[1,128], index: 7, kind: input, shape index: {}]
  %s8 = inlined_call_operand.vmem [shape: f32[1,128], index: 8, kind: input, shape index: {}]
  %s9 = inlined_call_operand.hbm [shape: bf16[128,512], index: 9, kind: input, shape index: {}]
  %s10 = inlined_call_operand.vmem [shape: f32[1,512], index: 10, kind: input, shape index: {}]
  %s11 = inlined_call_operand.hbm [shape: bf16[512,128], index: 11, kind: input, shape index: {}]
  %s12 = inlined_call_operand.vmem [shape: f32[1,128], index: 12, kind: input, shape index: {}]
  %s13 = inlined_call_operand.vmem [shape: f32[1,128], index: 13, kind: input, shape index: {}]
  %s14 = inlined_call_operand.vmem [shape: f32[1,128], index: 14, kind: input, shape index: {}]
  %s15 = inlined_call_operand.hbm [shape: bf16[128,128], index: 15, kind: input, shape index: {}]
  %s16 = inlined_call_operand.vmem [shape: f32[1,128], index: 16, kind: input, shape index: {}]
  %s17 = inlined_call_operand.hbm [shape: bf16[128,128], index: 17, kind: input, shape index: {}]
  %s18 = inlined_call_operand.vmem [shape: f32[1,128], index: 18, kind: input, shape index: {}]
  %s19 = inlined_call_operand.hbm [shape: f32[8,2,128], index: 19, kind: output, shape index: {}]
  %s20 = sld [smem:[#allocation0]]
  $region122: #{tpu_custom_call.1} parent=0
    _
  %s22 = ssub.s32 1, %s20
  %s23 = scalar_select 0, %s22, %s20
  $region1: #{tpu_custom_call.1} parent=0
    #allocation2 [shape = 'u8[8192]{0}', space=vmem, size = 0x2000, scoped, tag = 'input window, operand 0, single buffered']
    #allocation3 [shape = 's32[1]{0}', space=sflag, size = 0x4, scoped, tag = 'scoped memory for tpu_custom_call.1']
    #allocation4 [shape = 's32[1]{0}', space=sflag, size = 0x4, scoped, tag = 'scoped memory for tpu_custom_call.1']
    #allocation5 [shape = 'u8[512]{0}', space=vmem, size = 0x400, scoped, tag = 'input window, operand 1, single buffered']
    #allocation6 [shape = 's32[1]{0}', space=sflag, size = 0x4, scoped, tag = 'scoped memory for tpu_custom_call.1']
    #allocation7 [shape = 'u8[512]{0}', space=vmem, size = 0x400, scoped, tag = 'input window, operand 2, single buffered']
    #allocation8 [shape = 'u8[98304]{0}', space=vmem, size = 0x18000, scoped, tag = 'input window, operand 3, single buffered']
    #allocation9 [shape = 's32[1]{0}', space=sflag, size = 0x4, scoped, tag = 'scoped memory for tpu_custom_call.1']
    #allocation10 [shape = 'u8[32768]{0}', space=vmem, size = 0x8000, scoped, tag = 'input window, operand 5, single buffered']
    #allocation11 [shape = 'u8[131072]{0}', space=vmem, size = 0x20000, scoped, tag = 'input window, operand 9, single buffered']
    #allocation12 [shape = 's32[1]{0}', space=sflag, size = 0x4, scoped, tag = 'scoped memory for tpu_custom_call.1']
    #allocation13 [shape = 'u8[131072]{0}', space=vmem, size = 0x20000, scoped, tag = 'input window, operand 11, single buffered']
    #allocation14 [shape = 'u8[32768]{0}', space=vmem, size = 0x8000, scoped, tag = 'input window, operand 15, single buffered']
    #allocation15 [shape = 's32[1]{0}', space=sflag, size = 0x4, scoped, tag = 'scoped memory for tpu_custom_call.1']
    #allocation16 [shape = 'u8[32768]{0}', space=vmem, size = 0x8000, scoped, tag = 'input window, operand 17, single buffered']
    #allocation17 [shape = 'u8[8192]{0}', space=vmem, size = 0x2000, scoped, tag = 'output window, operand 0, single buffered']
    %24 = vsyncpa [#allocation3], 0
    %25 = vsyncpa [#allocation6], 0
    %26 = vsyncpa [#allocation9], 0
    %27 = vsyncpa [#allocation12], 0
    %28 = vsyncpa [#allocation15], 0
    %29 = vsyncpa [#allocation4], 0
    // Predicated region
    $region2: #{tpu_custom_call.1} parent=1 // pred_check
      _
    $region3: #{tpu_custom_call.1} parent=1 // pred_check_branch
      %31 = sbr.rel (0) target = $region5
    $region4: #{tpu_custom_call.1} parent=1 // pred_region
      %s33 = ssub.s32 256, 256
      %34 = vsyncadd [#allocation3], %s33
      %s35 = sshll.u32 [#allocation2], 4
      %s36 = int_to_ptr.vmem [resolvable:$true] %s35
      %41 = dma.hbm_to_vmem [thread:$0]  %s0, 256, %s36, [#allocation3], 32, 32, 2
    $region5: #{tpu_custom_call.1} parent=1 // pred_fallthru
      _
    // Predicated region
    $region6: #{tpu_custom_call.1} parent=1 // pred_check
      _
    $region7: #{tpu_custom_call.1} parent=1 // pred_check_branch
      %43 = sbr.rel (0) target = $region9
    $region8: #{tpu_custom_call.1} parent=1 // pred_region
      %s45 = ssub.s32 16, 16
      %46 = vsyncadd [#allocation6], %s45
      %s48 = sshll.u32 [#allocation5], 4
      %s49 = int_to_ptr.vmem [resolvable:$true] %s48
      %51 = dma.hbm_to_vmem [thread:$0]  %s1, 16, %s49, [#allocation6]
    $region9: #{tpu_custom_call.1} parent=1 // pred_fallthru
      _
    // Predicated region
    $region10: #{tpu_custom_call.1} parent=1 // pred_check
      _
    $region11: #{tpu_custom_call.1} parent=1 // pred_check_branch
      %53 = sbr.rel (0) target = $region13
    $region12: #{tpu_custom_call.1} parent=1 // pred_region
      %s55 = ssub.s32 16, 16
      %56 = vsyncadd [#allocation6], %s55
      %s58 = sshll.u32 [#allocation7], 4
      %s59 = int_to_ptr.vmem [resolvable:$true] %s58
      %61 = dma.hbm_to_vmem [thread:$0]  %s2, 16, %s59, [#allocation6]
    $region13: #{tpu_custom_call.1} parent=1 // pred_fallthru
      _
    // Predicated region
    $region14: #{tpu_custom_call.1} parent=1 // pred_check
      _
    $region15: #{tpu_custom_call.1} parent=1 // pred_check_branch
      %63 = sbr.rel (0) target = $region17
    $region16: #{tpu_custom_call.1} parent=1 // pred_region
      %s65 = ssub.s32 3072, 3072
      %66 = vsyncadd [#allocation9], %s65
      %s67 = sshll.u32 [#allocation8], 4
      %s68 = int_to_ptr.vmem [resolvable:$true] %s67
      %73 = dma.hbm_to_vmem [thread:$0]  %s3, 3072, %s68, [#allocation9], 192, 192, 12
    $region17: #{tpu_custom_call.1} parent=1 // pred_fallthru
      _
    // Predicated region
    $region18: #{tpu_custom_call.1} parent=1 // pred_check
      _
    $region19: #{tpu_custom_call.1} parent=1 // pred_check_branch
      %75 = sbr.rel (0) target = $region21
    $region20: #{tpu_custom_call.1} parent=1 // pred_region
      _
    $region21: #{tpu_custom_call.1} parent=1 // pred_fallthru
      _
    // Predicated region
    $region22: #{tpu_custom_call.1} parent=1 // pred_check
      _
    $region23: #{tpu_custom_call.1} parent=1 // pred_check_branch
      %77 = sbr.rel (0) target = $region25
    $region24: #{tpu_custom_call.1} parent=1 // pred_region
      %s79 = ssub.s32 1024, 1024
      %80 = vsyncadd [#allocation9], %s79
      %s81 = sshll.u32 [#allocation10], 4
      %s82 = int_to_ptr.vmem [resolvable:$true] %s81
      %87 = dma.hbm_to_vmem [thread:$0]  %s5, 1024, %s82, [#allocation9], 64, 64, 4
    $region25: #{tpu_custom_call.1} parent=1 // pred_fallthru
      _
    // Predicated region
    $region26: #{tpu_custom_call.1} parent=1 // pred_check
      _
    $region27: #{tpu_custom_call.1} parent=1 // pred_check_branch
      %89 = sbr.rel (0) target = $region29
    $region28: #{tpu_custom_call.1} parent=1 // pred_region
      _
    $region29: #{tpu_custom_call.1} parent=1 // pred_fallthru
      _
    // Predicated region
    $region30: #{tpu_custom_call.1} parent=1 // pred_check
      _
    $region31: #{tpu_custom_call.1} parent=1 // pred_check_branch
      %91 = sbr.rel (0) target = $region33
    $region32: #{tpu_custom_call.1} parent=1 // pred_region
      _
    $region33: #{tpu_custom_call.1} parent=1 // pred_fallthru
      _
    // Predicated region
    $region34: #{tpu_custom_call.1} parent=1 // pred_check
      _
    $region35: #{tpu_custom_call.1} parent=1 // pred_check_branch
      %93 = sbr.rel (0) target = $region37
    $region36: #{tpu_custom_call.1} parent=1 // pred_region
      _
    $region37: #{tpu_custom_call.1} parent=1 // pred_fallthru
      _
    // Predicated region
    $region38: #{tpu_custom_call.1} parent=1 // pred_check
      _
    $region39: #{tpu_custom_call.1} parent=1 // pred_check_branch
      %95 = sbr.rel (0) target = $region41
    $region40: #{tpu_custom_call.1} parent=1 // pred_region
      %s97 = ssub.s32 4096, 4096
      %98 = vsyncadd [#allocation12], %s97
      %s99 = sshll.u32 [#allocation11], 4
      %s100 = int_to_ptr.vmem [resolvable:$true] %s99
      %105 = dma.hbm_to_vmem [thread:$0]  %s9, 4096, %s100, [#allocation12], 256, 256, 16
    $region41: #{tpu_custom_call.1} parent=1 // pred_fallthru
      _
    // Predicated region
    $region42: #{tpu_custom_call.1} parent=1 // pred_check
      _
    $region43: #{tpu_custom_call.1} parent=1 // pred_check_branch
      %107 = sbr.rel (0) target = $region45
    $region44: #{tpu_custom_call.1} parent=1 // pred_region
      _
    $region45: #{tpu_custom_call.1} parent=1 // pred_fallthru
      _
    // Predicated region
    $region46: #{tpu_custom_call.1} parent=1 // pred_check
      _
    $region47: #{tpu_custom_call.1} parent=1 // pred_check_branch
      %109 = sbr.rel (0) target = $region49
    $region48: #{tpu_custom_call.1} parent=1 // pred_region
      %s111 = ssub.s32 4096, 4096
      %112 = vsyncadd [#allocation12], %s111
      %s113 = sshll.u32 [#allocation13], 4
      %s114 = int_to_ptr.vmem [resolvable:$true] %s113
      %119 = dma.hbm_to_vmem [thread:$0]  %s11, 4096, %s114, [#allocation12], 64, 64, 4
    $region49: #{tpu_custom_call.1} parent=1 // pred_fallthru
      _
    // Predicated region
    $region50: #{tpu_custom_call.1} parent=1 // pred_check
      _
    $region51: #{tpu_custom_call.1} parent=1 // pred_check_branch
      %121 = sbr.rel (0) target = $region53
    $region52: #{tpu_custom_call.1} parent=1 // pred_region
      _
    $region53: #{tpu_custom_call.1} parent=1 // pred_fallthru
      _
    // Predicated region
    $region54: #{tpu_custom_call.1} parent=1 // pred_check
      _
    $region55: #{tpu_custom_call.1} parent=1 // pred_check_branch
      %123 = sbr.rel (0) target = $region57
    $region56: #{tpu_custom_call.1} parent=1 // pred_region
      _
    $region57: #{tpu_custom_call.1} parent=1 // pred_fallthru
      _
    // Predicated region
    $region58: #{tpu_custom_call.1} parent=1 // pred_check
      _
    $region59: #{tpu_custom_call.1} parent=1 // pred_check_branch
      %125 = sbr.rel (0) target = $region61
    $region60: #{tpu_custom_call.1} parent=1 // pred_region
      _
    $region61: #{tpu_custom_call.1} parent=1 // pred_fallthru
      _
    // Predicated region
    $region62: #{tpu_custom_call.1} parent=1 // pred_check
      _
    $region63: #{tpu_custom_call.1} parent=1 // pred_check_branch
      %127 = sbr.rel (0) target = $region65
    $region64: #{tpu_custom_call.1} parent=1 // pred_region
      %s129 = ssub.s32 1024, 1024
      %130 = vsyncadd [#allocation15], %s129
      %s131 = sshll.u32 [#allocation14], 4
      %s132 = int_to_ptr.vmem [resolvable:$true] %s131
      %137 = dma.hbm_to_vmem [thread:$0]  %s15, 1024, %s132, [#allocation15], 64, 64, 4
    $region65: #{tpu_custom_call.1} parent=1 // pred_fallthru
      _
    // Predicated region
    $region66: #{tpu_custom_call.1} parent=1 // pred_check
      _
    $region67: #{tpu_custom_call.1} parent=1 // pred_check_branch
      %139 = sbr.rel (0) target = $region69
    $region68: #{tpu_custom_call.1} parent=1 // pred_region
      _
    $region69: #{tpu_custom_call.1} parent=1 // pred_fallthru
      _
    // Predicated region
    $region70: #{tpu_custom_call.1} parent=1 // pred_check
      _
    $region71: #{tpu_custom_call.1} parent=1 // pred_check_branch
      %141 = sbr.rel (0) target = $region73
    $region72: #{tpu_custom_call.1} parent=1 // pred_region
      %s143 = ssub.s32 1024, 1024
      %144 = vsyncadd [#allocation15], %s143
      %s145 = sshll.u32 [#allocation16], 4
      %s146 = int_to_ptr.vmem [resolvable:$true] %s145
      %151 = dma.hbm_to_vmem [thread:$0]  %s17, 1024, %s146, [#allocation15], 64, 64, 4
    $region73: #{tpu_custom_call.1} parent=1 // pred_fallthru
      _
    // Predicated region
    $region74: #{tpu_custom_call.1} parent=1 // pred_check
      _
    $region75: #{tpu_custom_call.1} parent=1 // pred_check_branch
      %153 = sbr.rel (0) target = $region77
    $region76: #{tpu_custom_call.1} parent=1 // pred_region
      _
    $region77: #{tpu_custom_call.1} parent=1 // pred_fallthru
      _
    // Predicated region
    $region78: #{tpu_custom_call.1} parent=1 // pred_check
      _
    $region79: #{tpu_custom_call.1} parent=1 // pred_check_branch
      %155 = sbr.rel (0) target = $region81
    $region80: #{tpu_custom_call.1} parent=1 // pred_region
      %156 = dma.done [#allocation3], 256
    $region81: #{tpu_custom_call.1} parent=1 // pred_fallthru
      _
    // Predicated region
    $region82: #{tpu_custom_call.1} parent=1 // pred_check
      _
    $region83: #{tpu_custom_call.1} parent=1 // pred_check_branch
      %158 = sbr.rel (0) target = $region85
    $region84: #{tpu_custom_call.1} parent=1 // pred_region
      %159 = dma.done [#allocation6], 16
    $region85: #{tpu_custom_call.1} parent=1 // pred_fallthru
      _
    // Predicated region
    $region86: #{tpu_custom_call.1} parent=1 // pred_check
      _
    $region87: #{tpu_custom_call.1} parent=1 // pred_check_branch
      %161 = sbr.rel (0) target = $region89
    $region88: #{tpu_custom_call.1} parent=1 // pred_region
      %162 = dma.done [#allocation6], 16
    $region89: #{tpu_custom_call.1} parent=1 // pred_fallthru
      _
    // Predicated region
    $region90: #{tpu_custom_call.1} parent=1 // pred_check
      _
    $region91: #{tpu_custom_call.1} parent=1 // pred_check_branch
      %164 = sbr.rel (0) target = $region93
    $region92: #{tpu_custom_call.1} parent=1 // pred_region
      %165 = dma.done [#allocation9], 3072
    $region93: #{tpu_custom_call.1} parent=1 // pred_fallthru
      _
    // Predicated region
    $region94: #{tpu_custom_call.1} parent=1 // pred_check
      _
    $region95: #{tpu_custom_call.1} parent=1 // pred_check_branch
      %167 = sbr.rel (0) target = $region97
    $region96: #{tpu_custom_call.1} parent=1 // pred_region
      %168 = dma.done [#allocation9], 1024
    $region97: #{tpu_custom_call.1} parent=1 // pred_fallthru
      _
    // Predicated region
    $region98: #{tpu_custom_call.1} parent=1 // pred_check
      _
    $region99: #{tpu_custom_call.1} parent=1 // pred_check_branch
      %170 = sbr.rel (0) target = $region101
    $region100: #{tpu_custom_call.1} parent=1 // pred_region
      %171 = dma.done [#allocation12], 4096
    $region101: #{tpu_custom_call.1} parent=1 // pred_fallthru
      _
    // Predicated region
    $region102: #{tpu_custom_call.1} parent=1 // pred_check
      _
    $region103: #{tpu_custom_call.1} parent=1 // pred_check_branch
      %173 = sbr.rel (0) target = $region105
    $region104: #{tpu_custom_call.1} parent=1 // pred_region
      %174 = dma.done [#allocation12], 4096
    $region105: #{tpu_custom_call.1} parent=1 // pred_fallthru
      _
    // Predicated region
    $region106: #{tpu_custom_call.1} parent=1 // pred_check
      _
    $region107: #{tpu_custom_call.1} parent=1 // pred_check_branch
      %176 = sbr.rel (0) target = $region109
    $region108: #{tpu_custom_call.1} parent=1 // pred_region
      %177 = dma.done [#allocation15], 1024
    $region109: #{tpu_custom_call.1} parent=1 // pred_fallthru
      _
    // Predicated region
    $region110: #{tpu_custom_call.1} parent=1 // pred_check
      _
    $region111: #{tpu_custom_call.1} parent=1 // pred_check_branch
      %179 = sbr.rel (0) target = $region113
    $region112: #{tpu_custom_call.1} parent=1 // pred_region
      %180 = dma.done [#allocation15], 1024
    $region113: #{tpu_custom_call.1} parent=1 // pred_fallthru
      _
    %v182 = vld [vmem:[#allocation2] sm:$0x3]
    %v183 = vld [vmem:[#allocation2 + $0x2] sm:$0x3]
    %v184 = vld [vmem:[#allocation2 + $0x4] sm:$0x3]
    %v185 = vld [vmem:[#allocation2 + $0x6] sm:$0x3]
    %v186 = vld [vmem:[#allocation2 + $0x8] sm:$0x3]
    %v187 = vld [vmem:[#allocation2 + $0xa] sm:$0x3]
    %v188 = vld [vmem:[#allocation2 + $0xc] sm:$0x3]
    %v189 = vld [vmem:[#allocation2 + $0xe] sm:$0x3]
    %v198 = vcombine.low %v182, %v183
    %v199 = vcombine.low %v184, %v185
    %v201 = vunpack.c.l.s4 1983009808
    %v202 = vunpack.c.0.s8 %v201
    %v203 = vlaneseq
    %v204 = vshrl.u32 %v203, 7
    %v205 = vsub.s32 %v202, %v204
    %v206 = vrot.slane %v198, %v205
    %v208 = vunpack.c.l.s4 1983009808
    %v209 = vunpack.c.0.s8 %v208
    %v210 = vlaneseq
    %v211 = vshrl.u32 %v210, 7
    %v212 = vsub.s32 %v209, %v211
    %v213 = vrot.slane %v199, %v212
    %v214 = vcombine.low %v206, %v213
    %v215 = vcombine.low %v186, %v187
    %v216 = vcombine.low %v188, %v189
    %v218 = vunpack.c.l.s4 1983009808
    %v219 = vunpack.c.0.s8 %v218
    %v220 = vlaneseq
    %v221 = vshrl.u32 %v220, 7
    %v222 = vsub.s32 %v219, %v221
    %v223 = vrot.slane %v215, %v222
    %v225 = vunpack.c.l.s4 1983009808
    %v226 = vunpack.c.0.s8 %v225
    %v227 = vlaneseq
    %v228 = vshrl.u32 %v227, 7
    %v229 = vsub.s32 %v226, %v228
    %v230 = vrot.slane %v216, %v229
    %v231 = vcombine.low %v223, %v230
    %234 = vadd.xlane.f32.xlu0 %v214
    %v235 = vpop.xlane.xlu0 %234
    %236 = vadd.xlane.f32.xlu0 %v231
    %v237 = vpop.xlane.xlu0 %236
    %v238 = vrcp.pop 128.0
    %v239 = vmul.f32 %v235, %v238
    %v240 = vmul.f32 %v237, %v238
    %v244 = vunpack.c.l.s4 269488144
    %v245 = vunpack.c.0.s8 %v244
    %v246 = vlaneseq
    %v247 = vshrl.u32 %v246, 7
    %v248 = vsub.s32 %v245, %v247
    %v249 = vrot.slane %v239, %v248
    %v251 = vunpack.c.l.s4 842150450
    %v252 = vunpack.c.0.s8 %v251
    %v253 = vlaneseq
    %v254 = vshrl.u32 %v253, 7
    %v255 = vsub.s32 %v252, %v254
    %v256 = vrot.slane %v239, %v255
    %v258 = vunpack.c.l.s4 1414812756
    %v259 = vunpack.c.0.s8 %v258
    %v260 = vlaneseq
    %v261 = vshrl.u32 %v260, 7
    %v262 = vsub.s32 %v259, %v261
    %v263 = vrot.slane %v239, %v262
    %v265 = vunpack.c.l.s4 1987475062
    %v266 = vunpack.c.0.s8 %v265
    %v267 = vlaneseq
    %v268 = vshrl.u32 %v267, 7
    %v269 = vsub.s32 %v266, %v268
    %v270 = vrot.slane %v239, %v269
    %v272 = vunpack.c.l.s4 269488144
    %v273 = vunpack.c.0.s8 %v272
    %v274 = vlaneseq
    %v275 = vshrl.u32 %v274, 7
    %v276 = vsub.s32 %v273, %v275
    %v277 = vrot.slane %v240, %v276
    %v279 = vunpack.c.l.s4 842150450
    %v280 = vunpack.c.0.s8 %v279
    %v281 = vlaneseq
    %v282 = vshrl.u32 %v281, 7
    %v283 = vsub.s32 %v280, %v282
    %v284 = vrot.slane %v240, %v283
    %v286 = vunpack.c.l.s4 1414812756
    %v287 = vunpack.c.0.s8 %v286
    %v288 = vlaneseq
    %v289 = vshrl.u32 %v288, 7
    %v290 = vsub.s32 %v287, %v289
    %v291 = vrot.slane %v240, %v290
    %v293 = vunpack.c.l.s4 1987475062
    %v294 = vunpack.c.0.s8 %v293
    %v295 = vlaneseq
    %v296 = vshrl.u32 %v295, 7
    %v297 = vsub.s32 %v294, %v296
    %v298 = vrot.slane %v240, %v297
    %v307 = vsub.f32 %v182, %v249
    %v308 = vsub.f32 %v183, %v256
    %v309 = vsub.f32 %v184, %v263
    %v310 = vsub.f32 %v185, %v270
    %v311 = vsub.f32 %v186, %v277
    %v312 = vsub.f32 %v187, %v284
    %v313 = vsub.f32 %v188, %v291
    %v314 = vsub.f32 %v189, %v298
    %v315 = vmul.f32 %v307, %v307
    %v316 = vmul.f32 %v308, %v308
    %v317 = vmul.f32 %v309, %v309
    %v318 = vmul.f32 %v310, %v310
    %v319 = vmul.f32 %v311, %v311
    %v320 = vmul.f32 %v312, %v312
    %v321 = vmul.f32 %v313, %v313
    %v322 = vmul.f32 %v314, %v314
    %v331 = vcombine.low %v315, %v316
    %v332 = vcombine.low %v317, %v318
    %v334 = vunpack.c.l.s4 1983009808
    %v335 = vunpack.c.0.s8 %v334
    %v336 = vlaneseq
    %v337 = vshrl.u32 %v336, 7
    %v338 = vsub.s32 %v335, %v337
    %v339 = vrot.slane %v331, %v338
    %v341 = vunpack.c.l.s4 1983009808
    %v342 = vunpack.c.0.s8 %v341
    %v343 = vlaneseq
    %v344 = vshrl.u32 %v343, 7
    %v345 = vsub.s32 %v342, %v344
    %v346 = vrot.slane %v332, %v345
    %v347 = vcombine.low %v339, %v346
    %v348 = vcombine.low %v319, %v320
    %v349 = vcombine.low %v321, %v322
    %v351 = vunpack.c.l.s4 1983009808
    %v352 = vunpack.c.0.s8 %v351
    %v353 = vlaneseq
    %v354 = vshrl.u32 %v353, 7
    %v355 = vsub.s32 %v352, %v354
    %v356 = vrot.slane %v348, %v355
    %v358 = vunpack.c.l.s4 1983009808
    %v359 = vunpack.c.0.s8 %v358
    %v360 = vlaneseq
    %v361 = vshrl.u32 %v360, 7
    %v362 = vsub.s32 %v359, %v361
    %v363 = vrot.slane %v349, %v362
    %v364 = vcombine.low %v356, %v363
    %367 = vadd.xlane.f32.xlu0 %v347
    %v368 = vpop.xlane.xlu0 %367
    %369 = vadd.xlane.f32.xlu0 %v364
    %v370 = vpop.xlane.xlu0 %369
    %v371 = vmul.f32 %v368, %v238
    %v372 = vmul.f32 %v370, %v238
    %v373 = vadd.f32 %v371, 1e-05
    %v374 = vadd.f32 %v372, 1e-05
    %v375 = vrsqrt.pop %v373
    %v376 = vrsqrt.pop %v374
    %v380 = vunpack.c.l.s4 269488144
    %v381 = vunpack.c.0.s8 %v380
    %v382 = vlaneseq
    %v383 = vshrl.u32 %v382, 7
    %v384 = vsub.s32 %v381, %v383
    %v385 = vrot.slane %v375, %v384
    %v387 = vunpack.c.l.s4 842150450
    %v388 = vunpack.c.0.s8 %v387
    %v389 = vlaneseq
    %v390 = vshrl.u32 %v389, 7
    %v391 = vsub.s32 %v388, %v390
    %v392 = vrot.slane %v375, %v391
    %v394 = vunpack.c.l.s4 1414812756
    %v395 = vunpack.c.0.s8 %v394
    %v396 = vlaneseq
    %v397 = vshrl.u32 %v396, 7
    %v398 = vsub.s32 %v395, %v397
    %v399 = vrot.slane %v375, %v398
    %v401 = vunpack.c.l.s4 1987475062
    %v402 = vunpack.c.0.s8 %v401
    %v403 = vlaneseq
    %v404 = vshrl.u32 %v403, 7
    %v405 = vsub.s32 %v402, %v404
    %v406 = vrot.slane %v375, %v405
    %v408 = vunpack.c.l.s4 269488144
    %v409 = vunpack.c.0.s8 %v408
    %v410 = vlaneseq
    %v411 = vshrl.u32 %v410, 7
    %v412 = vsub.s32 %v409, %v411
    %v413 = vrot.slane %v376, %v412
    %v415 = vunpack.c.l.s4 842150450
    %v416 = vunpack.c.0.s8 %v415
    %v417 = vlaneseq
    %v418 = vshrl.u32 %v417, 7
    %v419 = vsub.s32 %v416, %v418
    %v420 = vrot.slane %v376, %v419
    %v422 = vunpack.c.l.s4 1414812756
    %v423 = vunpack.c.0.s8 %v422
    %v424 = vlaneseq
    %v425 = vshrl.u32 %v424, 7
    %v426 = vsub.s32 %v423, %v425
    %v427 = vrot.slane %v376, %v426
    %v429 = vunpack.c.l.s4 1987475062
    %v430 = vunpack.c.0.s8 %v429
    %v431 = vlaneseq
    %v432 = vshrl.u32 %v431, 7
    %v433 = vsub.s32 %v430, %v432
    %v434 = vrot.slane %v376, %v433
    %v443 = vmul.f32 %v307, %v385
    %v444 = vmul.f32 %v308, %v392
    %v445 = vmul.f32 %v309, %v399
    %v446 = vmul.f32 %v310, %v406
    %v447 = vmul.f32 %v311, %v413
    %v448 = vmul.f32 %v312, %v420
    %v449 = vmul.f32 %v313, %v427
    %v450 = vmul.f32 %v314, %v434
    %v451 = vld [vmem:[#allocation5] sm:$0x1]
    %v453 = vlaneseq
    %v454 = vshrl.u32 %v453, 7
    %v455 = vsub.s32 0, %v454
    %v456 = vrot.slane %v451, %v455
    %v457 = vcombine.high %v456, %v456
    %v459 = vunpack.c.l.s4 1983009808
    %v460 = vunpack.c.0.s8 %v459
    %v461 = vlaneseq
    %v462 = vshrl.u32 %v461, 7
    %v463 = vsub.s32 %v460, %v462
    %v464 = vrot.slane %v456, %v463
    %v466 = vunpack.c.l.s4 1983009808
    %v467 = vunpack.c.0.s8 %v466
    %v468 = vlaneseq
    %v469 = vshrl.u32 %v468, 7
    %v470 = vsub.s32 %v467, %v469
    %v471 = vrot.slane %v457, %v470
    %v472 = vcombine.high %v464, %v464
    %v473 = vcombine.high %v471, %v471
    %v478 = vmul.f32 %v443, %v464
    %v479 = vmul.f32 %v444, %v472
    %v480 = vmul.f32 %v445, %v471
    %v481 = vmul.f32 %v446, %v473
    %v482 = vmul.f32 %v447, %v464
    %v483 = vmul.f32 %v448, %v472
    %v484 = vmul.f32 %v449, %v471
    %v485 = vmul.f32 %v450, %v473
    %v486 = vld [vmem:[#allocation7] sm:$0x1]
    %v488 = vlaneseq
    %v489 = vshrl.u32 %v488, 7
    %v490 = vsub.s32 0, %v489
    %v491 = vrot.slane %v486, %v490
    %v492 = vcombine.high %v491, %v491
    %v494 = vunpack.c.l.s4 1983009808
    %v495 = vunpack.c.0.s8 %v494
    %v496 = vlaneseq
    %v497 = vshrl.u32 %v496, 7
    %v498 = vsub.s32 %v495, %v497
    %v499 = vrot.slane %v491, %v498
    %v501 = vunpack.c.l.s4 1983009808
    %v502 = vunpack.c.0.s8 %v501
    %v503 = vlaneseq
    %v504 = vshrl.u32 %v503, 7
    %v505 = vsub.s32 %v502, %v504
    %v506 = vrot.slane %v492, %v505
    %v507 = vcombine.high %v499, %v499
    %v508 = vcombine.high %v506, %v506
    %v513 = vadd.f32 %v478, %v499
    %v514 = vadd.f32 %v479, %v507
    %v515 = vadd.f32 %v480, %v506
    %v516 = vadd.f32 %v481, %v508
    %v517 = vadd.f32 %v482, %v499
    %v518 = vadd.f32 %v483, %v507
    %v519 = vadd.f32 %v484, %v506
    %v520 = vadd.f32 %v485, %v508
    %v529 = vcombine.low %v513, %v514
    %v530 = vcombine.low %v515, %v516
    %v532 = vunpack.c.l.s4 1983009808
    %v533 = vunpack.c.0.s8 %v532
    %v534 = vlaneseq
    %v535 = vshrl.u32 %v534, 7
    %v536 = vsub.s32 %v533, %v535
    %v537 = vrot.slane %v529, %v536
    %v539 = vunpack.c.l.s4 1983009808
    %v540 = vunpack.c.0.s8 %v539
    %v541 = vlaneseq
    %v542 = vshrl.u32 %v541, 7
    %v543 = vsub.s32 %v540, %v542
    %v544 = vrot.slane %v530, %v543
    %v545 = vcombine.low %v537, %v544
    %v546 = vcombine.low %v517, %v518
    %v547 = vcombine.low %v519, %v520
    %v549 = vunpack.c.l.s4 1983009808
    %v550 = vunpack.c.0.s8 %v549
    %v551 = vlaneseq
    %v552 = vshrl.u32 %v551, 7
    %v553 = vsub.s32 %v550, %v552
    %v554 = vrot.slane %v546, %v553
    %v556 = vunpack.c.l.s4 1983009808
    %v557 = vunpack.c.0.s8 %v556
    %v558 = vlaneseq
    %v559 = vshrl.u32 %v558, 7
    %v560 = vsub.s32 %v557, %v559
    %v561 = vrot.slane %v547, %v560
    %v562 = vcombine.low %v554, %v561
    %v565 = vpack.c.bf16 %v562, %v545
    %v566 = vld [vmem:[#allocation8] sm:$0xff]
    %v567 = vld [vmem:[#allocation8 + $0x8] sm:$0xf]
    %v568 = vld [vmem:[#allocation8 + $0xc] sm:$0xff]
    %v569 = vld [vmem:[#allocation8 + $0x14] sm:$0xf]
    %v570 = vld [vmem:[#allocation8 + $0x18] sm:$0xff]
    %v571 = vld [vmem:[#allocation8 + $0x20] sm:$0xf]
    %v572 = vld [vmem:[#allocation8 + $0x24] sm:$0xff]
    %v573 = vld [vmem:[#allocation8 + $0x2c] sm:$0xf]
    %v574 = vld [vmem:[#allocation8 + $0x30] sm:$0xff]
    %v575 = vld [vmem:[#allocation8 + $0x38] sm:$0xf]
    %v576 = vld [vmem:[#allocation8 + $0x3c] sm:$0xff]
    %v577 = vld [vmem:[#allocation8 + $0x44] sm:$0xf]
    %v578 = vld [vmem:[#allocation8 + $0x48] sm:$0xff]
    %v579 = vld [vmem:[#allocation8 + $0x50] sm:$0xf]
    %v580 = vld [vmem:[#allocation8 + $0x54] sm:$0xff]
    %v581 = vld [vmem:[#allocation8 + $0x5c] sm:$0xf]
    %v582 = vld [vmem:[#allocation8 + $0x60] sm:$0xff]
    %v583 = vld [vmem:[#allocation8 + $0x68] sm:$0xf]
    %v584 = vld [vmem:[#allocation8 + $0x6c] sm:$0xff]
    %v585 = vld [vmem:[#allocation8 + $0x74] sm:$0xf]
    %v586 = vld [vmem:[#allocation8 + $0x78] sm:$0xff]
    %v587 = vld [vmem:[#allocation8 + $0x80] sm:$0xf]
    %v588 = vld [vmem:[#allocation8 + $0x84] sm:$0xff]
    %v589 = vld [vmem:[#allocation8 + $0x8c] sm:$0xf]
    %v590 = vld [vmem:[#allocation8 + $0x90] sm:$0xff]
    %v591 = vld [vmem:[#allocation8 + $0x98] sm:$0xf]
    %v592 = vld [vmem:[#allocation8 + $0x9c] sm:$0xff]
    %v593 = vld [vmem:[#allocation8 + $0xa4] sm:$0xf]
    %v594 = vld [vmem:[#allocation8 + $0xa8] sm:$0xff]
    %v595 = vld [vmem:[#allocation8 + $0xb0] sm:$0xf]
    %v596 = vld [vmem:[#allocation8 + $0xb4] sm:$0xff]
    %v597 = vld [vmem:[#allocation8 + $0xbc] sm:$0xf]
    %v598 = vld [vmem:[%s4] sm:$0x7]
    %v600 = vlaneseq
    %v601 = vshrl.u32 %v600, 7
    %v602 = vsub.s32 0, %v601
    %v603 = vrot.slane %v598, %v602
    %v604 = vlaneseq
    %v605 = vshrl.u32 %v604, 7
    %v606 = vsub.s32 1, %v605
    %v607 = vrot.slane %v598, %v606
    %v608 = vlaneseq
    %v609 = vshrl.u32 %v608, 7
    %v610 = vsub.s32 2, %v609
    %v611 = vrot.slane %v598, %v610
    %v647 = vunpack.c.l.b16 %v566
    %v648 = vunpack.c.h.b16 %v566
    %v649 = vunpack.c.l.b16 %v567
    %v650 = vunpack.c.l.b16 %v568
    %v651 = vunpack.c.h.b16 %v568
    %v652 = vunpack.c.l.b16 %v569
    %v653 = vunpack.c.l.b16 %v570
    %v654 = vunpack.c.h.b16 %v570
    %v655 = vunpack.c.l.b16 %v571
    %v656 = vunpack.c.l.b16 %v572
    %v657 = vunpack.c.h.b16 %v572
    %v658 = vunpack.c.l.b16 %v573
    %v659 = vunpack.c.l.b16 %v574
    %v660 = vunpack.c.h.b16 %v574
    %v661 = vunpack.c.l.b16 %v575
    %v662 = vunpack.c.l.b16 %v576
    %v663 = vunpack.c.h.b16 %v576
    %v664 = vunpack.c.l.b16 %v577
    %v665 = vunpack.c.l.b16 %v578
    %v666 = vunpack.c.h.b16 %v578
    %v667 = vunpack.c.l.b16 %v579
    %v668 = vunpack.c.l.b16 %v580
    %v669 = vunpack.c.h.b16 %v580
    %v670 = vunpack.c.l.b16 %v581
    %v671 = vunpack.c.l.b16 %v582
    %v672 = vunpack.c.h.b16 %v582
    %v673 = vunpack.c.l.b16 %v583
    %v674 = vunpack.c.l.b16 %v584
    %v675 = vunpack.c.h.b16 %v584
    %v676 = vunpack.c.l.b16 %v585
    %v677 = vunpack.c.l.b16 %v586
    %v678 = vunpack.c.h.b16 %v586
    %v679 = vunpack.c.l.b16 %v587
    %v680 = vunpack.c.l.b16 %v588
    %v681 = vunpack.c.h.b16 %v588
    %v682 = vunpack.c.l.b16 %v589
    %v683 = vunpack.c.l.b16 %v590
    %v684 = vunpack.c.h.b16 %v590
    %v685 = vunpack.c.l.b16 %v591
    %v686 = vunpack.c.l.b16 %v592
    %v687 = vunpack.c.h.b16 %v592
    %v688 = vunpack.c.l.b16 %v593
    %v689 = vunpack.c.l.b16 %v594
    %v690 = vunpack.c.h.b16 %v594
    %v691 = vunpack.c.l.b16 %v595
    %v692 = vunpack.c.l.b16 %v596
    %v693 = vunpack.c.h.b16 %v596
    %v694 = vunpack.c.l.b16 %v597
    %v695 = vpack.c.b16 %v650, %v647
    %v696 = vpack.c.b16 %v651, %v648
    %v697 = vpack.c.b16 %v652, %v649
    %v698 = vpack.c.b16 %v656, %v653
    %v699 = vpack.c.b16 %v657, %v654
    %v700 = vpack.c.b16 %v658, %v655
    %v701 = vpack.c.b16 %v662, %v659
    %v702 = vpack.c.b16 %v663, %v660
    %v703 = vpack.c.b16 %v664, %v661
    %v704 = vpack.c.b16 %v668, %v665
    %v705 = vpack.c.b16 %v669, %v666
    %v706 = vpack.c.b16 %v670, %v667
    %v707 = vpack.c.b16 %v674, %v671
    %v708 = vpack.c.b16 %v675, %v672
    %v709 = vpack.c.b16 %v676, %v673
    %v710 = vpack.c.b16 %v680, %v677
    %v711 = vpack.c.b16 %v681, %v678
    %v712 = vpack.c.b16 %v682, %v679
    %v713 = vpack.c.b16 %v686, %v683
    %v714 = vpack.c.b16 %v687, %v684
    %v715 = vpack.c.b16 %v688, %v685
    %v716 = vpack.c.b16 %v692, %v689
    %v717 = vpack.c.b16 %v693, %v690
    %v718 = vpack.c.b16 %v694, %v691
    %743 = vmatprep.subr.bf16.mxu0 %v717
    %744 = vmatpush1.bf16.msra.mxu0 %v716
    %745 = vmatprep.subr.bf16.mxu0 %v714
    %746 = vmatpush1.bf16.msra.mxu0 %v713
    %747 = vmatprep.subr.bf16.mxu0 %v711
    %748 = vmatpush1.bf16.msra.mxu0 %v710
    %749 = vmatprep.subr.bf16.mxu0 %v708
    %750 = vmatpush1.bf16.msra.mxu0 %v707
    %751 = vmatprep.subr.bf16.mxu0 %v705
    %752 = vmatpush1.bf16.msra.mxu0 %v704
    %753 = vmatprep.subr.bf16.mxu0 %v702
    %754 = vmatpush1.bf16.msra.mxu0 %v701
    %755 = vmatprep.subr.bf16.mxu0 %v699
    %756 = vmatpush1.bf16.msra.mxu0 %v698
    %757 = vmatprep.subr.bf16.mxu0 %v696
    %758 = vmatpush1.bf16.msra.mxu0 %v695
    %759 = vmatprep.subr.bf16.mxu0 0
    %760 = vmatpush2.bf16.msra.mxu0 0
    %761 = vmatprep.subr.bf16.mxu0 0
    %762 = vmatpush2.bf16.msra.mxu0 0
    %763 = vmatprep.subr.bf16.mxu0 0
    %764 = vmatpush2.bf16.msra.mxu0 0
    %765 = vmatprep.subr.bf16.mxu0 0
    %766 = vmatpush2.bf16.msra.mxu0 0
    %767 = vmatprep.subr.bf16.mxu0 0
    %768 = vmatpush2.bf16.msra.mxu0 0
    %769 = vmatprep.subr.bf16.mxu0 0
    %770 = vmatpush2.bf16.msra.mxu0 0
    %771 = vmatprep.subr.bf16.mxu0 0
    %772 = vmatpush2.bf16.msra.mxu0 0
    %773 = vmatprep.subr.bf16.mxu0 0
    %774 = vmatpush2.bf16.msra.mxu0 0
    %775 = vmatprep.mubr.bf16.mxu0 0
    %776 = vmatmul.mubr.bf16.gmra.mxu0 %v565
    %v777 = vpop.f32.mrf.mxu0
    %v778 = vadd.f32 %v603, %v777
    %v779 = vpop.f32.mrf.mxu0
    %v780 = vadd.f32 %v607, %v779
    %v781 = vpop.f32.mrf.mxu0
    %v782 = vadd.f32 %v603, %v781
    %v783 = vpop.f32.mrf.mxu0
    %v784 = vadd.f32 %v607, %v783
    %785 = vdwg.mxu0
    %786 = vmatprep.subr.bf16.mxu0 0
    %787 = vmatpush1.bf16.msra.mxu0 %v718
    %788 = vmatprep.subr.bf16.mxu0 0
    %789 = vmatpush1.bf16.msra.mxu0 %v715
    %790 = vmatprep.subr.bf16.mxu0 0
    %791 = vmatpush1.bf16.msra.mxu0 %v712
    %792 = vmatprep.subr.bf16.mxu0 0
    %793 = vmatpush1.bf16.msra.mxu0 %v709
    %794 = vmatprep.subr.bf16.mxu0 0
    %795 = vmatpush1.bf16.msra.mxu0 %v706
    %796 = vmatprep.subr.bf16.mxu0 0
    %797 = vmatpush1.bf16.msra.mxu0 %v703
    %798 = vmatprep.subr.bf16.mxu0 0
    %799 = vmatpush1.bf16.msra.mxu0 %v700
    %800 = vmatprep.subr.bf16.mxu0 0
    %801 = vmatpush1.bf16.msra.mxu0 %v697
    %802 = vmatprep.subr.bf16.mxu0 0
    %803 = vmatpush2.bf16.msra.mxu0 0
    %804 = vmatprep.subr.bf16.mxu0 0
    %805 = vmatpush2.bf16.msra.mxu0 0
    %806 = vmatprep.subr.bf16.mxu0 0
    %807 = vmatpush2.bf16.msra.mxu0 0
    %808 = vmatprep.subr.bf16.mxu0 0
    %809 = vmatpush2.bf16.msra.mxu0 0
    %810 = vmatprep.subr.bf16.mxu0 0
    %811 = vmatpush2.bf16.msra.mxu0 0
    %812 = vmatprep.subr.bf16.mxu0 0
    %813 = vmatpush2.bf16.msra.mxu0 0
    %814 = vmatprep.subr.bf16.mxu0 0
    %815 = vmatpush2.bf16.msra.mxu0 0
    %816 = vmatprep.subr.bf16.mxu0 0
    %817 = vmatpush2.bf16.msra.mxu0 0
    %818 = vmatprep.mubr.bf16.mxu0 0
    %819 = vmatmul.mubr.bf16.gmra.mxu0 %v565
    %v820 = vpop.f32.mrf.mxu0
    %v821 = vadd.f32 %v611, %v820
    %v822 = vpop.f32.mrf.mxu0
    %v823 = vpop.f32.mrf.mxu0
    %v824 = vadd.f32 %v611, %v823
    %v825 = vpop.f32.mrf.mxu0
    %826 = vdwg.mxu0
    %v827 = vmul.f32 %v778, 0.17677669
    %v828 = vmul.f32 %v782, 0.17677669
    %831 = vrot.lane.b32.xlu0 %v827, 96
    %v832 = vpop.permute.xlu0 %831
    %833 = vrot.lane.b32.xlu0 %v828, 96
    %v834 = vpop.permute.xlu0 %833
    %837 = vrot.lane.b32.xlu0 %v827, 64
    %v838 = vpop.permute.xlu0 %837
    %839 = vrot.lane.b32.xlu0 %v828, 64
    %v840 = vpop.permute.xlu0 %839
    %843 = vrot.lane.b32.xlu0 %v827, 32
    %v844 = vpop.permute.xlu0 %843
    %845 = vrot.lane.b32.xlu0 %v828, 32
    %v846 = vpop.permute.xlu0 %845
    %v849 = vcombine.low %v827, %v838
    %v850 = vcombine.high %v827, %v838
    %v852 = vunpack.c.l.s4 1983009808
    %v853 = vunpack.c.0.s8 %v852
    %v854 = vlaneseq
    %v855 = vshrl.u32 %v854, 7
    %v856 = vsub.s32 %v853, %v855
    %v857 = vrot.slane %v849, %v856
    %v859 = vunpack.c.l.s4 1983009808
    %v860 = vunpack.c.0.s8 %v859
    %v861 = vlaneseq
    %v862 = vshrl.u32 %v861, 7
    %v863 = vsub.s32 %v860, %v862
    %v864 = vrot.slane %v850, %v863
    %v865 = vcombine.low %v832, %v844
    %v866 = vcombine.high %v832, %v844
    %v868 = vunpack.c.l.s4 1983009808
    %v869 = vunpack.c.0.s8 %v868
    %v870 = vlaneseq
    %v871 = vshrl.u32 %v870, 7
    %v872 = vsub.s32 %v869, %v871
    %v873 = vrot.slane %v865, %v872
    %v875 = vunpack.c.l.s4 1983009808
    %v876 = vunpack.c.0.s8 %v875
    %v877 = vlaneseq
    %v878 = vshrl.u32 %v877, 7
    %v879 = vsub.s32 %v876, %v878
    %v880 = vrot.slane %v866, %v879
    %v881 = vcombine.low %v857, %v873
    %v882 = vcombine.high %v857, %v873
    %v884 = vunpack.c.l.s4 1934713408
    %v885 = vunpack.c.0.s8 %v884
    %v886 = vlaneseq
    %v887 = vshrl.u32 %v886, 7
    %v888 = vsub.s32 %v885, %v887
    %v889 = vrot.slane %v881, %v888
    %v891 = vunpack.c.l.s4 1934713408
    %v892 = vunpack.c.0.s8 %v891
    %v893 = vlaneseq
    %v894 = vshrl.u32 %v893, 7
    %v895 = vsub.s32 %v892, %v894
    %v896 = vrot.slane %v882, %v895
    %v897 = vcombine.low %v864, %v880
    %v898 = vcombine.high %v864, %v880
    %v900 = vunpack.c.l.s4 1934713408
    %v901 = vunpack.c.0.s8 %v900
    %v902 = vlaneseq
    %v903 = vshrl.u32 %v902, 7
    %v904 = vsub.s32 %v901, %v903
    %v905 = vrot.slane %v897, %v904
    %v907 = vunpack.c.l.s4 1934713408
    %v908 = vunpack.c.0.s8 %v907
    %v909 = vlaneseq
    %v910 = vshrl.u32 %v909, 7
    %v911 = vsub.s32 %v908, %v910
    %v912 = vrot.slane %v898, %v911
    %v913 = vcombine.high %v889, 0.0
    %v914 = vcombine.high %v896, 0.0
    %v915 = vcombine.high %v905, 0.0
    %v916 = vcombine.high %v912, 0.0
    %v917 = vcombine.low %v828, %v840
    %v918 = vcombine.high %v828, %v840
    %v920 = vunpack.c.l.s4 1983009808
    %v921 = vunpack.c.0.s8 %v920
    %v922 = vlaneseq
    %v923 = vshrl.u32 %v922, 7
    %v924 = vsub.s32 %v921, %v923
    %v925 = vrot.slane %v917, %v924
    %v927 = vunpack.c.l.s4 1983009808
    %v928 = vunpack.c.0.s8 %v927
    %v929 = vlaneseq
    %v930 = vshrl.u32 %v929, 7
    %v931 = vsub.s32 %v928, %v930
    %v932 = vrot.slane %v918, %v931
    %v933 = vcombine.low %v834, %v846
    %v934 = vcombine.high %v834, %v846
    %v936 = vunpack.c.l.s4 1983009808
    %v937 = vunpack.c.0.s8 %v936
    %v938 = vlaneseq
    %v939 = vshrl.u32 %v938, 7
    %v940 = vsub.s32 %v937, %v939
    %v941 = vrot.slane %v933, %v940
    %v943 = vunpack.c.l.s4 1983009808
    %v944 = vunpack.c.0.s8 %v943
    %v945 = vlaneseq
    %v946 = vshrl.u32 %v945, 7
    %v947 = vsub.s32 %v944, %v946
    %v948 = vrot.slane %v934, %v947
    %v949 = vcombine.low %v925, %v941
    %v950 = vcombine.high %v925, %v941
    %v952 = vunpack.c.l.s4 1934713408
    %v953 = vunpack.c.0.s8 %v952
    %v954 = vlaneseq
    %v955 = vshrl.u32 %v954, 7
    %v956 = vsub.s32 %v953, %v955
    %v957 = vrot.slane %v949, %v956
    %v959 = vunpack.c.l.s4 1934713408
    %v960 = vunpack.c.0.s8 %v959
    %v961 = vlaneseq
    %v962 = vshrl.u32 %v961, 7
    %v963 = vsub.s32 %v960, %v962
    %v964 = vrot.slane %v950, %v963
    %v965 = vcombine.low %v932, %v948
    %v966 = vcombine.high %v932, %v948
    %v968 = vunpack.c.l.s4 1934713408
    %v969 = vunpack.c.0.s8 %v968
    %v970 = vlaneseq
    %v971 = vshrl.u32 %v970, 7
    %v972 = vsub.s32 %v969, %v971
    %v973 = vrot.slane %v965, %v972
    %v975 = vunpack.c.l.s4 1934713408
    %v976 = vunpack.c.0.s8 %v975
    %v977 = vlaneseq
    %v978 = vshrl.u32 %v977, 7
    %v979 = vsub.s32 %v976, %v978
    %v980 = vrot.slane %v966, %v979
    %v981 = vcombine.high %v957, 0.0
    %v982 = vcombine.high %v964, 0.0
    %v983 = vcombine.high %v973, 0.0
    %v984 = vcombine.high %v980, 0.0
    %v985 = vcombine.low %v889, %v905
    %v987 = vunpack.c.l.s4 1983009808
    %v988 = vunpack.c.0.s8 %v987
    %v989 = vlaneseq
    %v990 = vshrl.u32 %v989, 7
    %v991 = vsub.s32 %v988, %v990
    %v992 = vrot.slane %v985, %v991
    %v993 = vcombine.low %v896, %v912
    %v995 = vunpack.c.l.s4 1983009808
    %v996 = vunpack.c.0.s8 %v995
    %v997 = vlaneseq
    %v998 = vshrl.u32 %v997, 7
    %v999 = vsub.s32 %v996, %v998
    %v1000 = vrot.slane %v993, %v999
    %v1001 = vcombine.low %v957, %v973
    %v1003 = vunpack.c.l.s4 1983009808
    %v1004 = vunpack.c.0.s8 %v1003
    %v1005 = vlaneseq
    %v1006 = vshrl.u32 %v1005, 7
    %v1007 = vsub.s32 %v1004, %v1006
    %v1008 = vrot.slane %v1001, %v1007
    %v1009 = vcombine.low %v964, %v980
    %v1011 = vunpack.c.l.s4 1983009808
    %v1012 = vunpack.c.0.s8 %v1011
    %v1013 = vlaneseq
    %v1014 = vshrl.u32 %v1013, 7
    %v1015 = vsub.s32 %v1012, %v1014
    %v1016 = vrot.slane %v1009, %v1015
    %v1017 = vcombine.low %v992, %v1000
    %v1018 = vcombine.high %v992, %v1000
    %v1020 = vunpack.c.l.s4 1934713408
    %v1021 = vunpack.c.0.s8 %v1020
    %v1022 = vlaneseq
    %v1023 = vshrl.u32 %v1022, 7
    %v1024 = vsub.s32 %v1021, %v1023
    %v1025 = vrot.slane %v1017, %v1024
    %v1027 = vunpack.c.l.s4 1934713408
    %v1028 = vunpack.c.0.s8 %v1027
    %v1029 = vlaneseq
    %v1030 = vshrl.u32 %v1029, 7
    %v1031 = vsub.s32 %v1028, %v1030
    %v1032 = vrot.slane %v1018, %v1031
    %v1033 = vcombine.low %v1008, %v1016
    %v1034 = vcombine.high %v1008, %v1016
    %v1036 = vunpack.c.l.s4 1934713408
    %v1037 = vunpack.c.0.s8 %v1036
    %v1038 = vlaneseq
    %v1039 = vshrl.u32 %v1038, 7
    %v1040 = vsub.s32 %v1037, %v1039
    %v1041 = vrot.slane %v1033, %v1040
    %v1043 = vunpack.c.l.s4 1934713408
    %v1044 = vunpack.c.0.s8 %v1043
    %v1045 = vlaneseq
    %v1046 = vshrl.u32 %v1045, 7
    %v1047 = vsub.s32 %v1044, %v1046
    %v1048 = vrot.slane %v1034, %v1047
    %v1049 = vcombine.low %v1025, %v1041
    %v1050 = vcombine.high %v1025, %v1041
    %v1051 = vcombine.low %v1032, %v1048
    %v1052 = vcombine.high %v1032, %v1048
    %v1053 = vcombine.low %v913, %v915
    %v1055 = vunpack.c.l.s4 1983009808
    %v1056 = vunpack.c.0.s8 %v1055
    %v1057 = vlaneseq
    %v1058 = vshrl.u32 %v1057, 7
    %v1059 = vsub.s32 %v1056, %v1058
    %v1060 = vrot.slane %v1053, %v1059
    %v1061 = vcombine.low %v914, %v916
    %v1063 = vunpack.c.l.s4 1983009808
    %v1064 = vunpack.c.0.s8 %v1063
    %v1065 = vlaneseq
    %v1066 = vshrl.u32 %v1065, 7
    %v1067 = vsub.s32 %v1064, %v1066
    %v1068 = vrot.slane %v1061, %v1067
    %v1069 = vcombine.low %v981, %v983
    %v1071 = vunpack.c.l.s4 1983009808
    %v1072 = vunpack.c.0.s8 %v1071
    %v1073 = vlaneseq
    %v1074 = vshrl.u32 %v1073, 7
    %v1075 = vsub.s32 %v1072, %v1074
    %v1076 = vrot.slane %v1069, %v1075
    %v1077 = vcombine.low %v982, %v984
    %v1079 = vunpack.c.l.s4 1983009808
    %v1080 = vunpack.c.0.s8 %v1079
    %v1081 = vlaneseq
    %v1082 = vshrl.u32 %v1081, 7
    %v1083 = vsub.s32 %v1080, %v1082
    %v1084 = vrot.slane %v1077, %v1083
    %v1085 = vcombine.low %v1060, %v1068
    %v1086 = vcombine.high %v1060, %v1068
    %v1088 = vunpack.c.l.s4 1934713408
    %v1089 = vunpack.c.0.s8 %v1088
    %v1090 = vlaneseq
    %v1091 = vshrl.u32 %v1090, 7
    %v1092 = vsub.s32 %v1089, %v1091
    %v1093 = vrot.slane %v1085, %v1092
    %v1095 = vunpack.c.l.s4 1934713408
    %v1096 = vunpack.c.0.s8 %v1095
    %v1097 = vlaneseq
    %v1098 = vshrl.u32 %v1097, 7
    %v1099 = vsub.s32 %v1096, %v1098
    %v1100 = vrot.slane %v1086, %v1099
    %v1101 = vcombine.low %v1076, %v1084
    %v1102 = vcombine.high %v1076, %v1084
    %v1104 = vunpack.c.l.s4 1934713408
    %v1105 = vunpack.c.0.s8 %v1104
    %v1106 = vlaneseq
    %v1107 = vshrl.u32 %v1106, 7
    %v1108 = vsub.s32 %v1105, %v1107
    %v1109 = vrot.slane %v1101, %v1108
    %v1111 = vunpack.c.l.s4 1934713408
    %v1112 = vunpack.c.0.s8 %v1111
    %v1113 = vlaneseq
    %v1114 = vshrl.u32 %v1113, 7
    %v1115 = vsub.s32 %v1112, %v1114
    %v1116 = vrot.slane %v1102, %v1115
    %v1117 = vcombine.low %v1093, %v1109
    %v1118 = vcombine.high %v1093, %v1109
    %v1119 = vcombine.low %v1100, %v1116
    %v1120 = vcombine.high %v1100, %v1116
    %v1121 = vpack.c.bf16 %v1049, %v1049
    %v1122 = vpack.c.bf16 %v1050, %v1050
    %v1123 = vpack.c.bf16 %v1051, %v1051
    %v1124 = vpack.c.bf16 %v1052, %v1052
    %v1125 = vpack.c.bf16 %v1117, %v1117
    %v1126 = vpack.c.bf16 %v1118, %v1118
    %v1127 = vpack.c.bf16 %v1119, %v1119
    %v1128 = vpack.c.bf16 %v1120, %v1120
    %1131 = vrot.lane.b32.xlu0 %v780, 96
    %v1132 = vpop.permute.xlu0 %1131
    %1133 = vrot.lane.b32.xlu0 %v784, 96
    %v1134 = vpop.permute.xlu0 %1133
    %1137 = vrot.lane.b32.xlu0 %v780, 64
    %v1138 = vpop.permute.xlu0 %1137
    %1139 = vrot.lane.b32.xlu0 %v784, 64
    %v1140 = vpop.permute.xlu0 %1139
    %1143 = vrot.lane.b32.xlu0 %v780, 32
    %v1144 = vpop.permute.xlu0 %1143
    %1145 = vrot.lane.b32.xlu0 %v784, 32
    %v1146 = vpop.permute.xlu0 %1145
    %v1149 = vcombine.low %v780, %v1138
    %v1150 = vcombine.high %v780, %v1138
    %v1152 = vunpack.c.l.s4 1983009808
    %v1153 = vunpack.c.0.s8 %v1152
    %v1154 = vlaneseq
    %v1155 = vshrl.u32 %v1154, 7
    %v1156 = vsub.s32 %v1153, %v1155
    %v1157 = vrot.slane %v1149, %v1156
    %v1159 = vunpack.c.l.s4 1983009808
    %v1160 = vunpack.c.0.s8 %v1159
    %v1161 = vlaneseq
    %v1162 = vshrl.u32 %v1161, 7
    %v1163 = vsub.s32 %v1160, %v1162
    %v1164 = vrot.slane %v1150, %v1163
    %v1165 = vcombine.low %v1132, %v1144
    %v1166 = vcombine.high %v1132, %v1144
    %v1168 = vunpack.c.l.s4 1983009808
    %v1169 = vunpack.c.0.s8 %v1168
    %v1170 = vlaneseq
    %v1171 = vshrl.u32 %v1170, 7
    %v1172 = vsub.s32 %v1169, %v1171
    %v1173 = vrot.slane %v1165, %v1172
    %v1175 = vunpack.c.l.s4 1983009808
    %v1176 = vunpack.c.0.s8 %v1175
    %v1177 = vlaneseq
    %v1178 = vshrl.u32 %v1177, 7
    %v1179 = vsub.s32 %v1176, %v1178
    %v1180 = vrot.slane %v1166, %v1179
    %v1181 = vcombine.low %v1157, %v1173
    %v1182 = vcombine.high %v1157, %v1173
    %v1184 = vunpack.c.l.s4 1934713408
    %v1185 = vunpack.c.0.s8 %v1184
    %v1186 = vlaneseq
    %v1187 = vshrl.u32 %v1186, 7
    %v1188 = vsub.s32 %v1185, %v1187
    %v1189 = vrot.slane %v1181, %v1188
    %v1191 = vunpack.c.l.s4 1934713408
    %v1192 = vunpack.c.0.s8 %v1191
    %v1193 = vlaneseq
    %v1194 = vshrl.u32 %v1193, 7
    %v1195 = vsub.s32 %v1192, %v1194
    %v1196 = vrot.slane %v1182, %v1195
    %v1197 = vcombine.low %v1164, %v1180
    %v1198 = vcombine.high %v1164, %v1180
    %v1200 = vunpack.c.l.s4 1934713408
    %v1201 = vunpack.c.0.s8 %v1200
    %v1202 = vlaneseq
    %v1203 = vshrl.u32 %v1202, 7
    %v1204 = vsub.s32 %v1201, %v1203
    %v1205 = vrot.slane %v1197, %v1204
    %v1207 = vunpack.c.l.s4 1934713408
    %v1208 = vunpack.c.0.s8 %v1207
    %v1209 = vlaneseq
    %v1210 = vshrl.u32 %v1209, 7
    %v1211 = vsub.s32 %v1208, %v1210
    %v1212 = vrot.slane %v1198, %v1211
    %v1213 = vcombine.high %v1189, 0.0
    %v1214 = vcombine.high %v1196, 0.0
    %v1215 = vcombine.high %v1205, 0.0
    %v1216 = vcombine.high %v1212, 0.0
    %v1217 = vcombine.low %v784, %v1140
    %v1218 = vcombine.high %v784, %v1140
    %v1220 = vunpack.c.l.s4 1983009808
    %v1221 = vunpack.c.0.s8 %v1220
    %v1222 = vlaneseq
    %v1223 = vshrl.u32 %v1222, 7
    %v1224 = vsub.s32 %v1221, %v1223
    %v1225 = vrot.slane %v1217, %v1224
    %v1227 = vunpack.c.l.s4 1983009808
    %v1228 = vunpack.c.0.s8 %v1227
    %v1229 = vlaneseq
    %v1230 = vshrl.u32 %v1229, 7
    %v1231 = vsub.s32 %v1228, %v1230
    %v1232 = vrot.slane %v1218, %v1231
    %v1233 = vcombine.low %v1134, %v1146
    %v1234 = vcombine.high %v1134, %v1146
    %v1236 = vunpack.c.l.s4 1983009808
    %v1237 = vunpack.c.0.s8 %v1236
    %v1238 = vlaneseq
    %v1239 = vshrl.u32 %v1238, 7
    %v1240 = vsub.s32 %v1237, %v1239
    %v1241 = vrot.slane %v1233, %v1240
    %v1243 = vunpack.c.l.s4 1983009808
    %v1244 = vunpack.c.0.s8 %v1243
    %v1245 = vlaneseq
    %v1246 = vshrl.u32 %v1245, 7
    %v1247 = vsub.s32 %v1244, %v1246
    %v1248 = vrot.slane %v1234, %v1247
    %v1249 = vcombine.low %v1225, %v1241
    %v1250 = vcombine.high %v1225, %v1241
    %v1252 = vunpack.c.l.s4 1934713408
    %v1253 = vunpack.c.0.s8 %v1252
    %v1254 = vlaneseq
    %v1255 = vshrl.u32 %v1254, 7
    %v1256 = vsub.s32 %v1253, %v1255
    %v1257 = vrot.slane %v1249, %v1256
    %v1259 = vunpack.c.l.s4 1934713408
    %v1260 = vunpack.c.0.s8 %v1259
    %v1261 = vlaneseq
    %v1262 = vshrl.u32 %v1261, 7
    %v1263 = vsub.s32 %v1260, %v1262
    %v1264 = vrot.slane %v1250, %v1263
    %v1265 = vcombine.low %v1232, %v1248
    %v1266 = vcombine.high %v1232, %v1248
    %v1268 = vunpack.c.l.s4 1934713408
    %v1269 = vunpack.c.0.s8 %v1268
    %v1270 = vlaneseq
    %v1271 = vshrl.u32 %v1270, 7
    %v1272 = vsub.s32 %v1269, %v1271
    %v1273 = vrot.slane %v1265, %v1272
    %v1275 = vunpack.c.l.s4 1934713408
    %v1276 = vunpack.c.0.s8 %v1275
    %v1277 = vlaneseq
    %v1278 = vshrl.u32 %v1277, 7
    %v1279 = vsub.s32 %v1276, %v1278
    %v1280 = vrot.slane %v1266, %v1279
    %v1281 = vcombine.high %v1257, 0.0
    %v1282 = vcombine.high %v1264, 0.0
    %v1283 = vcombine.high %v1273, 0.0
    %v1284 = vcombine.high %v1280, 0.0
    %v1285 = vcombine.low %v1189, %v1205
    %v1287 = vunpack.c.l.s4 1983009808
    %v1288 = vunpack.c.0.s8 %v1287
    %v1289 = vlaneseq
    %v1290 = vshrl.u32 %v1289, 7
    %v1291 = vsub.s32 %v1288, %v1290
    %v1292 = vrot.slane %v1285, %v1291
    %v1293 = vcombine.low %v1196, %v1212
    %v1295 = vunpack.c.l.s4 1983009808
    %v1296 = vunpack.c.0.s8 %v1295
    %v1297 = vlaneseq
    %v1298 = vshrl.u32 %v1297, 7
    %v1299 = vsub.s32 %v1296, %v1298
    %v1300 = vrot.slane %v1293, %v1299
    %v1301 = vcombine.low %v1257, %v1273
    %v1303 = vunpack.c.l.s4 1983009808
    %v1304 = vunpack.c.0.s8 %v1303
    %v1305 = vlaneseq
    %v1306 = vshrl.u32 %v1305, 7
    %v1307 = vsub.s32 %v1304, %v1306
    %v1308 = vrot.slane %v1301, %v1307
    %v1309 = vcombine.low %v1264, %v1280
    %v1311 = vunpack.c.l.s4 1983009808
    %v1312 = vunpack.c.0.s8 %v1311
    %v1313 = vlaneseq
    %v1314 = vshrl.u32 %v1313, 7
    %v1315 = vsub.s32 %v1312, %v1314
    %v1316 = vrot.slane %v1309, %v1315
    %v1317 = vcombine.low %v1292, %v1300
    %v1318 = vcombine.high %v1292, %v1300
    %v1320 = vunpack.c.l.s4 1934713408
    %v1321 = vunpack.c.0.s8 %v1320
    %v1322 = vlaneseq
    %v1323 = vshrl.u32 %v1322, 7
    %v1324 = vsub.s32 %v1321, %v1323
    %v1325 = vrot.slane %v1317, %v1324
    %v1327 = vunpack.c.l.s4 1934713408
    %v1328 = vunpack.c.0.s8 %v1327
    %v1329 = vlaneseq
    %v1330 = vshrl.u32 %v1329, 7
    %v1331 = vsub.s32 %v1328, %v1330
    %v1332 = vrot.slane %v1318, %v1331
    %v1333 = vcombine.low %v1308, %v1316
    %v1334 = vcombine.high %v1308, %v1316
    %v1336 = vunpack.c.l.s4 1934713408
    %v1337 = vunpack.c.0.s8 %v1336
    %v1338 = vlaneseq
    %v1339 = vshrl.u32 %v1338, 7
    %v1340 = vsub.s32 %v1337, %v1339
    %v1341 = vrot.slane %v1333, %v1340
    %v1343 = vunpack.c.l.s4 1934713408
    %v1344 = vunpack.c.0.s8 %v1343
    %v1345 = vlaneseq
    %v1346 = vshrl.u32 %v1345, 7
    %v1347 = vsub.s32 %v1344, %v1346
    %v1348 = vrot.slane %v1334, %v1347
    %v1349 = vcombine.low %v1325, %v1341
    %v1350 = vcombine.high %v1325, %v1341
    %v1351 = vcombine.low %v1332, %v1348
    %v1352 = vcombine.high %v1332, %v1348
    %v1353 = vcombine.low %v1213, %v1215
    %v1355 = vunpack.c.l.s4 1983009808
    %v1356 = vunpack.c.0.s8 %v1355
    %v1357 = vlaneseq
    %v1358 = vshrl.u32 %v1357, 7
    %v1359 = vsub.s32 %v1356, %v1358
    %v1360 = vrot.slane %v1353, %v1359
    %v1361 = vcombine.low %v1214, %v1216
    %v1363 = vunpack.c.l.s4 1983009808
    %v1364 = vunpack.c.0.s8 %v1363
    %v1365 = vlaneseq
    %v1366 = vshrl.u32 %v1365, 7
    %v1367 = vsub.s32 %v1364, %v1366
    %v1368 = vrot.slane %v1361, %v1367
    %v1369 = vcombine.low %v1281, %v1283
    %v1371 = vunpack.c.l.s4 1983009808
    %v1372 = vunpack.c.0.s8 %v1371
    %v1373 = vlaneseq
    %v1374 = vshrl.u32 %v1373, 7
    %v1375 = vsub.s32 %v1372, %v1374
    %v1376 = vrot.slane %v1369, %v1375
    %v1377 = vcombine.low %v1282, %v1284
    %v1379 = vunpack.c.l.s4 1983009808
    %v1380 = vunpack.c.0.s8 %v1379
    %v1381 = vlaneseq
    %v1382 = vshrl.u32 %v1381, 7
    %v1383 = vsub.s32 %v1380, %v1382
    %v1384 = vrot.slane %v1377, %v1383
    %v1385 = vcombine.low %v1360, %v1368
    %v1386 = vcombine.high %v1360, %v1368
    %v1388 = vunpack.c.l.s4 1934713408
    %v1389 = vunpack.c.0.s8 %v1388
    %v1390 = vlaneseq
    %v1391 = vshrl.u32 %v1390, 7
    %v1392 = vsub.s32 %v1389, %v1391
    %v1393 = vrot.slane %v1385, %v1392
    %v1395 = vunpack.c.l.s4 1934713408
    %v1396 = vunpack.c.0.s8 %v1395
    %v1397 = vlaneseq
    %v1398 = vshrl.u32 %v1397, 7
    %v1399 = vsub.s32 %v1396, %v1398
    %v1400 = vrot.slane %v1386, %v1399
    %v1401 = vcombine.low %v1376, %v1384
    %v1402 = vcombine.high %v1376, %v1384
    %v1404 = vunpack.c.l.s4 1934713408
    %v1405 = vunpack.c.0.s8 %v1404
    %v1406 = vlaneseq
    %v1407 = vshrl.u32 %v1406, 7
    %v1408 = vsub.s32 %v1405, %v1407
    %v1409 = vrot.slane %v1401, %v1408
    %v1411 = vunpack.c.l.s4 1934713408
    %v1412 = vunpack.c.0.s8 %v1411
    %v1413 = vlaneseq
    %v1414 = vshrl.u32 %v1413, 7
    %v1415 = vsub.s32 %v1412, %v1414
    %v1416 = vrot.slane %v1402, %v1415
    %v1417 = vcombine.low %v1393, %v1409
    %v1418 = vcombine.high %v1393, %v1409
    %v1419 = vcombine.low %v1400, %v1416
    %v1420 = vcombine.high %v1400, %v1416
    %v1421 = vpack.c.bf16 %v1349, %v1349
    %v1422 = vpack.c.bf16 %v1350, %v1350
    %v1423 = vpack.c.bf16 %v1351, %v1351
    %v1424 = vpack.c.bf16 %v1352, %v1352
    %v1425 = vpack.c.bf16 %v1417, %v1417
    %v1426 = vpack.c.bf16 %v1418, %v1418
    %v1427 = vpack.c.bf16 %v1419, %v1419
    %v1428 = vpack.c.bf16 %v1420, %v1420
    %1431 = vrot.lane.b32.xlu0 %v821, 96
    %v1432 = vpop.permute.xlu0 %1431
    %1433 = vrot.lane.b32.xlu0 %v824, 96
    %v1434 = vpop.permute.xlu0 %1433
    %1437 = vrot.lane.b32.xlu0 %v821, 64
    %v1438 = vpop.permute.xlu0 %1437
    %1439 = vrot.lane.b32.xlu0 %v824, 64
    %v1440 = vpop.permute.xlu0 %1439
    %1443 = vrot.lane.b32.xlu0 %v821, 32
    %v1444 = vpop.permute.xlu0 %1443
    %1445 = vrot.lane.b32.xlu0 %v824, 32
    %v1446 = vpop.permute.xlu0 %1445
    %v1449 = vcombine.low %v821, %v1438
    %v1450 = vcombine.high %v821, %v1438
    %v1452 = vunpack.c.l.s4 1983009808
    %v1453 = vunpack.c.0.s8 %v1452
    %v1454 = vlaneseq
    %v1455 = vshrl.u32 %v1454, 7
    %v1456 = vsub.s32 %v1453, %v1455
    %v1457 = vrot.slane %v1449, %v1456
    %v1459 = vunpack.c.l.s4 1983009808
    %v1460 = vunpack.c.0.s8 %v1459
    %v1461 = vlaneseq
    %v1462 = vshrl.u32 %v1461, 7
    %v1463 = vsub.s32 %v1460, %v1462
    %v1464 = vrot.slane %v1450, %v1463
    %v1465 = vcombine.low %v1432, %v1444
    %v1466 = vcombine.high %v1432, %v1444
    %v1468 = vunpack.c.l.s4 1983009808
    %v1469 = vunpack.c.0.s8 %v1468
    %v1470 = vlaneseq
    %v1471 = vshrl.u32 %v1470, 7
    %v1472 = vsub.s32 %v1469, %v1471
    %v1473 = vrot.slane %v1465, %v1472
    %v1475 = vunpack.c.l.s4 1983009808
    %v1476 = vunpack.c.0.s8 %v1475
    %v1477 = vlaneseq
    %v1478 = vshrl.u32 %v1477, 7
    %v1479 = vsub.s32 %v1476, %v1478
    %v1480 = vrot.slane %v1466, %v1479
    %v1481 = vcombine.low %v1457, %v1473
    %v1482 = vcombine.high %v1457, %v1473
    %v1484 = vunpack.c.l.s4 1934713408
    %v1485 = vunpack.c.0.s8 %v1484
    %v1486 = vlaneseq
    %v1487 = vshrl.u32 %v1486, 7
    %v1488 = vsub.s32 %v1485, %v1487
    %v1489 = vrot.slane %v1481, %v1488
    %v1491 = vunpack.c.l.s4 1934713408
    %v1492 = vunpack.c.0.s8 %v1491
    %v1493 = vlaneseq
    %v1494 = vshrl.u32 %v1493, 7
    %v1495 = vsub.s32 %v1492, %v1494
    %v1496 = vrot.slane %v1482, %v1495
    %v1497 = vcombine.low %v1464, %v1480
    %v1498 = vcombine.high %v1464, %v1480
    %v1500 = vunpack.c.l.s4 1934713408
    %v1501 = vunpack.c.0.s8 %v1500
    %v1502 = vlaneseq
    %v1503 = vshrl.u32 %v1502, 7
    %v1504 = vsub.s32 %v1501, %v1503
    %v1505 = vrot.slane %v1497, %v1504
    %v1507 = vunpack.c.l.s4 1934713408
    %v1508 = vunpack.c.0.s8 %v1507
    %v1509 = vlaneseq
    %v1510 = vshrl.u32 %v1509, 7
    %v1511 = vsub.s32 %v1508, %v1510
    %v1512 = vrot.slane %v1498, %v1511
    %v1513 = vcombine.high %v1489, 0.0
    %v1514 = vcombine.high %v1496, 0.0
    %v1515 = vcombine.high %v1505, 0.0
    %v1516 = vcombine.high %v1512, 0.0
    %v1517 = vcombine.low %v824, %v1440
    %v1518 = vcombine.high %v824, %v1440
    %v1520 = vunpack.c.l.s4 1983009808
    %v1521 = vunpack.c.0.s8 %v1520
    %v1522 = vlaneseq
    %v1523 = vshrl.u32 %v1522, 7
    %v1524 = vsub.s32 %v1521, %v1523
    %v1525 = vrot.slane %v1517, %v1524
    %v1527 = vunpack.c.l.s4 1983009808
    %v1528 = vunpack.c.0.s8 %v1527
    %v1529 = vlaneseq
    %v1530 = vshrl.u32 %v1529, 7
    %v1531 = vsub.s32 %v1528, %v1530
    %v1532 = vrot.slane %v1518, %v1531
    %v1533 = vcombine.low %v1434, %v1446
    %v1534 = vcombine.high %v1434, %v1446
    %v1536 = vunpack.c.l.s4 1983009808
    %v1537 = vunpack.c.0.s8 %v1536
    %v1538 = vlaneseq
    %v1539 = vshrl.u32 %v1538, 7
    %v1540 = vsub.s32 %v1537, %v1539
    %v1541 = vrot.slane %v1533, %v1540
    %v1543 = vunpack.c.l.s4 1983009808
    %v1544 = vunpack.c.0.s8 %v1543
    %v1545 = vlaneseq
    %v1546 = vshrl.u32 %v1545, 7
    %v1547 = vsub.s32 %v1544, %v1546
    %v1548 = vrot.slane %v1534, %v1547
    %v1549 = vcombine.low %v1525, %v1541
    %v1550 = vcombine.high %v1525, %v1541
    %v1552 = vunpack.c.l.s4 1934713408
    %v1553 = vunpack.c.0.s8 %v1552
    %v1554 = vlaneseq
    %v1555 = vshrl.u32 %v1554, 7
    %v1556 = vsub.s32 %v1553, %v1555
    %v1557 = vrot.slane %v1549, %v1556
    %v1559 = vunpack.c.l.s4 1934713408
    %v1560 = vunpack.c.0.s8 %v1559
    %v1561 = vlaneseq
    %v1562 = vshrl.u32 %v1561, 7
    %v1563 = vsub.s32 %v1560, %v1562
    %v1564 = vrot.slane %v1550, %v1563
    %v1565 = vcombine.low %v1532, %v1548
    %v1566 = vcombine.high %v1532, %v1548
    %v1568 = vunpack.c.l.s4 1934713408
    %v1569 = vunpack.c.0.s8 %v1568
    %v1570 = vlaneseq
    %v1571 = vshrl.u32 %v1570, 7
    %v1572 = vsub.s32 %v1569, %v1571
    %v1573 = vrot.slane %v1565, %v1572
    %v1575 = vunpack.c.l.s4 1934713408
    %v1576 = vunpack.c.0.s8 %v1575
    %v1577 = vlaneseq
    %v1578 = vshrl.u32 %v1577, 7
    %v1579 = vsub.s32 %v1576, %v1578
    %v1580 = vrot.slane %v1566, %v1579
    %v1581 = vcombine.high %v1557, 0.0
    %v1582 = vcombine.high %v1564, 0.0
    %v1583 = vcombine.high %v1573, 0.0
    %v1584 = vcombine.high %v1580, 0.0
    %v1585 = vcombine.low %v1489, %v1505
    %v1587 = vunpack.c.l.s4 1983009808
    %v1588 = vunpack.c.0.s8 %v1587
    %v1589 = vlaneseq
    %v1590 = vshrl.u32 %v1589, 7
    %v1591 = vsub.s32 %v1588, %v1590
    %v1592 = vrot.slane %v1585, %v1591
    %v1593 = vcombine.low %v1496, %v1512
    %v1595 = vunpack.c.l.s4 1983009808
    %v1596 = vunpack.c.0.s8 %v1595
    %v1597 = vlaneseq
    %v1598 = vshrl.u32 %v1597, 7
    %v1599 = vsub.s32 %v1596, %v1598
    %v1600 = vrot.slane %v1593, %v1599
    %v1601 = vcombine.low %v1557, %v1573
    %v1603 = vunpack.c.l.s4 1983009808
    %v1604 = vunpack.c.0.s8 %v1603
    %v1605 = vlaneseq
    %v1606 = vshrl.u32 %v1605, 7
    %v1607 = vsub.s32 %v1604, %v1606
    %v1608 = vrot.slane %v1601, %v1607
    %v1609 = vcombine.low %v1564, %v1580
    %v1611 = vunpack.c.l.s4 1983009808
    %v1612 = vunpack.c.0.s8 %v1611
    %v1613 = vlaneseq
    %v1614 = vshrl.u32 %v1613, 7
    %v1615 = vsub.s32 %v1612, %v1614
    %v1616 = vrot.slane %v1609, %v1615
    %v1617 = vcombine.low %v1592, %v1600
    %v1618 = vcombine.high %v1592, %v1600
    %v1620 = vunpack.c.l.s4 1934713408
    %v1621 = vunpack.c.0.s8 %v1620
    %v1622 = vlaneseq
    %v1623 = vshrl.u32 %v1622, 7
    %v1624 = vsub.s32 %v1621, %v1623
    %v1625 = vrot.slane %v1617, %v1624
    %v1627 = vunpack.c.l.s4 1934713408
    %v1628 = vunpack.c.0.s8 %v1627
    %v1629 = vlaneseq
    %v1630 = vshrl.u32 %v1629, 7
    %v1631 = vsub.s32 %v1628, %v1630
    %v1632 = vrot.slane %v1618, %v1631
    %v1633 = vcombine.low %v1608, %v1616
    %v1634 = vcombine.high %v1608, %v1616
    %v1636 = vunpack.c.l.s4 1934713408
    %v1637 = vunpack.c.0.s8 %v1636
    %v1638 = vlaneseq
    %v1639 = vshrl.u32 %v1638, 7
    %v1640 = vsub.s32 %v1637, %v1639
    %v1641 = vrot.slane %v1633, %v1640
    %v1643 = vunpack.c.l.s4 1934713408
    %v1644 = vunpack.c.0.s8 %v1643
    %v1645 = vlaneseq
    %v1646 = vshrl.u32 %v1645, 7
    %v1647 = vsub.s32 %v1644, %v1646
    %v1648 = vrot.slane %v1634, %v1647
    %v1649 = vcombine.low %v1625, %v1641
    %v1650 = vcombine.high %v1625, %v1641
    %v1651 = vcombine.low %v1632, %v1648
    %v1652 = vcombine.high %v1632, %v1648
    %v1653 = vcombine.low %v1513, %v1515
    %v1655 = vunpack.c.l.s4 1983009808
    %v1656 = vunpack.c.0.s8 %v1655
    %v1657 = vlaneseq
    %v1658 = vshrl.u32 %v1657, 7
    %v1659 = vsub.s32 %v1656, %v1658
    %v1660 = vrot.slane %v1653, %v1659
    %v1661 = vcombine.low %v1514, %v1516
    %v1663 = vunpack.c.l.s4 1983009808
    %v1664 = vunpack.c.0.s8 %v1663
    %v1665 = vlaneseq
    %v1666 = vshrl.u32 %v1665, 7
    %v1667 = vsub.s32 %v1664, %v1666
    %v1668 = vrot.slane %v1661, %v1667
    %v1669 = vcombine.low %v1581, %v1583
    %v1671 = vunpack.c.l.s4 1983009808
    %v1672 = vunpack.c.0.s8 %v1671
    %v1673 = vlaneseq
    %v1674 = vshrl.u32 %v1673, 7
    %v1675 = vsub.s32 %v1672, %v1674
    %v1676 = vrot.slane %v1669, %v1675
    %v1677 = vcombine.low %v1582, %v1584
    %v1679 = vunpack.c.l.s4 1983009808
    %v1680 = vunpack.c.0.s8 %v1679
    %v1681 = vlaneseq
    %v1682 = vshrl.u32 %v1681, 7
    %v1683 = vsub.s32 %v1680, %v1682
    %v1684 = vrot.slane %v1677, %v1683
    %v1685 = vcombine.low %v1660, %v1668
    %v1686 = vcombine.high %v1660, %v1668
    %v1688 = vunpack.c.l.s4 1934713408
    %v1689 = vunpack.c.0.s8 %v1688
    %v1690 = vlaneseq
    %v1691 = vshrl.u32 %v1690, 7
    %v1692 = vsub.s32 %v1689, %v1691
    %v1693 = vrot.slane %v1685, %v1692
    %v1695 = vunpack.c.l.s4 1934713408
    %v1696 = vunpack.c.0.s8 %v1695
    %v1697 = vlaneseq
    %v1698 = vshrl.u32 %v1697, 7
    %v1699 = vsub.s32 %v1696, %v1698
    %v1700 = vrot.slane %v1686, %v1699
    %v1701 = vcombine.low %v1676, %v1684
    %v1702 = vcombine.high %v1676, %v1684
    %v1704 = vunpack.c.l.s4 1934713408
    %v1705 = vunpack.c.0.s8 %v1704
    %v1706 = vlaneseq
    %v1707 = vshrl.u32 %v1706, 7
    %v1708 = vsub.s32 %v1705, %v1707
    %v1709 = vrot.slane %v1701, %v1708
    %v1711 = vunpack.c.l.s4 1934713408
    %v1712 = vunpack.c.0.s8 %v1711
    %v1713 = vlaneseq
    %v1714 = vshrl.u32 %v1713, 7
    %v1715 = vsub.s32 %v1712, %v1714
    %v1716 = vrot.slane %v1702, %v1715
    %v1717 = vcombine.low %v1693, %v1709
    %v1718 = vcombine.high %v1693, %v1709
    %v1719 = vcombine.low %v1700, %v1716
    %v1720 = vcombine.high %v1700, %v1716
    %v1721 = vpack.c.bf16 %v1649, %v1649
    %v1722 = vpack.c.bf16 %v1650, %v1650
    %v1723 = vpack.c.bf16 %v1651, %v1651
    %v1724 = vpack.c.bf16 %v1652, %v1652
    %v1725 = vpack.c.bf16 %v1717, %v1717
    %v1726 = vpack.c.bf16 %v1718, %v1718
    %v1727 = vpack.c.bf16 %v1719, %v1719
    %v1728 = vpack.c.bf16 %v1720, %v1720
    %vm1729 = vcmask 261120
    %v1731 = vsel %vm1729, %v1121, 0
    %v1734 = vsel %vm1729, %v1421, 0
    %1736 = vmatprep.subr.bf16.mxu0 0
    %1737 = vmatpush1.bf16.xpose.msra.mxu0 0
    %1738 = vmatprep.subr.bf16.mxu0 0
    %1739 = vmatpush1.bf16.xpose.msra.mxu0 0
    %1740 = vmatprep.subr.bf16.mxu0 0
    %1741 = vmatpush1.bf16.xpose.msra.mxu0 0
    %1742 = vmatprep.subr.bf16.mxu0 0
    %1743 = vmatpush1.bf16.xpose.msra.mxu0 0
    %1744 = vmatprep.subr.bf16.mxu0 0
    %1745 = vmatpush1.bf16.xpose.msra.mxu0 0
    %1746 = vmatprep.subr.bf16.mxu0 0
    %1747 = vmatpush1.bf16.xpose.msra.mxu0 0
    %1748 = vmatprep.subr.bf16.mxu0 0
    %1749 = vmatpush1.bf16.xpose.msra.mxu0 0
    %1750 = vmatprep.subr.bf16.mxu0 0
    %1751 = vmatpush1.bf16.xpose.msra.mxu0 %v1734
    %1752 = vmatprep.subr.bf16.mxu0 0
    %1753 = vmatpush2.bf16.xpose.msra.mxu0 0
    %1754 = vmatprep.subr.bf16.mxu0 0
    %1755 = vmatpush2.bf16.xpose.msra.mxu0 0
    %1756 = vmatprep.subr.bf16.mxu0 0
    %1757 = vmatpush2.bf16.xpose.msra.mxu0 0
    %1758 = vmatprep.subr.bf16.mxu0 0
    %1759 = vmatpush2.bf16.xpose.msra.mxu0 0
    %1760 = vmatprep.subr.bf16.mxu0 0
    %1761 = vmatpush2.bf16.xpose.msra.mxu0 0
    %1762 = vmatprep.subr.bf16.mxu0 0
    %1763 = vmatpush2.bf16.xpose.msra.mxu0 0
    %1764 = vmatprep.subr.bf16.mxu0 0
    %1765 = vmatpush2.bf16.xpose.msra.mxu0 0
    %1766 = vmatprep.subr.bf16.mxu0 0
    %1767 = vmatpush2.bf16.xpose.msra.mxu0 0
    %1768 = vmatprep.mubr.bf16.mxu0 0
    %1769 = vmatmul.mubr.bf16.gmra.mxu0 %v1731
    %v1770 = vpop.f32.mrf.mxu0
    %v1771 = vadd.f32 0.0, %v1770
    %v1772 = vpop.f32.mrf.mxu0
    %v1773 = vpop.f32.mrf.mxu0
    %v1774 = vpop.f32.mrf.mxu0
    %1775 = vdwg.mxu0
    %v1777 = vsel %vm1729, %v1122, 0
    %v1780 = vsel %vm1729, %v1422, 0
    %1782 = vmatprep.subr.bf16.mxu0 0
    %1783 = vmatpush1.bf16.xpose.msra.mxu0 0
    %1784 = vmatprep.subr.bf16.mxu0 0
    %1785 = vmatpush1.bf16.xpose.msra.mxu0 0
    %1786 = vmatprep.subr.bf16.mxu0 0
    %1787 = vmatpush1.bf16.xpose.msra.mxu0 0
    %1788 = vmatprep.subr.bf16.mxu0 0
    %1789 = vmatpush1.bf16.xpose.msra.mxu0 0
    %1790 = vmatprep.subr.bf16.mxu0 0
    %1791 = vmatpush1.bf16.xpose.msra.mxu0 0
    %1792 = vmatprep.subr.bf16.mxu0 0
    %1793 = vmatpush1.bf16.xpose.msra.mxu0 0
    %1794 = vmatprep.subr.bf16.mxu0 0
    %1795 = vmatpush1.bf16.xpose.msra.mxu0 0
    %1796 = vmatprep.subr.bf16.mxu0 0
    %1797 = vmatpush1.bf16.xpose.msra.mxu0 %v1780
    %1798 = vmatprep.subr.bf16.mxu0 0
    %1799 = vmatpush2.bf16.xpose.msra.mxu0 0
    %1800 = vmatprep.subr.bf16.mxu0 0
    %1801 = vmatpush2.bf16.xpose.msra.mxu0 0
    %1802 = vmatprep.subr.bf16.mxu0 0
    %1803 = vmatpush2.bf16.xpose.msra.mxu0 0
    %1804 = vmatprep.subr.bf16.mxu0 0
    %1805 = vmatpush2.bf16.xpose.msra.mxu0 0
    %1806 = vmatprep.subr.bf16.mxu0 0
    %1807 = vmatpush2.bf16.xpose.msra.mxu0 0
    %1808 = vmatprep.subr.bf16.mxu0 0
    %1809 = vmatpush2.bf16.xpose.msra.mxu0 0
    %1810 = vmatprep.subr.bf16.mxu0 0
    %1811 = vmatpush2.bf16.xpose.msra.mxu0 0
    %1812 = vmatprep.subr.bf16.mxu0 0
    %1813 = vmatpush2.bf16.xpose.msra.mxu0 0
    %1814 = vmatprep.mubr.bf16.mxu0 0
    %1815 = vmatmul.mubr.bf16.gmra.mxu0 %v1777
    %v1816 = vpop.f32.mrf.mxu0
    %v1817 = vadd.f32 0.0, %v1816
    %v1818 = vpop.f32.mrf.mxu0
    %v1819 = vpop.f32.mrf.mxu0
    %v1820 = vpop.f32.mrf.mxu0
    %1821 = vdwg.mxu0
    %v1823 = vsel %vm1729, %v1123, 0
    %v1826 = vsel %vm1729, %v1423, 0
    %1828 = vmatprep.subr.bf16.mxu0 0
    %1829 = vmatpush1.bf16.xpose.msra.mxu0 0
    %1830 = vmatprep.subr.bf16.mxu0 0
    %1831 = vmatpush1.bf16.xpose.msra.mxu0 0
    %1832 = vmatprep.subr.bf16.mxu0 0
    %1833 = vmatpush1.bf16.xpose.msra.mxu0 0
    %1834 = vmatprep.subr.bf16.mxu0 0
    %1835 = vmatpush1.bf16.xpose.msra.mxu0 0
    %1836 = vmatprep.subr.bf16.mxu0 0
    %1837 = vmatpush1.bf16.xpose.msra.mxu0 0
    %1838 = vmatprep.subr.bf16.mxu0 0
    %1839 = vmatpush1.bf16.xpose.msra.mxu0 0
    %1840 = vmatprep.subr.bf16.mxu0 0
    %1841 = vmatpush1.bf16.xpose.msra.mxu0 0
    %1842 = vmatprep.subr.bf16.mxu0 0
    %1843 = vmatpush1.bf16.xpose.msra.mxu0 %v1826
    %1844 = vmatprep.subr.bf16.mxu0 0
    %1845 = vmatpush2.bf16.xpose.msra.mxu0 0
    %1846 = vmatprep.subr.bf16.mxu0 0
    %1847 = vmatpush2.bf16.xpose.msra.mxu0 0
    %1848 = vmatprep.subr.bf16.mxu0 0
    %1849 = vmatpush2.bf16.xpose.msra.mxu0 0
    %1850 = vmatprep.subr.bf16.mxu0 0
    %1851 = vmatpush2.bf16.xpose.msra.mxu0 0
    %1852 = vmatprep.subr.bf16.mxu0 0
    %1853 = vmatpush2.bf16.xpose.msra.mxu0 0
    %1854 = vmatprep.subr.bf16.mxu0 0
    %1855 = vmatpush2.bf16.xpose.msra.mxu0 0
    %1856 = vmatprep.subr.bf16.mxu0 0
    %1857 = vmatpush2.bf16.xpose.msra.mxu0 0
    %1858 = vmatprep.subr.bf16.mxu0 0
    %1859 = vmatpush2.bf16.xpose.msra.mxu0 0
    %1860 = vmatprep.mubr.bf16.mxu0 0
    %1861 = vmatmul.mubr.bf16.gmra.mxu0 %v1823
    %v1862 = vpop.f32.mrf.mxu0
    %v1863 = vadd.f32 0.0, %v1862
    %v1864 = vpop.f32.mrf.mxu0
    %v1865 = vpop.f32.mrf.mxu0
    %v1866 = vpop.f32.mrf.mxu0
    %1867 = vdwg.mxu0
    %v1869 = vsel %vm1729, %v1124, 0
    %v1872 = vsel %vm1729, %v1424, 0
    %1874 = vmatprep.subr.bf16.mxu0 0
    %1875 = vmatpush1.bf16.xpose.msra.mxu0 0
    %1876 = vmatprep.subr.bf16.mxu0 0
    %1877 = vmatpush1.bf16.xpose.msra.mxu0 0
    %1878 = vmatprep.subr.bf16.mxu0 0
    %1879 = vmatpush1.bf16.xpose.msra.mxu0 0
    %1880 = vmatprep.subr.bf16.mxu0 0
    %1881 = vmatpush1.bf16.xpose.msra.mxu0 0
    %1882 = vmatprep.subr.bf16.mxu0 0
    %1883 = vmatpush1.bf16.xpose.msra.mxu0 0
    %1884 = vmatprep.subr.bf16.mxu0 0
    %1885 = vmatpush1.bf16.xpose.msra.mxu0 0
    %1886 = vmatprep.subr.bf16.mxu0 0
    %1887 = vmatpush1.bf16.xpose.msra.mxu0 0
    %1888 = vmatprep.subr.bf16.mxu0 0
    %1889 = vmatpush1.bf16.xpose.msra.mxu0 %v1872
    %1890 = vmatprep.subr.bf16.mxu0 0
    %1891 = vmatpush2.bf16.xpose.msra.mxu0 0
    %1892 = vmatprep.subr.bf16.mxu0 0
    %1893 = vmatpush2.bf16.xpose.msra.mxu0 0
    %1894 = vmatprep.subr.bf16.mxu0 0
    %1895 = vmatpush2.bf16.xpose.msra.mxu0 0
    %1896 = vmatprep.subr.bf16.mxu0 0
    %1897 = vmatpush2.bf16.xpose.msra.mxu0 0
    %1898 = vmatprep.subr.bf16.mxu0 0
    %1899 = vmatpush2.bf16.xpose.msra.mxu0 0
    %1900 = vmatprep.subr.bf16.mxu0 0
    %1901 = vmatpush2.bf16.xpose.msra.mxu0 0
    %1902 = vmatprep.subr.bf16.mxu0 0
    %1903 = vmatpush2.bf16.xpose.msra.mxu0 0
    %1904 = vmatprep.subr.bf16.mxu0 0
    %1905 = vmatpush2.bf16.xpose.msra.mxu0 0
    %1906 = vmatprep.mubr.bf16.mxu0 0
    %1907 = vmatmul.mubr.bf16.gmra.mxu0 %v1869
    %v1908 = vpop.f32.mrf.mxu0
    %v1909 = vadd.f32 0.0, %v1908
    %v1910 = vpop.f32.mrf.mxu0
    %v1911 = vpop.f32.mrf.mxu0
    %v1912 = vpop.f32.mrf.mxu0
    %1913 = vdwg.mxu0
    %v1915 = vsel %vm1729, %v1125, 0
    %v1918 = vsel %vm1729, %v1425, 0
    %1920 = vmatprep.subr.bf16.mxu0 0
    %1921 = vmatpush1.bf16.xpose.msra.mxu0 0
    %1922 = vmatprep.subr.bf16.mxu0 0
    %1923 = vmatpush1.bf16.xpose.msra.mxu0 0
    %1924 = vmatprep.subr.bf16.mxu0 0
    %1925 = vmatpush1.bf16.xpose.msra.mxu0 0
    %1926 = vmatprep.subr.bf16.mxu0 0
    %1927 = vmatpush1.bf16.xpose.msra.mxu0 0
    %1928 = vmatprep.subr.bf16.mxu0 0
    %1929 = vmatpush1.bf16.xpose.msra.mxu0 0
    %1930 = vmatprep.subr.bf16.mxu0 0
    %1931 = vmatpush1.bf16.xpose.msra.mxu0 0
    %1932 = vmatprep.subr.bf16.mxu0 0
    %1933 = vmatpush1.bf16.xpose.msra.mxu0 0
    %1934 = vmatprep.subr.bf16.mxu0 0
    %1935 = vmatpush1.bf16.xpose.msra.mxu0 %v1918
    %1936 = vmatprep.subr.bf16.mxu0 0
    %1937 = vmatpush2.bf16.xpose.msra.mxu0 0
    %1938 = vmatprep.subr.bf16.mxu0 0
    %1939 = vmatpush2.bf16.xpose.msra.mxu0 0
    %1940 = vmatprep.subr.bf16.mxu0 0
    %1941 = vmatpush2.bf16.xpose.msra.mxu0 0
    %1942 = vmatprep.subr.bf16.mxu0 0
    %1943 = vmatpush2.bf16.xpose.msra.mxu0 0
    %1944 = vmatprep.subr.bf16.mxu0 0
    %1945 = vmatpush2.bf16.xpose.msra.mxu0 0
    %1946 = vmatprep.subr.bf16.mxu0 0
    %1947 = vmatpush2.bf16.xpose.msra.mxu0 0
    %1948 = vmatprep.subr.bf16.mxu0 0
    %1949 = vmatpush2.bf16.xpose.msra.mxu0 0
    %1950 = vmatprep.subr.bf16.mxu0 0
    %1951 = vmatpush2.bf16.xpose.msra.mxu0 0
    %1952 = vmatprep.mubr.bf16.mxu0 0
    %1953 = vmatmul.mubr.bf16.gmra.mxu0 %v1915
    %v1954 = vpop.f32.mrf.mxu0
    %v1955 = vadd.f32 0.0, %v1954
    %v1956 = vpop.f32.mrf.mxu0
    %v1957 = vpop.f32.mrf.mxu0
    %v1958 = vpop.f32.mrf.mxu0
    %1959 = vdwg.mxu0
    %v1961 = vsel %vm1729, %v1126, 0
    %v1964 = vsel %vm1729, %v1426, 0
    %1966 = vmatprep.subr.bf16.mxu0 0
    %1967 = vmatpush1.bf16.xpose.msra.mxu0 0
    %1968 = vmatprep.subr.bf16.mxu0 0
    %1969 = vmatpush1.bf16.xpose.msra.mxu0 0
    %1970 = vmatprep.subr.bf16.mxu0 0
    %1971 = vmatpush1.bf16.xpose.msra.mxu0 0
    %1972 = vmatprep.subr.bf16.mxu0 0
    %1973 = vmatpush1.bf16.xpose.msra.mxu0 0
    %1974 = vmatprep.subr.bf16.mxu0 0
    %1975 = vmatpush1.bf16.xpose.msra.mxu0 0
    %1976 = vmatprep.subr.bf16.mxu0 0
    %1977 = vmatpush1.bf16.xpose.msra.mxu0 0
    %1978 = vmatprep.subr.bf16.mxu0 0
    %1979 = vmatpush1.bf16.xpose.msra.mxu0 0
    %1980 = vmatprep.subr.bf16.mxu0 0
    %1981 = vmatpush1.bf16.xpose.msra.mxu0 %v1964
    %1982 = vmatprep.subr.bf16.mxu0 0
    %1983 = vmatpush2.bf16.xpose.msra.mxu0 0
    %1984 = vmatprep.subr.bf16.mxu0 0
    %1985 = vmatpush2.bf16.xpose.msra.mxu0 0
    %1986 = vmatprep.subr.bf16.mxu0 0
    %1987 = vmatpush2.bf16.xpose.msra.mxu0 0
    %1988 = vmatprep.subr.bf16.mxu0 0
    %1989 = vmatpush2.bf16.xpose.msra.mxu0 0
    %1990 = vmatprep.subr.bf16.mxu0 0
    %1991 = vmatpush2.bf16.xpose.msra.mxu0 0
    %1992 = vmatprep.subr.bf16.mxu0 0
    %1993 = vmatpush2.bf16.xpose.msra.mxu0 0
    %1994 = vmatprep.subr.bf16.mxu0 0
    %1995 = vmatpush2.bf16.xpose.msra.mxu0 0
    %1996 = vmatprep.subr.bf16.mxu0 0
    %1997 = vmatpush2.bf16.xpose.msra.mxu0 0
    %1998 = vmatprep.mubr.bf16.mxu0 0
    %1999 = vmatmul.mubr.bf16.gmra.mxu0 %v1961
    %v2000 = vpop.f32.mrf.mxu0
    %v2001 = vadd.f32 0.0, %v2000
    %v2002 = vpop.f32.mrf.mxu0
    %v2003 = vpop.f32.mrf.mxu0
    %v2004 = vpop.f32.mrf.mxu0
    %2005 = vdwg.mxu0
    %v2007 = vsel %vm1729, %v1127, 0
    %v2010 = vsel %vm1729, %v1427, 0
    %2012 = vmatprep.subr.bf16.mxu0 0
    %2013 = vmatpush1.bf16.xpose.msra.mxu0 0
    %2014 = vmatprep.subr.bf16.mxu0 0
    %2015 = vmatpush1.bf16.xpose.msra.mxu0 0
    %2016 = vmatprep.subr.bf16.mxu0 0
    %2017 = vmatpush1.bf16.xpose.msra.mxu0 0
    %2018 = vmatprep.subr.bf16.mxu0 0
    %2019 = vmatpush1.bf16.xpose.msra.mxu0 0
    %2020 = vmatprep.subr.bf16.mxu0 0
    %2021 = vmatpush1.bf16.xpose.msra.mxu0 0
    %2022 = vmatprep.subr.bf16.mxu0 0
    %2023 = vmatpush1.bf16.xpose.msra.mxu0 0
    %2024 = vmatprep.subr.bf16.mxu0 0
    %2025 = vmatpush1.bf16.xpose.msra.mxu0 0
    %2026 = vmatprep.subr.bf16.mxu0 0
    %2027 = vmatpush1.bf16.xpose.msra.mxu0 %v2010
    %2028 = vmatprep.subr.bf16.mxu0 0
    %2029 = vmatpush2.bf16.xpose.msra.mxu0 0
    %2030 = vmatprep.subr.bf16.mxu0 0
    %2031 = vmatpush2.bf16.xpose.msra.mxu0 0
    %2032 = vmatprep.subr.bf16.mxu0 0
    %2033 = vmatpush2.bf16.xpose.msra.mxu0 0
    %2034 = vmatprep.subr.bf16.mxu0 0
    %2035 = vmatpush2.bf16.xpose.msra.mxu0 0
    %2036 = vmatprep.subr.bf16.mxu0 0
    %2037 = vmatpush2.bf16.xpose.msra.mxu0 0
    %2038 = vmatprep.subr.bf16.mxu0 0
    %2039 = vmatpush2.bf16.xpose.msra.mxu0 0
    %2040 = vmatprep.subr.bf16.mxu0 0
    %2041 = vmatpush2.bf16.xpose.msra.mxu0 0
    %2042 = vmatprep.subr.bf16.mxu0 0
    %2043 = vmatpush2.bf16.xpose.msra.mxu0 0
    %2044 = vmatprep.mubr.bf16.mxu0 0
    %2045 = vmatmul.mubr.bf16.gmra.mxu0 %v2007
    %v2046 = vpop.f32.mrf.mxu0
    %v2047 = vadd.f32 0.0, %v2046
    %v2048 = vpop.f32.mrf.mxu0
    %v2049 = vpop.f32.mrf.mxu0
    %v2050 = vpop.f32.mrf.mxu0
    %2051 = vdwg.mxu0
    %v2053 = vsel %vm1729, %v1128, 0
    %v2056 = vsel %vm1729, %v1428, 0
    %2058 = vmatprep.subr.bf16.mxu0 0
    %2059 = vmatpush1.bf16.xpose.msra.mxu0 0
    %2060 = vmatprep.subr.bf16.mxu0 0
    %2061 = vmatpush1.bf16.xpose.msra.mxu0 0
    %2062 = vmatprep.subr.bf16.mxu0 0
    %2063 = vmatpush1.bf16.xpose.msra.mxu0 0
    %2064 = vmatprep.subr.bf16.mxu0 0
    %2065 = vmatpush1.bf16.xpose.msra.mxu0 0
    %2066 = vmatprep.subr.bf16.mxu0 0
    %2067 = vmatpush1.bf16.xpose.msra.mxu0 0
    %2068 = vmatprep.subr.bf16.mxu0 0
    %2069 = vmatpush1.bf16.xpose.msra.mxu0 0
    %2070 = vmatprep.subr.bf16.mxu0 0
    %2071 = vmatpush1.bf16.xpose.msra.mxu0 0
    %2072 = vmatprep.subr.bf16.mxu0 0
    %2073 = vmatpush1.bf16.xpose.msra.mxu0 %v2056
    %2074 = vmatprep.subr.bf16.mxu0 0
    %2075 = vmatpush2.bf16.xpose.msra.mxu0 0
    %2076 = vmatprep.subr.bf16.mxu0 0
    %2077 = vmatpush2.bf16.xpose.msra.mxu0 0
    %2078 = vmatprep.subr.bf16.mxu0 0
    %2079 = vmatpush2.bf16.xpose.msra.mxu0 0
    %2080 = vmatprep.subr.bf16.mxu0 0
    %2081 = vmatpush2.bf16.xpose.msra.mxu0 0
    %2082 = vmatprep.subr.bf16.mxu0 0
    %2083 = vmatpush2.bf16.xpose.msra.mxu0 0
    %2084 = vmatprep.subr.bf16.mxu0 0
    %2085 = vmatpush2.bf16.xpose.msra.mxu0 0
    %2086 = vmatprep.subr.bf16.mxu0 0
    %2087 = vmatpush2.bf16.xpose.msra.mxu0 0
    %2088 = vmatprep.subr.bf16.mxu0 0
    %2089 = vmatpush2.bf16.xpose.msra.mxu0 0
    %2090 = vmatprep.mubr.bf16.mxu0 0
    %2091 = vmatmul.mubr.bf16.gmra.mxu0 %v2053
    %v2092 = vpop.f32.mrf.mxu0
    %v2093 = vadd.f32 0.0, %v2092
    %v2094 = vpop.f32.mrf.mxu0
    %v2095 = vpop.f32.mrf.mxu0
    %v2096 = vpop.f32.mrf.mxu0
    %2097 = vdwg.mxu0
    %vm2098 = vcmask 64512
    %v2099 = vsel %vm2098, %v1771, -inf
    %2100 = vmax.xlane.f32.xlu0 %v2099
    %v2101 = vpop.xlane.xlu0 %2100
    %v2102 = vsel %vm2098, %v1817, -inf
    %2103 = vmax.xlane.f32.xlu0 %v2102
    %v2104 = vpop.xlane.xlu0 %2103
    %v2105 = vsel %vm2098, %v1863, -inf
    %2106 = vmax.xlane.f32.xlu0 %v2105
    %v2107 = vpop.xlane.xlu0 %2106
    %v2108 = vsel %vm2098, %v1909, -inf
    %2109 = vmax.xlane.f32.xlu0 %v2108
    %v2110 = vpop.xlane.xlu0 %2109
    %v2111 = vsel %vm2098, %v1955, -inf
    %2112 = vmax.xlane.f32.xlu0 %v2111
    %v2113 = vpop.xlane.xlu0 %2112
    %v2114 = vsel %vm2098, %v2001, -inf
    %2115 = vmax.xlane.f32.xlu0 %v2114
    %v2116 = vpop.xlane.xlu0 %2115
    %v2117 = vsel %vm2098, %v2047, -inf
    %2118 = vmax.xlane.f32.xlu0 %v2117
    %v2119 = vpop.xlane.xlu0 %2118
    %v2120 = vsel %vm2098, %v2093, -inf
    %2121 = vmax.xlane.f32.xlu0 %v2120
    %v2122 = vpop.xlane.xlu0 %2121
    %v2123 = vsub.f32 %v1771, %v2101
    %v2124 = vsub.f32 %v1817, %v2104
    %v2125 = vsub.f32 %v1863, %v2107
    %v2126 = vsub.f32 %v1909, %v2110
    %v2127 = vsub.f32 %v1955, %v2113
    %v2128 = vsub.f32 %v2001, %v2116
    %v2129 = vsub.f32 %v2047, %v2119
    %v2130 = vsub.f32 %v2093, %v2122
    %v2131 = vmul.f32 %v2123, 1.442695
    %v2132 = vpow.pop %v2131
    %v2133 = vmul.f32 %v2124, 1.442695
    %v2134 = vpow.pop %v2133
    %v2135 = vmul.f32 %v2125, 1.442695
    %v2136 = vpow.pop %v2135
    %v2137 = vmul.f32 %v2126, 1.442695
    %v2138 = vpow.pop %v2137
    %v2139 = vmul.f32 %v2127, 1.442695
    %v2140 = vpow.pop %v2139
    %v2141 = vmul.f32 %v2128, 1.442695
    %v2142 = vpow.pop %v2141
    %v2143 = vmul.f32 %v2129, 1.442695
    %v2144 = vpow.pop %v2143
    %v2145 = vmul.f32 %v2130, 1.442695
    %v2146 = vpow.pop %v2145
    %v2147 = vsel %vm2098, %v2132, 0.0
    %2148 = vadd.xlane.f32.xlu0 %v2147
    %v2149 = vpop.xlane.xlu0 %2148
    %v2150 = vsel %vm2098, %v2134, 0.0
    %2151 = vadd.xlane.f32.xlu0 %v2150
    %v2152 = vpop.xlane.xlu0 %2151
    %v2153 = vsel %vm2098, %v2136, 0.0
    %2154 = vadd.xlane.f32.xlu0 %v2153
    %v2155 = vpop.xlane.xlu0 %2154
    %v2156 = vsel %vm2098, %v2138, 0.0
    %2157 = vadd.xlane.f32.xlu0 %v2156
    %v2158 = vpop.xlane.xlu0 %2157
    %v2159 = vsel %vm2098, %v2140, 0.0
    %2160 = vadd.xlane.f32.xlu0 %v2159
    %v2161 = vpop.xlane.xlu0 %2160
    %v2162 = vsel %vm2098, %v2142, 0.0
    %2163 = vadd.xlane.f32.xlu0 %v2162
    %v2164 = vpop.xlane.xlu0 %2163
    %v2165 = vsel %vm2098, %v2144, 0.0
    %2166 = vadd.xlane.f32.xlu0 %v2165
    %v2167 = vpop.xlane.xlu0 %2166
    %v2168 = vsel %vm2098, %v2146, 0.0
    %2169 = vadd.xlane.f32.xlu0 %v2168
    %v2170 = vpop.xlane.xlu0 %2169
    %v2171 = vrcp.pop %v2149
    %v2172 = vmul.f32 %v2132, %v2171
    %v2173 = vrcp.pop %v2152
    %v2174 = vmul.f32 %v2134, %v2173
    %v2175 = vrcp.pop %v2155
    %v2176 = vmul.f32 %v2136, %v2175
    %v2177 = vrcp.pop %v2158
    %v2178 = vmul.f32 %v2138, %v2177
    %v2179 = vrcp.pop %v2161
    %v2180 = vmul.f32 %v2140, %v2179
    %v2181 = vrcp.pop %v2164
    %v2182 = vmul.f32 %v2142, %v2181
    %v2183 = vrcp.pop %v2167
    %v2184 = vmul.f32 %v2144, %v2183
    %v2185 = vrcp.pop %v2170
    %v2186 = vmul.f32 %v2146, %v2185
    %v2187 = vpack.c.bf16 %v2172, %v2172
    %v2188 = vpack.c.bf16 %v2174, %v2174
    %v2189 = vpack.c.bf16 %v2176, %v2176
    %v2190 = vpack.c.bf16 %v2178, %v2178
    %v2191 = vpack.c.bf16 %v2180, %v2180
    %v2192 = vpack.c.bf16 %v2182, %v2182
    %v2193 = vpack.c.bf16 %v2184, %v2184
    %v2194 = vpack.c.bf16 %v2186, %v2186
    %v2196 = vsel %vm2098, %v2187, 0
    %vm2198 = vcmask 1043456
    %v2200 = vsel %vm2198, %v1721, 0
    %2202 = vmatprep.subr.bf16.mxu0 0
    %2203 = vmatpush1.bf16.msra.mxu0 0
    %2204 = vmatprep.subr.bf16.mxu0 0
    %2205 = vmatpush1.bf16.msra.mxu0 0
    %2206 = vmatprep.subr.bf16.mxu0 0
    %2207 = vmatpush1.bf16.msra.mxu0 0
    %2208 = vmatprep.subr.bf16.mxu0 0
    %2209 = vmatpush1.bf16.msra.mxu0 0
    %2210 = vmatprep.subr.bf16.mxu0 0
    %2211 = vmatpush1.bf16.msra.mxu0 0
    %2212 = vmatprep.subr.bf16.mxu0 0
    %2213 = vmatpush1.bf16.msra.mxu0 0
    %2214 = vmatprep.subr.bf16.mxu0 0
    %2215 = vmatpush1.bf16.msra.mxu0 0
    %2216 = vmatprep.subr.bf16.mxu0 0
    %2217 = vmatpush1.bf16.msra.mxu0 %v2200
    %2218 = vmatprep.subr.bf16.mxu0 0
    %2219 = vmatpush2.bf16.msra.mxu0 0
    %2220 = vmatprep.subr.bf16.mxu0 0
    %2221 = vmatpush2.bf16.msra.mxu0 0
    %2222 = vmatprep.subr.bf16.mxu0 0
    %2223 = vmatpush2.bf16.msra.mxu0 0
    %2224 = vmatprep.subr.bf16.mxu0 0
    %2225 = vmatpush2.bf16.msra.mxu0 0
    %2226 = vmatprep.subr.bf16.mxu0 0
    %2227 = vmatpush2.bf16.msra.mxu0 0
    %2228 = vmatprep.subr.bf16.mxu0 0
    %2229 = vmatpush2.bf16.msra.mxu0 0
    %2230 = vmatprep.subr.bf16.mxu0 0
    %2231 = vmatpush2.bf16.msra.mxu0 0
    %2232 = vmatprep.subr.bf16.mxu0 0
    %2233 = vmatpush2.bf16.msra.mxu0 0
    %2234 = vmatprep.mubr.bf16.mxu0 0
    %2235 = vmatmul.mubr.bf16.gmra.mxu0 %v2196
    %v2236 = vpop.f32.mrf.mxu0
    %v2237 = vadd.f32 0.0, %v2236
    %v2238 = vpop.f32.mrf.mxu0
    %v2239 = vpop.f32.mrf.mxu0
    %v2240 = vpop.f32.mrf.mxu0
    %2241 = vdwg.mxu0
    %v2243 = vsel %vm2098, %v2188, 0
    %v2246 = vsel %vm2198, %v1722, 0
    %2248 = vmatprep.subr.bf16.mxu0 0
    %2249 = vmatpush1.bf16.msra.mxu0 0
    %2250 = vmatprep.subr.bf16.mxu0 0
    %2251 = vmatpush1.bf16.msra.mxu0 0
    %2252 = vmatprep.subr.bf16.mxu0 0
    %2253 = vmatpush1.bf16.msra.mxu0 0
    %2254 = vmatprep.subr.bf16.mxu0 0
    %2255 = vmatpush1.bf16.msra.mxu0 0
    %2256 = vmatprep.subr.bf16.mxu0 0
    %2257 = vmatpush1.bf16.msra.mxu0 0
    %2258 = vmatprep.subr.bf16.mxu0 0
    %2259 = vmatpush1.bf16.msra.mxu0 0
    %2260 = vmatprep.subr.bf16.mxu0 0
    %2261 = vmatpush1.bf16.msra.mxu0 0
    %2262 = vmatprep.subr.bf16.mxu0 0
    %2263 = vmatpush1.bf16.msra.mxu0 %v2246
    %2264 = vmatprep.subr.bf16.mxu0 0
    %2265 = vmatpush2.bf16.msra.mxu0 0
    %2266 = vmatprep.subr.bf16.mxu0 0
    %2267 = vmatpush2.bf16.msra.mxu0 0
    %2268 = vmatprep.subr.bf16.mxu0 0
    %2269 = vmatpush2.bf16.msra.mxu0 0
    %2270 = vmatprep.subr.bf16.mxu0 0
    %2271 = vmatpush2.bf16.msra.mxu0 0
    %2272 = vmatprep.subr.bf16.mxu0 0
    %2273 = vmatpush2.bf16.msra.mxu0 0
    %2274 = vmatprep.subr.bf16.mxu0 0
    %2275 = vmatpush2.bf16.msra.mxu0 0
    %2276 = vmatprep.subr.bf16.mxu0 0
    %2277 = vmatpush2.bf16.msra.mxu0 0
    %2278 = vmatprep.subr.bf16.mxu0 0
    %2279 = vmatpush2.bf16.msra.mxu0 0
    %2280 = vmatprep.mubr.bf16.mxu0 0
    %2281 = vmatmul.mubr.bf16.gmra.mxu0 %v2243
    %v2282 = vpop.f32.mrf.mxu0
    %v2283 = vadd.f32 0.0, %v2282
    %v2284 = vpop.f32.mrf.mxu0
    %v2285 = vpop.f32.mrf.mxu0
    %v2286 = vpop.f32.mrf.mxu0
    %2287 = vdwg.mxu0
    %v2289 = vsel %vm2098, %v2189, 0
    %v2292 = vsel %vm2198, %v1723, 0
    %2294 = vmatprep.subr.bf16.mxu0 0
    %2295 = vmatpush1.bf16.msra.mxu0 0
    %2296 = vmatprep.subr.bf16.mxu0 0
    %2297 = vmatpush1.bf16.msra.mxu0 0
    %2298 = vmatprep.subr.bf16.mxu0 0
    %2299 = vmatpush1.bf16.msra.mxu0 0
    %2300 = vmatprep.subr.bf16.mxu0 0
    %2301 = vmatpush1.bf16.msra.mxu0 0
    %2302 = vmatprep.subr.bf16.mxu0 0
    %2303 = vmatpush1.bf16.msra.mxu0 0
    %2304 = vmatprep.subr.bf16.mxu0 0
    %2305 = vmatpush1.bf16.msra.mxu0 0
    %2306 = vmatprep.subr.bf16.mxu0 0
    %2307 = vmatpush1.bf16.msra.mxu0 0
    %2308 = vmatprep.subr.bf16.mxu0 0
    %2309 = vmatpush1.bf16.msra.mxu0 %v2292
    %2310 = vmatprep.subr.bf16.mxu0 0
    %2311 = vmatpush2.bf16.msra.mxu0 0
    %2312 = vmatprep.subr.bf16.mxu0 0
    %2313 = vmatpush2.bf16.msra.mxu0 0
    %2314 = vmatprep.subr.bf16.mxu0 0
    %2315 = vmatpush2.bf16.msra.mxu0 0
    %2316 = vmatprep.subr.bf16.mxu0 0
    %2317 = vmatpush2.bf16.msra.mxu0 0
    %2318 = vmatprep.subr.bf16.mxu0 0
    %2319 = vmatpush2.bf16.msra.mxu0 0
    %2320 = vmatprep.subr.bf16.mxu0 0
    %2321 = vmatpush2.bf16.msra.mxu0 0
    %2322 = vmatprep.subr.bf16.mxu0 0
    %2323 = vmatpush2.bf16.msra.mxu0 0
    %2324 = vmatprep.subr.bf16.mxu0 0
    %2325 = vmatpush2.bf16.msra.mxu0 0
    %2326 = vmatprep.mubr.bf16.mxu0 0
    %2327 = vmatmul.mubr.bf16.gmra.mxu0 %v2289
    %v2328 = vpop.f32.mrf.mxu0
    %v2329 = vadd.f32 0.0, %v2328
    %v2330 = vpop.f32.mrf.mxu0
    %v2331 = vpop.f32.mrf.mxu0
    %v2332 = vpop.f32.mrf.mxu0
    %2333 = vdwg.mxu0
    %v2335 = vsel %vm2098, %v2190, 0
    %v2338 = vsel %vm2198, %v1724, 0
    %2340 = vmatprep.subr.bf16.mxu0 0
    %2341 = vmatpush1.bf16.msra.mxu0 0
    %2342 = vmatprep.subr.bf16.mxu0 0
    %2343 = vmatpush1.bf16.msra.mxu0 0
    %2344 = vmatprep.subr.bf16.mxu0 0
    %2345 = vmatpush1.bf16.msra.mxu0 0
    %2346 = vmatprep.subr.bf16.mxu0 0
    %2347 = vmatpush1.bf16.msra.mxu0 0
    %2348 = vmatprep.subr.bf16.mxu0 0
    %2349 = vmatpush1.bf16.msra.mxu0 0
    %2350 = vmatprep.subr.bf16.mxu0 0
    %2351 = vmatpush1.bf16.msra.mxu0 0
    %2352 = vmatprep.subr.bf16.mxu0 0
    %2353 = vmatpush1.bf16.msra.mxu0 0
    %2354 = vmatprep.subr.bf16.mxu0 0
    %2355 = vmatpush1.bf16.msra.mxu0 %v2338
    %2356 = vmatprep.subr.bf16.mxu0 0
    %2357 = vmatpush2.bf16.msra.mxu0 0
    %2358 = vmatprep.subr.bf16.mxu0 0
    %2359 = vmatpush2.bf16.msra.mxu0 0
    %2360 = vmatprep.subr.bf16.mxu0 0
    %2361 = vmatpush2.bf16.msra.mxu0 0
    %2362 = vmatprep.subr.bf16.mxu0 0
    %2363 = vmatpush2.bf16.msra.mxu0 0
    %2364 = vmatprep.subr.bf16.mxu0 0
    %2365 = vmatpush2.bf16.msra.mxu0 0
    %2366 = vmatprep.subr.bf16.mxu0 0
    %2367 = vmatpush2.bf16.msra.mxu0 0
    %2368 = vmatprep.subr.bf16.mxu0 0
    %2369 = vmatpush2.bf16.msra.mxu0 0
    %2370 = vmatprep.subr.bf16.mxu0 0
    %2371 = vmatpush2.bf16.msra.mxu0 0
    %2372 = vmatprep.mubr.bf16.mxu0 0
    %2373 = vmatmul.mubr.bf16.gmra.mxu0 %v2335
    %v2374 = vpop.f32.mrf.mxu0
    %v2375 = vadd.f32 0.0, %v2374
    %v2376 = vpop.f32.mrf.mxu0
    %v2377 = vpop.f32.mrf.mxu0
    %v2378 = vpop.f32.mrf.mxu0
    %2379 = vdwg.mxu0
    %v2381 = vsel %vm2098, %v2191, 0
    %v2384 = vsel %vm2198, %v1725, 0
    %2386 = vmatprep.subr.bf16.mxu0 0
    %2387 = vmatpush1.bf16.msra.mxu0 0
    %2388 = vmatprep.subr.bf16.mxu0 0
    %2389 = vmatpush1.bf16.msra.mxu0 0
    %2390 = vmatprep.subr.bf16.mxu0 0
    %2391 = vmatpush1.bf16.msra.mxu0 0
    %2392 = vmatprep.subr.bf16.mxu0 0
    %2393 = vmatpush1.bf16.msra.mxu0 0
    %2394 = vmatprep.subr.bf16.mxu0 0
    %2395 = vmatpush1.bf16.msra.mxu0 0
    %2396 = vmatprep.subr.bf16.mxu0 0
    %2397 = vmatpush1.bf16.msra.mxu0 0
    %2398 = vmatprep.subr.bf16.mxu0 0
    %2399 = vmatpush1.bf16.msra.mxu0 0
    %2400 = vmatprep.subr.bf16.mxu0 0
    %2401 = vmatpush1.bf16.msra.mxu0 %v2384
    %2402 = vmatprep.subr.bf16.mxu0 0
    %2403 = vmatpush2.bf16.msra.mxu0 0
    %2404 = vmatprep.subr.bf16.mxu0 0
    %2405 = vmatpush2.bf16.msra.mxu0 0
    %2406 = vmatprep.subr.bf16.mxu0 0
    %2407 = vmatpush2.bf16.msra.mxu0 0
    %2408 = vmatprep.subr.bf16.mxu0 0
    %2409 = vmatpush2.bf16.msra.mxu0 0
    %2410 = vmatprep.subr.bf16.mxu0 0
    %2411 = vmatpush2.bf16.msra.mxu0 0
    %2412 = vmatprep.subr.bf16.mxu0 0
    %2413 = vmatpush2.bf16.msra.mxu0 0
    %2414 = vmatprep.subr.bf16.mxu0 0
    %2415 = vmatpush2.bf16.msra.mxu0 0
    %2416 = vmatprep.subr.bf16.mxu0 0
    %2417 = vmatpush2.bf16.msra.mxu0 0
    %2418 = vmatprep.mubr.bf16.mxu0 0
    %2419 = vmatmul.mubr.bf16.gmra.mxu0 %v2381
    %v2420 = vpop.f32.mrf.mxu0
    %v2421 = vadd.f32 0.0, %v2420
    %v2422 = vpop.f32.mrf.mxu0
    %v2423 = vpop.f32.mrf.mxu0
    %v2424 = vpop.f32.mrf.mxu0
    %2425 = vdwg.mxu0
    %v2427 = vsel %vm2098, %v2192, 0
    %v2430 = vsel %vm2198, %v1726, 0
    %2432 = vmatprep.subr.bf16.mxu0 0
    %2433 = vmatpush1.bf16.msra.mxu0 0
    %2434 = vmatprep.subr.bf16.mxu0 0
    %2435 = vmatpush1.bf16.msra.mxu0 0
    %2436 = vmatprep.subr.bf16.mxu0 0
    %2437 = vmatpush1.bf16.msra.mxu0 0
    %2438 = vmatprep.subr.bf16.mxu0 0
    %2439 = vmatpush1.bf16.msra.mxu0 0
    %2440 = vmatprep.subr.bf16.mxu0 0
    %2441 = vmatpush1.bf16.msra.mxu0 0
    %2442 = vmatprep.subr.bf16.mxu0 0
    %2443 = vmatpush1.bf16.msra.mxu0 0
    %2444 = vmatprep.subr.bf16.mxu0 0
    %2445 = vmatpush1.bf16.msra.mxu0 0
    %2446 = vmatprep.subr.bf16.mxu0 0
    %2447 = vmatpush1.bf16.msra.mxu0 %v2430
    %2448 = vmatprep.subr.bf16.mxu0 0
    %2449 = vmatpush2.bf16.msra.mxu0 0
    %2450 = vmatprep.subr.bf16.mxu0 0
    %2451 = vmatpush2.bf16.msra.mxu0 0
    %2452 = vmatprep.subr.bf16.mxu0 0
    %2453 = vmatpush2.bf16.msra.mxu0 0
    %2454 = vmatprep.subr.bf16.mxu0 0
    %2455 = vmatpush2.bf16.msra.mxu0 0
    %2456 = vmatprep.subr.bf16.mxu0 0
    %2457 = vmatpush2.bf16.msra.mxu0 0
    %2458 = vmatprep.subr.bf16.mxu0 0
    %2459 = vmatpush2.bf16.msra.mxu0 0
    %2460 = vmatprep.subr.bf16.mxu0 0
    %2461 = vmatpush2.bf16.msra.mxu0 0
    %2462 = vmatprep.subr.bf16.mxu0 0
    %2463 = vmatpush2.bf16.msra.mxu0 0
    %2464 = vmatprep.mubr.bf16.mxu0 0
    %2465 = vmatmul.mubr.bf16.gmra.mxu0 %v2427
    %v2466 = vpop.f32.mrf.mxu0
    %v2467 = vadd.f32 0.0, %v2466
    %v2468 = vpop.f32.mrf.mxu0
    %v2469 = vpop.f32.mrf.mxu0
    %v2470 = vpop.f32.mrf.mxu0
    %2471 = vdwg.mxu0
    %v2473 = vsel %vm2098, %v2193, 0
    %v2476 = vsel %vm2198, %v1727, 0
    %2478 = vmatprep.subr.bf16.mxu0 0
    %2479 = vmatpush1.bf16.msra.mxu0 0
    %2480 = vmatprep.subr.bf16.mxu0 0
    %2481 = vmatpush1.bf16.msra.mxu0 0
    %2482 = vmatprep.subr.bf16.mxu0 0
    %2483 = vmatpush1.bf16.msra.mxu0 0
    %2484 = vmatprep.subr.bf16.mxu0 0
    %2485 = vmatpush1.bf16.msra.mxu0 0
    %2486 = vmatprep.subr.bf16.mxu0 0
    %2487 = vmatpush1.bf16.msra.mxu0 0
    %2488 = vmatprep.subr.bf16.mxu0 0
    %2489 = vmatpush1.bf16.msra.mxu0 0
    %2490 = vmatprep.subr.bf16.mxu0 0
    %2491 = vmatpush1.bf16.msra.mxu0 0
    %2492 = vmatprep.subr.bf16.mxu0 0
    %2493 = vmatpush1.bf16.msra.mxu0 %v2476
    %2494 = vmatprep.subr.bf16.mxu0 0
    %2495 = vmatpush2.bf16.msra.mxu0 0
    %2496 = vmatprep.subr.bf16.mxu0 0
    %2497 = vmatpush2.bf16.msra.mxu0 0
    %2498 = vmatprep.subr.bf16.mxu0 0
    %2499 = vmatpush2.bf16.msra.mxu0 0
    %2500 = vmatprep.subr.bf16.mxu0 0
    %2501 = vmatpush2.bf16.msra.mxu0 0
    %2502 = vmatprep.subr.bf16.mxu0 0
    %2503 = vmatpush2.bf16.msra.mxu0 0
    %2504 = vmatprep.subr.bf16.mxu0 0
    %2505 = vmatpush2.bf16.msra.mxu0 0
    %2506 = vmatprep.subr.bf16.mxu0 0
    %2507 = vmatpush2.bf16.msra.mxu0 0
    %2508 = vmatprep.subr.bf16.mxu0 0
    %2509 = vmatpush2.bf16.msra.mxu0 0
    %2510 = vmatprep.mubr.bf16.mxu0 0
    %2511 = vmatmul.mubr.bf16.gmra.mxu0 %v2473
    %v2512 = vpop.f32.mrf.mxu0
    %v2513 = vadd.f32 0.0, %v2512
    %v2514 = vpop.f32.mrf.mxu0
    %v2515 = vpop.f32.mrf.mxu0
    %v2516 = vpop.f32.mrf.mxu0
    %2517 = vdwg.mxu0
    %v2519 = vsel %vm2098, %v2194, 0
    %v2522 = vsel %vm2198, %v1728, 0
    %2524 = vmatprep.subr.bf16.mxu0 0
    %2525 = vmatpush1.bf16.msra.mxu0 0
    %2526 = vmatprep.subr.bf16.mxu0 0
    %2527 = vmatpush1.bf16.msra.mxu0 0
    %2528 = vmatprep.subr.bf16.mxu0 0
    %2529 = vmatpush1.bf16.msra.mxu0 0
    %2530 = vmatprep.subr.bf16.mxu0 0
    %2531 = vmatpush1.bf16.msra.mxu0 0
    %2532 = vmatprep.subr.bf16.mxu0 0
    %2533 = vmatpush1.bf16.msra.mxu0 0
    %2534 = vmatprep.subr.bf16.mxu0 0
    %2535 = vmatpush1.bf16.msra.mxu0 0
    %2536 = vmatprep.subr.bf16.mxu0 0
    %2537 = vmatpush1.bf16.msra.mxu0 0
    %2538 = vmatprep.subr.bf16.mxu0 0
    %2539 = vmatpush1.bf16.msra.mxu0 %v2522
    %2540 = vmatprep.subr.bf16.mxu0 0
    %2541 = vmatpush2.bf16.msra.mxu0 0
    %2542 = vmatprep.subr.bf16.mxu0 0
    %2543 = vmatpush2.bf16.msra.mxu0 0
    %2544 = vmatprep.subr.bf16.mxu0 0
    %2545 = vmatpush2.bf16.msra.mxu0 0
    %2546 = vmatprep.subr.bf16.mxu0 0
    %2547 = vmatpush2.bf16.msra.mxu0 0
    %2548 = vmatprep.subr.bf16.mxu0 0
    %2549 = vmatpush2.bf16.msra.mxu0 0
    %2550 = vmatprep.subr.bf16.mxu0 0
    %2551 = vmatpush2.bf16.msra.mxu0 0
    %2552 = vmatprep.subr.bf16.mxu0 0
    %2553 = vmatpush2.bf16.msra.mxu0 0
    %2554 = vmatprep.subr.bf16.mxu0 0
    %2555 = vmatpush2.bf16.msra.mxu0 0
    %2556 = vmatprep.mubr.bf16.mxu0 0
    %2557 = vmatmul.mubr.bf16.gmra.mxu0 %v2519
    %v2558 = vpop.f32.mrf.mxu0
    %v2559 = vadd.f32 0.0, %v2558
    %v2560 = vpop.f32.mrf.mxu0
    %v2561 = vpop.f32.mrf.mxu0
    %v2562 = vpop.f32.mrf.mxu0
    %2563 = vdwg.mxu0
    %v2564 = vcombine.low %v2237, %v2329
    %v2565 = vcombine.high %v2237, %v2329
    %v2567 = vunpack.c.l.s4 1983009808
    %v2568 = vunpack.c.0.s8 %v2567
    %v2569 = vlaneseq
    %v2570 = vshrl.u32 %v2569, 7
    %v2571 = vsub.s32 %v2568, %v2570
    %v2572 = vrot.slane %v2564, %v2571
    %v2574 = vunpack.c.l.s4 1983009808
    %v2575 = vunpack.c.0.s8 %v2574
    %v2576 = vlaneseq
    %v2577 = vshrl.u32 %v2576, 7
    %v2578 = vsub.s32 %v2575, %v2577
    %v2579 = vrot.slane %v2565, %v2578
    %v2580 = vcombine.low %v2283, %v2375
    %v2581 = vcombine.high %v2283, %v2375
    %v2583 = vunpack.c.l.s4 1983009808
    %v2584 = vunpack.c.0.s8 %v2583
    %v2585 = vlaneseq
    %v2586 = vshrl.u32 %v2585, 7
    %v2587 = vsub.s32 %v2584, %v2586
    %v2588 = vrot.slane %v2580, %v2587
    %v2590 = vunpack.c.l.s4 1983009808
    %v2591 = vunpack.c.0.s8 %v2590
    %v2592 = vlaneseq
    %v2593 = vshrl.u32 %v2592, 7
    %v2594 = vsub.s32 %v2591, %v2593
    %v2595 = vrot.slane %v2581, %v2594
    %v2596 = vcombine.low %v2572, %v2588
    %v2597 = vcombine.high %v2572, %v2588
    %v2599 = vunpack.c.l.s4 1934713408
    %v2600 = vunpack.c.0.s8 %v2599
    %v2601 = vlaneseq
    %v2602 = vshrl.u32 %v2601, 7
    %v2603 = vsub.s32 %v2600, %v2602
    %v2604 = vrot.slane %v2596, %v2603
    %v2606 = vunpack.c.l.s4 1934713408
    %v2607 = vunpack.c.0.s8 %v2606
    %v2608 = vlaneseq
    %v2609 = vshrl.u32 %v2608, 7
    %v2610 = vsub.s32 %v2607, %v2609
    %v2611 = vrot.slane %v2597, %v2610
    %v2612 = vcombine.low %v2579, %v2595
    %v2613 = vcombine.high %v2579, %v2595
    %v2615 = vunpack.c.l.s4 1934713408
    %v2616 = vunpack.c.0.s8 %v2615
    %v2617 = vlaneseq
    %v2618 = vshrl.u32 %v2617, 7
    %v2619 = vsub.s32 %v2616, %v2618
    %v2620 = vrot.slane %v2612, %v2619
    %v2622 = vunpack.c.l.s4 1934713408
    %v2623 = vunpack.c.0.s8 %v2622
    %v2624 = vlaneseq
    %v2625 = vshrl.u32 %v2624, 7
    %v2626 = vsub.s32 %v2623, %v2625
    %v2627 = vrot.slane %v2613, %v2626
    %v2628 = vcombine.high %v2604, 0.0
    %v2629 = vcombine.high %v2611, 0.0
    %v2630 = vcombine.high %v2620, 0.0
    %v2631 = vcombine.high %v2627, 0.0
    %v2632 = vcombine.low %v2421, %v2513
    %v2633 = vcombine.high %v2421, %v2513
    %v2635 = vunpack.c.l.s4 1983009808
    %v2636 = vunpack.c.0.s8 %v2635
    %v2637 = vlaneseq
    %v2638 = vshrl.u32 %v2637, 7
    %v2639 = vsub.s32 %v2636, %v2638
    %v2640 = vrot.slane %v2632, %v2639
    %v2642 = vunpack.c.l.s4 1983009808
    %v2643 = vunpack.c.0.s8 %v2642
    %v2644 = vlaneseq
    %v2645 = vshrl.u32 %v2644, 7
    %v2646 = vsub.s32 %v2643, %v2645
    %v2647 = vrot.slane %v2633, %v2646
    %v2648 = vcombine.low %v2467, %v2559
    %v2649 = vcombine.high %v2467, %v2559
    %v2651 = vunpack.c.l.s4 1983009808
    %v2652 = vunpack.c.0.s8 %v2651
    %v2653 = vlaneseq
    %v2654 = vshrl.u32 %v2653, 7
    %v2655 = vsub.s32 %v2652, %v2654
    %v2656 = vrot.slane %v2648, %v2655
    %v2658 = vunpack.c.l.s4 1983009808
    %v2659 = vunpack.c.0.s8 %v2658
    %v2660 = vlaneseq
    %v2661 = vshrl.u32 %v2660, 7
    %v2662 = vsub.s32 %v2659, %v2661
    %v2663 = vrot.slane %v2649, %v2662
    %v2664 = vcombine.low %v2640, %v2656
    %v2665 = vcombine.high %v2640, %v2656
    %v2667 = vunpack.c.l.s4 1934713408
    %v2668 = vunpack.c.0.s8 %v2667
    %v2669 = vlaneseq
    %v2670 = vshrl.u32 %v2669, 7
    %v2671 = vsub.s32 %v2668, %v2670
    %v2672 = vrot.slane %v2664, %v2671
    %v2674 = vunpack.c.l.s4 1934713408
    %v2675 = vunpack.c.0.s8 %v2674
    %v2676 = vlaneseq
    %v2677 = vshrl.u32 %v2676, 7
    %v2678 = vsub.s32 %v2675, %v2677
    %v2679 = vrot.slane %v2665, %v2678
    %v2680 = vcombine.low %v2647, %v2663
    %v2681 = vcombine.high %v2647, %v2663
    %v2683 = vunpack.c.l.s4 1934713408
    %v2684 = vunpack.c.0.s8 %v2683
    %v2685 = vlaneseq
    %v2686 = vshrl.u32 %v2685, 7
    %v2687 = vsub.s32 %v2684, %v2686
    %v2688 = vrot.slane %v2680, %v2687
    %v2690 = vunpack.c.l.s4 1934713408
    %v2691 = vunpack.c.0.s8 %v2690
    %v2692 = vlaneseq
    %v2693 = vshrl.u32 %v2692, 7
    %v2694 = vsub.s32 %v2691, %v2693
    %v2695 = vrot.slane %v2681, %v2694
    %v2696 = vcombine.high %v2672, 0.0
    %v2697 = vcombine.high %v2679, 0.0
    %v2698 = vcombine.high %v2688, 0.0
    %v2699 = vcombine.high %v2695, 0.0
    %v2700 = vcombine.low %v2604, %v2628
    %v2702 = vunpack.c.l.s4 1983009808
    %v2703 = vunpack.c.0.s8 %v2702
    %v2704 = vlaneseq
    %v2705 = vshrl.u32 %v2704, 7
    %v2706 = vsub.s32 %v2703, %v2705
    %v2707 = vrot.slane %v2700, %v2706
    %v2708 = vcombine.low %v2672, %v2696
    %v2710 = vunpack.c.l.s4 1983009808
    %v2711 = vunpack.c.0.s8 %v2710
    %v2712 = vlaneseq
    %v2713 = vshrl.u32 %v2712, 7
    %v2714 = vsub.s32 %v2711, %v2713
    %v2715 = vrot.slane %v2708, %v2714
    %v2716 = vcombine.low %v2611, %v2629
    %v2718 = vunpack.c.l.s4 1983009808
    %v2719 = vunpack.c.0.s8 %v2718
    %v2720 = vlaneseq
    %v2721 = vshrl.u32 %v2720, 7
    %v2722 = vsub.s32 %v2719, %v2721
    %v2723 = vrot.slane %v2716, %v2722
    %v2724 = vcombine.low %v2679, %v2697
    %v2726 = vunpack.c.l.s4 1983009808
    %v2727 = vunpack.c.0.s8 %v2726
    %v2728 = vlaneseq
    %v2729 = vshrl.u32 %v2728, 7
    %v2730 = vsub.s32 %v2727, %v2729
    %v2731 = vrot.slane %v2724, %v2730
    %v2732 = vcombine.low %v2707, %v2715
    %v2733 = vcombine.high %v2707, %v2715
    %v2735 = vunpack.c.l.s4 1934713408
    %v2736 = vunpack.c.0.s8 %v2735
    %v2737 = vlaneseq
    %v2738 = vshrl.u32 %v2737, 7
    %v2739 = vsub.s32 %v2736, %v2738
    %v2740 = vrot.slane %v2732, %v2739
    %v2742 = vunpack.c.l.s4 1934713408
    %v2743 = vunpack.c.0.s8 %v2742
    %v2744 = vlaneseq
    %v2745 = vshrl.u32 %v2744, 7
    %v2746 = vsub.s32 %v2743, %v2745
    %v2747 = vrot.slane %v2733, %v2746
    %v2748 = vcombine.low %v2723, %v2731
    %v2749 = vcombine.high %v2723, %v2731
    %v2751 = vunpack.c.l.s4 1934713408
    %v2752 = vunpack.c.0.s8 %v2751
    %v2753 = vlaneseq
    %v2754 = vshrl.u32 %v2753, 7
    %v2755 = vsub.s32 %v2752, %v2754
    %v2756 = vrot.slane %v2748, %v2755
    %v2758 = vunpack.c.l.s4 1934713408
    %v2759 = vunpack.c.0.s8 %v2758
    %v2760 = vlaneseq
    %v2761 = vshrl.u32 %v2760, 7
    %v2762 = vsub.s32 %v2759, %v2761
    %v2763 = vrot.slane %v2749, %v2762
    %v2764 = vcombine.low %v2740, %v2756
    %v2765 = vcombine.high %v2740, %v2756
    %v2766 = vcombine.low %v2747, %v2763
    %v2767 = vcombine.high %v2747, %v2763
    %v2768 = vcombine.low %v2620, %v2630
    %v2770 = vunpack.c.l.s4 1983009808
    %v2771 = vunpack.c.0.s8 %v2770
    %v2772 = vlaneseq
    %v2773 = vshrl.u32 %v2772, 7
    %v2774 = vsub.s32 %v2771, %v2773
    %v2775 = vrot.slane %v2768, %v2774
    %v2776 = vcombine.low %v2688, %v2698
    %v2778 = vunpack.c.l.s4 1983009808
    %v2779 = vunpack.c.0.s8 %v2778
    %v2780 = vlaneseq
    %v2781 = vshrl.u32 %v2780, 7
    %v2782 = vsub.s32 %v2779, %v2781
    %v2783 = vrot.slane %v2776, %v2782
    %v2784 = vcombine.low %v2627, %v2631
    %v2786 = vunpack.c.l.s4 1983009808
    %v2787 = vunpack.c.0.s8 %v2786
    %v2788 = vlaneseq
    %v2789 = vshrl.u32 %v2788, 7
    %v2790 = vsub.s32 %v2787, %v2789
    %v2791 = vrot.slane %v2784, %v2790
    %v2792 = vcombine.low %v2695, %v2699
    %v2794 = vunpack.c.l.s4 1983009808
    %v2795 = vunpack.c.0.s8 %v2794
    %v2796 = vlaneseq
    %v2797 = vshrl.u32 %v2796, 7
    %v2798 = vsub.s32 %v2795, %v2797
    %v2799 = vrot.slane %v2792, %v2798
    %v2800 = vcombine.low %v2775, %v2783
    %v2801 = vcombine.high %v2775, %v2783
    %v2803 = vunpack.c.l.s4 1934713408
    %v2804 = vunpack.c.0.s8 %v2803
    %v2805 = vlaneseq
    %v2806 = vshrl.u32 %v2805, 7
    %v2807 = vsub.s32 %v2804, %v2806
    %v2808 = vrot.slane %v2800, %v2807
    %v2810 = vunpack.c.l.s4 1934713408
    %v2811 = vunpack.c.0.s8 %v2810
    %v2812 = vlaneseq
    %v2813 = vshrl.u32 %v2812, 7
    %v2814 = vsub.s32 %v2811, %v2813
    %v2815 = vrot.slane %v2801, %v2814
    %v2816 = vcombine.low %v2791, %v2799
    %v2817 = vcombine.high %v2791, %v2799
    %v2819 = vunpack.c.l.s4 1934713408
    %v2820 = vunpack.c.0.s8 %v2819
    %v2821 = vlaneseq
    %v2822 = vshrl.u32 %v2821, 7
    %v2823 = vsub.s32 %v2820, %v2822
    %v2824 = vrot.slane %v2816, %v2823
    %v2826 = vunpack.c.l.s4 1934713408
    %v2827 = vunpack.c.0.s8 %v2826
    %v2828 = vlaneseq
    %v2829 = vshrl.u32 %v2828, 7
    %v2830 = vsub.s32 %v2827, %v2829
    %v2831 = vrot.slane %v2817, %v2830
    %v2832 = vcombine.low %v2808, %v2824
    %v2833 = vcombine.high %v2808, %v2824
    %v2834 = vcombine.low %v2815, %v2831
    %v2835 = vcombine.high %v2815, %v2831
    %2838 = vrot.lane.b32.xlu0 %v2765, 32
    %v2839 = vpop.permute.xlu0 %2838
    %2840 = vrot.lane.b32.xlu0 %v2833, 32
    %v2841 = vpop.permute.xlu0 %2840
    %2846 = vrot.lane.b32.xlu0 %v2766, 64
    %v2847 = vpop.permute.xlu0 %2846
    %2848 = vrot.lane.b32.xlu0 %v2834, 64
    %v2849 = vpop.permute.xlu0 %2848
    %2854 = vrot.lane.b32.xlu0 %v2767, 96
    %v2855 = vpop.permute.xlu0 %2854
    %2856 = vrot.lane.b32.xlu0 %v2835, 96
    %v2857 = vpop.permute.xlu0 %2856
    %v2860 = vsel %vm1729, %v2764, %v2839
    %v2861 = vsel %vm1729, %v2832, %v2841
    %vm2862 = vcmask 523264
    %v2863 = vsel %vm2862, %v2860, %v2847
    %v2864 = vsel %vm2862, %v2861, %v2849
    %vm2865 = vcmask 785408
    %v2866 = vsel %vm2865, %v2863, %v2855
    %v2867 = vsel %vm2865, %v2864, %v2857
    %v2868 = vpack.c.bf16 %v2867, %v2866
    %v2869 = vld [vmem:[#allocation10] sm:$0xf]
    %v2870 = vld [vmem:[#allocation10 + $0x4] sm:$0xf]
    %v2871 = vld [vmem:[#allocation10 + $0x8] sm:$0xf]
    %v2872 = vld [vmem:[#allocation10 + $0xc] sm:$0xf]
    %v2873 = vld [vmem:[#allocation10 + $0x10] sm:$0xf]
    %v2874 = vld [vmem:[#allocation10 + $0x14] sm:$0xf]
    %v2875 = vld [vmem:[#allocation10 + $0x18] sm:$0xf]
    %v2876 = vld [vmem:[#allocation10 + $0x1c] sm:$0xf]
    %v2877 = vld [vmem:[#allocation10 + $0x20] sm:$0xf]
    %v2878 = vld [vmem:[#allocation10 + $0x24] sm:$0xf]
    %v2879 = vld [vmem:[#allocation10 + $0x28] sm:$0xf]
    %v2880 = vld [vmem:[#allocation10 + $0x2c] sm:$0xf]
    %v2881 = vld [vmem:[#allocation10 + $0x30] sm:$0xf]
    %v2882 = vld [vmem:[#allocation10 + $0x34] sm:$0xf]
    %v2883 = vld [vmem:[#allocation10 + $0x38] sm:$0xf]
    %v2884 = vld [vmem:[#allocation10 + $0x3c] sm:$0xf]
    %v2885 = vld [vmem:[%s6] sm:$0x1]
    %v2887 = vlaneseq
    %v2888 = vshrl.u32 %v2887, 7
    %v2889 = vsub.s32 0, %v2888
    %v2890 = vrot.slane %v2885, %v2889
    %v2908 = vunpack.c.l.b16 %v2869
    %v2909 = vunpack.c.l.b16 %v2870
    %v2910 = vunpack.c.l.b16 %v2871
    %v2911 = vunpack.c.l.b16 %v2872
    %v2912 = vunpack.c.l.b16 %v2873
    %v2913 = vunpack.c.l.b16 %v2874
    %v2914 = vunpack.c.l.b16 %v2875
    %v2915 = vunpack.c.l.b16 %v2876
    %v2916 = vunpack.c.l.b16 %v2877
    %v2917 = vunpack.c.l.b16 %v2878
    %v2918 = vunpack.c.l.b16 %v2879
    %v2919 = vunpack.c.l.b16 %v2880
    %v2920 = vunpack.c.l.b16 %v2881
    %v2921 = vunpack.c.l.b16 %v2882
    %v2922 = vunpack.c.l.b16 %v2883
    %v2923 = vunpack.c.l.b16 %v2884
    %v2924 = vpack.c.b16 %v2909, %v2908
    %v2925 = vpack.c.b16 %v2911, %v2910
    %v2926 = vpack.c.b16 %v2913, %v2912
    %v2927 = vpack.c.b16 %v2915, %v2914
    %v2928 = vpack.c.b16 %v2917, %v2916
    %v2929 = vpack.c.b16 %v2919, %v2918
    %v2930 = vpack.c.b16 %v2921, %v2920
    %v2931 = vpack.c.b16 %v2923, %v2922
    %2940 = vmatprep.subr.bf16.mxu0 0
    %2941 = vmatpush1.bf16.msra.mxu0 %v2931
    %2942 = vmatprep.subr.bf16.mxu0 0
    %2943 = vmatpush1.bf16.msra.mxu0 %v2930
    %2944 = vmatprep.subr.bf16.mxu0 0
    %2945 = vmatpush1.bf16.msra.mxu0 %v2929
    %2946 = vmatprep.subr.bf16.mxu0 0
    %2947 = vmatpush1.bf16.msra.mxu0 %v2928
    %2948 = vmatprep.subr.bf16.mxu0 0
    %2949 = vmatpush1.bf16.msra.mxu0 %v2927
    %2950 = vmatprep.subr.bf16.mxu0 0
    %2951 = vmatpush1.bf16.msra.mxu0 %v2926
    %2952 = vmatprep.subr.bf16.mxu0 0
    %2953 = vmatpush1.bf16.msra.mxu0 %v2925
    %2954 = vmatprep.subr.bf16.mxu0 0
    %2955 = vmatpush1.bf16.msra.mxu0 %v2924
    %2956 = vmatprep.subr.bf16.mxu0 0
    %2957 = vmatpush2.bf16.msra.mxu0 0
    %2958 = vmatprep.subr.bf16.mxu0 0
    %2959 = vmatpush2.bf16.msra.mxu0 0
    %2960 = vmatprep.subr.bf16.mxu0 0
    %2961 = vmatpush2.bf16.msra.mxu0 0
    %2962 = vmatprep.subr.bf16.mxu0 0
    %2963 = vmatpush2.bf16.msra.mxu0 0
    %2964 = vmatprep.subr.bf16.mxu0 0
    %2965 = vmatpush2.bf16.msra.mxu0 0
    %2966 = vmatprep.subr.bf16.mxu0 0
    %2967 = vmatpush2.bf16.msra.mxu0 0
    %2968 = vmatprep.subr.bf16.mxu0 0
    %2969 = vmatpush2.bf16.msra.mxu0 0
    %2970 = vmatprep.subr.bf16.mxu0 0
    %2971 = vmatpush2.bf16.msra.mxu0 0
    %2972 = vmatprep.mubr.bf16.mxu0 0
    %2973 = vmatmul.mubr.bf16.gmra.mxu0 %v2868
    %v2974 = vpop.f32.mrf.mxu0
    %v2975 = vadd.f32 %v2890, %v2974
    %v2976 = vpop.f32.mrf.mxu0
    %v2977 = vpop.f32.mrf.mxu0
    %v2978 = vadd.f32 %v2890, %v2977
    %v2979 = vpop.f32.mrf.mxu0
    %2980 = vdwg.mxu0
    %v2983 = vcombine.high %v2975, %v2975
    %v2985 = vunpack.c.l.s4 1983009808
    %v2986 = vunpack.c.0.s8 %v2985
    %v2987 = vlaneseq
    %v2988 = vshrl.u32 %v2987, 7
    %v2989 = vsub.s32 %v2986, %v2988
    %v2990 = vrot.slane %v2975, %v2989
    %v2992 = vunpack.c.l.s4 1983009808
    %v2993 = vunpack.c.0.s8 %v2992
    %v2994 = vlaneseq
    %v2995 = vshrl.u32 %v2994, 7
    %v2996 = vsub.s32 %v2993, %v2995
    %v2997 = vrot.slane %v2983, %v2996
    %v2998 = vcombine.high %v2990, %v2990
    %v2999 = vcombine.high %v2997, %v2997
    %v3000 = vcombine.high %v2978, %v2978
    %v3002 = vunpack.c.l.s4 1983009808
    %v3003 = vunpack.c.0.s8 %v3002
    %v3004 = vlaneseq
    %v3005 = vshrl.u32 %v3004, 7
    %v3006 = vsub.s32 %v3003, %v3005
    %v3007 = vrot.slane %v2978, %v3006
    %v3009 = vunpack.c.l.s4 1983009808
    %v3010 = vunpack.c.0.s8 %v3009
    %v3011 = vlaneseq
    %v3012 = vshrl.u32 %v3011, 7
    %v3013 = vsub.s32 %v3010, %v3012
    %v3014 = vrot.slane %v3000, %v3013
    %v3015 = vcombine.high %v3007, %v3007
    %v3016 = vcombine.high %v3014, %v3014
    %v3025 = vadd.f32 %v182, %v2990
    %v3026 = vadd.f32 %v183, %v2998
    %v3027 = vadd.f32 %v184, %v2997
    %v3028 = vadd.f32 %v185, %v2999
    %v3029 = vadd.f32 %v186, %v3007
    %v3030 = vadd.f32 %v187, %v3015
    %v3031 = vadd.f32 %v188, %v3014
    %v3032 = vadd.f32 %v189, %v3016
    %v3041 = vcombine.low %v3025, %v3026
    %v3042 = vcombine.low %v3027, %v3028
    %v3044 = vunpack.c.l.s4 1983009808
    %v3045 = vunpack.c.0.s8 %v3044
    %v3046 = vlaneseq
    %v3047 = vshrl.u32 %v3046, 7
    %v3048 = vsub.s32 %v3045, %v3047
    %v3049 = vrot.slane %v3041, %v3048
    %v3051 = vunpack.c.l.s4 1983009808
    %v3052 = vunpack.c.0.s8 %v3051
    %v3053 = vlaneseq
    %v3054 = vshrl.u32 %v3053, 7
    %v3055 = vsub.s32 %v3052, %v3054
    %v3056 = vrot.slane %v3042, %v3055
    %v3057 = vcombine.low %v3049, %v3056
    %v3058 = vcombine.low %v3029, %v3030
    %v3059 = vcombine.low %v3031, %v3032
    %v3061 = vunpack.c.l.s4 1983009808
    %v3062 = vunpack.c.0.s8 %v3061
    %v3063 = vlaneseq
    %v3064 = vshrl.u32 %v3063, 7
    %v3065 = vsub.s32 %v3062, %v3064
    %v3066 = vrot.slane %v3058, %v3065
    %v3068 = vunpack.c.l.s4 1983009808
    %v3069 = vunpack.c.0.s8 %v3068
    %v3070 = vlaneseq
    %v3071 = vshrl.u32 %v3070, 7
    %v3072 = vsub.s32 %v3069, %v3071
    %v3073 = vrot.slane %v3059, %v3072
    %v3074 = vcombine.low %v3066, %v3073
    %3077 = vadd.xlane.f32.xlu0 %v3057
    %v3078 = vpop.xlane.xlu0 %3077
    %3079 = vadd.xlane.f32.xlu0 %v3074
    %v3080 = vpop.xlane.xlu0 %3079
    %v3081 = vmul.f32 %v3078, %v238
    %v3082 = vmul.f32 %v3080, %v238
    %v3086 = vunpack.c.l.s4 269488144
    %v3087 = vunpack.c.0.s8 %v3086
    %v3088 = vlaneseq
    %v3089 = vshrl.u32 %v3088, 7
    %v3090 = vsub.s32 %v3087, %v3089
    %v3091 = vrot.slane %v3081, %v3090
    %v3093 = vunpack.c.l.s4 842150450
    %v3094 = vunpack.c.0.s8 %v3093
    %v3095 = vlaneseq
    %v3096 = vshrl.u32 %v3095, 7
    %v3097 = vsub.s32 %v3094, %v3096
    %v3098 = vrot.slane %v3081, %v3097
    %v3100 = vunpack.c.l.s4 1414812756
    %v3101 = vunpack.c.0.s8 %v3100
    %v3102 = vlaneseq
    %v3103 = vshrl.u32 %v3102, 7
    %v3104 = vsub.s32 %v3101, %v3103
    %v3105 = vrot.slane %v3081, %v3104
    %v3107 = vunpack.c.l.s4 1987475062
    %v3108 = vunpack.c.0.s8 %v3107
    %v3109 = vlaneseq
    %v3110 = vshrl.u32 %v3109, 7
    %v3111 = vsub.s32 %v3108, %v3110
    %v3112 = vrot.slane %v3081, %v3111
    %v3114 = vunpack.c.l.s4 269488144
    %v3115 = vunpack.c.0.s8 %v3114
    %v3116 = vlaneseq
    %v3117 = vshrl.u32 %v3116, 7
    %v3118 = vsub.s32 %v3115, %v3117
    %v3119 = vrot.slane %v3082, %v3118
    %v3121 = vunpack.c.l.s4 842150450
    %v3122 = vunpack.c.0.s8 %v3121
    %v3123 = vlaneseq
    %v3124 = vshrl.u32 %v3123, 7
    %v3125 = vsub.s32 %v3122, %v3124
    %v3126 = vrot.slane %v3082, %v3125
    %v3128 = vunpack.c.l.s4 1414812756
    %v3129 = vunpack.c.0.s8 %v3128
    %v3130 = vlaneseq
    %v3131 = vshrl.u32 %v3130, 7
    %v3132 = vsub.s32 %v3129, %v3131
    %v3133 = vrot.slane %v3082, %v3132
    %v3135 = vunpack.c.l.s4 1987475062
    %v3136 = vunpack.c.0.s8 %v3135
    %v3137 = vlaneseq
    %v3138 = vshrl.u32 %v3137, 7
    %v3139 = vsub.s32 %v3136, %v3138
    %v3140 = vrot.slane %v3082, %v3139
    %v3149 = vsub.f32 %v3025, %v3091
    %v3150 = vsub.f32 %v3026, %v3098
    %v3151 = vsub.f32 %v3027, %v3105
    %v3152 = vsub.f32 %v3028, %v3112
    %v3153 = vsub.f32 %v3029, %v3119
    %v3154 = vsub.f32 %v3030, %v3126
    %v3155 = vsub.f32 %v3031, %v3133
    %v3156 = vsub.f32 %v3032, %v3140
    %v3157 = vmul.f32 %v3149, %v3149
    %v3158 = vmul.f32 %v3150, %v3150
    %v3159 = vmul.f32 %v3151, %v3151
    %v3160 = vmul.f32 %v3152, %v3152
    %v3161 = vmul.f32 %v3153, %v3153
    %v3162 = vmul.f32 %v3154, %v3154
    %v3163 = vmul.f32 %v3155, %v3155
    %v3164 = vmul.f32 %v3156, %v3156
    %v3173 = vcombine.low %v3157, %v3158
    %v3174 = vcombine.low %v3159, %v3160
    %v3176 = vunpack.c.l.s4 1983009808
    %v3177 = vunpack.c.0.s8 %v3176
    %v3178 = vlaneseq
    %v3179 = vshrl.u32 %v3178, 7
    %v3180 = vsub.s32 %v3177, %v3179
    %v3181 = vrot.slane %v3173, %v3180
    %v3183 = vunpack.c.l.s4 1983009808
    %v3184 = vunpack.c.0.s8 %v3183
    %v3185 = vlaneseq
    %v3186 = vshrl.u32 %v3185, 7
    %v3187 = vsub.s32 %v3184, %v3186
    %v3188 = vrot.slane %v3174, %v3187
    %v3189 = vcombine.low %v3181, %v3188
    %v3190 = vcombine.low %v3161, %v3162
    %v3191 = vcombine.low %v3163, %v3164
    %v3193 = vunpack.c.l.s4 1983009808
    %v3194 = vunpack.c.0.s8 %v3193
    %v3195 = vlaneseq
    %v3196 = vshrl.u32 %v3195, 7
    %v3197 = vsub.s32 %v3194, %v3196
    %v3198 = vrot.slane %v3190, %v3197
    %v3200 = vunpack.c.l.s4 1983009808
    %v3201 = vunpack.c.0.s8 %v3200
    %v3202 = vlaneseq
    %v3203 = vshrl.u32 %v3202, 7
    %v3204 = vsub.s32 %v3201, %v3203
    %v3205 = vrot.slane %v3191, %v3204
    %v3206 = vcombine.low %v3198, %v3205
    %3209 = vadd.xlane.f32.xlu0 %v3189
    %v3210 = vpop.xlane.xlu0 %3209
    %3211 = vadd.xlane.f32.xlu0 %v3206
    %v3212 = vpop.xlane.xlu0 %3211
    %v3213 = vmul.f32 %v3210, %v238
    %v3214 = vmul.f32 %v3212, %v238
    %v3215 = vadd.f32 %v3213, 1e-05
    %v3216 = vadd.f32 %v3214, 1e-05
    %v3217 = vrsqrt.pop %v3215
    %v3218 = vrsqrt.pop %v3216
    %v3222 = vunpack.c.l.s4 269488144
    %v3223 = vunpack.c.0.s8 %v3222
    %v3224 = vlaneseq
    %v3225 = vshrl.u32 %v3224, 7
    %v3226 = vsub.s32 %v3223, %v3225
    %v3227 = vrot.slane %v3217, %v3226
    %v3229 = vunpack.c.l.s4 842150450
    %v3230 = vunpack.c.0.s8 %v3229
    %v3231 = vlaneseq
    %v3232 = vshrl.u32 %v3231, 7
    %v3233 = vsub.s32 %v3230, %v3232
    %v3234 = vrot.slane %v3217, %v3233
    %v3236 = vunpack.c.l.s4 1414812756
    %v3237 = vunpack.c.0.s8 %v3236
    %v3238 = vlaneseq
    %v3239 = vshrl.u32 %v3238, 7
    %v3240 = vsub.s32 %v3237, %v3239
    %v3241 = vrot.slane %v3217, %v3240
    %v3243 = vunpack.c.l.s4 1987475062
    %v3244 = vunpack.c.0.s8 %v3243
    %v3245 = vlaneseq
    %v3246 = vshrl.u32 %v3245, 7
    %v3247 = vsub.s32 %v3244, %v3246
    %v3248 = vrot.slane %v3217, %v3247
    %v3250 = vunpack.c.l.s4 269488144
    %v3251 = vunpack.c.0.s8 %v3250
    %v3252 = vlaneseq
    %v3253 = vshrl.u32 %v3252, 7
    %v3254 = vsub.s32 %v3251, %v3253
    %v3255 = vrot.slane %v3218, %v3254
    %v3257 = vunpack.c.l.s4 842150450
    %v3258 = vunpack.c.0.s8 %v3257
    %v3259 = vlaneseq
    %v3260 = vshrl.u32 %v3259, 7
    %v3261 = vsub.s32 %v3258, %v3260
    %v3262 = vrot.slane %v3218, %v3261
    %v3264 = vunpack.c.l.s4 1414812756
    %v3265 = vunpack.c.0.s8 %v3264
    %v3266 = vlaneseq
    %v3267 = vshrl.u32 %v3266, 7
    %v3268 = vsub.s32 %v3265, %v3267
    %v3269 = vrot.slane %v3218, %v3268
    %v3271 = vunpack.c.l.s4 1987475062
    %v3272 = vunpack.c.0.s8 %v3271
    %v3273 = vlaneseq
    %v3274 = vshrl.u32 %v3273, 7
    %v3275 = vsub.s32 %v3272, %v3274
    %v3276 = vrot.slane %v3218, %v3275
    %v3285 = vmul.f32 %v3149, %v3227
    %v3286 = vmul.f32 %v3150, %v3234
    %v3287 = vmul.f32 %v3151, %v3241
    %v3288 = vmul.f32 %v3152, %v3248
    %v3289 = vmul.f32 %v3153, %v3255
    %v3290 = vmul.f32 %v3154, %v3262
    %v3291 = vmul.f32 %v3155, %v3269
    %v3292 = vmul.f32 %v3156, %v3276
    %v3293 = vld [vmem:[%s7] sm:$0x1]
    %v3295 = vlaneseq
    %v3296 = vshrl.u32 %v3295, 7
    %v3297 = vsub.s32 0, %v3296
    %v3298 = vrot.slane %v3293, %v3297
    %v3299 = vcombine.high %v3298, %v3298
    %v3301 = vunpack.c.l.s4 1983009808
    %v3302 = vunpack.c.0.s8 %v3301
    %v3303 = vlaneseq
    %v3304 = vshrl.u32 %v3303, 7
    %v3305 = vsub.s32 %v3302, %v3304
    %v3306 = vrot.slane %v3298, %v3305
    %v3308 = vunpack.c.l.s4 1983009808
    %v3309 = vunpack.c.0.s8 %v3308
    %v3310 = vlaneseq
    %v3311 = vshrl.u32 %v3310, 7
    %v3312 = vsub.s32 %v3309, %v3311
    %v3313 = vrot.slane %v3299, %v3312
    %v3314 = vcombine.high %v3306, %v3306
    %v3315 = vcombine.high %v3313, %v3313
    %v3320 = vmul.f32 %v3285, %v3306
    %v3321 = vmul.f32 %v3286, %v3314
    %v3322 = vmul.f32 %v3287, %v3313
    %v3323 = vmul.f32 %v3288, %v3315
    %v3324 = vmul.f32 %v3289, %v3306
    %v3325 = vmul.f32 %v3290, %v3314
    %v3326 = vmul.f32 %v3291, %v3313
    %v3327 = vmul.f32 %v3292, %v3315
    %v3328 = vld [vmem:[%s8] sm:$0x1]
    %v3330 = vlaneseq
    %v3331 = vshrl.u32 %v3330, 7
    %v3332 = vsub.s32 0, %v3331
    %v3333 = vrot.slane %v3328, %v3332
    %v3334 = vcombine.high %v3333, %v3333
    %v3336 = vunpack.c.l.s4 1983009808
    %v3337 = vunpack.c.0.s8 %v3336
    %v3338 = vlaneseq
    %v3339 = vshrl.u32 %v3338, 7
    %v3340 = vsub.s32 %v3337, %v3339
    %v3341 = vrot.slane %v3333, %v3340
    %v3343 = vunpack.c.l.s4 1983009808
    %v3344 = vunpack.c.0.s8 %v3343
    %v3345 = vlaneseq
    %v3346 = vshrl.u32 %v3345, 7
    %v3347 = vsub.s32 %v3344, %v3346
    %v3348 = vrot.slane %v3334, %v3347
    %v3349 = vcombine.high %v3341, %v3341
    %v3350 = vcombine.high %v3348, %v3348
    %v3355 = vadd.f32 %v3320, %v3341
    %v3356 = vadd.f32 %v3321, %v3349
    %v3357 = vadd.f32 %v3322, %v3348
    %v3358 = vadd.f32 %v3323, %v3350
    %v3359 = vadd.f32 %v3324, %v3341
    %v3360 = vadd.f32 %v3325, %v3349
    %v3361 = vadd.f32 %v3326, %v3348
    %v3362 = vadd.f32 %v3327, %v3350
    %v3371 = vcombine.low %v3355, %v3356
    %v3372 = vcombine.low %v3357, %v3358
    %v3374 = vunpack.c.l.s4 1983009808
    %v3375 = vunpack.c.0.s8 %v3374
    %v3376 = vlaneseq
    %v3377 = vshrl.u32 %v3376, 7
    %v3378 = vsub.s32 %v3375, %v3377
    %v3379 = vrot.slane %v3371, %v3378
    %v3381 = vunpack.c.l.s4 1983009808
    %v3382 = vunpack.c.0.s8 %v3381
    %v3383 = vlaneseq
    %v3384 = vshrl.u32 %v3383, 7
    %v3385 = vsub.s32 %v3382, %v3384
    %v3386 = vrot.slane %v3372, %v3385
    %v3387 = vcombine.low %v3379, %v3386
    %v3388 = vcombine.low %v3359, %v3360
    %v3389 = vcombine.low %v3361, %v3362
    %v3391 = vunpack.c.l.s4 1983009808
    %v3392 = vunpack.c.0.s8 %v3391
    %v3393 = vlaneseq
    %v3394 = vshrl.u32 %v3393, 7
    %v3395 = vsub.s32 %v3392, %v3394
    %v3396 = vrot.slane %v3388, %v3395
    %v3398 = vunpack.c.l.s4 1983009808
    %v3399 = vunpack.c.0.s8 %v3398
    %v3400 = vlaneseq
    %v3401 = vshrl.u32 %v3400, 7
    %v3402 = vsub.s32 %v3399, %v3401
    %v3403 = vrot.slane %v3389, %v3402
    %v3404 = vcombine.low %v3396, %v3403
    %v3407 = vpack.c.bf16 %v3404, %v3387
    %v3408 = vld [vmem:[#allocation11] sm:$0xff]
    %v3409 = vld [vmem:[#allocation11 + $0x8] sm:$0xff]
    %v3410 = vld [vmem:[#allocation11 + $0x10] sm:$0xff]
    %v3411 = vld [vmem:[#allocation11 + $0x18] sm:$0xff]
    %v3412 = vld [vmem:[#allocation11 + $0x20] sm:$0xff]
    %v3413 = vld [vmem:[#allocation11 + $0x28] sm:$0xff]
    %v3414 = vld [vmem:[#allocation11 + $0x30] sm:$0xff]
    %v3415 = vld [vmem:[#allocation11 + $0x38] sm:$0xff]
    %v3416 = vld [vmem:[#allocation11 + $0x40] sm:$0xff]
    %v3417 = vld [vmem:[#allocation11 + $0x48] sm:$0xff]
    %v3418 = vld [vmem:[#allocation11 + $0x50] sm:$0xff]
    %v3419 = vld [vmem:[#allocation11 + $0x58] sm:$0xff]
    %v3420 = vld [vmem:[#allocation11 + $0x60] sm:$0xff]
    %v3421 = vld [vmem:[#allocation11 + $0x68] sm:$0xff]
    %v3422 = vld [vmem:[#allocation11 + $0x70] sm:$0xff]
    %v3423 = vld [vmem:[#allocation11 + $0x78] sm:$0xff]
    %v3424 = vld [vmem:[#allocation11 + $0x80] sm:$0xff]
    %v3425 = vld [vmem:[#allocation11 + $0x88] sm:$0xff]
    %v3426 = vld [vmem:[#allocation11 + $0x90] sm:$0xff]
    %v3427 = vld [vmem:[#allocation11 + $0x98] sm:$0xff]
    %v3428 = vld [vmem:[#allocation11 + $0xa0] sm:$0xff]
    %v3429 = vld [vmem:[#allocation11 + $0xa8] sm:$0xff]
    %v3430 = vld [vmem:[#allocation11 + $0xb0] sm:$0xff]
    %v3431 = vld [vmem:[#allocation11 + $0xb8] sm:$0xff]
    %v3432 = vld [vmem:[#allocation11 + $0xc0] sm:$0xff]
    %v3433 = vld [vmem:[#allocation11 + $0xc8] sm:$0xff]
    %v3434 = vld [vmem:[#allocation11 + $0xd0] sm:$0xff]
    %v3435 = vld [vmem:[#allocation11 + $0xd8] sm:$0xff]
    %v3436 = vld [vmem:[#allocation11 + $0xe0] sm:$0xff]
    %v3437 = vld [vmem:[#allocation11 + $0xe8] sm:$0xff]
    %v3438 = vld [vmem:[#allocation11 + $0xf0] sm:$0xff]
    %v3439 = vld [vmem:[#allocation11 + $0xf8] sm:$0xff]
    %v3440 = vld [vmem:[%s10] sm:$0xf]
    %v3442 = vlaneseq
    %v3443 = vshrl.u32 %v3442, 7
    %v3444 = vsub.s32 0, %v3443
    %v3445 = vrot.slane %v3440, %v3444
    %v3446 = vlaneseq
    %v3447 = vshrl.u32 %v3446, 7
    %v3448 = vsub.s32 1, %v3447
    %v3449 = vrot.slane %v3440, %v3448
    %v3450 = vlaneseq
    %v3451 = vshrl.u32 %v3450, 7
    %v3452 = vsub.s32 2, %v3451
    %v3453 = vrot.slane %v3440, %v3452
    %v3454 = vlaneseq
    %v3455 = vshrl.u32 %v3454, 7
    %v3456 = vsub.s32 3, %v3455
    %v3457 = vrot.slane %v3440, %v3456
    %v3494 = vunpack.c.l.b16 %v3408
    %v3495 = vunpack.c.h.b16 %v3408
    %v3496 = vunpack.c.l.b16 %v3409
    %v3497 = vunpack.c.h.b16 %v3409
    %v3498 = vunpack.c.l.b16 %v3410
    %v3499 = vunpack.c.h.b16 %v3410
    %v3500 = vunpack.c.l.b16 %v3411
    %v3501 = vunpack.c.h.b16 %v3411
    %v3502 = vunpack.c.l.b16 %v3412
    %v3503 = vunpack.c.h.b16 %v3412
    %v3504 = vunpack.c.l.b16 %v3413
    %v3505 = vunpack.c.h.b16 %v3413
    %v3506 = vunpack.c.l.b16 %v3414
    %v3507 = vunpack.c.h.b16 %v3414
    %v3508 = vunpack.c.l.b16 %v3415
    %v3509 = vunpack.c.h.b16 %v3415
    %v3510 = vunpack.c.l.b16 %v3416
    %v3511 = vunpack.c.h.b16 %v3416
    %v3512 = vunpack.c.l.b16 %v3417
    %v3513 = vunpack.c.h.b16 %v3417
    %v3514 = vunpack.c.l.b16 %v3418
    %v3515 = vunpack.c.h.b16 %v3418
    %v3516 = vunpack.c.l.b16 %v3419
    %v3517 = vunpack.c.h.b16 %v3419
    %v3518 = vunpack.c.l.b16 %v3420
    %v3519 = vunpack.c.h.b16 %v3420
    %v3520 = vunpack.c.l.b16 %v3421
    %v3521 = vunpack.c.h.b16 %v3421
    %v3522 = vunpack.c.l.b16 %v3422
    %v3523 = vunpack.c.h.b16 %v3422
    %v3524 = vunpack.c.l.b16 %v3423
    %v3525 = vunpack.c.h.b16 %v3423
    %v3526 = vunpack.c.l.b16 %v3424
    %v3527 = vunpack.c.h.b16 %v3424
    %v3528 = vunpack.c.l.b16 %v3425
    %v3529 = vunpack.c.h.b16 %v3425
    %v3530 = vunpack.c.l.b16 %v3426
    %v3531 = vunpack.c.h.b16 %v3426
    %v3532 = vunpack.c.l.b16 %v3427
    %v3533 = vunpack.c.h.b16 %v3427
    %v3534 = vunpack.c.l.b16 %v3428
    %v3535 = vunpack.c.h.b16 %v3428
    %v3536 = vunpack.c.l.b16 %v3429
    %v3537 = vunpack.c.h.b16 %v3429
    %v3538 = vunpack.c.l.b16 %v3430
    %v3539 = vunpack.c.h.b16 %v3430
    %v3540 = vunpack.c.l.b16 %v3431
    %v3541 = vunpack.c.h.b16 %v3431
    %v3542 = vunpack.c.l.b16 %v3432
    %v3543 = vunpack.c.h.b16 %v3432
    %v3544 = vunpack.c.l.b16 %v3433
    %v3545 = vunpack.c.h.b16 %v3433
    %v3546 = vunpack.c.l.b16 %v3434
    %v3547 = vunpack.c.h.b16 %v3434
    %v3548 = vunpack.c.l.b16 %v3435
    %v3549 = vunpack.c.h.b16 %v3435
    %v3550 = vunpack.c.l.b16 %v3436
    %v3551 = vunpack.c.h.b16 %v3436
    %v3552 = vunpack.c.l.b16 %v3437
    %v3553 = vunpack.c.h.b16 %v3437
    %v3554 = vunpack.c.l.b16 %v3438
    %v3555 = vunpack.c.h.b16 %v3438
    %v3556 = vunpack.c.l.b16 %v3439
    %v3557 = vunpack.c.h.b16 %v3439
    %v3558 = vpack.c.b16 %v3498, %v3494
    %v3559 = vpack.c.b16 %v3499, %v3495
    %v3560 = vpack.c.b16 %v3500, %v3496
    %v3561 = vpack.c.b16 %v3501, %v3497
    %v3562 = vpack.c.b16 %v3506, %v3502
    %v3563 = vpack.c.b16 %v3507, %v3503
    %v3564 = vpack.c.b16 %v3508, %v3504
    %v3565 = vpack.c.b16 %v3509, %v3505
    %v3566 = vpack.c.b16 %v3514, %v3510
    %v3567 = vpack.c.b16 %v3515, %v3511
    %v3568 = vpack.c.b16 %v3516, %v3512
    %v3569 = vpack.c.b16 %v3517, %v3513
    %v3570 = vpack.c.b16 %v3522, %v3518
    %v3571 = vpack.c.b16 %v3523, %v3519
    %v3572 = vpack.c.b16 %v3524, %v3520
    %v3573 = vpack.c.b16 %v3525, %v3521
    %v3574 = vpack.c.b16 %v3530, %v3526
    %v3575 = vpack.c.b16 %v3531, %v3527
    %v3576 = vpack.c.b16 %v3532, %v3528
    %v3577 = vpack.c.b16 %v3533, %v3529
    %v3578 = vpack.c.b16 %v3538, %v3534
    %v3579 = vpack.c.b16 %v3539, %v3535
    %v3580 = vpack.c.b16 %v3540, %v3536
    %v3581 = vpack.c.b16 %v3541, %v3537
    %v3582 = vpack.c.b16 %v3546, %v3542
    %v3583 = vpack.c.b16 %v3547, %v3543
    %v3584 = vpack.c.b16 %v3548, %v3544
    %v3585 = vpack.c.b16 %v3549, %v3545
    %v3586 = vpack.c.b16 %v3554, %v3550
    %v3587 = vpack.c.b16 %v3555, %v3551
    %v3588 = vpack.c.b16 %v3556, %v3552
    %v3589 = vpack.c.b16 %v3557, %v3553
    %3622 = vmatprep.subr.bf16.mxu0 %v3587
    %3623 = vmatpush1.bf16.msra.mxu0 %v3586
    %3624 = vmatprep.subr.bf16.mxu0 %v3583
    %3625 = vmatpush1.bf16.msra.mxu0 %v3582
    %3626 = vmatprep.subr.bf16.mxu0 %v3579
    %3627 = vmatpush1.bf16.msra.mxu0 %v3578
    %3628 = vmatprep.subr.bf16.mxu0 %v3575
    %3629 = vmatpush1.bf16.msra.mxu0 %v3574
    %3630 = vmatprep.subr.bf16.mxu0 %v3571
    %3631 = vmatpush1.bf16.msra.mxu0 %v3570
    %3632 = vmatprep.subr.bf16.mxu0 %v3567
    %3633 = vmatpush1.bf16.msra.mxu0 %v3566
    %3634 = vmatprep.subr.bf16.mxu0 %v3563
    %3635 = vmatpush1.bf16.msra.mxu0 %v3562
    %3636 = vmatprep.subr.bf16.mxu0 %v3559
    %3637 = vmatpush1.bf16.msra.mxu0 %v3558
    %3638 = vmatprep.subr.bf16.mxu0 0
    %3639 = vmatpush2.bf16.msra.mxu0 0
    %3640 = vmatprep.subr.bf16.mxu0 0
    %3641 = vmatpush2.bf16.msra.mxu0 0
    %3642 = vmatprep.subr.bf16.mxu0 0
    %3643 = vmatpush2.bf16.msra.mxu0 0
    %3644 = vmatprep.subr.bf16.mxu0 0
    %3645 = vmatpush2.bf16.msra.mxu0 0
    %3646 = vmatprep.subr.bf16.mxu0 0
    %3647 = vmatpush2.bf16.msra.mxu0 0
    %3648 = vmatprep.subr.bf16.mxu0 0
    %3649 = vmatpush2.bf16.msra.mxu0 0
    %3650 = vmatprep.subr.bf16.mxu0 0
    %3651 = vmatpush2.bf16.msra.mxu0 0
    %3652 = vmatprep.subr.bf16.mxu0 0
    %3653 = vmatpush2.bf16.msra.mxu0 0
    %3654 = vmatprep.mubr.bf16.mxu0 0
    %3655 = vmatmul.mubr.bf16.gmra.mxu0 %v3407
    %v3656 = vpop.f32.mrf.mxu0
    %v3657 = vadd.f32 %v3445, %v3656
    %v3658 = vpop.f32.mrf.mxu0
    %v3659 = vadd.f32 %v3449, %v3658
    %v3660 = vpop.f32.mrf.mxu0
    %v3661 = vadd.f32 %v3445, %v3660
    %v3662 = vpop.f32.mrf.mxu0
    %v3663 = vadd.f32 %v3449, %v3662
    %3664 = vdwg.mxu0
    %3665 = vmatprep.subr.bf16.mxu0 %v3589
    %3666 = vmatpush1.bf16.msra.mxu0 %v3588
    %3667 = vmatprep.subr.bf16.mxu0 %v3585
    %3668 = vmatpush1.bf16.msra.mxu0 %v3584
    %3669 = vmatprep.subr.bf16.mxu0 %v3581
    %3670 = vmatpush1.bf16.msra.mxu0 %v3580
    %3671 = vmatprep.subr.bf16.mxu0 %v3577
    %3672 = vmatpush1.bf16.msra.mxu0 %v3576
    %3673 = vmatprep.subr.bf16.mxu0 %v3573
    %3674 = vmatpush1.bf16.msra.mxu0 %v3572
    %3675 = vmatprep.subr.bf16.mxu0 %v3569
    %3676 = vmatpush1.bf16.msra.mxu0 %v3568
    %3677 = vmatprep.subr.bf16.mxu0 %v3565
    %3678 = vmatpush1.bf16.msra.mxu0 %v3564
    %3679 = vmatprep.subr.bf16.mxu0 %v3561
    %3680 = vmatpush1.bf16.msra.mxu0 %v3560
    %3681 = vmatprep.subr.bf16.mxu0 0
    %3682 = vmatpush2.bf16.msra.mxu0 0
    %3683 = vmatprep.subr.bf16.mxu0 0
    %3684 = vmatpush2.bf16.msra.mxu0 0
    %3685 = vmatprep.subr.bf16.mxu0 0
    %3686 = vmatpush2.bf16.msra.mxu0 0
    %3687 = vmatprep.subr.bf16.mxu0 0
    %3688 = vmatpush2.bf16.msra.mxu0 0
    %3689 = vmatprep.subr.bf16.mxu0 0
    %3690 = vmatpush2.bf16.msra.mxu0 0
    %3691 = vmatprep.subr.bf16.mxu0 0
    %3692 = vmatpush2.bf16.msra.mxu0 0
    %3693 = vmatprep.subr.bf16.mxu0 0
    %3694 = vmatpush2.bf16.msra.mxu0 0
    %3695 = vmatprep.subr.bf16.mxu0 0
    %3696 = vmatpush2.bf16.msra.mxu0 0
    %3697 = vmatprep.mubr.bf16.mxu0 0
    %3698 = vmatmul.mubr.bf16.gmra.mxu0 %v3407
    %v3699 = vpop.f32.mrf.mxu0
    %v3700 = vadd.f32 %v3453, %v3699
    %v3701 = vpop.f32.mrf.mxu0
    %v3702 = vadd.f32 %v3457, %v3701
    %v3703 = vpop.f32.mrf.mxu0
    %v3704 = vadd.f32 %v3453, %v3703
    %v3705 = vpop.f32.mrf.mxu0
    %v3706 = vadd.f32 %v3457, %v3705
    %3707 = vdwg.mxu0
    %v3708 = vmul.f32 %v3657, 1.702
    %v3709 = vmul.f32 %v3659, 1.702
    %v3710 = vmul.f32 %v3700, 1.702
    %v3711 = vmul.f32 %v3702, 1.702
    %v3712 = vmul.f32 %v3661, 1.702
    %v3713 = vmul.f32 %v3663, 1.702
    %v3714 = vmul.f32 %v3704, 1.702
    %v3715 = vmul.f32 %v3706, 1.702
    %v3716 = vxor.u32 %v3708, 2147483648
    %v3717 = vxor.u32 %v3709, 2147483648
    %v3718 = vxor.u32 %v3710, 2147483648
    %v3719 = vxor.u32 %v3711, 2147483648
    %v3720 = vxor.u32 %v3712, 2147483648
    %v3721 = vxor.u32 %v3713, 2147483648
    %v3722 = vxor.u32 %v3714, 2147483648
    %v3723 = vxor.u32 %v3715, 2147483648
    %v3724 = vmul.f32 %v3716, 1.442695
    %v3725 = vpow.pop %v3724
    %v3726 = vmul.f32 %v3717, 1.442695
    %v3727 = vpow.pop %v3726
    %v3728 = vmul.f32 %v3718, 1.442695
    %v3729 = vpow.pop %v3728
    %v3730 = vmul.f32 %v3719, 1.442695
    %v3731 = vpow.pop %v3730
    %v3732 = vmul.f32 %v3720, 1.442695
    %v3733 = vpow.pop %v3732
    %v3734 = vmul.f32 %v3721, 1.442695
    %v3735 = vpow.pop %v3734
    %v3736 = vmul.f32 %v3722, 1.442695
    %v3737 = vpow.pop %v3736
    %v3738 = vmul.f32 %v3723, 1.442695
    %v3739 = vpow.pop %v3738
    %v3740 = vadd.f32 %v3725, 1.0
    %v3741 = vadd.f32 %v3727, 1.0
    %v3742 = vadd.f32 %v3729, 1.0
    %v3743 = vadd.f32 %v3731, 1.0
    %v3744 = vadd.f32 %v3733, 1.0
    %v3745 = vadd.f32 %v3735, 1.0
    %v3746 = vadd.f32 %v3737, 1.0
    %v3747 = vadd.f32 %v3739, 1.0
    %v3748 = vrcp.pop %v3740
    %v3749 = vmul.f32 1.0, %v3748
    %v3750 = vrcp.pop %v3741
    %v3751 = vmul.f32 1.0, %v3750
    %v3752 = vrcp.pop %v3742
    %v3753 = vmul.f32 1.0, %v3752
    %v3754 = vrcp.pop %v3743
    %v3755 = vmul.f32 1.0, %v3754
    %v3756 = vrcp.pop %v3744
    %v3757 = vmul.f32 1.0, %v3756
    %v3758 = vrcp.pop %v3745
    %v3759 = vmul.f32 1.0, %v3758
    %v3760 = vrcp.pop %v3746
    %v3761 = vmul.f32 1.0, %v3760
    %v3762 = vrcp.pop %v3747
    %v3763 = vmul.f32 1.0, %v3762
    %v3764 = vmul.f32 %v3657, %v3749
    %v3765 = vmul.f32 %v3659, %v3751
    %v3766 = vmul.f32 %v3700, %v3753
    %v3767 = vmul.f32 %v3702, %v3755
    %v3768 = vmul.f32 %v3661, %v3757
    %v3769 = vmul.f32 %v3663, %v3759
    %v3770 = vmul.f32 %v3704, %v3761
    %v3771 = vmul.f32 %v3706, %v3763
    %v3772 = vpack.c.bf16 %v3768, %v3764
    %v3773 = vpack.c.bf16 %v3769, %v3765
    %v3774 = vpack.c.bf16 %v3770, %v3766
    %v3775 = vpack.c.bf16 %v3771, %v3767
    %v3776 = vld [vmem:[#allocation13] sm:$0xf]
    %v3777 = vld [vmem:[#allocation13 + $0x4] sm:$0xf]
    %v3778 = vld [vmem:[#allocation13 + $0x8] sm:$0xf]
    %v3779 = vld [vmem:[#allocation13 + $0xc] sm:$0xf]
    %v3780 = vld [vmem:[#allocation13 + $0x10] sm:$0xf]
    %v3781 = vld [vmem:[#allocation13 + $0x14] sm:$0xf]
    %v3782 = vld [vmem:[#allocation13 + $0x18] sm:$0xf]
    %v3783 = vld [vmem:[#allocation13 + $0x1c] sm:$0xf]
    %v3784 = vld [vmem:[#allocation13 + $0x20] sm:$0xf]
    %v3785 = vld [vmem:[#allocation13 + $0x24] sm:$0xf]
    %v3786 = vld [vmem:[#allocation13 + $0x28] sm:$0xf]
    %v3787 = vld [vmem:[#allocation13 + $0x2c] sm:$0xf]
    %v3788 = vld [vmem:[#allocation13 + $0x30] sm:$0xf]
    %v3789 = vld [vmem:[#allocation13 + $0x34] sm:$0xf]
    %v3790 = vld [vmem:[#allocation13 + $0x38] sm:$0xf]
    %v3791 = vld [vmem:[#allocation13 + $0x3c] sm:$0xf]
    %v3792 = vld [vmem:[#allocation13 + $0x40] sm:$0xf]
    %v3793 = vld [vmem:[#allocation13 + $0x44] sm:$0xf]
    %v3794 = vld [vmem:[#allocation13 + $0x48] sm:$0xf]
    %v3795 = vld [vmem:[#allocation13 + $0x4c] sm:$0xf]
    %v3796 = vld [vmem:[#allocation13 + $0x50] sm:$0xf]
    %v3797 = vld [vmem:[#allocation13 + $0x54] sm:$0xf]
    %v3798 = vld [vmem:[#allocation13 + $0x58] sm:$0xf]
    %v3799 = vld [vmem:[#allocation13 + $0x5c] sm:$0xf]
    %v3800 = vld [vmem:[#allocation13 + $0x60] sm:$0xf]
    %v3801 = vld [vmem:[#allocation13 + $0x64] sm:$0xf]
    %v3802 = vld [vmem:[#allocation13 + $0x68] sm:$0xf]
    %v3803 = vld [vmem:[#allocation13 + $0x6c] sm:$0xf]
    %v3804 = vld [vmem:[#allocation13 + $0x70] sm:$0xf]
    %v3805 = vld [vmem:[#allocation13 + $0x74] sm:$0xf]
    %v3806 = vld [vmem:[#allocation13 + $0x78] sm:$0xf]
    %v3807 = vld [vmem:[#allocation13 + $0x7c] sm:$0xf]
    %v3808 = vld [vmem:[#allocation13 + $0x80] sm:$0xf]
    %v3809 = vld [vmem:[#allocation13 + $0x84] sm:$0xf]
    %v3810 = vld [vmem:[#allocation13 + $0x88] sm:$0xf]
    %v3811 = vld [vmem:[#allocation13 + $0x8c] sm:$0xf]
    %v3812 = vld [vmem:[#allocation13 + $0x90] sm:$0xf]
    %v3813 = vld [vmem:[#allocation13 + $0x94] sm:$0xf]
    %v3814 = vld [vmem:[#allocation13 + $0x98] sm:$0xf]
    %v3815 = vld [vmem:[#allocation13 + $0x9c] sm:$0xf]
    %v3816 = vld [vmem:[#allocation13 + $0xa0] sm:$0xf]
    %v3817 = vld [vmem:[#allocation13 + $0xa4] sm:$0xf]
    %v3818 = vld [vmem:[#allocation13 + $0xa8] sm:$0xf]
    %v3819 = vld [vmem:[#allocation13 + $0xac] sm:$0xf]
    %v3820 = vld [vmem:[#allocation13 + $0xb0] sm:$0xf]
    %v3821 = vld [vmem:[#allocation13 + $0xb4] sm:$0xf]
    %v3822 = vld [vmem:[#allocation13 + $0xb8] sm:$0xf]
    %v3823 = vld [vmem:[#allocation13 + $0xbc] sm:$0xf]
    %v3824 = vld [vmem:[#allocation13 + $0xc0] sm:$0xf]
    %v3825 = vld [vmem:[#allocation13 + $0xc4] sm:$0xf]
    %v3826 = vld [vmem:[#allocation13 + $0xc8] sm:$0xf]
    %v3827 = vld [vmem:[#allocation13 + $0xcc] sm:$0xf]
    %v3828 = vld [vmem:[#allocation13 + $0xd0] sm:$0xf]
    %v3829 = vld [vmem:[#allocation13 + $0xd4] sm:$0xf]
    %v3830 = vld [vmem:[#allocation13 + $0xd8] sm:$0xf]
    %v3831 = vld [vmem:[#allocation13 + $0xdc] sm:$0xf]
    %v3832 = vld [vmem:[#allocation13 + $0xe0] sm:$0xf]
    %v3833 = vld [vmem:[#allocation13 + $0xe4] sm:$0xf]
    %v3834 = vld [vmem:[#allocation13 + $0xe8] sm:$0xf]
    %v3835 = vld [vmem:[#allocation13 + $0xec] sm:$0xf]
    %v3836 = vld [vmem:[#allocation13 + $0xf0] sm:$0xf]
    %v3837 = vld [vmem:[#allocation13 + $0xf4] sm:$0xf]
    %v3838 = vld [vmem:[#allocation13 + $0xf8] sm:$0xf]
    %v3839 = vld [vmem:[#allocation13 + $0xfc] sm:$0xf]
    %v3840 = vld [vmem:[%s12] sm:$0x1]
    %v3842 = vlaneseq
    %v3843 = vshrl.u32 %v3842, 7
    %v3844 = vsub.s32 0, %v3843
    %v3845 = vrot.slane %v3840, %v3844
    %v3911 = vunpack.c.l.b16 %v3776
    %v3912 = vunpack.c.l.b16 %v3777
    %v3913 = vunpack.c.l.b16 %v3778
    %v3914 = vunpack.c.l.b16 %v3779
    %v3915 = vunpack.c.l.b16 %v3780
    %v3916 = vunpack.c.l.b16 %v3781
    %v3917 = vunpack.c.l.b16 %v3782
    %v3918 = vunpack.c.l.b16 %v3783
    %v3919 = vunpack.c.l.b16 %v3784
    %v3920 = vunpack.c.l.b16 %v3785
    %v3921 = vunpack.c.l.b16 %v3786
    %v3922 = vunpack.c.l.b16 %v3787
    %v3923 = vunpack.c.l.b16 %v3788
    %v3924 = vunpack.c.l.b16 %v3789
    %v3925 = vunpack.c.l.b16 %v3790
    %v3926 = vunpack.c.l.b16 %v3791
    %v3927 = vunpack.c.l.b16 %v3792
    %v3928 = vunpack.c.l.b16 %v3793
    %v3929 = vunpack.c.l.b16 %v3794
    %v3930 = vunpack.c.l.b16 %v3795
    %v3931 = vunpack.c.l.b16 %v3796
    %v3932 = vunpack.c.l.b16 %v3797
    %v3933 = vunpack.c.l.b16 %v3798
    %v3934 = vunpack.c.l.b16 %v3799
    %v3935 = vunpack.c.l.b16 %v3800
    %v3936 = vunpack.c.l.b16 %v3801
    %v3937 = vunpack.c.l.b16 %v3802
    %v3938 = vunpack.c.l.b16 %v3803
    %v3939 = vunpack.c.l.b16 %v3804
    %v3940 = vunpack.c.l.b16 %v3805
    %v3941 = vunpack.c.l.b16 %v3806
    %v3942 = vunpack.c.l.b16 %v3807
    %v3943 = vunpack.c.l.b16 %v3808
    %v3944 = vunpack.c.l.b16 %v3809
    %v3945 = vunpack.c.l.b16 %v3810
    %v3946 = vunpack.c.l.b16 %v3811
    %v3947 = vunpack.c.l.b16 %v3812
    %v3948 = vunpack.c.l.b16 %v3813
    %v3949 = vunpack.c.l.b16 %v3814
    %v3950 = vunpack.c.l.b16 %v3815
    %v3951 = vunpack.c.l.b16 %v3816
    %v3952 = vunpack.c.l.b16 %v3817
    %v3953 = vunpack.c.l.b16 %v3818
    %v3954 = vunpack.c.l.b16 %v3819
    %v3955 = vunpack.c.l.b16 %v3820
    %v3956 = vunpack.c.l.b16 %v3821
    %v3957 = vunpack.c.l.b16 %v3822
    %v3958 = vunpack.c.l.b16 %v3823
    %v3959 = vunpack.c.l.b16 %v3824
    %v3960 = vunpack.c.l.b16 %v3825
    %v3961 = vunpack.c.l.b16 %v3826
    %v3962 = vunpack.c.l.b16 %v3827
    %v3963 = vunpack.c.l.b16 %v3828
    %v3964 = vunpack.c.l.b16 %v3829
    %v3965 = vunpack.c.l.b16 %v3830
    %v3966 = vunpack.c.l.b16 %v3831
    %v3967 = vunpack.c.l.b16 %v3832
    %v3968 = vunpack.c.l.b16 %v3833
    %v3969 = vunpack.c.l.b16 %v3834
    %v3970 = vunpack.c.l.b16 %v3835
    %v3971 = vunpack.c.l.b16 %v3836
    %v3972 = vunpack.c.l.b16 %v3837
    %v3973 = vunpack.c.l.b16 %v3838
    %v3974 = vunpack.c.l.b16 %v3839
    %v3975 = vpack.c.b16 %v3912, %v3911
    %v3976 = vpack.c.b16 %v3914, %v3913
    %v3977 = vpack.c.b16 %v3916, %v3915
    %v3978 = vpack.c.b16 %v3918, %v3917
    %v3979 = vpack.c.b16 %v3920, %v3919
    %v3980 = vpack.c.b16 %v3922, %v3921
    %v3981 = vpack.c.b16 %v3924, %v3923
    %v3982 = vpack.c.b16 %v3926, %v3925
    %v3983 = vpack.c.b16 %v3928, %v3927
    %v3984 = vpack.c.b16 %v3930, %v3929
    %v3985 = vpack.c.b16 %v3932, %v3931
    %v3986 = vpack.c.b16 %v3934, %v3933
    %v3987 = vpack.c.b16 %v3936, %v3935
    %v3988 = vpack.c.b16 %v3938, %v3937
    %v3989 = vpack.c.b16 %v3940, %v3939
    %v3990 = vpack.c.b16 %v3942, %v3941
    %v3991 = vpack.c.b16 %v3944, %v3943
    %v3992 = vpack.c.b16 %v3946, %v3945
    %v3993 = vpack.c.b16 %v3948, %v3947
    %v3994 = vpack.c.b16 %v3950, %v3949
    %v3995 = vpack.c.b16 %v3952, %v3951
    %v3996 = vpack.c.b16 %v3954, %v3953
    %v3997 = vpack.c.b16 %v3956, %v3955
    %v3998 = vpack.c.b16 %v3958, %v3957
    %v3999 = vpack.c.b16 %v3960, %v3959
    %v4000 = vpack.c.b16 %v3962, %v3961
    %v4001 = vpack.c.b16 %v3964, %v3963
    %v4002 = vpack.c.b16 %v3966, %v3965
    %v4003 = vpack.c.b16 %v3968, %v3967
    %v4004 = vpack.c.b16 %v3970, %v3969
    %v4005 = vpack.c.b16 %v3972, %v3971
    %v4006 = vpack.c.b16 %v3974, %v3973
    %4039 = vmatprep.subr.bf16.mxu0 0
    %4040 = vmatpush1.bf16.msra.mxu0 %v3982
    %4041 = vmatprep.subr.bf16.mxu0 0
    %4042 = vmatpush1.bf16.msra.mxu0 %v3981
    %4043 = vmatprep.subr.bf16.mxu0 0
    %4044 = vmatpush1.bf16.msra.mxu0 %v3980
    %4045 = vmatprep.subr.bf16.mxu0 0
    %4046 = vmatpush1.bf16.msra.mxu0 %v3979
    %4047 = vmatprep.subr.bf16.mxu0 0
    %4048 = vmatpush1.bf16.msra.mxu0 %v3978
    %4049 = vmatprep.subr.bf16.mxu0 0
    %4050 = vmatpush1.bf16.msra.mxu0 %v3977
    %4051 = vmatprep.subr.bf16.mxu0 0
    %4052 = vmatpush1.bf16.msra.mxu0 %v3976
    %4053 = vmatprep.subr.bf16.mxu0 0
    %4054 = vmatpush1.bf16.msra.mxu0 %v3975
    %4055 = vmatprep.subr.bf16.mxu0 0
    %4056 = vmatpush2.bf16.msra.mxu0 %v3990
    %4057 = vmatprep.subr.bf16.mxu0 0
    %4058 = vmatpush2.bf16.msra.mxu0 %v3989
    %4059 = vmatprep.subr.bf16.mxu0 0
    %4060 = vmatpush2.bf16.msra.mxu0 %v3988
    %4061 = vmatprep.subr.bf16.mxu0 0
    %4062 = vmatpush2.bf16.msra.mxu0 %v3987
    %4063 = vmatprep.subr.bf16.mxu0 0
    %4064 = vmatpush2.bf16.msra.mxu0 %v3986
    %4065 = vmatprep.subr.bf16.mxu0 0
    %4066 = vmatpush2.bf16.msra.mxu0 %v3985
    %4067 = vmatprep.subr.bf16.mxu0 0
    %4068 = vmatpush2.bf16.msra.mxu0 %v3984
    %4069 = vmatprep.subr.bf16.mxu0 0
    %4070 = vmatpush2.bf16.msra.mxu0 %v3983
    %4071 = vmatprep.mubr.bf16.mxu0 %v3773
    %4072 = vmatmul.mubr.bf16.gmra.mxu0 %v3772
    %v4073 = vpop.f32.mrf.mxu0
    %v4074 = vadd.f32 %v3845, %v4073
    %v4075 = vpop.f32.mrf.mxu0
    %v4076 = vpop.f32.mrf.mxu0
    %v4077 = vadd.f32 %v3845, %v4076
    %v4078 = vpop.f32.mrf.mxu0
    %4079 = vdwg.mxu0
    %4080 = vmatprep.subr.bf16.mxu0 0
    %4081 = vmatpush1.bf16.msra.mxu0 %v3998
    %4082 = vmatprep.subr.bf16.mxu0 0
    %4083 = vmatpush1.bf16.msra.mxu0 %v3997
    %4084 = vmatprep.subr.bf16.mxu0 0
    %4085 = vmatpush1.bf16.msra.mxu0 %v3996
    %4086 = vmatprep.subr.bf16.mxu0 0
    %4087 = vmatpush1.bf16.msra.mxu0 %v3995
    %4088 = vmatprep.subr.bf16.mxu0 0
    %4089 = vmatpush1.bf16.msra.mxu0 %v3994
    %4090 = vmatprep.subr.bf16.mxu0 0
    %4091 = vmatpush1.bf16.msra.mxu0 %v3993
    %4092 = vmatprep.subr.bf16.mxu0 0
    %4093 = vmatpush1.bf16.msra.mxu0 %v3992
    %4094 = vmatprep.subr.bf16.mxu0 0
    %4095 = vmatpush1.bf16.msra.mxu0 %v3991
    %4096 = vmatprep.subr.bf16.mxu0 0
    %4097 = vmatpush2.bf16.msra.mxu0 %v4006
    %4098 = vmatprep.subr.bf16.mxu0 0
    %4099 = vmatpush2.bf16.msra.mxu0 %v4005
    %4100 = vmatprep.subr.bf16.mxu0 0
    %4101 = vmatpush2.bf16.msra.mxu0 %v4004
    %4102 = vmatprep.subr.bf16.mxu0 0
    %4103 = vmatpush2.bf16.msra.mxu0 %v4003
    %4104 = vmatprep.subr.bf16.mxu0 0
    %4105 = vmatpush2.bf16.msra.mxu0 %v4002
    %4106 = vmatprep.subr.bf16.mxu0 0
    %4107 = vmatpush2.bf16.msra.mxu0 %v4001
    %4108 = vmatprep.subr.bf16.mxu0 0
    %4109 = vmatpush2.bf16.msra.mxu0 %v4000
    %4110 = vmatprep.subr.bf16.mxu0 0
    %4111 = vmatpush2.bf16.msra.mxu0 %v3999
    %4112 = vmatprep.mubr.bf16.mxu0 %v3775
    %4113 = vmatmul.mubr.bf16.gmra.mxu0 %v3774
    %v4114 = vpop.f32.mrf.mxu0
    %v4115 = vadd.f32 %v4074, %v4114
    %v4116 = vpop.f32.mrf.mxu0
    %v4117 = vpop.f32.mrf.mxu0
    %v4118 = vadd.f32 %v4077, %v4117
    %v4119 = vpop.f32.mrf.mxu0
    %4120 = vdwg.mxu0
    %v4123 = vcombine.high %v4115, %v4115
    %v4125 = vunpack.c.l.s4 1983009808
    %v4126 = vunpack.c.0.s8 %v4125
    %v4127 = vlaneseq
    %v4128 = vshrl.u32 %v4127, 7
    %v4129 = vsub.s32 %v4126, %v4128
    %v4130 = vrot.slane %v4115, %v4129
    %v4132 = vunpack.c.l.s4 1983009808
    %v4133 = vunpack.c.0.s8 %v4132
    %v4134 = vlaneseq
    %v4135 = vshrl.u32 %v4134, 7
    %v4136 = vsub.s32 %v4133, %v4135
    %v4137 = vrot.slane %v4123, %v4136
    %v4138 = vcombine.high %v4130, %v4130
    %v4139 = vcombine.high %v4137, %v4137
    %v4140 = vcombine.high %v4118, %v4118
    %v4142 = vunpack.c.l.s4 1983009808
    %v4143 = vunpack.c.0.s8 %v4142
    %v4144 = vlaneseq
    %v4145 = vshrl.u32 %v4144, 7
    %v4146 = vsub.s32 %v4143, %v4145
    %v4147 = vrot.slane %v4118, %v4146
    %v4149 = vunpack.c.l.s4 1983009808
    %v4150 = vunpack.c.0.s8 %v4149
    %v4151 = vlaneseq
    %v4152 = vshrl.u32 %v4151, 7
    %v4153 = vsub.s32 %v4150, %v4152
    %v4154 = vrot.slane %v4140, %v4153
    %v4155 = vcombine.high %v4147, %v4147
    %v4156 = vcombine.high %v4154, %v4154
    %v4165 = vadd.f32 %v3025, %v4130
    %v4166 = vadd.f32 %v3026, %v4138
    %v4167 = vadd.f32 %v3027, %v4137
    %v4168 = vadd.f32 %v3028, %v4139
    %v4169 = vadd.f32 %v3029, %v4147
    %v4170 = vadd.f32 %v3030, %v4155
    %v4171 = vadd.f32 %v3031, %v4154
    %v4172 = vadd.f32 %v3032, %v4156
    %v4181 = vcombine.low %v4165, %v4166
    %v4182 = vcombine.low %v4167, %v4168
    %v4184 = vunpack.c.l.s4 1983009808
    %v4185 = vunpack.c.0.s8 %v4184
    %v4186 = vlaneseq
    %v4187 = vshrl.u32 %v4186, 7
    %v4188 = vsub.s32 %v4185, %v4187
    %v4189 = vrot.slane %v4181, %v4188
    %v4191 = vunpack.c.l.s4 1983009808
    %v4192 = vunpack.c.0.s8 %v4191
    %v4193 = vlaneseq
    %v4194 = vshrl.u32 %v4193, 7
    %v4195 = vsub.s32 %v4192, %v4194
    %v4196 = vrot.slane %v4182, %v4195
    %v4197 = vcombine.low %v4189, %v4196
    %v4198 = vcombine.low %v4169, %v4170
    %v4199 = vcombine.low %v4171, %v4172
    %v4201 = vunpack.c.l.s4 1983009808
    %v4202 = vunpack.c.0.s8 %v4201
    %v4203 = vlaneseq
    %v4204 = vshrl.u32 %v4203, 7
    %v4205 = vsub.s32 %v4202, %v4204
    %v4206 = vrot.slane %v4198, %v4205
    %v4208 = vunpack.c.l.s4 1983009808
    %v4209 = vunpack.c.0.s8 %v4208
    %v4210 = vlaneseq
    %v4211 = vshrl.u32 %v4210, 7
    %v4212 = vsub.s32 %v4209, %v4211
    %v4213 = vrot.slane %v4199, %v4212
    %v4214 = vcombine.low %v4206, %v4213
    %4217 = vadd.xlane.f32.xlu0 %v4197
    %v4218 = vpop.xlane.xlu0 %4217
    %4219 = vadd.xlane.f32.xlu0 %v4214
    %v4220 = vpop.xlane.xlu0 %4219
    %v4221 = vmul.f32 %v4218, %v238
    %v4222 = vmul.f32 %v4220, %v238
    %v4226 = vunpack.c.l.s4 269488144
    %v4227 = vunpack.c.0.s8 %v4226
    %v4228 = vlaneseq
    %v4229 = vshrl.u32 %v4228, 7
    %v4230 = vsub.s32 %v4227, %v4229
    %v4231 = vrot.slane %v4221, %v4230
    %v4233 = vunpack.c.l.s4 842150450
    %v4234 = vunpack.c.0.s8 %v4233
    %v4235 = vlaneseq
    %v4236 = vshrl.u32 %v4235, 7
    %v4237 = vsub.s32 %v4234, %v4236
    %v4238 = vrot.slane %v4221, %v4237
    %v4240 = vunpack.c.l.s4 1414812756
    %v4241 = vunpack.c.0.s8 %v4240
    %v4242 = vlaneseq
    %v4243 = vshrl.u32 %v4242, 7
    %v4244 = vsub.s32 %v4241, %v4243
    %v4245 = vrot.slane %v4221, %v4244
    %v4247 = vunpack.c.l.s4 1987475062
    %v4248 = vunpack.c.0.s8 %v4247
    %v4249 = vlaneseq
    %v4250 = vshrl.u32 %v4249, 7
    %v4251 = vsub.s32 %v4248, %v4250
    %v4252 = vrot.slane %v4221, %v4251
    %v4254 = vunpack.c.l.s4 269488144
    %v4255 = vunpack.c.0.s8 %v4254
    %v4256 = vlaneseq
    %v4257 = vshrl.u32 %v4256, 7
    %v4258 = vsub.s32 %v4255, %v4257
    %v4259 = vrot.slane %v4222, %v4258
    %v4261 = vunpack.c.l.s4 842150450
    %v4262 = vunpack.c.0.s8 %v4261
    %v4263 = vlaneseq
    %v4264 = vshrl.u32 %v4263, 7
    %v4265 = vsub.s32 %v4262, %v4264
    %v4266 = vrot.slane %v4222, %v4265
    %v4268 = vunpack.c.l.s4 1414812756
    %v4269 = vunpack.c.0.s8 %v4268
    %v4270 = vlaneseq
    %v4271 = vshrl.u32 %v4270, 7
    %v4272 = vsub.s32 %v4269, %v4271
    %v4273 = vrot.slane %v4222, %v4272
    %v4275 = vunpack.c.l.s4 1987475062
    %v4276 = vunpack.c.0.s8 %v4275
    %v4277 = vlaneseq
    %v4278 = vshrl.u32 %v4277, 7
    %v4279 = vsub.s32 %v4276, %v4278
    %v4280 = vrot.slane %v4222, %v4279
    %v4289 = vsub.f32 %v4165, %v4231
    %v4290 = vsub.f32 %v4166, %v4238
    %v4291 = vsub.f32 %v4167, %v4245
    %v4292 = vsub.f32 %v4168, %v4252
    %v4293 = vsub.f32 %v4169, %v4259
    %v4294 = vsub.f32 %v4170, %v4266
    %v4295 = vsub.f32 %v4171, %v4273
    %v4296 = vsub.f32 %v4172, %v4280
    %v4297 = vmul.f32 %v4289, %v4289
    %v4298 = vmul.f32 %v4290, %v4290
    %v4299 = vmul.f32 %v4291, %v4291
    %v4300 = vmul.f32 %v4292, %v4292
    %v4301 = vmul.f32 %v4293, %v4293
    %v4302 = vmul.f32 %v4294, %v4294
    %v4303 = vmul.f32 %v4295, %v4295
    %v4304 = vmul.f32 %v4296, %v4296
    %v4313 = vcombine.low %v4297, %v4298
    %v4314 = vcombine.low %v4299, %v4300
    %v4316 = vunpack.c.l.s4 1983009808
    %v4317 = vunpack.c.0.s8 %v4316
    %v4318 = vlaneseq
    %v4319 = vshrl.u32 %v4318, 7
    %v4320 = vsub.s32 %v4317, %v4319
    %v4321 = vrot.slane %v4313, %v4320
    %v4323 = vunpack.c.l.s4 1983009808
    %v4324 = vunpack.c.0.s8 %v4323
    %v4325 = vlaneseq
    %v4326 = vshrl.u32 %v4325, 7
    %v4327 = vsub.s32 %v4324, %v4326
    %v4328 = vrot.slane %v4314, %v4327
    %v4329 = vcombine.low %v4321, %v4328
    %v4330 = vcombine.low %v4301, %v4302
    %v4331 = vcombine.low %v4303, %v4304
    %v4333 = vunpack.c.l.s4 1983009808
    %v4334 = vunpack.c.0.s8 %v4333
    %v4335 = vlaneseq
    %v4336 = vshrl.u32 %v4335, 7
    %v4337 = vsub.s32 %v4334, %v4336
    %v4338 = vrot.slane %v4330, %v4337
    %v4340 = vunpack.c.l.s4 1983009808
    %v4341 = vunpack.c.0.s8 %v4340
    %v4342 = vlaneseq
    %v4343 = vshrl.u32 %v4342, 7
    %v4344 = vsub.s32 %v4341, %v4343
    %v4345 = vrot.slane %v4331, %v4344
    %v4346 = vcombine.low %v4338, %v4345
    %4349 = vadd.xlane.f32.xlu0 %v4329
    %v4350 = vpop.xlane.xlu0 %4349
    %4351 = vadd.xlane.f32.xlu0 %v4346
    %v4352 = vpop.xlane.xlu0 %4351
    %v4353 = vmul.f32 %v4350, %v238
    %v4354 = vmul.f32 %v4352, %v238
    %v4355 = vadd.f32 %v4353, 1e-05
    %v4356 = vadd.f32 %v4354, 1e-05
    %v4357 = vrsqrt.pop %v4355
    %v4358 = vrsqrt.pop %v4356
    %v4362 = vunpack.c.l.s4 269488144
    %v4363 = vunpack.c.0.s8 %v4362
    %v4364 = vlaneseq
    %v4365 = vshrl.u32 %v4364, 7
    %v4366 = vsub.s32 %v4363, %v4365
    %v4367 = vrot.slane %v4357, %v4366
    %v4369 = vunpack.c.l.s4 842150450
    %v4370 = vunpack.c.0.s8 %v4369
    %v4371 = vlaneseq
    %v4372 = vshrl.u32 %v4371, 7
    %v4373 = vsub.s32 %v4370, %v4372
    %v4374 = vrot.slane %v4357, %v4373
    %v4376 = vunpack.c.l.s4 1414812756
    %v4377 = vunpack.c.0.s8 %v4376
    %v4378 = vlaneseq
    %v4379 = vshrl.u32 %v4378, 7
    %v4380 = vsub.s32 %v4377, %v4379
    %v4381 = vrot.slane %v4357, %v4380
    %v4383 = vunpack.c.l.s4 1987475062
    %v4384 = vunpack.c.0.s8 %v4383
    %v4385 = vlaneseq
    %v4386 = vshrl.u32 %v4385, 7
    %v4387 = vsub.s32 %v4384, %v4386
    %v4388 = vrot.slane %v4357, %v4387
    %v4390 = vunpack.c.l.s4 269488144
    %v4391 = vunpack.c.0.s8 %v4390
    %v4392 = vlaneseq
    %v4393 = vshrl.u32 %v4392, 7
    %v4394 = vsub.s32 %v4391, %v4393
    %v4395 = vrot.slane %v4358, %v4394
    %v4397 = vunpack.c.l.s4 842150450
    %v4398 = vunpack.c.0.s8 %v4397
    %v4399 = vlaneseq
    %v4400 = vshrl.u32 %v4399, 7
    %v4401 = vsub.s32 %v4398, %v4400
    %v4402 = vrot.slane %v4358, %v4401
    %v4404 = vunpack.c.l.s4 1414812756
    %v4405 = vunpack.c.0.s8 %v4404
    %v4406 = vlaneseq
    %v4407 = vshrl.u32 %v4406, 7
    %v4408 = vsub.s32 %v4405, %v4407
    %v4409 = vrot.slane %v4358, %v4408
    %v4411 = vunpack.c.l.s4 1987475062
    %v4412 = vunpack.c.0.s8 %v4411
    %v4413 = vlaneseq
    %v4414 = vshrl.u32 %v4413, 7
    %v4415 = vsub.s32 %v4412, %v4414
    %v4416 = vrot.slane %v4358, %v4415
    %v4425 = vmul.f32 %v4289, %v4367
    %v4426 = vmul.f32 %v4290, %v4374
    %v4427 = vmul.f32 %v4291, %v4381
    %v4428 = vmul.f32 %v4292, %v4388
    %v4429 = vmul.f32 %v4293, %v4395
    %v4430 = vmul.f32 %v4294, %v4402
    %v4431 = vmul.f32 %v4295, %v4409
    %v4432 = vmul.f32 %v4296, %v4416
    %v4433 = vld [vmem:[%s13] sm:$0x1]
    %v4435 = vlaneseq
    %v4436 = vshrl.u32 %v4435, 7
    %v4437 = vsub.s32 0, %v4436
    %v4438 = vrot.slane %v4433, %v4437
    %v4439 = vcombine.high %v4438, %v4438
    %v4441 = vunpack.c.l.s4 1983009808
    %v4442 = vunpack.c.0.s8 %v4441
    %v4443 = vlaneseq
    %v4444 = vshrl.u32 %v4443, 7
    %v4445 = vsub.s32 %v4442, %v4444
    %v4446 = vrot.slane %v4438, %v4445
    %v4448 = vunpack.c.l.s4 1983009808
    %v4449 = vunpack.c.0.s8 %v4448
    %v4450 = vlaneseq
    %v4451 = vshrl.u32 %v4450, 7
    %v4452 = vsub.s32 %v4449, %v4451
    %v4453 = vrot.slane %v4439, %v4452
    %v4454 = vcombine.high %v4446, %v4446
    %v4455 = vcombine.high %v4453, %v4453
    %v4460 = vmul.f32 %v4425, %v4446
    %v4461 = vmul.f32 %v4426, %v4454
    %v4462 = vmul.f32 %v4427, %v4453
    %v4463 = vmul.f32 %v4428, %v4455
    %v4464 = vmul.f32 %v4429, %v4446
    %v4465 = vmul.f32 %v4430, %v4454
    %v4466 = vmul.f32 %v4431, %v4453
    %v4467 = vmul.f32 %v4432, %v4455
    %v4468 = vld [vmem:[%s14] sm:$0x1]
    %v4470 = vlaneseq
    %v4471 = vshrl.u32 %v4470, 7
    %v4472 = vsub.s32 0, %v4471
    %v4473 = vrot.slane %v4468, %v4472
    %v4474 = vcombine.high %v4473, %v4473
    %v4476 = vunpack.c.l.s4 1983009808
    %v4477 = vunpack.c.0.s8 %v4476
    %v4478 = vlaneseq
    %v4479 = vshrl.u32 %v4478, 7
    %v4480 = vsub.s32 %v4477, %v4479
    %v4481 = vrot.slane %v4473, %v4480
    %v4483 = vunpack.c.l.s4 1983009808
    %v4484 = vunpack.c.0.s8 %v4483
    %v4485 = vlaneseq
    %v4486 = vshrl.u32 %v4485, 7
    %v4487 = vsub.s32 %v4484, %v4486
    %v4488 = vrot.slane %v4474, %v4487
    %v4489 = vcombine.high %v4481, %v4481
    %v4490 = vcombine.high %v4488, %v4488
    %v4495 = vadd.f32 %v4460, %v4481
    %v4496 = vadd.f32 %v4461, %v4489
    %v4497 = vadd.f32 %v4462, %v4488
    %v4498 = vadd.f32 %v4463, %v4490
    %v4499 = vadd.f32 %v4464, %v4481
    %v4500 = vadd.f32 %v4465, %v4489
    %v4501 = vadd.f32 %v4466, %v4488
    %v4502 = vadd.f32 %v4467, %v4490
    %v4511 = vcombine.low %v4495, %v4496
    %v4512 = vcombine.low %v4497, %v4498
    %v4514 = vunpack.c.l.s4 1983009808
    %v4515 = vunpack.c.0.s8 %v4514
    %v4516 = vlaneseq
    %v4517 = vshrl.u32 %v4516, 7
    %v4518 = vsub.s32 %v4515, %v4517
    %v4519 = vrot.slane %v4511, %v4518
    %v4521 = vunpack.c.l.s4 1983009808
    %v4522 = vunpack.c.0.s8 %v4521
    %v4523 = vlaneseq
    %v4524 = vshrl.u32 %v4523, 7
    %v4525 = vsub.s32 %v4522, %v4524
    %v4526 = vrot.slane %v4512, %v4525
    %v4527 = vcombine.low %v4519, %v4526
    %v4528 = vcombine.low %v4499, %v4500
    %v4529 = vcombine.low %v4501, %v4502
    %v4531 = vunpack.c.l.s4 1983009808
    %v4532 = vunpack.c.0.s8 %v4531
    %v4533 = vlaneseq
    %v4534 = vshrl.u32 %v4533, 7
    %v4535 = vsub.s32 %v4532, %v4534
    %v4536 = vrot.slane %v4528, %v4535
    %v4538 = vunpack.c.l.s4 1983009808
    %v4539 = vunpack.c.0.s8 %v4538
    %v4540 = vlaneseq
    %v4541 = vshrl.u32 %v4540, 7
    %v4542 = vsub.s32 %v4539, %v4541
    %v4543 = vrot.slane %v4529, %v4542
    %v4544 = vcombine.low %v4536, %v4543
    %v4547 = vpack.c.bf16 %v4544, %v4527
    %v4548 = vld [vmem:[#allocation14] sm:$0xf]
    %v4549 = vld [vmem:[#allocation14 + $0x4] sm:$0xf]
    %v4550 = vld [vmem:[#allocation14 + $0x8] sm:$0xf]
    %v4551 = vld [vmem:[#allocation14 + $0xc] sm:$0xf]
    %v4552 = vld [vmem:[#allocation14 + $0x10] sm:$0xf]
    %v4553 = vld [vmem:[#allocation14 + $0x14] sm:$0xf]
    %v4554 = vld [vmem:[#allocation14 + $0x18] sm:$0xf]
    %v4555 = vld [vmem:[#allocation14 + $0x1c] sm:$0xf]
    %v4556 = vld [vmem:[#allocation14 + $0x20] sm:$0xf]
    %v4557 = vld [vmem:[#allocation14 + $0x24] sm:$0xf]
    %v4558 = vld [vmem:[#allocation14 + $0x28] sm:$0xf]
    %v4559 = vld [vmem:[#allocation14 + $0x2c] sm:$0xf]
    %v4560 = vld [vmem:[#allocation14 + $0x30] sm:$0xf]
    %v4561 = vld [vmem:[#allocation14 + $0x34] sm:$0xf]
    %v4562 = vld [vmem:[#allocation14 + $0x38] sm:$0xf]
    %v4563 = vld [vmem:[#allocation14 + $0x3c] sm:$0xf]
    %v4564 = vld [vmem:[%s16] sm:$0x1]
    %v4566 = vlaneseq
    %v4567 = vshrl.u32 %v4566, 7
    %v4568 = vsub.s32 0, %v4567
    %v4569 = vrot.slane %v4564, %v4568
    %v4587 = vunpack.c.l.b16 %v4548
    %v4588 = vunpack.c.l.b16 %v4549
    %v4589 = vunpack.c.l.b16 %v4550
    %v4590 = vunpack.c.l.b16 %v4551
    %v4591 = vunpack.c.l.b16 %v4552
    %v4592 = vunpack.c.l.b16 %v4553
    %v4593 = vunpack.c.l.b16 %v4554
    %v4594 = vunpack.c.l.b16 %v4555
    %v4595 = vunpack.c.l.b16 %v4556
    %v4596 = vunpack.c.l.b16 %v4557
    %v4597 = vunpack.c.l.b16 %v4558
    %v4598 = vunpack.c.l.b16 %v4559
    %v4599 = vunpack.c.l.b16 %v4560
    %v4600 = vunpack.c.l.b16 %v4561
    %v4601 = vunpack.c.l.b16 %v4562
    %v4602 = vunpack.c.l.b16 %v4563
    %v4603 = vpack.c.b16 %v4588, %v4587
    %v4604 = vpack.c.b16 %v4590, %v4589
    %v4605 = vpack.c.b16 %v4592, %v4591
    %v4606 = vpack.c.b16 %v4594, %v4593
    %v4607 = vpack.c.b16 %v4596, %v4595
    %v4608 = vpack.c.b16 %v4598, %v4597
    %v4609 = vpack.c.b16 %v4600, %v4599
    %v4610 = vpack.c.b16 %v4602, %v4601
    %4619 = vmatprep.subr.bf16.mxu0 0
    %4620 = vmatpush1.bf16.msra.mxu0 %v4610
    %4621 = vmatprep.subr.bf16.mxu0 0
    %4622 = vmatpush1.bf16.msra.mxu0 %v4609
    %4623 = vmatprep.subr.bf16.mxu0 0
    %4624 = vmatpush1.bf16.msra.mxu0 %v4608
    %4625 = vmatprep.subr.bf16.mxu0 0
    %4626 = vmatpush1.bf16.msra.mxu0 %v4607
    %4627 = vmatprep.subr.bf16.mxu0 0
    %4628 = vmatpush1.bf16.msra.mxu0 %v4606
    %4629 = vmatprep.subr.bf16.mxu0 0
    %4630 = vmatpush1.bf16.msra.mxu0 %v4605
    %4631 = vmatprep.subr.bf16.mxu0 0
    %4632 = vmatpush1.bf16.msra.mxu0 %v4604
    %4633 = vmatprep.subr.bf16.mxu0 0
    %4634 = vmatpush1.bf16.msra.mxu0 %v4603
    %4635 = vmatprep.subr.bf16.mxu0 0
    %4636 = vmatpush2.bf16.msra.mxu0 0
    %4637 = vmatprep.subr.bf16.mxu0 0
    %4638 = vmatpush2.bf16.msra.mxu0 0
    %4639 = vmatprep.subr.bf16.mxu0 0
    %4640 = vmatpush2.bf16.msra.mxu0 0
    %4641 = vmatprep.subr.bf16.mxu0 0
    %4642 = vmatpush2.bf16.msra.mxu0 0
    %4643 = vmatprep.subr.bf16.mxu0 0
    %4644 = vmatpush2.bf16.msra.mxu0 0
    %4645 = vmatprep.subr.bf16.mxu0 0
    %4646 = vmatpush2.bf16.msra.mxu0 0
    %4647 = vmatprep.subr.bf16.mxu0 0
    %4648 = vmatpush2.bf16.msra.mxu0 0
    %4649 = vmatprep.subr.bf16.mxu0 0
    %4650 = vmatpush2.bf16.msra.mxu0 0
    %4651 = vmatprep.mubr.bf16.mxu0 0
    %4652 = vmatmul.mubr.bf16.gmra.mxu0 %v4547
    %v4653 = vpop.f32.mrf.mxu0
    %v4654 = vadd.f32 %v4569, %v4653
    %v4655 = vpop.f32.mrf.mxu0
    %v4656 = vpop.f32.mrf.mxu0
    %v4657 = vadd.f32 %v4569, %v4656
    %v4658 = vpop.f32.mrf.mxu0
    %4659 = vdwg.mxu0
    %v4660 = vmax.f32 %v4654, 0.0
    %v4661 = vmax.f32 %v4657, 0.0
    %v4662 = vpack.c.bf16 %v4661, %v4660
    %v4663 = vld [vmem:[#allocation16] sm:$0xf]
    %v4664 = vld [vmem:[#allocation16 + $0x4] sm:$0xf]
    %v4665 = vld [vmem:[#allocation16 + $0x8] sm:$0xf]
    %v4666 = vld [vmem:[#allocation16 + $0xc] sm:$0xf]
    %v4667 = vld [vmem:[#allocation16 + $0x10] sm:$0xf]
    %v4668 = vld [vmem:[#allocation16 + $0x14] sm:$0xf]
    %v4669 = vld [vmem:[#allocation16 + $0x18] sm:$0xf]
    %v4670 = vld [vmem:[#allocation16 + $0x1c] sm:$0xf]
    %v4671 = vld [vmem:[#allocation16 + $0x20] sm:$0xf]
    %v4672 = vld [vmem:[#allocation16 + $0x24] sm:$0xf]
    %v4673 = vld [vmem:[#allocation16 + $0x28] sm:$0xf]
    %v4674 = vld [vmem:[#allocation16 + $0x2c] sm:$0xf]
    %v4675 = vld [vmem:[#allocation16 + $0x30] sm:$0xf]
    %v4676 = vld [vmem:[#allocation16 + $0x34] sm:$0xf]
    %v4677 = vld [vmem:[#allocation16 + $0x38] sm:$0xf]
    %v4678 = vld [vmem:[#allocation16 + $0x3c] sm:$0xf]
    %v4679 = vld [vmem:[%s18] sm:$0x1]
    %v4681 = vlaneseq
    %v4682 = vshrl.u32 %v4681, 7
    %v4683 = vsub.s32 0, %v4682
    %v4684 = vrot.slane %v4679, %v4683
    %v4702 = vunpack.c.l.b16 %v4663
    %v4703 = vunpack.c.l.b16 %v4664
    %v4704 = vunpack.c.l.b16 %v4665
    %v4705 = vunpack.c.l.b16 %v4666
    %v4706 = vunpack.c.l.b16 %v4667
    %v4707 = vunpack.c.l.b16 %v4668
    %v4708 = vunpack.c.l.b16 %v4669
    %v4709 = vunpack.c.l.b16 %v4670
    %v4710 = vunpack.c.l.b16 %v4671
    %v4711 = vunpack.c.l.b16 %v4672
    %v4712 = vunpack.c.l.b16 %v4673
    %v4713 = vunpack.c.l.b16 %v4674
    %v4714 = vunpack.c.l.b16 %v4675
    %v4715 = vunpack.c.l.b16 %v4676
    %v4716 = vunpack.c.l.b16 %v4677
    %v4717 = vunpack.c.l.b16 %v4678
    %v4718 = vpack.c.b16 %v4703, %v4702
    %v4719 = vpack.c.b16 %v4705, %v4704
    %v4720 = vpack.c.b16 %v4707, %v4706
    %v4721 = vpack.c.b16 %v4709, %v4708
    %v4722 = vpack.c.b16 %v4711, %v4710
    %v4723 = vpack.c.b16 %v4713, %v4712
    %v4724 = vpack.c.b16 %v4715, %v4714
    %v4725 = vpack.c.b16 %v4717, %v4716
    %4734 = vmatprep.subr.bf16.mxu0 0
    %4735 = vmatpush1.bf16.msra.mxu0 %v4725
    %4736 = vmatprep.subr.bf16.mxu0 0
    %4737 = vmatpush1.bf16.msra.mxu0 %v4724
    %4738 = vmatprep.subr.bf16.mxu0 0
    %4739 = vmatpush1.bf16.msra.mxu0 %v4723
    %4740 = vmatprep.subr.bf16.mxu0 0
    %4741 = vmatpush1.bf16.msra.mxu0 %v4722
    %4742 = vmatprep.subr.bf16.mxu0 0
    %4743 = vmatpush1.bf16.msra.mxu0 %v4721
    %4744 = vmatprep.subr.bf16.mxu0 0
    %4745 = vmatpush1.bf16.msra.mxu0 %v4720
    %4746 = vmatprep.subr.bf16.mxu0 0
    %4747 = vmatpush1.bf16.msra.mxu0 %v4719
    %4748 = vmatprep.subr.bf16.mxu0 0
    %4749 = vmatpush1.bf16.msra.mxu0 %v4718
    %4750 = vmatprep.subr.bf16.mxu0 0
    %4751 = vmatpush2.bf16.msra.mxu0 0
    %4752 = vmatprep.subr.bf16.mxu0 0
    %4753 = vmatpush2.bf16.msra.mxu0 0
    %4754 = vmatprep.subr.bf16.mxu0 0
    %4755 = vmatpush2.bf16.msra.mxu0 0
    %4756 = vmatprep.subr.bf16.mxu0 0
    %4757 = vmatpush2.bf16.msra.mxu0 0
    %4758 = vmatprep.subr.bf16.mxu0 0
    %4759 = vmatpush2.bf16.msra.mxu0 0
    %4760 = vmatprep.subr.bf16.mxu0 0
    %4761 = vmatpush2.bf16.msra.mxu0 0
    %4762 = vmatprep.subr.bf16.mxu0 0
    %4763 = vmatpush2.bf16.msra.mxu0 0
    %4764 = vmatprep.subr.bf16.mxu0 0
    %4765 = vmatpush2.bf16.msra.mxu0 0
    %4766 = vmatprep.mubr.bf16.mxu0 0
    %4767 = vmatmul.mubr.bf16.gmra.mxu0 %v4662
    %v4768 = vpop.f32.mrf.mxu0
    %v4769 = vadd.f32 %v4684, %v4768
    %v4770 = vpop.f32.mrf.mxu0
    %v4771 = vpop.f32.mrf.mxu0
    %v4772 = vadd.f32 %v4684, %v4771
    %v4773 = vpop.f32.mrf.mxu0
    %4774 = vdwg.mxu0
    %v4777 = vcombine.high %v4769, %v4769
    %v4779 = vunpack.c.l.s4 1983009808
    %v4780 = vunpack.c.0.s8 %v4779
    %v4781 = vlaneseq
    %v4782 = vshrl.u32 %v4781, 7
    %v4783 = vsub.s32 %v4780, %v4782
    %v4784 = vrot.slane %v4769, %v4783
    %v4786 = vunpack.c.l.s4 1983009808
    %v4787 = vunpack.c.0.s8 %v4786
    %v4788 = vlaneseq
    %v4789 = vshrl.u32 %v4788, 7
    %v4790 = vsub.s32 %v4787, %v4789
    %v4791 = vrot.slane %v4777, %v4790
    %v4792 = vcombine.high %v4784, %v4784
    %v4793 = vcombine.high %v4791, %v4791
    %v4794 = vcombine.high %v4772, %v4772
    %v4796 = vunpack.c.l.s4 1983009808
    %v4797 = vunpack.c.0.s8 %v4796
    %v4798 = vlaneseq
    %v4799 = vshrl.u32 %v4798, 7
    %v4800 = vsub.s32 %v4797, %v4799
    %v4801 = vrot.slane %v4772, %v4800
    %v4803 = vunpack.c.l.s4 1983009808
    %v4804 = vunpack.c.0.s8 %v4803
    %v4805 = vlaneseq
    %v4806 = vshrl.u32 %v4805, 7
    %v4807 = vsub.s32 %v4804, %v4806
    %v4808 = vrot.slane %v4794, %v4807
    %v4809 = vcombine.high %v4801, %v4801
    %v4810 = vcombine.high %v4808, %v4808
    %v4819 = vadd.f32 %v3025, %v4784
    %v4820 = vadd.f32 %v3026, %v4792
    %v4821 = vadd.f32 %v3027, %v4791
    %v4822 = vadd.f32 %v3028, %v4793
    %v4823 = vadd.f32 %v3029, %v4801
    %v4824 = vadd.f32 %v3030, %v4809
    %v4825 = vadd.f32 %v3031, %v4808
    %v4826 = vadd.f32 %v3032, %v4810
    %v4827 = vadd.f32 %v4819, %v4130
    %v4828 = vadd.f32 %v4820, %v4138
    %v4829 = vadd.f32 %v4821, %v4137
    %v4830 = vadd.f32 %v4822, %v4139
    %v4831 = vadd.f32 %v4823, %v4147
    %v4832 = vadd.f32 %v4824, %v4155
    %v4833 = vadd.f32 %v4825, %v4154
    %v4834 = vadd.f32 %v4826, %v4156
    %4835 = vst [vmem:[#allocation17] sm:$0x3] %v4827
    %4836 = vst [vmem:[#allocation17 + $0x2] sm:$0x3] %v4828
    %4837 = vst [vmem:[#allocation17 + $0x4] sm:$0x3] %v4829
    %4838 = vst [vmem:[#allocation17 + $0x6] sm:$0x3] %v4830
    %4839 = vst [vmem:[#allocation17 + $0x8] sm:$0x3] %v4831
    %4840 = vst [vmem:[#allocation17 + $0xa] sm:$0x3] %v4832
    %4841 = vst [vmem:[#allocation17 + $0xc] sm:$0x3] %v4833
    %4842 = vst [vmem:[#allocation17 + $0xe] sm:$0x3] %v4834
    // Predicated region
    $region114: #{tpu_custom_call.1} parent=1 // pred_check
      _
    $region115: #{tpu_custom_call.1} parent=1 // pred_check_branch
      %4844 = sbr.rel (0) target = $region117
    $region116: #{tpu_custom_call.1} parent=1 // pred_region
      %s4846 = ssub.s32 256, 256
      %4847 = vsyncadd [#allocation4], %s4846
      %s4848 = sshll.u32 [#allocation17], 4
      %s4849 = int_to_ptr.vmem [resolvable:$true] %s4848
      %4854 = dma.vmem_to_hbm [thread:$0]  %s4849, 256, %s19, [#allocation4], 32, 32, 2
    $region117: #{tpu_custom_call.1} parent=1 // pred_fallthru
      _
    // Predicated region
    $region118: #{tpu_custom_call.1} parent=1 // pred_check
      _
    $region119: #{tpu_custom_call.1} parent=1 // pred_check_branch
      %4856 = sbr.rel (0) target = $region121
    $region120: #{tpu_custom_call.1} parent=1 // pred_region
      %4857 = dma.done [#allocation4], 256
    $region121: #{tpu_custom_call.1} parent=1 // pred_fallthru
      _
    %4858 = vsyncpa [#allocation3], 1
    %4859 = vsyncpa [#allocation6], 1
    %4860 = vsyncpa [#allocation9], 1
    %4861 = vsyncpa [#allocation12], 1
    %4862 = vsyncpa [#allocation15], 1
    %4863 = vsyncpa [#allocation4], 1

// kernel: tpu_custom_call.1
$region0: #{tpu_custom_call.1}
  #allocation0 [shape = 'u32[]', space=smem, size = 0x4, offset = 0x4, fixed_abs, tag = 'smem constant byte address 0x4 - core index']
  #allocation1 [shape = 'u32[144,128]{1,0:T(1,128)}', space=vmem, size = 0x12000, scoped, tag = 'internal scratch']
  %s0 = inlined_call_operand.hbm [shape: f32[8,2,128], index: 0, kind: input, shape index: {}]
  %s1 = inlined_call_operand.hbm [shape: f32[1,128], index: 1, kind: input, shape index: {}]
  %s2 = inlined_call_operand.hbm [shape: f32[1,128], index: 2, kind: input, shape index: {}]
  %s3 = inlined_call_operand.hbm [shape: bf16[128,384], index: 3, kind: input, shape index: {}]
  %s4 = inlined_call_operand.vmem [shape: f32[1,384], index: 4, kind: input, shape index: {}]
  %s5 = inlined_call_operand.hbm [shape: bf16[128,128], index: 5, kind: input, shape index: {}]
  %s6 = inlined_call_operand.vmem [shape: f32[1,128], index: 6, kind: input, shape index: {}]
  %s7 = inlined_call_operand.vmem [shape: f32[1,128], index: 7, kind: input, shape index: {}]
  %s8 = inlined_call_operand.vmem [shape: f32[1,128], index: 8, kind: input, shape index: {}]
  %s9 = inlined_call_operand.hbm [shape: bf16[128,512], index: 9, kind: input, shape index: {}]
  %s10 = inlined_call_operand.vmem [shape: f32[1,512], index: 10, kind: input, shape index: {}]
  %s11 = inlined_call_operand.hbm [shape: bf16[512,128], index: 11, kind: input, shape index: {}]
  %s12 = inlined_call_operand.vmem [shape: f32[1,128], index: 12, kind: input, shape index: {}]
  %s13 = inlined_call_operand.vmem [shape: f32[1,128], index: 13, kind: input, shape index: {}]
  %s14 = inlined_call_operand.vmem [shape: f32[1,128], index: 14, kind: input, shape index: {}]
  %s15 = inlined_call_operand.hbm [shape: bf16[128,128], index: 15, kind: input, shape index: {}]
  %s16 = inlined_call_operand.vmem [shape: f32[1,128], index: 16, kind: input, shape index: {}]
  %s17 = inlined_call_operand.hbm [shape: bf16[128,128], index: 17, kind: input, shape index: {}]
  %s18 = inlined_call_operand.vmem [shape: f32[1,128], index: 18, kind: input, shape index: {}]
  %s19 = inlined_call_operand.hbm [shape: f32[8,2,128], index: 19, kind: output, shape index: {}]
  %s20 = sld [smem:[#allocation0]]
  $region122: #{tpu_custom_call.1} parent=0
    _
  %s22 = ssub.s32 1, %s20
  %s23 = scalar_select 0, %s22, %s20
  $region1: #{tpu_custom_call.1} parent=0
    #allocation2 [shape = 'u8[8192]{0}', space=vmem, size = 0x2000, scoped, tag = 'input window, operand 0, single buffered']
    #allocation3 [shape = 's32[1]{0}', space=sflag, size = 0x4, scoped, tag = 'scoped memory for tpu_custom_call.1']
    #allocation4 [shape = 's32[1]{0}', space=sflag, size = 0x4, scoped, tag = 'scoped memory for tpu_custom_call.1']
    #allocation5 [shape = 'u8[512]{0}', space=vmem, size = 0x400, scoped, tag = 'input window, operand 1, single buffered']
    #allocation6 [shape = 's32[1]{0}', space=sflag, size = 0x4, scoped, tag = 'scoped memory for tpu_custom_call.1']
    #allocation7 [shape = 'u8[512]{0}', space=vmem, size = 0x400, scoped, tag = 'input window, operand 2, single buffered']
    #allocation8 [shape = 'u8[98304]{0}', space=vmem, size = 0x18000, scoped, tag = 'input window, operand 3, single buffered']
    #allocation9 [shape = 's32[1]{0}', space=sflag, size = 0x4, scoped, tag = 'scoped memory for tpu_custom_call.1']
    #allocation10 [shape = 'u8[32768]{0}', space=vmem, size = 0x8000, scoped, tag = 'input window, operand 5, single buffered']
    #allocation11 [shape = 'u8[131072]{0}', space=vmem, size = 0x20000, scoped, tag = 'input window, operand 9, single buffered']
    #allocation12 [shape = 's32[1]{0}', space=sflag, size = 0x4, scoped, tag = 'scoped memory for tpu_custom_call.1']
    #allocation13 [shape = 'u8[131072]{0}', space=vmem, size = 0x20000, scoped, tag = 'input window, operand 11, single buffered']
    #allocation14 [shape = 'u8[32768]{0}', space=vmem, size = 0x8000, scoped, tag = 'input window, operand 15, single buffered']
    #allocation15 [shape = 's32[1]{0}', space=sflag, size = 0x4, scoped, tag = 'scoped memory for tpu_custom_call.1']
    #allocation16 [shape = 'u8[32768]{0}', space=vmem, size = 0x8000, scoped, tag = 'input window, operand 17, single buffered']
    #allocation17 [shape = 'u8[8192]{0}', space=vmem, size = 0x2000, scoped, tag = 'output window, operand 0, single buffered']
    %24 = vsyncpa [#allocation3], 0
    %25 = vsyncpa [#allocation6], 0
    %26 = vsyncpa [#allocation9], 0
    %27 = vsyncpa [#allocation12], 0
    %28 = vsyncpa [#allocation15], 0
    %29 = vsyncpa [#allocation4], 0
    // Predicated region
    $region2: #{tpu_custom_call.1} parent=1 // pred_check
      _
    $region3: #{tpu_custom_call.1} parent=1 // pred_check_branch
      %31 = sbr.rel (0) target = $region5
    $region4: #{tpu_custom_call.1} parent=1 // pred_region
      %s33 = ssub.s32 256, 256
      %34 = vsyncadd [#allocation3], %s33
      %s35 = sshll.u32 [#allocation2], 4
      %s36 = int_to_ptr.vmem [resolvable:$true] %s35
      %41 = dma.hbm_to_vmem [thread:$0]  %s0, 256, %s36, [#allocation3], 32, 32, 2
    $region5: #{tpu_custom_call.1} parent=1 // pred_fallthru
      _
    // Predicated region
    $region6: #{tpu_custom_call.1} parent=1 // pred_check
      _
    $region7: #{tpu_custom_call.1} parent=1 // pred_check_branch
      %43 = sbr.rel (0) target = $region9
    $region8: #{tpu_custom_call.1} parent=1 // pred_region
      %s45 = ssub.s32 16, 16
      %46 = vsyncadd [#allocation6], %s45
      %s48 = sshll.u32 [#allocation5], 4
      %s49 = int_to_ptr.vmem [resolvable:$true] %s48
      %51 = dma.hbm_to_vmem [thread:$0]  %s1, 16, %s49, [#allocation6]
    $region9: #{tpu_custom_call.1} parent=1 // pred_fallthru
      _
    // Predicated region
    $region10: #{tpu_custom_call.1} parent=1 // pred_check
      _
    $region11: #{tpu_custom_call.1} parent=1 // pred_check_branch
      %53 = sbr.rel (0) target = $region13
    $region12: #{tpu_custom_call.1} parent=1 // pred_region
      %s55 = ssub.s32 16, 16
      %56 = vsyncadd [#allocation6], %s55
      %s58 = sshll.u32 [#allocation7], 4
      %s59 = int_to_ptr.vmem [resolvable:$true] %s58
      %61 = dma.hbm_to_vmem [thread:$0]  %s2, 16, %s59, [#allocation6]
    $region13: #{tpu_custom_call.1} parent=1 // pred_fallthru
      _
    // Predicated region
    $region14: #{tpu_custom_call.1} parent=1 // pred_check
      _
    $region15: #{tpu_custom_call.1} parent=1 // pred_check_branch
      %63 = sbr.rel (0) target = $region17
    $region16: #{tpu_custom_call.1} parent=1 // pred_region
      %s65 = ssub.s32 3072, 3072
      %66 = vsyncadd [#allocation9], %s65
      %s67 = sshll.u32 [#allocation8], 4
      %s68 = int_to_ptr.vmem [resolvable:$true] %s67
      %73 = dma.hbm_to_vmem [thread:$0]  %s3, 3072, %s68, [#allocation9], 192, 192, 12
    $region17: #{tpu_custom_call.1} parent=1 // pred_fallthru
      _
    // Predicated region
    $region18: #{tpu_custom_call.1} parent=1 // pred_check
      _
    $region19: #{tpu_custom_call.1} parent=1 // pred_check_branch
      %75 = sbr.rel (0) target = $region21
    $region20: #{tpu_custom_call.1} parent=1 // pred_region
      _
    $region21: #{tpu_custom_call.1} parent=1 // pred_fallthru
      _
    // Predicated region
    $region22: #{tpu_custom_call.1} parent=1 // pred_check
      _
    $region23: #{tpu_custom_call.1} parent=1 // pred_check_branch
      %77 = sbr.rel (0) target = $region25
    $region24: #{tpu_custom_call.1} parent=1 // pred_region
      %s79 = ssub.s32 1024, 1024
      %80 = vsyncadd [#allocation9], %s79
      %s81 = sshll.u32 [#allocation10], 4
      %s82 = int_to_ptr.vmem [resolvable:$true] %s81
      %87 = dma.hbm_to_vmem [thread:$0]  %s5, 1024, %s82, [#allocation9], 64, 64, 4
    $region25: #{tpu_custom_call.1} parent=1 // pred_fallthru
      _
    // Predicated region
    $region26: #{tpu_custom_call.1} parent=1 // pred_check
      _
    $region27: #{tpu_custom_call.1} parent=1 // pred_check_branch
      %89 = sbr.rel (0) target = $region29
    $region28: #{tpu_custom_call.1} parent=1 // pred_region
      _
    $region29: #{tpu_custom_call.1} parent=1 // pred_fallthru
      _
    // Predicated region
    $region30: #{tpu_custom_call.1} parent=1 // pred_check
      _
    $region31: #{tpu_custom_call.1} parent=1 // pred_check_branch
      %91 = sbr.rel (0) target = $region33
    $region32: #{tpu_custom_call.1} parent=1 // pred_region
      _
    $region33: #{tpu_custom_call.1} parent=1 // pred_fallthru
      _
    // Predicated region
    $region34: #{tpu_custom_call.1} parent=1 // pred_check
      _
    $region35: #{tpu_custom_call.1} parent=1 // pred_check_branch
      %93 = sbr.rel (0) target = $region37
    $region36: #{tpu_custom_call.1} parent=1 // pred_region
      _
    $region37: #{tpu_custom_call.1} parent=1 // pred_fallthru
      _
    // Predicated region
    $region38: #{tpu_custom_call.1} parent=1 // pred_check
      _
    $region39: #{tpu_custom_call.1} parent=1 // pred_check_branch
      %95 = sbr.rel (0) target = $region41
    $region40: #{tpu_custom_call.1} parent=1 // pred_region
      %s97 = ssub.s32 4096, 4096
      %98 = vsyncadd [#allocation12], %s97
      %s99 = sshll.u32 [#allocation11], 4
      %s100 = int_to_ptr.vmem [resolvable:$true] %s99
      %105 = dma.hbm_to_vmem [thread:$0]  %s9, 4096, %s100, [#allocation12], 256, 256, 16
    $region41: #{tpu_custom_call.1} parent=1 // pred_fallthru
      _
    // Predicated region
    $region42: #{tpu_custom_call.1} parent=1 // pred_check
      _
    $region43: #{tpu_custom_call.1} parent=1 // pred_check_branch
      %107 = sbr.rel (0) target = $region45
    $region44: #{tpu_custom_call.1} parent=1 // pred_region
      _
    $region45: #{tpu_custom_call.1} parent=1 // pred_fallthru
      _
    // Predicated region
    $region46: #{tpu_custom_call.1} parent=1 // pred_check
      _
    $region47: #{tpu_custom_call.1} parent=1 // pred_check_branch
      %109 = sbr.rel (0) target = $region49
    $region48: #{tpu_custom_call.1} parent=1 // pred_region
      %s111 = ssub.s32 4096, 4096
      %112 = vsyncadd [#allocation12], %s111
      %s113 = sshll.u32 [#allocation13], 4
      %s114 = int_to_ptr.vmem [resolvable:$true] %s113
      %119 = dma.hbm_to_vmem [thread:$0]  %s11, 4096, %s114, [#allocation12], 64, 64, 4
    $region49: #{tpu_custom_call.1} parent=1 // pred_fallthru
      _
    // Predicated region
    $region50: #{tpu_custom_call.1} parent=1 // pred_check
      _
    $region51: #{tpu_custom_call.1} parent=1 // pred_check_branch
      %121 = sbr.rel (0) target = $region53
    $region52: #{tpu_custom_call.1} parent=1 // pred_region
      _
    $region53: #{tpu_custom_call.1} parent=1 // pred_fallthru
      _
    // Predicated region
    $region54: #{tpu_custom_call.1} parent=1 // pred_check
      _
    $region55: #{tpu_custom_call.1} parent=1 // pred_check_branch
      %123 = sbr.rel (0) target = $region57
    $region56: #{tpu_custom_call.1} parent=1 // pred_region
      _
    $region57: #{tpu_custom_call.1} parent=1 // pred_fallthru
      _
    // Predicated region
    $region58: #{tpu_custom_call.1} parent=1 // pred_check
      _
    $region59: #{tpu_custom_call.1} parent=1 // pred_check_branch
      %125 = sbr.rel (0) target = $region61
    $region60: #{tpu_custom_call.1} parent=1 // pred_region
      _
    $region61: #{tpu_custom_call.1} parent=1 // pred_fallthru
      _
    // Predicated region
    $region62: #{tpu_custom_call.1} parent=1 // pred_check
      _
    $region63: #{tpu_custom_call.1} parent=1 // pred_check_branch
      %127 = sbr.rel (0) target = $region65
    $region64: #{tpu_custom_call.1} parent=1 // pred_region
      %s129 = ssub.s32 1024, 1024
      %130 = vsyncadd [#allocation15], %s129
      %s131 = sshll.u32 [#allocation14], 4
      %s132 = int_to_ptr.vmem [resolvable:$true] %s131
      %137 = dma.hbm_to_vmem [thread:$0]  %s15, 1024, %s132, [#allocation15], 64, 64, 4
    $region65: #{tpu_custom_call.1} parent=1 // pred_fallthru
      _
    // Predicated region
    $region66: #{tpu_custom_call.1} parent=1 // pred_check
      _
    $region67: #{tpu_custom_call.1} parent=1 // pred_check_branch
      %139 = sbr.rel (0) target = $region69
    $region68: #{tpu_custom_call.1} parent=1 // pred_region
      _
    $region69: #{tpu_custom_call.1} parent=1 // pred_fallthru
      _
    // Predicated region
    $region70: #{tpu_custom_call.1} parent=1 // pred_check
      _
    $region71: #{tpu_custom_call.1} parent=1 // pred_check_branch
      %141 = sbr.rel (0) target = $region73
    $region72: #{tpu_custom_call.1} parent=1 // pred_region
      %s143 = ssub.s32 1024, 1024
      %144 = vsyncadd [#allocation15], %s143
      %s145 = sshll.u32 [#allocation16], 4
      %s146 = int_to_ptr.vmem [resolvable:$true] %s145
      %151 = dma.hbm_to_vmem [thread:$0]  %s17, 1024, %s146, [#allocation15], 64, 64, 4
    $region73: #{tpu_custom_call.1} parent=1 // pred_fallthru
      _
    // Predicated region
    $region74: #{tpu_custom_call.1} parent=1 // pred_check
      _
    $region75: #{tpu_custom_call.1} parent=1 // pred_check_branch
      %153 = sbr.rel (0) target = $region77
    $region76: #{tpu_custom_call.1} parent=1 // pred_region
      _
    $region77: #{tpu_custom_call.1} parent=1 // pred_fallthru
      _
    // Predicated region
    $region78: #{tpu_custom_call.1} parent=1 // pred_check
      _
    $region79: #{tpu_custom_call.1} parent=1 // pred_check_branch
      %155 = sbr.rel (0) target = $region81
    $region80: #{tpu_custom_call.1} parent=1 // pred_region
      %156 = dma.done [#allocation3], 256
    $region81: #{tpu_custom_call.1} parent=1 // pred_fallthru
      _
    // Predicated region
    $region82: #{tpu_custom_call.1} parent=1 // pred_check
      _
    $region83: #{tpu_custom_call.1} parent=1 // pred_check_branch
      %158 = sbr.rel (0) target = $region85
    $region84: #{tpu_custom_call.1} parent=1 // pred_region
      %159 = dma.done [#allocation6], 16
    $region85: #{tpu_custom_call.1} parent=1 // pred_fallthru
      _
    // Predicated region
    $region86: #{tpu_custom_call.1} parent=1 // pred_check
      _
    $region87: #{tpu_custom_call.1} parent=1 // pred_check_branch
      %161 = sbr.rel (0) target = $region89
    $region88: #{tpu_custom_call.1} parent=1 // pred_region
      %162 = dma.done [#allocation6], 16
    $region89: #{tpu_custom_call.1} parent=1 // pred_fallthru
      _
    // Predicated region
    $region90: #{tpu_custom_call.1} parent=1 // pred_check
      _
    $region91: #{tpu_custom_call.1} parent=1 // pred_check_branch
      %164 = sbr.rel (0) target = $region93
    $region92: #{tpu_custom_call.1} parent=1 // pred_region
      %165 = dma.done [#allocation9], 3072
    $region93: #{tpu_custom_call.1} parent=1 // pred_fallthru
      _
    // Predicated region
    $region94: #{tpu_custom_call.1} parent=1 // pred_check
      _
    $region95: #{tpu_custom_call.1} parent=1 // pred_check_branch
      %167 = sbr.rel (0) target = $region97
    $region96: #{tpu_custom_call.1} parent=1 // pred_region
      %168 = dma.done [#allocation9], 1024
    $region97: #{tpu_custom_call.1} parent=1 // pred_fallthru
      _
    // Predicated region
    $region98: #{tpu_custom_call.1} parent=1 // pred_check
      _
    $region99: #{tpu_custom_call.1} parent=1 // pred_check_branch
      %170 = sbr.rel (0) target = $region101
    $region100: #{tpu_custom_call.1} parent=1 // pred_region
      %171 = dma.done [#allocation12], 4096
    $region101: #{tpu_custom_call.1} parent=1 // pred_fallthru
      _
    // Predicated region
    $region102: #{tpu_custom_call.1} parent=1 // pred_check
      _
    $region103: #{tpu_custom_call.1} parent=1 // pred_check_branch
      %173 = sbr.rel (0) target = $region105
    $region104: #{tpu_custom_call.1} parent=1 // pred_region
      %174 = dma.done [#allocation12], 4096
    $region105: #{tpu_custom_call.1} parent=1 // pred_fallthru
      _
    // Predicated region
    $region106: #{tpu_custom_call.1} parent=1 // pred_check
      _
    $region107: #{tpu_custom_call.1} parent=1 // pred_check_branch
      %176 = sbr.rel (0) target = $region109
    $region108: #{tpu_custom_call.1} parent=1 // pred_region
      %177 = dma.done [#allocation15], 1024
    $region109: #{tpu_custom_call.1} parent=1 // pred_fallthru
      _
    // Predicated region
    $region110: #{tpu_custom_call.1} parent=1 // pred_check
      _
    $region111: #{tpu_custom_call.1} parent=1 // pred_check_branch
      %179 = sbr.rel (0) target = $region113
    $region112: #{tpu_custom_call.1} parent=1 // pred_region
      %180 = dma.done [#allocation15], 1024
    $region113: #{tpu_custom_call.1} parent=1 // pred_fallthru
      _
    %v182 = vld [vmem:[#allocation2] sm:$0x3]
    %v183 = vld [vmem:[#allocation2 + $0x2] sm:$0x3]
    %v184 = vld [vmem:[#allocation2 + $0x4] sm:$0x3]
    %v185 = vld [vmem:[#allocation2 + $0x6] sm:$0x3]
    %v186 = vld [vmem:[#allocation2 + $0x8] sm:$0x3]
    %v187 = vld [vmem:[#allocation2 + $0xa] sm:$0x3]
    %v188 = vld [vmem:[#allocation2 + $0xc] sm:$0x3]
    %v189 = vld [vmem:[#allocation2 + $0xe] sm:$0x3]
    %v198 = vcombine.low %v182, %v183
    %v199 = vcombine.low %v184, %v185
    %v201 = vunpack.c.l.s4 1983009808
    %v202 = vunpack.c.0.s8 %v201
    %v203 = vlaneseq
    %v204 = vshrl.u32 %v203, 7
    %v205 = vsub.s32 %v202, %v204
    %v206 = vrot.slane %v198, %v205
    %v208 = vunpack.c.l.s4 1983009808
    %v209 = vunpack.c.0.s8 %v208
    %v210 = vlaneseq
    %v211 = vshrl.u32 %v210, 7
    %v212 = vsub.s32 %v209, %v211
    %v213 = vrot.slane %v199, %v212
    %v214 = vcombine.low %v206, %v213
    %v215 = vcombine.low %v186, %v187
    %v216 = vcombine.low %v188, %v189
    %v218 = vunpack.c.l.s4 1983009808
    %v219 = vunpack.c.0.s8 %v218
    %v220 = vlaneseq
    %v221 = vshrl.u32 %v220, 7
    %v222 = vsub.s32 %v219, %v221
    %v223 = vrot.slane %v215, %v222
    %v225 = vunpack.c.l.s4 1983009808
    %v226 = vunpack.c.0.s8 %v225
    %v227 = vlaneseq
    %v228 = vshrl.u32 %v227, 7
    %v229 = vsub.s32 %v226, %v228
    %v230 = vrot.slane %v216, %v229
    %v231 = vcombine.low %v223, %v230
    %234 = vadd.xlane.f32.xlu0 %v214
    %v235 = vpop.xlane.xlu0 %234
    %236 = vadd.xlane.f32.xlu0 %v231
    %v237 = vpop.xlane.xlu0 %236
    %v238 = vrcp.pop 128.0
    %v239 = vmul.f32 %v235, %v238
    %v240 = vmul.f32 %v237, %v238
    %v244 = vunpack.c.l.s4 269488144
    %v245 = vunpack.c.0.s8 %v244
    %v246 = vlaneseq
    %v247 = vshrl.u32 %v246, 7
    %v248 = vsub.s32 %v245, %v247
    %v249 = vrot.slane %v239, %v248
    %v251 = vunpack.c.l.s4 842150450
    %v252 = vunpack.c.0.s8 %v251
    %v253 = vlaneseq
    %v254 = vshrl.u32 %v253, 7
    %v255 = vsub.s32 %v252, %v254
    %v256 = vrot.slane %v239, %v255
    %v258 = vunpack.c.l.s4 1414812756
    %v259 = vunpack.c.0.s8 %v258
    %v260 = vlaneseq
    %v261 = vshrl.u32 %v260, 7
    %v262 = vsub.s32 %v259, %v261
    %v263 = vrot.slane %v239, %v262
    %v265 = vunpack.c.l.s4 1987475062
    %v266 = vunpack.c.0.s8 %v265
    %v267 = vlaneseq
    %v268 = vshrl.u32 %v267, 7
    %v269 = vsub.s32 %v266, %v268
    %v270 = vrot.slane %v239, %v269
    %v272 = vunpack.c.l.s4 269488144
    %v273 = vunpack.c.0.s8 %v272
    %v274 = vlaneseq
    %v275 = vshrl.u32 %v274, 7
    %v276 = vsub.s32 %v273, %v275
    %v277 = vrot.slane %v240, %v276
    %v279 = vunpack.c.l.s4 842150450
    %v280 = vunpack.c.0.s8 %v279
    %v281 = vlaneseq
    %v282 = vshrl.u32 %v281, 7
    %v283 = vsub.s32 %v280, %v282
    %v284 = vrot.slane %v240, %v283
    %v286 = vunpack.c.l.s4 1414812756
    %v287 = vunpack.c.0.s8 %v286
    %v288 = vlaneseq
    %v289 = vshrl.u32 %v288, 7
    %v290 = vsub.s32 %v287, %v289
    %v291 = vrot.slane %v240, %v290
    %v293 = vunpack.c.l.s4 1987475062
    %v294 = vunpack.c.0.s8 %v293
    %v295 = vlaneseq
    %v296 = vshrl.u32 %v295, 7
    %v297 = vsub.s32 %v294, %v296
    %v298 = vrot.slane %v240, %v297
    %v307 = vsub.f32 %v182, %v249
    %v308 = vsub.f32 %v183, %v256
    %v309 = vsub.f32 %v184, %v263
    %v310 = vsub.f32 %v185, %v270
    %v311 = vsub.f32 %v186, %v277
    %v312 = vsub.f32 %v187, %v284
    %v313 = vsub.f32 %v188, %v291
    %v314 = vsub.f32 %v189, %v298
    %v315 = vmul.f32 %v307, %v307
    %v316 = vmul.f32 %v308, %v308
    %v317 = vmul.f32 %v309, %v309
    %v318 = vmul.f32 %v310, %v310
    %v319 = vmul.f32 %v311, %v311
    %v320 = vmul.f32 %v312, %v312
    %v321 = vmul.f32 %v313, %v313
    %v322 = vmul.f32 %v314, %v314
    %v331 = vcombine.low %v315, %v316
    %v332 = vcombine.low %v317, %v318
    %v334 = vunpack.c.l.s4 1983009808
    %v335 = vunpack.c.0.s8 %v334
    %v336 = vlaneseq
    %v337 = vshrl.u32 %v336, 7
    %v338 = vsub.s32 %v335, %v337
    %v339 = vrot.slane %v331, %v338
    %v341 = vunpack.c.l.s4 1983009808
    %v342 = vunpack.c.0.s8 %v341
    %v343 = vlaneseq
    %v344 = vshrl.u32 %v343, 7
    %v345 = vsub.s32 %v342, %v344
    %v346 = vrot.slane %v332, %v345
    %v347 = vcombine.low %v339, %v346
    %v348 = vcombine.low %v319, %v320
    %v349 = vcombine.low %v321, %v322
    %v351 = vunpack.c.l.s4 1983009808
    %v352 = vunpack.c.0.s8 %v351
    %v353 = vlaneseq
    %v354 = vshrl.u32 %v353, 7
    %v355 = vsub.s32 %v352, %v354
    %v356 = vrot.slane %v348, %v355
    %v358 = vunpack.c.l.s4 1983009808
    %v359 = vunpack.c.0.s8 %v358
    %v360 = vlaneseq
    %v361 = vshrl.u32 %v360, 7
    %v362 = vsub.s32 %v359, %v361
    %v363 = vrot.slane %v349, %v362
    %v364 = vcombine.low %v356, %v363
    %367 = vadd.xlane.f32.xlu0 %v347
    %v368 = vpop.xlane.xlu0 %367
    %369 = vadd.xlane.f32.xlu0 %v364
    %v370 = vpop.xlane.xlu0 %369
    %v371 = vmul.f32 %v368, %v238
    %v372 = vmul.f32 %v370, %v238
    %v373 = vadd.f32 %v371, 1e-05
    %v374 = vadd.f32 %v372, 1e-05
    %v375 = vrsqrt.pop %v373
    %v376 = vrsqrt.pop %v374
    %v380 = vunpack.c.l.s4 269488144
    %v381 = vunpack.c.0.s8 %v380
    %v382 = vlaneseq
    %v383 = vshrl.u32 %v382, 7
    %v384 = vsub.s32 %v381, %v383
    %v385 = vrot.slane %v375, %v384
    %v387 = vunpack.c.l.s4 842150450
    %v388 = vunpack.c.0.s8 %v387
    %v389 = vlaneseq
    %v390 = vshrl.u32 %v389, 7
    %v391 = vsub.s32 %v388, %v390
    %v392 = vrot.slane %v375, %v391
    %v394 = vunpack.c.l.s4 1414812756
    %v395 = vunpack.c.0.s8 %v394
    %v396 = vlaneseq
    %v397 = vshrl.u32 %v396, 7
    %v398 = vsub.s32 %v395, %v397
    %v399 = vrot.slane %v375, %v398
    %v401 = vunpack.c.l.s4 1987475062
    %v402 = vunpack.c.0.s8 %v401
    %v403 = vlaneseq
    %v404 = vshrl.u32 %v403, 7
    %v405 = vsub.s32 %v402, %v404
    %v406 = vrot.slane %v375, %v405
    %v408 = vunpack.c.l.s4 269488144
    %v409 = vunpack.c.0.s8 %v408
    %v410 = vlaneseq
    %v411 = vshrl.u32 %v410, 7
    %v412 = vsub.s32 %v409, %v411
    %v413 = vrot.slane %v376, %v412
    %v415 = vunpack.c.l.s4 842150450
    %v416 = vunpack.c.0.s8 %v415
    %v417 = vlaneseq
    %v418 = vshrl.u32 %v417, 7
    %v419 = vsub.s32 %v416, %v418
    %v420 = vrot.slane %v376, %v419
    %v422 = vunpack.c.l.s4 1414812756
    %v423 = vunpack.c.0.s8 %v422
    %v424 = vlaneseq
    %v425 = vshrl.u32 %v424, 7
    %v426 = vsub.s32 %v423, %v425
    %v427 = vrot.slane %v376, %v426
    %v429 = vunpack.c.l.s4 1987475062
    %v430 = vunpack.c.0.s8 %v429
    %v431 = vlaneseq
    %v432 = vshrl.u32 %v431, 7
    %v433 = vsub.s32 %v430, %v432
    %v434 = vrot.slane %v376, %v433
    %v443 = vmul.f32 %v307, %v385
    %v444 = vmul.f32 %v308, %v392
    %v445 = vmul.f32 %v309, %v399
    %v446 = vmul.f32 %v310, %v406
    %v447 = vmul.f32 %v311, %v413
    %v448 = vmul.f32 %v312, %v420
    %v449 = vmul.f32 %v313, %v427
    %v450 = vmul.f32 %v314, %v434
    %v451 = vld [vmem:[#allocation5] sm:$0x1]
    %v453 = vlaneseq
    %v454 = vshrl.u32 %v453, 7
    %v455 = vsub.s32 0, %v454
    %v456 = vrot.slane %v451, %v455
    %v457 = vcombine.high %v456, %v456
    %v459 = vunpack.c.l.s4 1983009808
    %v460 = vunpack.c.0.s8 %v459
    %v461 = vlaneseq
    %v462 = vshrl.u32 %v461, 7
    %v463 = vsub.s32 %v460, %v462
    %v464 = vrot.slane %v456, %v463
    %v466 = vunpack.c.l.s4 1983009808
    %v467 = vunpack.c.0.s8 %v466
    %v468 = vlaneseq
    %v469 = vshrl.u32 %v468, 7
    %v470 = vsub.s32 %v467, %v469
    %v471 = vrot.slane %v457, %v470
    %v472 = vcombine.high %v464, %v464
    %v473 = vcombine.high %v471, %v471
    %v478 = vmul.f32 %v443, %v464
    %v479 = vmul.f32 %v444, %v472
    %v480 = vmul.f32 %v445, %v471
    %v481 = vmul.f32 %v446, %v473
    %v482 = vmul.f32 %v447, %v464
    %v483 = vmul.f32 %v448, %v472
    %v484 = vmul.f32 %v449, %v471
    %v485 = vmul.f32 %v450, %v473
    %v486 = vld [vmem:[#allocation7] sm:$0x1]
    %v488 = vlaneseq
    %v489 = vshrl.u32 %v488, 7
    %v490 = vsub.s32 0, %v489
    %v491 = vrot.slane %v486, %v490
    %v492 = vcombine.high %v491, %v491
    %v494 = vunpack.c.l.s4 1983009808
    %v495 = vunpack.c.0.s8 %v494
    %v496 = vlaneseq
    %v497 = vshrl.u32 %v496, 7
    %v498 = vsub.s32 %v495, %v497
    %v499 = vrot.slane %v491, %v498
    %v501 = vunpack.c.l.s4 1983009808
    %v502 = vunpack.c.0.s8 %v501
    %v503 = vlaneseq
    %v504 = vshrl.u32 %v503, 7
    %v505 = vsub.s32 %v502, %v504
    %v506 = vrot.slane %v492, %v505
    %v507 = vcombine.high %v499, %v499
    %v508 = vcombine.high %v506, %v506
    %v513 = vadd.f32 %v478, %v499
    %v514 = vadd.f32 %v479, %v507
    %v515 = vadd.f32 %v480, %v506
    %v516 = vadd.f32 %v481, %v508
    %v517 = vadd.f32 %v482, %v499
    %v518 = vadd.f32 %v483, %v507
    %v519 = vadd.f32 %v484, %v506
    %v520 = vadd.f32 %v485, %v508
    %v529 = vcombine.low %v513, %v514
    %v530 = vcombine.low %v515, %v516
    %v532 = vunpack.c.l.s4 1983009808
    %v533 = vunpack.c.0.s8 %v532
    %v534 = vlaneseq
    %v535 = vshrl.u32 %v534, 7
    %v536 = vsub.s32 %v533, %v535
    %v537 = vrot.slane %v529, %v536
    %v539 = vunpack.c.l.s4 1983009808
    %v540 = vunpack.c.0.s8 %v539
    %v541 = vlaneseq
    %v542 = vshrl.u32 %v541, 7
    %v543 = vsub.s32 %v540, %v542
    %v544 = vrot.slane %v530, %v543
    %v545 = vcombine.low %v537, %v544
    %v546 = vcombine.low %v517, %v518
    %v547 = vcombine.low %v519, %v520
    %v549 = vunpack.c.l.s4 1983009808
    %v550 = vunpack.c.0.s8 %v549
    %v551 = vlaneseq
    %v552 = vshrl.u32 %v551, 7
    %v553 = vsub.s32 %v550, %v552
    %v554 = vrot.slane %v546, %v553
    %v556 = vunpack.c.l.s4 1983009808
    %v557 = vunpack.c.0.s8 %v556
    %v558 = vlaneseq
    %v559 = vshrl.u32 %v558, 7
    %v560 = vsub.s32 %v557, %v559
    %v561 = vrot.slane %v547, %v560
    %v562 = vcombine.low %v554, %v561
    %v565 = vpack.c.bf16 %v562, %v545
    %v566 = vld [vmem:[#allocation8] sm:$0xff]
    %v567 = vld [vmem:[#allocation8 + $0x8] sm:$0xf]
    %v568 = vld [vmem:[#allocation8 + $0xc] sm:$0xff]
    %v569 = vld [vmem:[#allocation8 + $0x14] sm:$0xf]
    %v570 = vld [vmem:[#allocation8 + $0x18] sm:$0xff]
    %v571 = vld [vmem:[#allocation8 + $0x20] sm:$0xf]
    %v572 = vld [vmem:[#allocation8 + $0x24] sm:$0xff]
    %v573 = vld [vmem:[#allocation8 + $0x2c] sm:$0xf]
    %v574 = vld [vmem:[#allocation8 + $0x30] sm:$0xff]
    %v575 = vld [vmem:[#allocation8 + $0x38] sm:$0xf]
    %v576 = vld [vmem:[#allocation8 + $0x3c] sm:$0xff]
    %v577 = vld [vmem:[#allocation8 + $0x44] sm:$0xf]
    %v578 = vld [vmem:[#allocation8 + $0x48] sm:$0xff]
    %v579 = vld [vmem:[#allocation8 + $0x50] sm:$0xf]
    %v580 = vld [vmem:[#allocation8 + $0x54] sm:$0xff]
    %v581 = vld [vmem:[#allocation8 + $0x5c] sm:$0xf]
    %v582 = vld [vmem:[#allocation8 + $0x60] sm:$0xff]
    %v583 = vld [vmem:[#allocation8 + $0x68] sm:$0xf]
    %v584 = vld [vmem:[#allocation8 + $0x6c] sm:$0xff]
    %v585 = vld [vmem:[#allocation8 + $0x74] sm:$0xf]
    %v586 = vld [vmem:[#allocation8 + $0x78] sm:$0xff]
    %v587 = vld [vmem:[#allocation8 + $0x80] sm:$0xf]
    %v588 = vld [vmem:[#allocation8 + $0x84] sm:$0xff]
    %v589 = vld [vmem:[#allocation8 + $0x8c] sm:$0xf]
    %v590 = vld [vmem:[#allocation8 + $0x90] sm:$0xff]
    %v591 = vld [vmem:[#allocation8 + $0x98] sm:$0xf]
    %v592 = vld [vmem:[#allocation8 + $0x9c] sm:$0xff]
    %v593 = vld [vmem:[#allocation8 + $0xa4] sm:$0xf]
    %v594 = vld [vmem:[#allocation8 + $0xa8] sm:$0xff]
    %v595 = vld [vmem:[#allocation8 + $0xb0] sm:$0xf]
    %v596 = vld [vmem:[#allocation8 + $0xb4] sm:$0xff]
    %v597 = vld [vmem:[#allocation8 + $0xbc] sm:$0xf]
    %v598 = vld [vmem:[%s4] sm:$0x7]
    %v600 = vlaneseq
    %v601 = vshrl.u32 %v600, 7
    %v602 = vsub.s32 0, %v601
    %v603 = vrot.slane %v598, %v602
    %v604 = vlaneseq
    %v605 = vshrl.u32 %v604, 7
    %v606 = vsub.s32 1, %v605
    %v607 = vrot.slane %v598, %v606
    %v608 = vlaneseq
    %v609 = vshrl.u32 %v608, 7
    %v610 = vsub.s32 2, %v609
    %v611 = vrot.slane %v598, %v610
    %v647 = vunpack.c.l.b16 %v566
    %v648 = vunpack.c.h.b16 %v566
    %v649 = vunpack.c.l.b16 %v567
    %v650 = vunpack.c.l.b16 %v568
    %v651 = vunpack.c.h.b16 %v568
    %v652 = vunpack.c.l.b16 %v569
    %v653 = vunpack.c.l.b16 %v570
    %v654 = vunpack.c.h.b16 %v570
    %v655 = vunpack.c.l.b16 %v571
    %v656 = vunpack.c.l.b16 %v572
    %v657 = vunpack.c.h.b16 %v572
    %v658 = vunpack.c.l.b16 %v573
    %v659 = vunpack.c.l.b16 %v574
    %v660 = vunpack.c.h.b16 %v574
    %v661 = vunpack.c.l.b16 %v575
    %v662 = vunpack.c.l.b16 %v576
    %v663 = vunpack.c.h.b16 %v576
    %v664 = vunpack.c.l.b16 %v577
    %v665 = vunpack.c.l.b16 %v578
    %v666 = vunpack.c.h.b16 %v578
    %v667 = vunpack.c.l.b16 %v579
    %v668 = vunpack.c.l.b16 %v580
    %v669 = vunpack.c.h.b16 %v580
    %v670 = vunpack.c.l.b16 %v581
    %v671 = vunpack.c.l.b16 %v582
    %v672 = vunpack.c.h.b16 %v582
    %v673 = vunpack.c.l.b16 %v583
    %v674 = vunpack.c.l.b16 %v584
    %v675 = vunpack.c.h.b16 %v584
    %v676 = vunpack.c.l.b16 %v585
    %v677 = vunpack.c.l.b16 %v586
    %v678 = vunpack.c.h.b16 %v586
    %v679 = vunpack.c.l.b16 %v587
    %v680 = vunpack.c.l.b16 %v588
    %v681 = vunpack.c.h.b16 %v588
    %v682 = vunpack.c.l.b16 %v589
    %v683 = vunpack.c.l.b16 %v590
    %v684 = vunpack.c.h.b16 %v590
    %v685 = vunpack.c.l.b16 %v591
    %v686 = vunpack.c.l.b16 %v592
    %v687 = vunpack.c.h.b16 %v592
    %v688 = vunpack.c.l.b16 %v593
    %v689 = vunpack.c.l.b16 %v594
    %v690 = vunpack.c.h.b16 %v594
    %v691 = vunpack.c.l.b16 %v595
    %v692 = vunpack.c.l.b16 %v596
    %v693 = vunpack.c.h.b16 %v596
    %v694 = vunpack.c.l.b16 %v597
    %v695 = vpack.c.b16 %v650, %v647
    %v696 = vpack.c.b16 %v651, %v648
    %v697 = vpack.c.b16 %v652, %v649
    %v698 = vpack.c.b16 %v656, %v653
    %v699 = vpack.c.b16 %v657, %v654
    %v700 = vpack.c.b16 %v658, %v655
    %v701 = vpack.c.b16 %v662, %v659
    %v702 = vpack.c.b16 %v663, %v660
    %v703 = vpack.c.b16 %v664, %v661
    %v704 = vpack.c.b16 %v668, %v665
    %v705 = vpack.c.b16 %v669, %v666
    %v706 = vpack.c.b16 %v670, %v667
    %v707 = vpack.c.b16 %v674, %v671
    %v708 = vpack.c.b16 %v675, %v672
    %v709 = vpack.c.b16 %v676, %v673
    %v710 = vpack.c.b16 %v680, %v677
    %v711 = vpack.c.b16 %v681, %v678
    %v712 = vpack.c.b16 %v682, %v679
    %v713 = vpack.c.b16 %v686, %v683
    %v714 = vpack.c.b16 %v687, %v684
    %v715 = vpack.c.b16 %v688, %v685
    %v716 = vpack.c.b16 %v692, %v689
    %v717 = vpack.c.b16 %v693, %v690
    %v718 = vpack.c.b16 %v694, %v691
    %743 = vmatprep.subr.bf16.mxu0 %v717
    %744 = vmatpush1.bf16.msra.mxu0 %v716
    %745 = vmatprep.subr.bf16.mxu0 %v714
    %746 = vmatpush1.bf16.msra.mxu0 %v713
    %747 = vmatprep.subr.bf16.mxu0 %v711
    %748 = vmatpush1.bf16.msra.mxu0 %v710
    %749 = vmatprep.subr.bf16.mxu0 %v708
    %750 = vmatpush1.bf16.msra.mxu0 %v707
    %751 = vmatprep.subr.bf16.mxu0 %v705
    %752 = vmatpush1.bf16.msra.mxu0 %v704
    %753 = vmatprep.subr.bf16.mxu0 %v702
    %754 = vmatpush1.bf16.msra.mxu0 %v701
    %755 = vmatprep.subr.bf16.mxu0 %v699
    %756 = vmatpush1.bf16.msra.mxu0 %v698
    %757 = vmatprep.subr.bf16.mxu0 %v696
    %758 = vmatpush1.bf16.msra.mxu0 %v695
    %759 = vmatprep.subr.bf16.mxu0 0
    %760 = vmatpush2.bf16.msra.mxu0 0
    %761 = vmatprep.subr.bf16.mxu0 0
    %762 = vmatpush2.bf16.msra.mxu0 0
    %763 = vmatprep.subr.bf16.mxu0 0
    %764 = vmatpush2.bf16.msra.mxu0 0
    %765 = vmatprep.subr.bf16.mxu0 0
    %766 = vmatpush2.bf16.msra.mxu0 0
    %767 = vmatprep.subr.bf16.mxu0 0
    %768 = vmatpush2.bf16.msra.mxu0 0
    %769 = vmatprep.subr.bf16.mxu0 0
    %770 = vmatpush2.bf16.msra.mxu0 0
    %771 = vmatprep.subr.bf16.mxu0 0
    %772 = vmatpush2.bf16.msra.mxu0 0
    %773 = vmatprep.subr.bf16.mxu0 0
    %774 = vmatpush2.bf16.msra.mxu0 0
    %775 = vmatprep.mubr.bf16.mxu0 0
    %776 = vmatmul.mubr.bf16.gmra.mxu0 %v565
    %v777 = vpop.f32.mrf.mxu0
    %v778 = vadd.f32 %v603, %v777
    %v779 = vpop.f32.mrf.mxu0
    %v780 = vadd.f32 %v607, %v779
    %v781 = vpop.f32.mrf.mxu0
    %v782 = vadd.f32 %v603, %v781
    %v783 = vpop.f32.mrf.mxu0
    %v784 = vadd.f32 %v607, %v783
    %785 = vdwg.mxu0
    %786 = vmatprep.subr.bf16.mxu0 0
    %787 = vmatpush1.bf16.msra.mxu0 %v718
    %788 = vmatprep.subr.bf16.mxu0 0
    %789 = vmatpush1.bf16.msra.mxu0 %v715
    %790 = vmatprep.subr.bf16.mxu0 0
    %791 = vmatpush1.bf16.msra.mxu0 %v712
    %792 = vmatprep.subr.bf16.mxu0 0
    %793 = vmatpush1.bf16.msra.mxu0 %v709
    %794 = vmatprep.subr.bf16.mxu0 0
    %795 = vmatpush1.bf16.msra.mxu0 %v706
    %796 = vmatprep.subr.bf16.mxu0 0
    %797 = vmatpush1.bf16.msra.mxu0 %v703
    %798 = vmatprep.subr.bf16.mxu0 0
    %799 = vmatpush1.bf16.msra.mxu0 %v700
    %800 = vmatprep.subr.bf16.mxu0 0
    %801 = vmatpush1.bf16.msra.mxu0 %v697
    %802 = vmatprep.subr.bf16.mxu0 0
    %803 = vmatpush2.bf16.msra.mxu0 0
    %804 = vmatprep.subr.bf16.mxu0 0
    %805 = vmatpush2.bf16.msra.mxu0 0
    %806 = vmatprep.subr.bf16.mxu0 0
    %807 = vmatpush2.bf16.msra.mxu0 0
    %808 = vmatprep.subr.bf16.mxu0 0
    %809 = vmatpush2.bf16.msra.mxu0 0
    %810 = vmatprep.subr.bf16.mxu0 0
    %811 = vmatpush2.bf16.msra.mxu0 0
    %812 = vmatprep.subr.bf16.mxu0 0
    %813 = vmatpush2.bf16.msra.mxu0 0
    %814 = vmatprep.subr.bf16.mxu0 0
    %815 = vmatpush2.bf16.msra.mxu0 0
    %816 = vmatprep.subr.bf16.mxu0 0
    %817 = vmatpush2.bf16.msra.mxu0 0
    %818 = vmatprep.mubr.bf16.mxu0 0
    %819 = vmatmul.mubr.bf16.gmra.mxu0 %v565
    %v820 = vpop.f32.mrf.mxu0
    %v821 = vadd.f32 %v611, %v820
    %v822 = vpop.f32.mrf.mxu0
    %v823 = vpop.f32.mrf.mxu0
    %v824 = vadd.f32 %v611, %v823
    %v825 = vpop.f32.mrf.mxu0
    %826 = vdwg.mxu0
    %v827 = vmul.f32 %v778, 0.17677669
    %v828 = vmul.f32 %v782, 0.17677669
    %v831 = vcombine.high %v827, %v827
    %v833 = vunpack.c.l.s4 1983009808
    %v834 = vunpack.c.0.s8 %v833
    %v835 = vlaneseq
    %v836 = vshrl.u32 %v835, 7
    %v837 = vsub.s32 %v834, %v836
    %v838 = vrot.slane %v827, %v837
    %v840 = vunpack.c.l.s4 1983009808
    %v841 = vunpack.c.0.s8 %v840
    %v842 = vlaneseq
    %v843 = vshrl.u32 %v842, 7
    %v844 = vsub.s32 %v841, %v843
    %v845 = vrot.slane %v831, %v844
    %v846 = vcombine.high %v838, %v838
    %v847 = vcombine.high %v845, %v845
    %v848 = vcombine.high %v828, %v828
    %v850 = vunpack.c.l.s4 1983009808
    %v851 = vunpack.c.0.s8 %v850
    %v852 = vlaneseq
    %v853 = vshrl.u32 %v852, 7
    %v854 = vsub.s32 %v851, %v853
    %v855 = vrot.slane %v828, %v854
    %v857 = vunpack.c.l.s4 1983009808
    %v858 = vunpack.c.0.s8 %v857
    %v859 = vlaneseq
    %v860 = vshrl.u32 %v859, 7
    %v861 = vsub.s32 %v858, %v860
    %v862 = vrot.slane %v848, %v861
    %v863 = vcombine.high %v855, %v855
    %v864 = vcombine.high %v862, %v862
    %873 = vrot.lane.b32.xlu0 %v838, 96
    %v874 = vpop.permute.xlu0 %873
    %875 = vrot.lane.b32.xlu0 %v846, 96
    %v876 = vpop.permute.xlu0 %875
    %877 = vrot.lane.b32.xlu0 %v845, 96
    %v878 = vpop.permute.xlu0 %877
    %879 = vrot.lane.b32.xlu0 %v847, 96
    %v880 = vpop.permute.xlu0 %879
    %881 = vrot.lane.b32.xlu0 %v855, 96
    %v882 = vpop.permute.xlu0 %881
    %883 = vrot.lane.b32.xlu0 %v863, 96
    %v884 = vpop.permute.xlu0 %883
    %885 = vrot.lane.b32.xlu0 %v862, 96
    %v886 = vpop.permute.xlu0 %885
    %887 = vrot.lane.b32.xlu0 %v864, 96
    %v888 = vpop.permute.xlu0 %887
    %897 = vrot.lane.b32.xlu0 %v838, 64
    %v898 = vpop.permute.xlu0 %897
    %899 = vrot.lane.b32.xlu0 %v846, 64
    %v900 = vpop.permute.xlu0 %899
    %901 = vrot.lane.b32.xlu0 %v845, 64
    %v902 = vpop.permute.xlu0 %901
    %903 = vrot.lane.b32.xlu0 %v847, 64
    %v904 = vpop.permute.xlu0 %903
    %905 = vrot.lane.b32.xlu0 %v855, 64
    %v906 = vpop.permute.xlu0 %905
    %907 = vrot.lane.b32.xlu0 %v863, 64
    %v908 = vpop.permute.xlu0 %907
    %909 = vrot.lane.b32.xlu0 %v862, 64
    %v910 = vpop.permute.xlu0 %909
    %911 = vrot.lane.b32.xlu0 %v864, 64
    %v912 = vpop.permute.xlu0 %911
    %921 = vrot.lane.b32.xlu0 %v838, 32
    %v922 = vpop.permute.xlu0 %921
    %923 = vrot.lane.b32.xlu0 %v846, 32
    %v924 = vpop.permute.xlu0 %923
    %925 = vrot.lane.b32.xlu0 %v845, 32
    %v926 = vpop.permute.xlu0 %925
    %927 = vrot.lane.b32.xlu0 %v847, 32
    %v928 = vpop.permute.xlu0 %927
    %929 = vrot.lane.b32.xlu0 %v855, 32
    %v930 = vpop.permute.xlu0 %929
    %931 = vrot.lane.b32.xlu0 %v863, 32
    %v932 = vpop.permute.xlu0 %931
    %933 = vrot.lane.b32.xlu0 %v862, 32
    %v934 = vpop.permute.xlu0 %933
    %935 = vrot.lane.b32.xlu0 %v864, 32
    %v936 = vpop.permute.xlu0 %935
    %v945 = vrot.slane %v838, 7
    %v946 = vrot.slane %v945, 2
    %v947 = vrot.slane %v846, 7
    %v948 = vrot.slane %v947, 2
    %v949 = vrot.slane %v845, 7
    %v950 = vrot.slane %v949, 2
    %v951 = vrot.slane %v847, 7
    %v952 = vrot.slane %v951, 2
    %v953 = vrot.slane %v855, 7
    %v954 = vrot.slane %v953, 2
    %v955 = vrot.slane %v863, 7
    %v956 = vrot.slane %v955, 2
    %v957 = vrot.slane %v862, 7
    %v958 = vrot.slane %v957, 2
    %v959 = vrot.slane %v864, 7
    %v960 = vrot.slane %v959, 2
    %969 = vrot.lane.b32.xlu0 %v946, 96
    %v970 = vpop.permute.xlu0 %969
    %971 = vrot.lane.b32.xlu0 %v948, 96
    %v972 = vpop.permute.xlu0 %971
    %973 = vrot.lane.b32.xlu0 %v950, 96
    %v974 = vpop.permute.xlu0 %973
    %975 = vrot.lane.b32.xlu0 %v952, 96
    %v976 = vpop.permute.xlu0 %975
    %977 = vrot.lane.b32.xlu0 %v954, 96
    %v978 = vpop.permute.xlu0 %977
    %979 = vrot.lane.b32.xlu0 %v956, 96
    %v980 = vpop.permute.xlu0 %979
    %981 = vrot.lane.b32.xlu0 %v958, 96
    %v982 = vpop.permute.xlu0 %981
    %983 = vrot.lane.b32.xlu0 %v960, 96
    %v984 = vpop.permute.xlu0 %983
    %993 = vrot.lane.b32.xlu0 %v946, 64
    %v994 = vpop.permute.xlu0 %993
    %995 = vrot.lane.b32.xlu0 %v948, 64
    %v996 = vpop.permute.xlu0 %995
    %997 = vrot.lane.b32.xlu0 %v950, 64
    %v998 = vpop.permute.xlu0 %997
    %999 = vrot.lane.b32.xlu0 %v952, 64
    %v1000 = vpop.permute.xlu0 %999
    %1001 = vrot.lane.b32.xlu0 %v954, 64
    %v1002 = vpop.permute.xlu0 %1001
    %1003 = vrot.lane.b32.xlu0 %v956, 64
    %v1004 = vpop.permute.xlu0 %1003
    %1005 = vrot.lane.b32.xlu0 %v958, 64
    %v1006 = vpop.permute.xlu0 %1005
    %1007 = vrot.lane.b32.xlu0 %v960, 64
    %v1008 = vpop.permute.xlu0 %1007
    %1017 = vrot.lane.b32.xlu0 %v946, 32
    %v1018 = vpop.permute.xlu0 %1017
    %1019 = vrot.lane.b32.xlu0 %v948, 32
    %v1020 = vpop.permute.xlu0 %1019
    %1021 = vrot.lane.b32.xlu0 %v950, 32
    %v1022 = vpop.permute.xlu0 %1021
    %1023 = vrot.lane.b32.xlu0 %v952, 32
    %v1024 = vpop.permute.xlu0 %1023
    %1025 = vrot.lane.b32.xlu0 %v954, 32
    %v1026 = vpop.permute.xlu0 %1025
    %1027 = vrot.lane.b32.xlu0 %v956, 32
    %v1028 = vpop.permute.xlu0 %1027
    %1029 = vrot.lane.b32.xlu0 %v958, 32
    %v1030 = vpop.permute.xlu0 %1029
    %1031 = vrot.lane.b32.xlu0 %v960, 32
    %v1032 = vpop.permute.xlu0 %1031
    %v1041 = vpack.c.bf16 %v838, %v838
    %v1042 = vpack.c.bf16 %v846, %v846
    %v1043 = vpack.c.bf16 %v845, %v845
    %v1044 = vpack.c.bf16 %v847, %v847
    %v1045 = vpack.c.bf16 %v855, %v855
    %v1046 = vpack.c.bf16 %v863, %v863
    %v1047 = vpack.c.bf16 %v862, %v862
    %v1048 = vpack.c.bf16 %v864, %v864
    %v1049 = vpack.c.bf16 %v874, %v874
    %v1050 = vpack.c.bf16 %v876, %v876
    %v1051 = vpack.c.bf16 %v878, %v878
    %v1052 = vpack.c.bf16 %v880, %v880
    %v1053 = vpack.c.bf16 %v882, %v882
    %v1054 = vpack.c.bf16 %v884, %v884
    %v1055 = vpack.c.bf16 %v886, %v886
    %v1056 = vpack.c.bf16 %v888, %v888
    %v1057 = vpack.c.bf16 %v898, %v898
    %v1058 = vpack.c.bf16 %v900, %v900
    %v1059 = vpack.c.bf16 %v902, %v902
    %v1060 = vpack.c.bf16 %v904, %v904
    %v1061 = vpack.c.bf16 %v906, %v906
    %v1062 = vpack.c.bf16 %v908, %v908
    %v1063 = vpack.c.bf16 %v910, %v910
    %v1064 = vpack.c.bf16 %v912, %v912
    %v1065 = vpack.c.bf16 %v922, %v922
    %v1066 = vpack.c.bf16 %v924, %v924
    %v1067 = vpack.c.bf16 %v926, %v926
    %v1068 = vpack.c.bf16 %v928, %v928
    %v1069 = vpack.c.bf16 %v930, %v930
    %v1070 = vpack.c.bf16 %v932, %v932
    %v1071 = vpack.c.bf16 %v934, %v934
    %v1072 = vpack.c.bf16 %v936, %v936
    %v1073 = vpack.c.bf16 %v946, %v946
    %v1074 = vpack.c.bf16 %v948, %v948
    %v1075 = vpack.c.bf16 %v950, %v950
    %v1076 = vpack.c.bf16 %v952, %v952
    %v1077 = vpack.c.bf16 %v954, %v954
    %v1078 = vpack.c.bf16 %v956, %v956
    %v1079 = vpack.c.bf16 %v958, %v958
    %v1080 = vpack.c.bf16 %v960, %v960
    %v1081 = vpack.c.bf16 %v970, %v970
    %v1082 = vpack.c.bf16 %v972, %v972
    %v1083 = vpack.c.bf16 %v974, %v974
    %v1084 = vpack.c.bf16 %v976, %v976
    %v1085 = vpack.c.bf16 %v978, %v978
    %v1086 = vpack.c.bf16 %v980, %v980
    %v1087 = vpack.c.bf16 %v982, %v982
    %v1088 = vpack.c.bf16 %v984, %v984
    %v1089 = vpack.c.bf16 %v994, %v994
    %v1090 = vpack.c.bf16 %v996, %v996
    %v1091 = vpack.c.bf16 %v998, %v998
    %v1092 = vpack.c.bf16 %v1000, %v1000
    %v1093 = vpack.c.bf16 %v1002, %v1002
    %v1094 = vpack.c.bf16 %v1004, %v1004
    %v1095 = vpack.c.bf16 %v1006, %v1006
    %v1096 = vpack.c.bf16 %v1008, %v1008
    %v1097 = vpack.c.bf16 %v1018, %v1018
    %v1098 = vpack.c.bf16 %v1020, %v1020
    %v1099 = vpack.c.bf16 %v1022, %v1022
    %v1100 = vpack.c.bf16 %v1024, %v1024
    %v1101 = vpack.c.bf16 %v1026, %v1026
    %v1102 = vpack.c.bf16 %v1028, %v1028
    %v1103 = vpack.c.bf16 %v1030, %v1030
    %v1104 = vpack.c.bf16 %v1032, %v1032
    %v1107 = vcombine.high %v780, %v780
    %v1109 = vunpack.c.l.s4 1983009808
    %v1110 = vunpack.c.0.s8 %v1109
    %v1111 = vlaneseq
    %v1112 = vshrl.u32 %v1111, 7
    %v1113 = vsub.s32 %v1110, %v1112
    %v1114 = vrot.slane %v780, %v1113
    %v1116 = vunpack.c.l.s4 1983009808
    %v1117 = vunpack.c.0.s8 %v1116
    %v1118 = vlaneseq
    %v1119 = vshrl.u32 %v1118, 7
    %v1120 = vsub.s32 %v1117, %v1119
    %v1121 = vrot.slane %v1107, %v1120
    %v1122 = vcombine.high %v1114, %v1114
    %v1123 = vcombine.high %v1121, %v1121
    %v1124 = vcombine.high %v784, %v784
    %v1126 = vunpack.c.l.s4 1983009808
    %v1127 = vunpack.c.0.s8 %v1126
    %v1128 = vlaneseq
    %v1129 = vshrl.u32 %v1128, 7
    %v1130 = vsub.s32 %v1127, %v1129
    %v1131 = vrot.slane %v784, %v1130
    %v1133 = vunpack.c.l.s4 1983009808
    %v1134 = vunpack.c.0.s8 %v1133
    %v1135 = vlaneseq
    %v1136 = vshrl.u32 %v1135, 7
    %v1137 = vsub.s32 %v1134, %v1136
    %v1138 = vrot.slane %v1124, %v1137
    %v1139 = vcombine.high %v1131, %v1131
    %v1140 = vcombine.high %v1138, %v1138
    %1149 = vrot.lane.b32.xlu0 %v1114, 96
    %v1150 = vpop.permute.xlu0 %1149
    %1151 = vrot.lane.b32.xlu0 %v1122, 96
    %v1152 = vpop.permute.xlu0 %1151
    %1153 = vrot.lane.b32.xlu0 %v1121, 96
    %v1154 = vpop.permute.xlu0 %1153
    %1155 = vrot.lane.b32.xlu0 %v1123, 96
    %v1156 = vpop.permute.xlu0 %1155
    %1157 = vrot.lane.b32.xlu0 %v1131, 96
    %v1158 = vpop.permute.xlu0 %1157
    %1159 = vrot.lane.b32.xlu0 %v1139, 96
    %v1160 = vpop.permute.xlu0 %1159
    %1161 = vrot.lane.b32.xlu0 %v1138, 96
    %v1162 = vpop.permute.xlu0 %1161
    %1163 = vrot.lane.b32.xlu0 %v1140, 96
    %v1164 = vpop.permute.xlu0 %1163
    %1173 = vrot.lane.b32.xlu0 %v1114, 64
    %v1174 = vpop.permute.xlu0 %1173
    %1175 = vrot.lane.b32.xlu0 %v1122, 64
    %v1176 = vpop.permute.xlu0 %1175
    %1177 = vrot.lane.b32.xlu0 %v1121, 64
    %v1178 = vpop.permute.xlu0 %1177
    %1179 = vrot.lane.b32.xlu0 %v1123, 64
    %v1180 = vpop.permute.xlu0 %1179
    %1181 = vrot.lane.b32.xlu0 %v1131, 64
    %v1182 = vpop.permute.xlu0 %1181
    %1183 = vrot.lane.b32.xlu0 %v1139, 64
    %v1184 = vpop.permute.xlu0 %1183
    %1185 = vrot.lane.b32.xlu0 %v1138, 64
    %v1186 = vpop.permute.xlu0 %1185
    %1187 = vrot.lane.b32.xlu0 %v1140, 64
    %v1188 = vpop.permute.xlu0 %1187
    %1197 = vrot.lane.b32.xlu0 %v1114, 32
    %v1198 = vpop.permute.xlu0 %1197
    %1199 = vrot.lane.b32.xlu0 %v1122, 32
    %v1200 = vpop.permute.xlu0 %1199
    %1201 = vrot.lane.b32.xlu0 %v1121, 32
    %v1202 = vpop.permute.xlu0 %1201
    %1203 = vrot.lane.b32.xlu0 %v1123, 32
    %v1204 = vpop.permute.xlu0 %1203
    %1205 = vrot.lane.b32.xlu0 %v1131, 32
    %v1206 = vpop.permute.xlu0 %1205
    %1207 = vrot.lane.b32.xlu0 %v1139, 32
    %v1208 = vpop.permute.xlu0 %1207
    %1209 = vrot.lane.b32.xlu0 %v1138, 32
    %v1210 = vpop.permute.xlu0 %1209
    %1211 = vrot.lane.b32.xlu0 %v1140, 32
    %v1212 = vpop.permute.xlu0 %1211
    %v1221 = vrot.slane %v1114, 7
    %v1222 = vrot.slane %v1221, 2
    %v1223 = vrot.slane %v1122, 7
    %v1224 = vrot.slane %v1223, 2
    %v1225 = vrot.slane %v1121, 7
    %v1226 = vrot.slane %v1225, 2
    %v1227 = vrot.slane %v1123, 7
    %v1228 = vrot.slane %v1227, 2
    %v1229 = vrot.slane %v1131, 7
    %v1230 = vrot.slane %v1229, 2
    %v1231 = vrot.slane %v1139, 7
    %v1232 = vrot.slane %v1231, 2
    %v1233 = vrot.slane %v1138, 7
    %v1234 = vrot.slane %v1233, 2
    %v1235 = vrot.slane %v1140, 7
    %v1236 = vrot.slane %v1235, 2
    %1245 = vrot.lane.b32.xlu0 %v1222, 96
    %v1246 = vpop.permute.xlu0 %1245
    %1247 = vrot.lane.b32.xlu0 %v1224, 96
    %v1248 = vpop.permute.xlu0 %1247
    %1249 = vrot.lane.b32.xlu0 %v1226, 96
    %v1250 = vpop.permute.xlu0 %1249
    %1251 = vrot.lane.b32.xlu0 %v1228, 96
    %v1252 = vpop.permute.xlu0 %1251
    %1253 = vrot.lane.b32.xlu0 %v1230, 96
    %v1254 = vpop.permute.xlu0 %1253
    %1255 = vrot.lane.b32.xlu0 %v1232, 96
    %v1256 = vpop.permute.xlu0 %1255
    %1257 = vrot.lane.b32.xlu0 %v1234, 96
    %v1258 = vpop.permute.xlu0 %1257
    %1259 = vrot.lane.b32.xlu0 %v1236, 96
    %v1260 = vpop.permute.xlu0 %1259
    %1269 = vrot.lane.b32.xlu0 %v1222, 64
    %v1270 = vpop.permute.xlu0 %1269
    %1271 = vrot.lane.b32.xlu0 %v1224, 64
    %v1272 = vpop.permute.xlu0 %1271
    %1273 = vrot.lane.b32.xlu0 %v1226, 64
    %v1274 = vpop.permute.xlu0 %1273
    %1275 = vrot.lane.b32.xlu0 %v1228, 64
    %v1276 = vpop.permute.xlu0 %1275
    %1277 = vrot.lane.b32.xlu0 %v1230, 64
    %v1278 = vpop.permute.xlu0 %1277
    %1279 = vrot.lane.b32.xlu0 %v1232, 64
    %v1280 = vpop.permute.xlu0 %1279
    %1281 = vrot.lane.b32.xlu0 %v1234, 64
    %v1282 = vpop.permute.xlu0 %1281
    %1283 = vrot.lane.b32.xlu0 %v1236, 64
    %v1284 = vpop.permute.xlu0 %1283
    %1293 = vrot.lane.b32.xlu0 %v1222, 32
    %v1294 = vpop.permute.xlu0 %1293
    %1295 = vrot.lane.b32.xlu0 %v1224, 32
    %v1296 = vpop.permute.xlu0 %1295
    %1297 = vrot.lane.b32.xlu0 %v1226, 32
    %v1298 = vpop.permute.xlu0 %1297
    %1299 = vrot.lane.b32.xlu0 %v1228, 32
    %v1300 = vpop.permute.xlu0 %1299
    %1301 = vrot.lane.b32.xlu0 %v1230, 32
    %v1302 = vpop.permute.xlu0 %1301
    %1303 = vrot.lane.b32.xlu0 %v1232, 32
    %v1304 = vpop.permute.xlu0 %1303
    %1305 = vrot.lane.b32.xlu0 %v1234, 32
    %v1306 = vpop.permute.xlu0 %1305
    %1307 = vrot.lane.b32.xlu0 %v1236, 32
    %v1308 = vpop.permute.xlu0 %1307
    %v1317 = vpack.c.bf16 %v1114, %v1114
    %v1318 = vpack.c.bf16 %v1122, %v1122
    %v1319 = vpack.c.bf16 %v1121, %v1121
    %v1320 = vpack.c.bf16 %v1123, %v1123
    %v1321 = vpack.c.bf16 %v1131, %v1131
    %v1322 = vpack.c.bf16 %v1139, %v1139
    %v1323 = vpack.c.bf16 %v1138, %v1138
    %v1324 = vpack.c.bf16 %v1140, %v1140
    %v1325 = vpack.c.bf16 %v1150, %v1150
    %v1326 = vpack.c.bf16 %v1152, %v1152
    %v1327 = vpack.c.bf16 %v1154, %v1154
    %v1328 = vpack.c.bf16 %v1156, %v1156
    %v1329 = vpack.c.bf16 %v1158, %v1158
    %v1330 = vpack.c.bf16 %v1160, %v1160
    %v1331 = vpack.c.bf16 %v1162, %v1162
    %v1332 = vpack.c.bf16 %v1164, %v1164
    %v1333 = vpack.c.bf16 %v1174, %v1174
    %v1334 = vpack.c.bf16 %v1176, %v1176
    %v1335 = vpack.c.bf16 %v1178, %v1178
    %v1336 = vpack.c.bf16 %v1180, %v1180
    %v1337 = vpack.c.bf16 %v1182, %v1182
    %v1338 = vpack.c.bf16 %v1184, %v1184
    %v1339 = vpack.c.bf16 %v1186, %v1186
    %v1340 = vpack.c.bf16 %v1188, %v1188
    %v1341 = vpack.c.bf16 %v1198, %v1198
    %v1342 = vpack.c.bf16 %v1200, %v1200
    %v1343 = vpack.c.bf16 %v1202, %v1202
    %v1344 = vpack.c.bf16 %v1204, %v1204
    %v1345 = vpack.c.bf16 %v1206, %v1206
    %v1346 = vpack.c.bf16 %v1208, %v1208
    %v1347 = vpack.c.bf16 %v1210, %v1210
    %v1348 = vpack.c.bf16 %v1212, %v1212
    %v1349 = vpack.c.bf16 %v1222, %v1222
    %v1350 = vpack.c.bf16 %v1224, %v1224
    %v1351 = vpack.c.bf16 %v1226, %v1226
    %v1352 = vpack.c.bf16 %v1228, %v1228
    %v1353 = vpack.c.bf16 %v1230, %v1230
    %v1354 = vpack.c.bf16 %v1232, %v1232
    %v1355 = vpack.c.bf16 %v1234, %v1234
    %v1356 = vpack.c.bf16 %v1236, %v1236
    %v1357 = vpack.c.bf16 %v1246, %v1246
    %v1358 = vpack.c.bf16 %v1248, %v1248
    %v1359 = vpack.c.bf16 %v1250, %v1250
    %v1360 = vpack.c.bf16 %v1252, %v1252
    %v1361 = vpack.c.bf16 %v1254, %v1254
    %v1362 = vpack.c.bf16 %v1256, %v1256
    %v1363 = vpack.c.bf16 %v1258, %v1258
    %v1364 = vpack.c.bf16 %v1260, %v1260
    %v1365 = vpack.c.bf16 %v1270, %v1270
    %v1366 = vpack.c.bf16 %v1272, %v1272
    %v1367 = vpack.c.bf16 %v1274, %v1274
    %v1368 = vpack.c.bf16 %v1276, %v1276
    %v1369 = vpack.c.bf16 %v1278, %v1278
    %v1370 = vpack.c.bf16 %v1280, %v1280
    %v1371 = vpack.c.bf16 %v1282, %v1282
    %v1372 = vpack.c.bf16 %v1284, %v1284
    %v1373 = vpack.c.bf16 %v1294, %v1294
    %v1374 = vpack.c.bf16 %v1296, %v1296
    %v1375 = vpack.c.bf16 %v1298, %v1298
    %v1376 = vpack.c.bf16 %v1300, %v1300
    %v1377 = vpack.c.bf16 %v1302, %v1302
    %v1378 = vpack.c.bf16 %v1304, %v1304
    %v1379 = vpack.c.bf16 %v1306, %v1306
    %v1380 = vpack.c.bf16 %v1308, %v1308
    %v1383 = vcombine.high %v821, %v821
    %v1385 = vunpack.c.l.s4 1983009808
    %v1386 = vunpack.c.0.s8 %v1385
    %v1387 = vlaneseq
    %v1388 = vshrl.u32 %v1387, 7
    %v1389 = vsub.s32 %v1386, %v1388
    %v1390 = vrot.slane %v821, %v1389
    %v1392 = vunpack.c.l.s4 1983009808
    %v1393 = vunpack.c.0.s8 %v1392
    %v1394 = vlaneseq
    %v1395 = vshrl.u32 %v1394, 7
    %v1396 = vsub.s32 %v1393, %v1395
    %v1397 = vrot.slane %v1383, %v1396
    %v1398 = vcombine.high %v1390, %v1390
    %v1399 = vcombine.high %v1397, %v1397
    %v1400 = vcombine.high %v824, %v824
    %v1402 = vunpack.c.l.s4 1983009808
    %v1403 = vunpack.c.0.s8 %v1402
    %v1404 = vlaneseq
    %v1405 = vshrl.u32 %v1404, 7
    %v1406 = vsub.s32 %v1403, %v1405
    %v1407 = vrot.slane %v824, %v1406
    %v1409 = vunpack.c.l.s4 1983009808
    %v1410 = vunpack.c.0.s8 %v1409
    %v1411 = vlaneseq
    %v1412 = vshrl.u32 %v1411, 7
    %v1413 = vsub.s32 %v1410, %v1412
    %v1414 = vrot.slane %v1400, %v1413
    %v1415 = vcombine.high %v1407, %v1407
    %v1416 = vcombine.high %v1414, %v1414
    %1425 = vrot.lane.b32.xlu0 %v1390, 96
    %v1426 = vpop.permute.xlu0 %1425
    %1427 = vrot.lane.b32.xlu0 %v1398, 96
    %v1428 = vpop.permute.xlu0 %1427
    %1429 = vrot.lane.b32.xlu0 %v1397, 96
    %v1430 = vpop.permute.xlu0 %1429
    %1431 = vrot.lane.b32.xlu0 %v1399, 96
    %v1432 = vpop.permute.xlu0 %1431
    %1433 = vrot.lane.b32.xlu0 %v1407, 96
    %v1434 = vpop.permute.xlu0 %1433
    %1435 = vrot.lane.b32.xlu0 %v1415, 96
    %v1436 = vpop.permute.xlu0 %1435
    %1437 = vrot.lane.b32.xlu0 %v1414, 96
    %v1438 = vpop.permute.xlu0 %1437
    %1439 = vrot.lane.b32.xlu0 %v1416, 96
    %v1440 = vpop.permute.xlu0 %1439
    %1449 = vrot.lane.b32.xlu0 %v1390, 64
    %v1450 = vpop.permute.xlu0 %1449
    %1451 = vrot.lane.b32.xlu0 %v1398, 64
    %v1452 = vpop.permute.xlu0 %1451
    %1453 = vrot.lane.b32.xlu0 %v1397, 64
    %v1454 = vpop.permute.xlu0 %1453
    %1455 = vrot.lane.b32.xlu0 %v1399, 64
    %v1456 = vpop.permute.xlu0 %1455
    %1457 = vrot.lane.b32.xlu0 %v1407, 64
    %v1458 = vpop.permute.xlu0 %1457
    %1459 = vrot.lane.b32.xlu0 %v1415, 64
    %v1460 = vpop.permute.xlu0 %1459
    %1461 = vrot.lane.b32.xlu0 %v1414, 64
    %v1462 = vpop.permute.xlu0 %1461
    %1463 = vrot.lane.b32.xlu0 %v1416, 64
    %v1464 = vpop.permute.xlu0 %1463
    %1473 = vrot.lane.b32.xlu0 %v1390, 32
    %v1474 = vpop.permute.xlu0 %1473
    %1475 = vrot.lane.b32.xlu0 %v1398, 32
    %v1476 = vpop.permute.xlu0 %1475
    %1477 = vrot.lane.b32.xlu0 %v1397, 32
    %v1478 = vpop.permute.xlu0 %1477
    %1479 = vrot.lane.b32.xlu0 %v1399, 32
    %v1480 = vpop.permute.xlu0 %1479
    %1481 = vrot.lane.b32.xlu0 %v1407, 32
    %v1482 = vpop.permute.xlu0 %1481
    %1483 = vrot.lane.b32.xlu0 %v1415, 32
    %v1484 = vpop.permute.xlu0 %1483
    %1485 = vrot.lane.b32.xlu0 %v1414, 32
    %v1486 = vpop.permute.xlu0 %1485
    %1487 = vrot.lane.b32.xlu0 %v1416, 32
    %v1488 = vpop.permute.xlu0 %1487
    %v1497 = vrot.slane %v1390, 7
    %v1498 = vrot.slane %v1497, 2
    %v1499 = vrot.slane %v1398, 7
    %v1500 = vrot.slane %v1499, 2
    %v1501 = vrot.slane %v1397, 7
    %v1502 = vrot.slane %v1501, 2
    %v1503 = vrot.slane %v1399, 7
    %v1504 = vrot.slane %v1503, 2
    %v1505 = vrot.slane %v1407, 7
    %v1506 = vrot.slane %v1505, 2
    %v1507 = vrot.slane %v1415, 7
    %v1508 = vrot.slane %v1507, 2
    %v1509 = vrot.slane %v1414, 7
    %v1510 = vrot.slane %v1509, 2
    %v1511 = vrot.slane %v1416, 7
    %v1512 = vrot.slane %v1511, 2
    %1521 = vrot.lane.b32.xlu0 %v1498, 96
    %v1522 = vpop.permute.xlu0 %1521
    %1523 = vrot.lane.b32.xlu0 %v1500, 96
    %v1524 = vpop.permute.xlu0 %1523
    %1525 = vrot.lane.b32.xlu0 %v1502, 96
    %v1526 = vpop.permute.xlu0 %1525
    %1527 = vrot.lane.b32.xlu0 %v1504, 96
    %v1528 = vpop.permute.xlu0 %1527
    %1529 = vrot.lane.b32.xlu0 %v1506, 96
    %v1530 = vpop.permute.xlu0 %1529
    %1531 = vrot.lane.b32.xlu0 %v1508, 96
    %v1532 = vpop.permute.xlu0 %1531
    %1533 = vrot.lane.b32.xlu0 %v1510, 96
    %v1534 = vpop.permute.xlu0 %1533
    %1535 = vrot.lane.b32.xlu0 %v1512, 96
    %v1536 = vpop.permute.xlu0 %1535
    %1545 = vrot.lane.b32.xlu0 %v1498, 64
    %v1546 = vpop.permute.xlu0 %1545
    %1547 = vrot.lane.b32.xlu0 %v1500, 64
    %v1548 = vpop.permute.xlu0 %1547
    %1549 = vrot.lane.b32.xlu0 %v1502, 64
    %v1550 = vpop.permute.xlu0 %1549
    %1551 = vrot.lane.b32.xlu0 %v1504, 64
    %v1552 = vpop.permute.xlu0 %1551
    %1553 = vrot.lane.b32.xlu0 %v1506, 64
    %v1554 = vpop.permute.xlu0 %1553
    %1555 = vrot.lane.b32.xlu0 %v1508, 64
    %v1556 = vpop.permute.xlu0 %1555
    %1557 = vrot.lane.b32.xlu0 %v1510, 64
    %v1558 = vpop.permute.xlu0 %1557
    %1559 = vrot.lane.b32.xlu0 %v1512, 64
    %v1560 = vpop.permute.xlu0 %1559
    %1569 = vrot.lane.b32.xlu0 %v1498, 32
    %v1570 = vpop.permute.xlu0 %1569
    %1571 = vrot.lane.b32.xlu0 %v1500, 32
    %v1572 = vpop.permute.xlu0 %1571
    %1573 = vrot.lane.b32.xlu0 %v1502, 32
    %v1574 = vpop.permute.xlu0 %1573
    %1575 = vrot.lane.b32.xlu0 %v1504, 32
    %v1576 = vpop.permute.xlu0 %1575
    %1577 = vrot.lane.b32.xlu0 %v1506, 32
    %v1578 = vpop.permute.xlu0 %1577
    %1579 = vrot.lane.b32.xlu0 %v1508, 32
    %v1580 = vpop.permute.xlu0 %1579
    %1581 = vrot.lane.b32.xlu0 %v1510, 32
    %v1582 = vpop.permute.xlu0 %1581
    %1583 = vrot.lane.b32.xlu0 %v1512, 32
    %v1584 = vpop.permute.xlu0 %1583
    %v1593 = vpack.c.bf16 %v1390, %v1390
    %v1594 = vpack.c.bf16 %v1398, %v1398
    %v1595 = vpack.c.bf16 %v1397, %v1397
    %v1596 = vpack.c.bf16 %v1399, %v1399
    %v1597 = vpack.c.bf16 %v1407, %v1407
    %v1598 = vpack.c.bf16 %v1415, %v1415
    %v1599 = vpack.c.bf16 %v1414, %v1414
    %v1600 = vpack.c.bf16 %v1416, %v1416
    %v1601 = vpack.c.bf16 %v1426, %v1426
    %v1602 = vpack.c.bf16 %v1428, %v1428
    %v1603 = vpack.c.bf16 %v1430, %v1430
    %v1604 = vpack.c.bf16 %v1432, %v1432
    %v1605 = vpack.c.bf16 %v1434, %v1434
    %v1606 = vpack.c.bf16 %v1436, %v1436
    %v1607 = vpack.c.bf16 %v1438, %v1438
    %v1608 = vpack.c.bf16 %v1440, %v1440
    %v1609 = vpack.c.bf16 %v1450, %v1450
    %v1610 = vpack.c.bf16 %v1452, %v1452
    %v1611 = vpack.c.bf16 %v1454, %v1454
    %v1612 = vpack.c.bf16 %v1456, %v1456
    %v1613 = vpack.c.bf16 %v1458, %v1458
    %v1614 = vpack.c.bf16 %v1460, %v1460
    %v1615 = vpack.c.bf16 %v1462, %v1462
    %v1616 = vpack.c.bf16 %v1464, %v1464
    %v1617 = vpack.c.bf16 %v1474, %v1474
    %v1618 = vpack.c.bf16 %v1476, %v1476
    %v1619 = vpack.c.bf16 %v1478, %v1478
    %v1620 = vpack.c.bf16 %v1480, %v1480
    %v1621 = vpack.c.bf16 %v1482, %v1482
    %v1622 = vpack.c.bf16 %v1484, %v1484
    %v1623 = vpack.c.bf16 %v1486, %v1486
    %v1624 = vpack.c.bf16 %v1488, %v1488
    %v1625 = vpack.c.bf16 %v1498, %v1498
    %v1626 = vpack.c.bf16 %v1500, %v1500
    %v1627 = vpack.c.bf16 %v1502, %v1502
    %v1628 = vpack.c.bf16 %v1504, %v1504
    %v1629 = vpack.c.bf16 %v1506, %v1506
    %v1630 = vpack.c.bf16 %v1508, %v1508
    %v1631 = vpack.c.bf16 %v1510, %v1510
    %v1632 = vpack.c.bf16 %v1512, %v1512
    %v1633 = vpack.c.bf16 %v1522, %v1522
    %v1634 = vpack.c.bf16 %v1524, %v1524
    %v1635 = vpack.c.bf16 %v1526, %v1526
    %v1636 = vpack.c.bf16 %v1528, %v1528
    %v1637 = vpack.c.bf16 %v1530, %v1530
    %v1638 = vpack.c.bf16 %v1532, %v1532
    %v1639 = vpack.c.bf16 %v1534, %v1534
    %v1640 = vpack.c.bf16 %v1536, %v1536
    %v1641 = vpack.c.bf16 %v1546, %v1546
    %v1642 = vpack.c.bf16 %v1548, %v1548
    %v1643 = vpack.c.bf16 %v1550, %v1550
    %v1644 = vpack.c.bf16 %v1552, %v1552
    %v1645 = vpack.c.bf16 %v1554, %v1554
    %v1646 = vpack.c.bf16 %v1556, %v1556
    %v1647 = vpack.c.bf16 %v1558, %v1558
    %v1648 = vpack.c.bf16 %v1560, %v1560
    %v1649 = vpack.c.bf16 %v1570, %v1570
    %v1650 = vpack.c.bf16 %v1572, %v1572
    %v1651 = vpack.c.bf16 %v1574, %v1574
    %v1652 = vpack.c.bf16 %v1576, %v1576
    %v1653 = vpack.c.bf16 %v1578, %v1578
    %v1654 = vpack.c.bf16 %v1580, %v1580
    %v1655 = vpack.c.bf16 %v1582, %v1582
    %v1656 = vpack.c.bf16 %v1584, %v1584
    %v1665 = vunpack.c.l.b16 %v1041
    %v1666 = vunpack.c.l.b16 %v1042
    %v1667 = vunpack.c.l.b16 %v1043
    %v1668 = vunpack.c.l.b16 %v1044
    %v1669 = vunpack.c.l.b16 %v1045
    %v1670 = vunpack.c.l.b16 %v1046
    %v1671 = vunpack.c.l.b16 %v1047
    %v1672 = vunpack.c.l.b16 %v1048
    %v1673 = vrot.slane %v1666, 7
    %vm1674 = vcmask 1041409
    %v1675 = vsel %vm1674, %v1673, %v1665
    %v1676 = vrot.slane %v1667, 6
    %vm1677 = vcmask 1042434
    %v1678 = vsel %vm1677, %v1676, %v1675
    %v1679 = vrot.slane %v1668, 5
    %vm1680 = vcmask 1043459
    %v1681 = vsel %vm1680, %v1679, %v1678
    %v1682 = vrot.slane %v1669, 4
    %vm1683 = vcmask 1044484
    %v1684 = vsel %vm1683, %v1682, %v1681
    %v1685 = vrot.slane %v1670, 3
    %vm1686 = vcmask 1045509
    %v1687 = vsel %vm1686, %v1685, %v1684
    %v1688 = vrot.slane %v1671, 2
    %vm1689 = vcmask 1046534
    %v1690 = vsel %vm1689, %v1688, %v1687
    %v1691 = vrot.slane %v1672, 1
    %vm1692 = vcmask 1047559
    %v1693 = vsel %vm1692, %v1691, %v1690
    %v1694 = vpack.c.b16 %v1693, %v1693
    %v1703 = vunpack.c.l.b16 %v1317
    %v1704 = vunpack.c.l.b16 %v1318
    %v1705 = vunpack.c.l.b16 %v1319
    %v1706 = vunpack.c.l.b16 %v1320
    %v1707 = vunpack.c.l.b16 %v1321
    %v1708 = vunpack.c.l.b16 %v1322
    %v1709 = vunpack.c.l.b16 %v1323
    %v1710 = vunpack.c.l.b16 %v1324
    %v1711 = vrot.slane %v1704, 7
    %v1712 = vsel %vm1674, %v1711, %v1703
    %v1713 = vrot.slane %v1705, 6
    %v1714 = vsel %vm1677, %v1713, %v1712
    %v1715 = vrot.slane %v1706, 5
    %v1716 = vsel %vm1680, %v1715, %v1714
    %v1717 = vrot.slane %v1707, 4
    %v1718 = vsel %vm1683, %v1717, %v1716
    %v1719 = vrot.slane %v1708, 3
    %v1720 = vsel %vm1686, %v1719, %v1718
    %v1721 = vrot.slane %v1709, 2
    %v1722 = vsel %vm1689, %v1721, %v1720
    %v1723 = vrot.slane %v1710, 1
    %v1724 = vsel %vm1692, %v1723, %v1722
    %v1725 = vpack.c.b16 %v1724, %v1724
    %vm1726 = vcmask 261120
    %v1728 = vsel %vm1726, %v1694, 0
    %v1731 = vsel %vm1726, %v1725, 0
    %1733 = vmatprep.subr.bf16.mxu0 0
    %1734 = vmatpush1.bf16.xpose.msra.mxu0 0
    %1735 = vmatprep.subr.bf16.mxu0 0
    %1736 = vmatpush1.bf16.xpose.msra.mxu0 0
    %1737 = vmatprep.subr.bf16.mxu0 0
    %1738 = vmatpush1.bf16.xpose.msra.mxu0 0
    %1739 = vmatprep.subr.bf16.mxu0 0
    %1740 = vmatpush1.bf16.xpose.msra.mxu0 0
    %1741 = vmatprep.subr.bf16.mxu0 0
    %1742 = vmatpush1.bf16.xpose.msra.mxu0 0
    %1743 = vmatprep.subr.bf16.mxu0 0
    %1744 = vmatpush1.bf16.xpose.msra.mxu0 0
    %1745 = vmatprep.subr.bf16.mxu0 0
    %1746 = vmatpush1.bf16.xpose.msra.mxu0 0
    %1747 = vmatprep.subr.bf16.mxu0 0
    %1748 = vmatpush1.bf16.xpose.msra.mxu0 %v1731
    %1749 = vmatprep.subr.bf16.mxu0 0
    %1750 = vmatpush2.bf16.xpose.msra.mxu0 0
    %1751 = vmatprep.subr.bf16.mxu0 0
    %1752 = vmatpush2.bf16.xpose.msra.mxu0 0
    %1753 = vmatprep.subr.bf16.mxu0 0
    %1754 = vmatpush2.bf16.xpose.msra.mxu0 0
    %1755 = vmatprep.subr.bf16.mxu0 0
    %1756 = vmatpush2.bf16.xpose.msra.mxu0 0
    %1757 = vmatprep.subr.bf16.mxu0 0
    %1758 = vmatpush2.bf16.xpose.msra.mxu0 0
    %1759 = vmatprep.subr.bf16.mxu0 0
    %1760 = vmatpush2.bf16.xpose.msra.mxu0 0
    %1761 = vmatprep.subr.bf16.mxu0 0
    %1762 = vmatpush2.bf16.xpose.msra.mxu0 0
    %1763 = vmatprep.subr.bf16.mxu0 0
    %1764 = vmatpush2.bf16.xpose.msra.mxu0 0
    %1765 = vmatprep.mubr.bf16.mxu0 0
    %1766 = vmatmul.mubr.bf16.gmra.mxu0 %v1728
    %v1767 = vpop.f32.mrf.mxu0
    %v1768 = vadd.f32 0.0, %v1767
    %v1769 = vpop.f32.mrf.mxu0
    %v1770 = vpop.f32.mrf.mxu0
    %v1771 = vpop.f32.mrf.mxu0
    %1772 = vdwg.mxu0
    %v1781 = vunpack.c.l.b16 %v1049
    %v1782 = vunpack.c.l.b16 %v1050
    %v1783 = vunpack.c.l.b16 %v1051
    %v1784 = vunpack.c.l.b16 %v1052
    %v1785 = vunpack.c.l.b16 %v1053
    %v1786 = vunpack.c.l.b16 %v1054
    %v1787 = vunpack.c.l.b16 %v1055
    %v1788 = vunpack.c.l.b16 %v1056
    %v1789 = vrot.slane %v1782, 7
    %v1790 = vsel %vm1674, %v1789, %v1781
    %v1791 = vrot.slane %v1783, 6
    %v1792 = vsel %vm1677, %v1791, %v1790
    %v1793 = vrot.slane %v1784, 5
    %v1794 = vsel %vm1680, %v1793, %v1792
    %v1795 = vrot.slane %v1785, 4
    %v1796 = vsel %vm1683, %v1795, %v1794
    %v1797 = vrot.slane %v1786, 3
    %v1798 = vsel %vm1686, %v1797, %v1796
    %v1799 = vrot.slane %v1787, 2
    %v1800 = vsel %vm1689, %v1799, %v1798
    %v1801 = vrot.slane %v1788, 1
    %v1802 = vsel %vm1692, %v1801, %v1800
    %v1803 = vpack.c.b16 %v1802, %v1802
    %v1812 = vunpack.c.l.b16 %v1325
    %v1813 = vunpack.c.l.b16 %v1326
    %v1814 = vunpack.c.l.b16 %v1327
    %v1815 = vunpack.c.l.b16 %v1328
    %v1816 = vunpack.c.l.b16 %v1329
    %v1817 = vunpack.c.l.b16 %v1330
    %v1818 = vunpack.c.l.b16 %v1331
    %v1819 = vunpack.c.l.b16 %v1332
    %v1820 = vrot.slane %v1813, 7
    %v1821 = vsel %vm1674, %v1820, %v1812
    %v1822 = vrot.slane %v1814, 6
    %v1823 = vsel %vm1677, %v1822, %v1821
    %v1824 = vrot.slane %v1815, 5
    %v1825 = vsel %vm1680, %v1824, %v1823
    %v1826 = vrot.slane %v1816, 4
    %v1827 = vsel %vm1683, %v1826, %v1825
    %v1828 = vrot.slane %v1817, 3
    %v1829 = vsel %vm1686, %v1828, %v1827
    %v1830 = vrot.slane %v1818, 2
    %v1831 = vsel %vm1689, %v1830, %v1829
    %v1832 = vrot.slane %v1819, 1
    %v1833 = vsel %vm1692, %v1832, %v1831
    %v1834 = vpack.c.b16 %v1833, %v1833
    %v1836 = vsel %vm1726, %v1803, 0
    %v1839 = vsel %vm1726, %v1834, 0
    %1841 = vmatprep.subr.bf16.mxu0 0
    %1842 = vmatpush1.bf16.xpose.msra.mxu0 0
    %1843 = vmatprep.subr.bf16.mxu0 0
    %1844 = vmatpush1.bf16.xpose.msra.mxu0 0
    %1845 = vmatprep.subr.bf16.mxu0 0
    %1846 = vmatpush1.bf16.xpose.msra.mxu0 0
    %1847 = vmatprep.subr.bf16.mxu0 0
    %1848 = vmatpush1.bf16.xpose.msra.mxu0 0
    %1849 = vmatprep.subr.bf16.mxu0 0
    %1850 = vmatpush1.bf16.xpose.msra.mxu0 0
    %1851 = vmatprep.subr.bf16.mxu0 0
    %1852 = vmatpush1.bf16.xpose.msra.mxu0 0
    %1853 = vmatprep.subr.bf16.mxu0 0
    %1854 = vmatpush1.bf16.xpose.msra.mxu0 0
    %1855 = vmatprep.subr.bf16.mxu0 0
    %1856 = vmatpush1.bf16.xpose.msra.mxu0 %v1839
    %1857 = vmatprep.subr.bf16.mxu0 0
    %1858 = vmatpush2.bf16.xpose.msra.mxu0 0
    %1859 = vmatprep.subr.bf16.mxu0 0
    %1860 = vmatpush2.bf16.xpose.msra.mxu0 0
    %1861 = vmatprep.subr.bf16.mxu0 0
    %1862 = vmatpush2.bf16.xpose.msra.mxu0 0
    %1863 = vmatprep.subr.bf16.mxu0 0
    %1864 = vmatpush2.bf16.xpose.msra.mxu0 0
    %1865 = vmatprep.subr.bf16.mxu0 0
    %1866 = vmatpush2.bf16.xpose.msra.mxu0 0
    %1867 = vmatprep.subr.bf16.mxu0 0
    %1868 = vmatpush2.bf16.xpose.msra.mxu0 0
    %1869 = vmatprep.subr.bf16.mxu0 0
    %1870 = vmatpush2.bf16.xpose.msra.mxu0 0
    %1871 = vmatprep.subr.bf16.mxu0 0
    %1872 = vmatpush2.bf16.xpose.msra.mxu0 0
    %1873 = vmatprep.mubr.bf16.mxu0 0
    %1874 = vmatmul.mubr.bf16.gmra.mxu0 %v1836
    %v1875 = vpop.f32.mrf.mxu0
    %v1876 = vadd.f32 0.0, %v1875
    %v1877 = vpop.f32.mrf.mxu0
    %v1878 = vpop.f32.mrf.mxu0
    %v1879 = vpop.f32.mrf.mxu0
    %1880 = vdwg.mxu0
    %v1889 = vunpack.c.l.b16 %v1057
    %v1890 = vunpack.c.l.b16 %v1058
    %v1891 = vunpack.c.l.b16 %v1059
    %v1892 = vunpack.c.l.b16 %v1060
    %v1893 = vunpack.c.l.b16 %v1061
    %v1894 = vunpack.c.l.b16 %v1062
    %v1895 = vunpack.c.l.b16 %v1063
    %v1896 = vunpack.c.l.b16 %v1064
    %v1897 = vrot.slane %v1890, 7
    %v1898 = vsel %vm1674, %v1897, %v1889
    %v1899 = vrot.slane %v1891, 6
    %v1900 = vsel %vm1677, %v1899, %v1898
    %v1901 = vrot.slane %v1892, 5
    %v1902 = vsel %vm1680, %v1901, %v1900
    %v1903 = vrot.slane %v1893, 4
    %v1904 = vsel %vm1683, %v1903, %v1902
    %v1905 = vrot.slane %v1894, 3
    %v1906 = vsel %vm1686, %v1905, %v1904
    %v1907 = vrot.slane %v1895, 2
    %v1908 = vsel %vm1689, %v1907, %v1906
    %v1909 = vrot.slane %v1896, 1
    %v1910 = vsel %vm1692, %v1909, %v1908
    %v1911 = vpack.c.b16 %v1910, %v1910
    %v1920 = vunpack.c.l.b16 %v1333
    %v1921 = vunpack.c.l.b16 %v1334
    %v1922 = vunpack.c.l.b16 %v1335
    %v1923 = vunpack.c.l.b16 %v1336
    %v1924 = vunpack.c.l.b16 %v1337
    %v1925 = vunpack.c.l.b16 %v1338
    %v1926 = vunpack.c.l.b16 %v1339
    %v1927 = vunpack.c.l.b16 %v1340
    %v1928 = vrot.slane %v1921, 7
    %v1929 = vsel %vm1674, %v1928, %v1920
    %v1930 = vrot.slane %v1922, 6
    %v1931 = vsel %vm1677, %v1930, %v1929
    %v1932 = vrot.slane %v1923, 5
    %v1933 = vsel %vm1680, %v1932, %v1931
    %v1934 = vrot.slane %v1924, 4
    %v1935 = vsel %vm1683, %v1934, %v1933
    %v1936 = vrot.slane %v1925, 3
    %v1937 = vsel %vm1686, %v1936, %v1935
    %v1938 = vrot.slane %v1926, 2
    %v1939 = vsel %vm1689, %v1938, %v1937
    %v1940 = vrot.slane %v1927, 1
    %v1941 = vsel %vm1692, %v1940, %v1939
    %v1942 = vpack.c.b16 %v1941, %v1941
    %v1944 = vsel %vm1726, %v1911, 0
    %v1947 = vsel %vm1726, %v1942, 0
    %1949 = vmatprep.subr.bf16.mxu0 0
    %1950 = vmatpush1.bf16.xpose.msra.mxu0 0
    %1951 = vmatprep.subr.bf16.mxu0 0
    %1952 = vmatpush1.bf16.xpose.msra.mxu0 0
    %1953 = vmatprep.subr.bf16.mxu0 0
    %1954 = vmatpush1.bf16.xpose.msra.mxu0 0
    %1955 = vmatprep.subr.bf16.mxu0 0
    %1956 = vmatpush1.bf16.xpose.msra.mxu0 0
    %1957 = vmatprep.subr.bf16.mxu0 0
    %1958 = vmatpush1.bf16.xpose.msra.mxu0 0
    %1959 = vmatprep.subr.bf16.mxu0 0
    %1960 = vmatpush1.bf16.xpose.msra.mxu0 0
    %1961 = vmatprep.subr.bf16.mxu0 0
    %1962 = vmatpush1.bf16.xpose.msra.mxu0 0
    %1963 = vmatprep.subr.bf16.mxu0 0
    %1964 = vmatpush1.bf16.xpose.msra.mxu0 %v1947
    %1965 = vmatprep.subr.bf16.mxu0 0
    %1966 = vmatpush2.bf16.xpose.msra.mxu0 0
    %1967 = vmatprep.subr.bf16.mxu0 0
    %1968 = vmatpush2.bf16.xpose.msra.mxu0 0
    %1969 = vmatprep.subr.bf16.mxu0 0
    %1970 = vmatpush2.bf16.xpose.msra.mxu0 0
    %1971 = vmatprep.subr.bf16.mxu0 0
    %1972 = vmatpush2.bf16.xpose.msra.mxu0 0
    %1973 = vmatprep.subr.bf16.mxu0 0
    %1974 = vmatpush2.bf16.xpose.msra.mxu0 0
    %1975 = vmatprep.subr.bf16.mxu0 0
    %1976 = vmatpush2.bf16.xpose.msra.mxu0 0
    %1977 = vmatprep.subr.bf16.mxu0 0
    %1978 = vmatpush2.bf16.xpose.msra.mxu0 0
    %1979 = vmatprep.subr.bf16.mxu0 0
    %1980 = vmatpush2.bf16.xpose.msra.mxu0 0
    %1981 = vmatprep.mubr.bf16.mxu0 0
    %1982 = vmatmul.mubr.bf16.gmra.mxu0 %v1944
    %v1983 = vpop.f32.mrf.mxu0
    %v1984 = vadd.f32 0.0, %v1983
    %v1985 = vpop.f32.mrf.mxu0
    %v1986 = vpop.f32.mrf.mxu0
    %v1987 = vpop.f32.mrf.mxu0
    %1988 = vdwg.mxu0
    %v1997 = vunpack.c.l.b16 %v1065
    %v1998 = vunpack.c.l.b16 %v1066
    %v1999 = vunpack.c.l.b16 %v1067
    %v2000 = vunpack.c.l.b16 %v1068
    %v2001 = vunpack.c.l.b16 %v1069
    %v2002 = vunpack.c.l.b16 %v1070
    %v2003 = vunpack.c.l.b16 %v1071
    %v2004 = vunpack.c.l.b16 %v1072
    %v2005 = vrot.slane %v1998, 7
    %v2006 = vsel %vm1674, %v2005, %v1997
    %v2007 = vrot.slane %v1999, 6
    %v2008 = vsel %vm1677, %v2007, %v2006
    %v2009 = vrot.slane %v2000, 5
    %v2010 = vsel %vm1680, %v2009, %v2008
    %v2011 = vrot.slane %v2001, 4
    %v2012 = vsel %vm1683, %v2011, %v2010
    %v2013 = vrot.slane %v2002, 3
    %v2014 = vsel %vm1686, %v2013, %v2012
    %v2015 = vrot.slane %v2003, 2
    %v2016 = vsel %vm1689, %v2015, %v2014
    %v2017 = vrot.slane %v2004, 1
    %v2018 = vsel %vm1692, %v2017, %v2016
    %v2019 = vpack.c.b16 %v2018, %v2018
    %v2028 = vunpack.c.l.b16 %v1341
    %v2029 = vunpack.c.l.b16 %v1342
    %v2030 = vunpack.c.l.b16 %v1343
    %v2031 = vunpack.c.l.b16 %v1344
    %v2032 = vunpack.c.l.b16 %v1345
    %v2033 = vunpack.c.l.b16 %v1346
    %v2034 = vunpack.c.l.b16 %v1347
    %v2035 = vunpack.c.l.b16 %v1348
    %v2036 = vrot.slane %v2029, 7
    %v2037 = vsel %vm1674, %v2036, %v2028
    %v2038 = vrot.slane %v2030, 6
    %v2039 = vsel %vm1677, %v2038, %v2037
    %v2040 = vrot.slane %v2031, 5
    %v2041 = vsel %vm1680, %v2040, %v2039
    %v2042 = vrot.slane %v2032, 4
    %v2043 = vsel %vm1683, %v2042, %v2041
    %v2044 = vrot.slane %v2033, 3
    %v2045 = vsel %vm1686, %v2044, %v2043
    %v2046 = vrot.slane %v2034, 2
    %v2047 = vsel %vm1689, %v2046, %v2045
    %v2048 = vrot.slane %v2035, 1
    %v2049 = vsel %vm1692, %v2048, %v2047
    %v2050 = vpack.c.b16 %v2049, %v2049
    %v2052 = vsel %vm1726, %v2019, 0
    %v2055 = vsel %vm1726, %v2050, 0
    %2057 = vmatprep.subr.bf16.mxu0 0
    %2058 = vmatpush1.bf16.xpose.msra.mxu0 0
    %2059 = vmatprep.subr.bf16.mxu0 0
    %2060 = vmatpush1.bf16.xpose.msra.mxu0 0
    %2061 = vmatprep.subr.bf16.mxu0 0
    %2062 = vmatpush1.bf16.xpose.msra.mxu0 0
    %2063 = vmatprep.subr.bf16.mxu0 0
    %2064 = vmatpush1.bf16.xpose.msra.mxu0 0
    %2065 = vmatprep.subr.bf16.mxu0 0
    %2066 = vmatpush1.bf16.xpose.msra.mxu0 0
    %2067 = vmatprep.subr.bf16.mxu0 0
    %2068 = vmatpush1.bf16.xpose.msra.mxu0 0
    %2069 = vmatprep.subr.bf16.mxu0 0
    %2070 = vmatpush1.bf16.xpose.msra.mxu0 0
    %2071 = vmatprep.subr.bf16.mxu0 0
    %2072 = vmatpush1.bf16.xpose.msra.mxu0 %v2055
    %2073 = vmatprep.subr.bf16.mxu0 0
    %2074 = vmatpush2.bf16.xpose.msra.mxu0 0
    %2075 = vmatprep.subr.bf16.mxu0 0
    %2076 = vmatpush2.bf16.xpose.msra.mxu0 0
    %2077 = vmatprep.subr.bf16.mxu0 0
    %2078 = vmatpush2.bf16.xpose.msra.mxu0 0
    %2079 = vmatprep.subr.bf16.mxu0 0
    %2080 = vmatpush2.bf16.xpose.msra.mxu0 0
    %2081 = vmatprep.subr.bf16.mxu0 0
    %2082 = vmatpush2.bf16.xpose.msra.mxu0 0
    %2083 = vmatprep.subr.bf16.mxu0 0
    %2084 = vmatpush2.bf16.xpose.msra.mxu0 0
    %2085 = vmatprep.subr.bf16.mxu0 0
    %2086 = vmatpush2.bf16.xpose.msra.mxu0 0
    %2087 = vmatprep.subr.bf16.mxu0 0
    %2088 = vmatpush2.bf16.xpose.msra.mxu0 0
    %2089 = vmatprep.mubr.bf16.mxu0 0
    %2090 = vmatmul.mubr.bf16.gmra.mxu0 %v2052
    %v2091 = vpop.f32.mrf.mxu0
    %v2092 = vadd.f32 0.0, %v2091
    %v2093 = vpop.f32.mrf.mxu0
    %v2094 = vpop.f32.mrf.mxu0
    %v2095 = vpop.f32.mrf.mxu0
    %2096 = vdwg.mxu0
    %v2105 = vunpack.c.l.b16 %v1073
    %v2106 = vunpack.c.l.b16 %v1074
    %v2107 = vunpack.c.l.b16 %v1075
    %v2108 = vunpack.c.l.b16 %v1076
    %v2109 = vunpack.c.l.b16 %v1077
    %v2110 = vunpack.c.l.b16 %v1078
    %v2111 = vunpack.c.l.b16 %v1079
    %v2112 = vunpack.c.l.b16 %v1080
    %v2113 = vrot.slane %v2106, 7
    %v2114 = vsel %vm1674, %v2113, %v2105
    %v2115 = vrot.slane %v2107, 6
    %v2116 = vsel %vm1677, %v2115, %v2114
    %v2117 = vrot.slane %v2108, 5
    %v2118 = vsel %vm1680, %v2117, %v2116
    %v2119 = vrot.slane %v2109, 4
    %v2120 = vsel %vm1683, %v2119, %v2118
    %v2121 = vrot.slane %v2110, 3
    %v2122 = vsel %vm1686, %v2121, %v2120
    %v2123 = vrot.slane %v2111, 2
    %v2124 = vsel %vm1689, %v2123, %v2122
    %v2125 = vrot.slane %v2112, 1
    %v2126 = vsel %vm1692, %v2125, %v2124
    %v2127 = vpack.c.b16 %v2126, %v2126
    %v2136 = vunpack.c.l.b16 %v1349
    %v2137 = vunpack.c.l.b16 %v1350
    %v2138 = vunpack.c.l.b16 %v1351
    %v2139 = vunpack.c.l.b16 %v1352
    %v2140 = vunpack.c.l.b16 %v1353
    %v2141 = vunpack.c.l.b16 %v1354
    %v2142 = vunpack.c.l.b16 %v1355
    %v2143 = vunpack.c.l.b16 %v1356
    %v2144 = vrot.slane %v2137, 7
    %v2145 = vsel %vm1674, %v2144, %v2136
    %v2146 = vrot.slane %v2138, 6
    %v2147 = vsel %vm1677, %v2146, %v2145
    %v2148 = vrot.slane %v2139, 5
    %v2149 = vsel %vm1680, %v2148, %v2147
    %v2150 = vrot.slane %v2140, 4
    %v2151 = vsel %vm1683, %v2150, %v2149
    %v2152 = vrot.slane %v2141, 3
    %v2153 = vsel %vm1686, %v2152, %v2151
    %v2154 = vrot.slane %v2142, 2
    %v2155 = vsel %vm1689, %v2154, %v2153
    %v2156 = vrot.slane %v2143, 1
    %v2157 = vsel %vm1692, %v2156, %v2155
    %v2158 = vpack.c.b16 %v2157, %v2157
    %v2160 = vsel %vm1726, %v2127, 0
    %v2163 = vsel %vm1726, %v2158, 0
    %2165 = vmatprep.subr.bf16.mxu0 0
    %2166 = vmatpush1.bf16.xpose.msra.mxu0 0
    %2167 = vmatprep.subr.bf16.mxu0 0
    %2168 = vmatpush1.bf16.xpose.msra.mxu0 0
    %2169 = vmatprep.subr.bf16.mxu0 0
    %2170 = vmatpush1.bf16.xpose.msra.mxu0 0
    %2171 = vmatprep.subr.bf16.mxu0 0
    %2172 = vmatpush1.bf16.xpose.msra.mxu0 0
    %2173 = vmatprep.subr.bf16.mxu0 0
    %2174 = vmatpush1.bf16.xpose.msra.mxu0 0
    %2175 = vmatprep.subr.bf16.mxu0 0
    %2176 = vmatpush1.bf16.xpose.msra.mxu0 0
    %2177 = vmatprep.subr.bf16.mxu0 0
    %2178 = vmatpush1.bf16.xpose.msra.mxu0 0
    %2179 = vmatprep.subr.bf16.mxu0 0
    %2180 = vmatpush1.bf16.xpose.msra.mxu0 %v2163
    %2181 = vmatprep.subr.bf16.mxu0 0
    %2182 = vmatpush2.bf16.xpose.msra.mxu0 0
    %2183 = vmatprep.subr.bf16.mxu0 0
    %2184 = vmatpush2.bf16.xpose.msra.mxu0 0
    %2185 = vmatprep.subr.bf16.mxu0 0
    %2186 = vmatpush2.bf16.xpose.msra.mxu0 0
    %2187 = vmatprep.subr.bf16.mxu0 0
    %2188 = vmatpush2.bf16.xpose.msra.mxu0 0
    %2189 = vmatprep.subr.bf16.mxu0 0
    %2190 = vmatpush2.bf16.xpose.msra.mxu0 0
    %2191 = vmatprep.subr.bf16.mxu0 0
    %2192 = vmatpush2.bf16.xpose.msra.mxu0 0
    %2193 = vmatprep.subr.bf16.mxu0 0
    %2194 = vmatpush2.bf16.xpose.msra.mxu0 0
    %2195 = vmatprep.subr.bf16.mxu0 0
    %2196 = vmatpush2.bf16.xpose.msra.mxu0 0
    %2197 = vmatprep.mubr.bf16.mxu0 0
    %2198 = vmatmul.mubr.bf16.gmra.mxu0 %v2160
    %v2199 = vpop.f32.mrf.mxu0
    %v2200 = vadd.f32 0.0, %v2199
    %v2201 = vpop.f32.mrf.mxu0
    %v2202 = vpop.f32.mrf.mxu0
    %v2203 = vpop.f32.mrf.mxu0
    %2204 = vdwg.mxu0
    %v2213 = vunpack.c.l.b16 %v1081
    %v2214 = vunpack.c.l.b16 %v1082
    %v2215 = vunpack.c.l.b16 %v1083
    %v2216 = vunpack.c.l.b16 %v1084
    %v2217 = vunpack.c.l.b16 %v1085
    %v2218 = vunpack.c.l.b16 %v1086
    %v2219 = vunpack.c.l.b16 %v1087
    %v2220 = vunpack.c.l.b16 %v1088
    %v2221 = vrot.slane %v2214, 7
    %v2222 = vsel %vm1674, %v2221, %v2213
    %v2223 = vrot.slane %v2215, 6
    %v2224 = vsel %vm1677, %v2223, %v2222
    %v2225 = vrot.slane %v2216, 5
    %v2226 = vsel %vm1680, %v2225, %v2224
    %v2227 = vrot.slane %v2217, 4
    %v2228 = vsel %vm1683, %v2227, %v2226
    %v2229 = vrot.slane %v2218, 3
    %v2230 = vsel %vm1686, %v2229, %v2228
    %v2231 = vrot.slane %v2219, 2
    %v2232 = vsel %vm1689, %v2231, %v2230
    %v2233 = vrot.slane %v2220, 1
    %v2234 = vsel %vm1692, %v2233, %v2232
    %v2235 = vpack.c.b16 %v2234, %v2234
    %v2244 = vunpack.c.l.b16 %v1357
    %v2245 = vunpack.c.l.b16 %v1358
    %v2246 = vunpack.c.l.b16 %v1359
    %v2247 = vunpack.c.l.b16 %v1360
    %v2248 = vunpack.c.l.b16 %v1361
    %v2249 = vunpack.c.l.b16 %v1362
    %v2250 = vunpack.c.l.b16 %v1363
    %v2251 = vunpack.c.l.b16 %v1364
    %v2252 = vrot.slane %v2245, 7
    %v2253 = vsel %vm1674, %v2252, %v2244
    %v2254 = vrot.slane %v2246, 6
    %v2255 = vsel %vm1677, %v2254, %v2253
    %v2256 = vrot.slane %v2247, 5
    %v2257 = vsel %vm1680, %v2256, %v2255
    %v2258 = vrot.slane %v2248, 4
    %v2259 = vsel %vm1683, %v2258, %v2257
    %v2260 = vrot.slane %v2249, 3
    %v2261 = vsel %vm1686, %v2260, %v2259
    %v2262 = vrot.slane %v2250, 2
    %v2263 = vsel %vm1689, %v2262, %v2261
    %v2264 = vrot.slane %v2251, 1
    %v2265 = vsel %vm1692, %v2264, %v2263
    %v2266 = vpack.c.b16 %v2265, %v2265
    %v2268 = vsel %vm1726, %v2235, 0
    %v2271 = vsel %vm1726, %v2266, 0
    %2273 = vmatprep.subr.bf16.mxu0 0
    %2274 = vmatpush1.bf16.xpose.msra.mxu0 0
    %2275 = vmatprep.subr.bf16.mxu0 0
    %2276 = vmatpush1.bf16.xpose.msra.mxu0 0
    %2277 = vmatprep.subr.bf16.mxu0 0
    %2278 = vmatpush1.bf16.xpose.msra.mxu0 0
    %2279 = vmatprep.subr.bf16.mxu0 0
    %2280 = vmatpush1.bf16.xpose.msra.mxu0 0
    %2281 = vmatprep.subr.bf16.mxu0 0
    %2282 = vmatpush1.bf16.xpose.msra.mxu0 0
    %2283 = vmatprep.subr.bf16.mxu0 0
    %2284 = vmatpush1.bf16.xpose.msra.mxu0 0
    %2285 = vmatprep.subr.bf16.mxu0 0
    %2286 = vmatpush1.bf16.xpose.msra.mxu0 0
    %2287 = vmatprep.subr.bf16.mxu0 0
    %2288 = vmatpush1.bf16.xpose.msra.mxu0 %v2271
    %2289 = vmatprep.subr.bf16.mxu0 0
    %2290 = vmatpush2.bf16.xpose.msra.mxu0 0
    %2291 = vmatprep.subr.bf16.mxu0 0
    %2292 = vmatpush2.bf16.xpose.msra.mxu0 0
    %2293 = vmatprep.subr.bf16.mxu0 0
    %2294 = vmatpush2.bf16.xpose.msra.mxu0 0
    %2295 = vmatprep.subr.bf16.mxu0 0
    %2296 = vmatpush2.bf16.xpose.msra.mxu0 0
    %2297 = vmatprep.subr.bf16.mxu0 0
    %2298 = vmatpush2.bf16.xpose.msra.mxu0 0
    %2299 = vmatprep.subr.bf16.mxu0 0
    %2300 = vmatpush2.bf16.xpose.msra.mxu0 0
    %2301 = vmatprep.subr.bf16.mxu0 0
    %2302 = vmatpush2.bf16.xpose.msra.mxu0 0
    %2303 = vmatprep.subr.bf16.mxu0 0
    %2304 = vmatpush2.bf16.xpose.msra.mxu0 0
    %2305 = vmatprep.mubr.bf16.mxu0 0
    %2306 = vmatmul.mubr.bf16.gmra.mxu0 %v2268
    %v2307 = vpop.f32.mrf.mxu0
    %v2308 = vadd.f32 0.0, %v2307
    %v2309 = vpop.f32.mrf.mxu0
    %v2310 = vpop.f32.mrf.mxu0
    %v2311 = vpop.f32.mrf.mxu0
    %2312 = vdwg.mxu0
    %v2321 = vunpack.c.l.b16 %v1089
    %v2322 = vunpack.c.l.b16 %v1090
    %v2323 = vunpack.c.l.b16 %v1091
    %v2324 = vunpack.c.l.b16 %v1092
    %v2325 = vunpack.c.l.b16 %v1093
    %v2326 = vunpack.c.l.b16 %v1094
    %v2327 = vunpack.c.l.b16 %v1095
    %v2328 = vunpack.c.l.b16 %v1096
    %v2329 = vrot.slane %v2322, 7
    %v2330 = vsel %vm1674, %v2329, %v2321
    %v2331 = vrot.slane %v2323, 6
    %v2332 = vsel %vm1677, %v2331, %v2330
    %v2333 = vrot.slane %v2324, 5
    %v2334 = vsel %vm1680, %v2333, %v2332
    %v2335 = vrot.slane %v2325, 4
    %v2336 = vsel %vm1683, %v2335, %v2334
    %v2337 = vrot.slane %v2326, 3
    %v2338 = vsel %vm1686, %v2337, %v2336
    %v2339 = vrot.slane %v2327, 2
    %v2340 = vsel %vm1689, %v2339, %v2338
    %v2341 = vrot.slane %v2328, 1
    %v2342 = vsel %vm1692, %v2341, %v2340
    %v2343 = vpack.c.b16 %v2342, %v2342
    %v2352 = vunpack.c.l.b16 %v1365
    %v2353 = vunpack.c.l.b16 %v1366
    %v2354 = vunpack.c.l.b16 %v1367
    %v2355 = vunpack.c.l.b16 %v1368
    %v2356 = vunpack.c.l.b16 %v1369
    %v2357 = vunpack.c.l.b16 %v1370
    %v2358 = vunpack.c.l.b16 %v1371
    %v2359 = vunpack.c.l.b16 %v1372
    %v2360 = vrot.slane %v2353, 7
    %v2361 = vsel %vm1674, %v2360, %v2352
    %v2362 = vrot.slane %v2354, 6
    %v2363 = vsel %vm1677, %v2362, %v2361
    %v2364 = vrot.slane %v2355, 5
    %v2365 = vsel %vm1680, %v2364, %v2363
    %v2366 = vrot.slane %v2356, 4
    %v2367 = vsel %vm1683, %v2366, %v2365
    %v2368 = vrot.slane %v2357, 3
    %v2369 = vsel %vm1686, %v2368, %v2367
    %v2370 = vrot.slane %v2358, 2
    %v2371 = vsel %vm1689, %v2370, %v2369
    %v2372 = vrot.slane %v2359, 1
    %v2373 = vsel %vm1692, %v2372, %v2371
    %v2374 = vpack.c.b16 %v2373, %v2373
    %v2376 = vsel %vm1726, %v2343, 0
    %v2379 = vsel %vm1726, %v2374, 0
    %2381 = vmatprep.subr.bf16.mxu0 0
    %2382 = vmatpush1.bf16.xpose.msra.mxu0 0
    %2383 = vmatprep.subr.bf16.mxu0 0
    %2384 = vmatpush1.bf16.xpose.msra.mxu0 0
    %2385 = vmatprep.subr.bf16.mxu0 0
    %2386 = vmatpush1.bf16.xpose.msra.mxu0 0
    %2387 = vmatprep.subr.bf16.mxu0 0
    %2388 = vmatpush1.bf16.xpose.msra.mxu0 0
    %2389 = vmatprep.subr.bf16.mxu0 0
    %2390 = vmatpush1.bf16.xpose.msra.mxu0 0
    %2391 = vmatprep.subr.bf16.mxu0 0
    %2392 = vmatpush1.bf16.xpose.msra.mxu0 0
    %2393 = vmatprep.subr.bf16.mxu0 0
    %2394 = vmatpush1.bf16.xpose.msra.mxu0 0
    %2395 = vmatprep.subr.bf16.mxu0 0
    %2396 = vmatpush1.bf16.xpose.msra.mxu0 %v2379
    %2397 = vmatprep.subr.bf16.mxu0 0
    %2398 = vmatpush2.bf16.xpose.msra.mxu0 0
    %2399 = vmatprep.subr.bf16.mxu0 0
    %2400 = vmatpush2.bf16.xpose.msra.mxu0 0
    %2401 = vmatprep.subr.bf16.mxu0 0
    %2402 = vmatpush2.bf16.xpose.msra.mxu0 0
    %2403 = vmatprep.subr.bf16.mxu0 0
    %2404 = vmatpush2.bf16.xpose.msra.mxu0 0
    %2405 = vmatprep.subr.bf16.mxu0 0
    %2406 = vmatpush2.bf16.xpose.msra.mxu0 0
    %2407 = vmatprep.subr.bf16.mxu0 0
    %2408 = vmatpush2.bf16.xpose.msra.mxu0 0
    %2409 = vmatprep.subr.bf16.mxu0 0
    %2410 = vmatpush2.bf16.xpose.msra.mxu0 0
    %2411 = vmatprep.subr.bf16.mxu0 0
    %2412 = vmatpush2.bf16.xpose.msra.mxu0 0
    %2413 = vmatprep.mubr.bf16.mxu0 0
    %2414 = vmatmul.mubr.bf16.gmra.mxu0 %v2376
    %v2415 = vpop.f32.mrf.mxu0
    %v2416 = vadd.f32 0.0, %v2415
    %v2417 = vpop.f32.mrf.mxu0
    %v2418 = vpop.f32.mrf.mxu0
    %v2419 = vpop.f32.mrf.mxu0
    %2420 = vdwg.mxu0
    %v2429 = vunpack.c.l.b16 %v1097
    %v2430 = vunpack.c.l.b16 %v1098
    %v2431 = vunpack.c.l.b16 %v1099
    %v2432 = vunpack.c.l.b16 %v1100
    %v2433 = vunpack.c.l.b16 %v1101
    %v2434 = vunpack.c.l.b16 %v1102
    %v2435 = vunpack.c.l.b16 %v1103
    %v2436 = vunpack.c.l.b16 %v1104
    %v2437 = vrot.slane %v2430, 7
    %v2438 = vsel %vm1674, %v2437, %v2429
    %v2439 = vrot.slane %v2431, 6
    %v2440 = vsel %vm1677, %v2439, %v2438
    %v2441 = vrot.slane %v2432, 5
    %v2442 = vsel %vm1680, %v2441, %v2440
    %v2443 = vrot.slane %v2433, 4
    %v2444 = vsel %vm1683, %v2443, %v2442
    %v2445 = vrot.slane %v2434, 3
    %v2446 = vsel %vm1686, %v2445, %v2444
    %v2447 = vrot.slane %v2435, 2
    %v2448 = vsel %vm1689, %v2447, %v2446
    %v2449 = vrot.slane %v2436, 1
    %v2450 = vsel %vm1692, %v2449, %v2448
    %v2451 = vpack.c.b16 %v2450, %v2450
    %v2460 = vunpack.c.l.b16 %v1373
    %v2461 = vunpack.c.l.b16 %v1374
    %v2462 = vunpack.c.l.b16 %v1375
    %v2463 = vunpack.c.l.b16 %v1376
    %v2464 = vunpack.c.l.b16 %v1377
    %v2465 = vunpack.c.l.b16 %v1378
    %v2466 = vunpack.c.l.b16 %v1379
    %v2467 = vunpack.c.l.b16 %v1380
    %v2468 = vrot.slane %v2461, 7
    %v2469 = vsel %vm1674, %v2468, %v2460
    %v2470 = vrot.slane %v2462, 6
    %v2471 = vsel %vm1677, %v2470, %v2469
    %v2472 = vrot.slane %v2463, 5
    %v2473 = vsel %vm1680, %v2472, %v2471
    %v2474 = vrot.slane %v2464, 4
    %v2475 = vsel %vm1683, %v2474, %v2473
    %v2476 = vrot.slane %v2465, 3
    %v2477 = vsel %vm1686, %v2476, %v2475
    %v2478 = vrot.slane %v2466, 2
    %v2479 = vsel %vm1689, %v2478, %v2477
    %v2480 = vrot.slane %v2467, 1
    %v2481 = vsel %vm1692, %v2480, %v2479
    %v2482 = vpack.c.b16 %v2481, %v2481
    %v2484 = vsel %vm1726, %v2451, 0
    %v2487 = vsel %vm1726, %v2482, 0
    %2489 = vmatprep.subr.bf16.mxu0 0
    %2490 = vmatpush1.bf16.xpose.msra.mxu0 0
    %2491 = vmatprep.subr.bf16.mxu0 0
    %2492 = vmatpush1.bf16.xpose.msra.mxu0 0
    %2493 = vmatprep.subr.bf16.mxu0 0
    %2494 = vmatpush1.bf16.xpose.msra.mxu0 0
    %2495 = vmatprep.subr.bf16.mxu0 0
    %2496 = vmatpush1.bf16.xpose.msra.mxu0 0
    %2497 = vmatprep.subr.bf16.mxu0 0
    %2498 = vmatpush1.bf16.xpose.msra.mxu0 0
    %2499 = vmatprep.subr.bf16.mxu0 0
    %2500 = vmatpush1.bf16.xpose.msra.mxu0 0
    %2501 = vmatprep.subr.bf16.mxu0 0
    %2502 = vmatpush1.bf16.xpose.msra.mxu0 0
    %2503 = vmatprep.subr.bf16.mxu0 0
    %2504 = vmatpush1.bf16.xpose.msra.mxu0 %v2487
    %2505 = vmatprep.subr.bf16.mxu0 0
    %2506 = vmatpush2.bf16.xpose.msra.mxu0 0
    %2507 = vmatprep.subr.bf16.mxu0 0
    %2508 = vmatpush2.bf16.xpose.msra.mxu0 0
    %2509 = vmatprep.subr.bf16.mxu0 0
    %2510 = vmatpush2.bf16.xpose.msra.mxu0 0
    %2511 = vmatprep.subr.bf16.mxu0 0
    %2512 = vmatpush2.bf16.xpose.msra.mxu0 0
    %2513 = vmatprep.subr.bf16.mxu0 0
    %2514 = vmatpush2.bf16.xpose.msra.mxu0 0
    %2515 = vmatprep.subr.bf16.mxu0 0
    %2516 = vmatpush2.bf16.xpose.msra.mxu0 0
    %2517 = vmatprep.subr.bf16.mxu0 0
    %2518 = vmatpush2.bf16.xpose.msra.mxu0 0
    %2519 = vmatprep.subr.bf16.mxu0 0
    %2520 = vmatpush2.bf16.xpose.msra.mxu0 0
    %2521 = vmatprep.mubr.bf16.mxu0 0
    %2522 = vmatmul.mubr.bf16.gmra.mxu0 %v2484
    %v2523 = vpop.f32.mrf.mxu0
    %v2524 = vadd.f32 0.0, %v2523
    %v2525 = vpop.f32.mrf.mxu0
    %v2526 = vpop.f32.mrf.mxu0
    %v2527 = vpop.f32.mrf.mxu0
    %2528 = vdwg.mxu0
    %vm2529 = vcmask 64512
    %v2530 = vsel %vm2529, %v1768, -inf
    %2531 = vmax.xlane.f32.xlu0 %v2530
    %v2532 = vpop.xlane.xlu0 %2531
    %v2533 = vsel %vm2529, %v1876, -inf
    %2534 = vmax.xlane.f32.xlu0 %v2533
    %v2535 = vpop.xlane.xlu0 %2534
    %v2536 = vsel %vm2529, %v1984, -inf
    %2537 = vmax.xlane.f32.xlu0 %v2536
    %v2538 = vpop.xlane.xlu0 %2537
    %v2539 = vsel %vm2529, %v2092, -inf
    %2540 = vmax.xlane.f32.xlu0 %v2539
    %v2541 = vpop.xlane.xlu0 %2540
    %v2542 = vsel %vm2529, %v2200, -inf
    %2543 = vmax.xlane.f32.xlu0 %v2542
    %v2544 = vpop.xlane.xlu0 %2543
    %v2545 = vsel %vm2529, %v2308, -inf
    %2546 = vmax.xlane.f32.xlu0 %v2545
    %v2547 = vpop.xlane.xlu0 %2546
    %v2548 = vsel %vm2529, %v2416, -inf
    %2549 = vmax.xlane.f32.xlu0 %v2548
    %v2550 = vpop.xlane.xlu0 %2549
    %v2551 = vsel %vm2529, %v2524, -inf
    %2552 = vmax.xlane.f32.xlu0 %v2551
    %v2553 = vpop.xlane.xlu0 %2552
    %v2554 = vsub.f32 %v1768, %v2532
    %v2555 = vsub.f32 %v1876, %v2535
    %v2556 = vsub.f32 %v1984, %v2538
    %v2557 = vsub.f32 %v2092, %v2541
    %v2558 = vsub.f32 %v2200, %v2544
    %v2559 = vsub.f32 %v2308, %v2547
    %v2560 = vsub.f32 %v2416, %v2550
    %v2561 = vsub.f32 %v2524, %v2553
    %v2562 = vmul.f32 %v2554, 1.442695
    %v2563 = vpow.pop %v2562
    %v2564 = vmul.f32 %v2555, 1.442695
    %v2565 = vpow.pop %v2564
    %v2566 = vmul.f32 %v2556, 1.442695
    %v2567 = vpow.pop %v2566
    %v2568 = vmul.f32 %v2557, 1.442695
    %v2569 = vpow.pop %v2568
    %v2570 = vmul.f32 %v2558, 1.442695
    %v2571 = vpow.pop %v2570
    %v2572 = vmul.f32 %v2559, 1.442695
    %v2573 = vpow.pop %v2572
    %v2574 = vmul.f32 %v2560, 1.442695
    %v2575 = vpow.pop %v2574
    %v2576 = vmul.f32 %v2561, 1.442695
    %v2577 = vpow.pop %v2576
    %v2578 = vsel %vm2529, %v2563, 0.0
    %2579 = vadd.xlane.f32.xlu0 %v2578
    %v2580 = vpop.xlane.xlu0 %2579
    %v2581 = vsel %vm2529, %v2565, 0.0
    %2582 = vadd.xlane.f32.xlu0 %v2581
    %v2583 = vpop.xlane.xlu0 %2582
    %v2584 = vsel %vm2529, %v2567, 0.0
    %2585 = vadd.xlane.f32.xlu0 %v2584
    %v2586 = vpop.xlane.xlu0 %2585
    %v2587 = vsel %vm2529, %v2569, 0.0
    %2588 = vadd.xlane.f32.xlu0 %v2587
    %v2589 = vpop.xlane.xlu0 %2588
    %v2590 = vsel %vm2529, %v2571, 0.0
    %2591 = vadd.xlane.f32.xlu0 %v2590
    %v2592 = vpop.xlane.xlu0 %2591
    %v2593 = vsel %vm2529, %v2573, 0.0
    %2594 = vadd.xlane.f32.xlu0 %v2593
    %v2595 = vpop.xlane.xlu0 %2594
    %v2596 = vsel %vm2529, %v2575, 0.0
    %2597 = vadd.xlane.f32.xlu0 %v2596
    %v2598 = vpop.xlane.xlu0 %2597
    %v2599 = vsel %vm2529, %v2577, 0.0
    %2600 = vadd.xlane.f32.xlu0 %v2599
    %v2601 = vpop.xlane.xlu0 %2600
    %v2602 = vrcp.pop %v2580
    %v2603 = vmul.f32 %v2563, %v2602
    %v2604 = vrcp.pop %v2583
    %v2605 = vmul.f32 %v2565, %v2604
    %v2606 = vrcp.pop %v2586
    %v2607 = vmul.f32 %v2567, %v2606
    %v2608 = vrcp.pop %v2589
    %v2609 = vmul.f32 %v2569, %v2608
    %v2610 = vrcp.pop %v2592
    %v2611 = vmul.f32 %v2571, %v2610
    %v2612 = vrcp.pop %v2595
    %v2613 = vmul.f32 %v2573, %v2612
    %v2614 = vrcp.pop %v2598
    %v2615 = vmul.f32 %v2575, %v2614
    %v2616 = vrcp.pop %v2601
    %v2617 = vmul.f32 %v2577, %v2616
    %v2618 = vpack.c.bf16 %v2603, %v2603
    %v2619 = vpack.c.bf16 %v2605, %v2605
    %v2620 = vpack.c.bf16 %v2607, %v2607
    %v2621 = vpack.c.bf16 %v2609, %v2609
    %v2622 = vpack.c.bf16 %v2611, %v2611
    %v2623 = vpack.c.bf16 %v2613, %v2613
    %v2624 = vpack.c.bf16 %v2615, %v2615
    %v2625 = vpack.c.bf16 %v2617, %v2617
    %v2634 = vunpack.c.l.b16 %v1593
    %v2635 = vunpack.c.l.b16 %v1594
    %v2636 = vunpack.c.l.b16 %v1595
    %v2637 = vunpack.c.l.b16 %v1596
    %v2638 = vunpack.c.l.b16 %v1597
    %v2639 = vunpack.c.l.b16 %v1598
    %v2640 = vunpack.c.l.b16 %v1599
    %v2641 = vunpack.c.l.b16 %v1600
    %v2642 = vrot.slane %v2635, 7
    %v2643 = vsel %vm1674, %v2642, %v2634
    %v2644 = vrot.slane %v2636, 6
    %v2645 = vsel %vm1677, %v2644, %v2643
    %v2646 = vrot.slane %v2637, 5
    %v2647 = vsel %vm1680, %v2646, %v2645
    %v2648 = vrot.slane %v2638, 4
    %v2649 = vsel %vm1683, %v2648, %v2647
    %v2650 = vrot.slane %v2639, 3
    %v2651 = vsel %vm1686, %v2650, %v2649
    %v2652 = vrot.slane %v2640, 2
    %v2653 = vsel %vm1689, %v2652, %v2651
    %v2654 = vrot.slane %v2641, 1
    %v2655 = vsel %vm1692, %v2654, %v2653
    %v2656 = vpack.c.b16 %v2655, %v2655
    %v2658 = vsel %vm2529, %v2618, 0
    %vm2660 = vcmask 1043456
    %v2662 = vsel %vm2660, %v2656, 0
    %2664 = vmatprep.subr.bf16.mxu0 0
    %2665 = vmatpush1.bf16.msra.mxu0 0
    %2666 = vmatprep.subr.bf16.mxu0 0
    %2667 = vmatpush1.bf16.msra.mxu0 0
    %2668 = vmatprep.subr.bf16.mxu0 0
    %2669 = vmatpush1.bf16.msra.mxu0 0
    %2670 = vmatprep.subr.bf16.mxu0 0
    %2671 = vmatpush1.bf16.msra.mxu0 0
    %2672 = vmatprep.subr.bf16.mxu0 0
    %2673 = vmatpush1.bf16.msra.mxu0 0
    %2674 = vmatprep.subr.bf16.mxu0 0
    %2675 = vmatpush1.bf16.msra.mxu0 0
    %2676 = vmatprep.subr.bf16.mxu0 0
    %2677 = vmatpush1.bf16.msra.mxu0 0
    %2678 = vmatprep.subr.bf16.mxu0 0
    %2679 = vmatpush1.bf16.msra.mxu0 %v2662
    %2680 = vmatprep.subr.bf16.mxu0 0
    %2681 = vmatpush2.bf16.msra.mxu0 0
    %2682 = vmatprep.subr.bf16.mxu0 0
    %2683 = vmatpush2.bf16.msra.mxu0 0
    %2684 = vmatprep.subr.bf16.mxu0 0
    %2685 = vmatpush2.bf16.msra.mxu0 0
    %2686 = vmatprep.subr.bf16.mxu0 0
    %2687 = vmatpush2.bf16.msra.mxu0 0
    %2688 = vmatprep.subr.bf16.mxu0 0
    %2689 = vmatpush2.bf16.msra.mxu0 0
    %2690 = vmatprep.subr.bf16.mxu0 0
    %2691 = vmatpush2.bf16.msra.mxu0 0
    %2692 = vmatprep.subr.bf16.mxu0 0
    %2693 = vmatpush2.bf16.msra.mxu0 0
    %2694 = vmatprep.subr.bf16.mxu0 0
    %2695 = vmatpush2.bf16.msra.mxu0 0
    %2696 = vmatprep.mubr.bf16.mxu0 0
    %2697 = vmatmul.mubr.bf16.gmra.mxu0 %v2658
    %v2698 = vpop.f32.mrf.mxu0
    %v2699 = vadd.f32 0.0, %v2698
    %v2700 = vpop.f32.mrf.mxu0
    %v2701 = vpop.f32.mrf.mxu0
    %v2702 = vpop.f32.mrf.mxu0
    %2703 = vdwg.mxu0
    %v2712 = vunpack.c.l.b16 %v1601
    %v2713 = vunpack.c.l.b16 %v1602
    %v2714 = vunpack.c.l.b16 %v1603
    %v2715 = vunpack.c.l.b16 %v1604
    %v2716 = vunpack.c.l.b16 %v1605
    %v2717 = vunpack.c.l.b16 %v1606
    %v2718 = vunpack.c.l.b16 %v1607
    %v2719 = vunpack.c.l.b16 %v1608
    %v2720 = vrot.slane %v2713, 7
    %v2721 = vsel %vm1674, %v2720, %v2712
    %v2722 = vrot.slane %v2714, 6
    %v2723 = vsel %vm1677, %v2722, %v2721
    %v2724 = vrot.slane %v2715, 5
    %v2725 = vsel %vm1680, %v2724, %v2723
    %v2726 = vrot.slane %v2716, 4
    %v2727 = vsel %vm1683, %v2726, %v2725
    %v2728 = vrot.slane %v2717, 3
    %v2729 = vsel %vm1686, %v2728, %v2727
    %v2730 = vrot.slane %v2718, 2
    %v2731 = vsel %vm1689, %v2730, %v2729
    %v2732 = vrot.slane %v2719, 1
    %v2733 = vsel %vm1692, %v2732, %v2731
    %v2734 = vpack.c.b16 %v2733, %v2733
    %v2736 = vsel %vm2529, %v2619, 0
    %v2739 = vsel %vm2660, %v2734, 0
    %2741 = vmatprep.subr.bf16.mxu0 0
    %2742 = vmatpush1.bf16.msra.mxu0 0
    %2743 = vmatprep.subr.bf16.mxu0 0
    %2744 = vmatpush1.bf16.msra.mxu0 0
    %2745 = vmatprep.subr.bf16.mxu0 0
    %2746 = vmatpush1.bf16.msra.mxu0 0
    %2747 = vmatprep.subr.bf16.mxu0 0
    %2748 = vmatpush1.bf16.msra.mxu0 0
    %2749 = vmatprep.subr.bf16.mxu0 0
    %2750 = vmatpush1.bf16.msra.mxu0 0
    %2751 = vmatprep.subr.bf16.mxu0 0
    %2752 = vmatpush1.bf16.msra.mxu0 0
    %2753 = vmatprep.subr.bf16.mxu0 0
    %2754 = vmatpush1.bf16.msra.mxu0 0
    %2755 = vmatprep.subr.bf16.mxu0 0
    %2756 = vmatpush1.bf16.msra.mxu0 %v2739
    %2757 = vmatprep.subr.bf16.mxu0 0
    %2758 = vmatpush2.bf16.msra.mxu0 0
    %2759 = vmatprep.subr.bf16.mxu0 0
    %2760 = vmatpush2.bf16.msra.mxu0 0
    %2761 = vmatprep.subr.bf16.mxu0 0
    %2762 = vmatpush2.bf16.msra.mxu0 0
    %2763 = vmatprep.subr.bf16.mxu0 0
    %2764 = vmatpush2.bf16.msra.mxu0 0
    %2765 = vmatprep.subr.bf16.mxu0 0
    %2766 = vmatpush2.bf16.msra.mxu0 0
    %2767 = vmatprep.subr.bf16.mxu0 0
    %2768 = vmatpush2.bf16.msra.mxu0 0
    %2769 = vmatprep.subr.bf16.mxu0 0
    %2770 = vmatpush2.bf16.msra.mxu0 0
    %2771 = vmatprep.subr.bf16.mxu0 0
    %2772 = vmatpush2.bf16.msra.mxu0 0
    %2773 = vmatprep.mubr.bf16.mxu0 0
    %2774 = vmatmul.mubr.bf16.gmra.mxu0 %v2736
    %v2775 = vpop.f32.mrf.mxu0
    %v2776 = vadd.f32 0.0, %v2775
    %v2777 = vpop.f32.mrf.mxu0
    %v2778 = vpop.f32.mrf.mxu0
    %v2779 = vpop.f32.mrf.mxu0
    %2780 = vdwg.mxu0
    %v2789 = vunpack.c.l.b16 %v1609
    %v2790 = vunpack.c.l.b16 %v1610
    %v2791 = vunpack.c.l.b16 %v1611
    %v2792 = vunpack.c.l.b16 %v1612
    %v2793 = vunpack.c.l.b16 %v1613
    %v2794 = vunpack.c.l.b16 %v1614
    %v2795 = vunpack.c.l.b16 %v1615
    %v2796 = vunpack.c.l.b16 %v1616
    %v2797 = vrot.slane %v2790, 7
    %v2798 = vsel %vm1674, %v2797, %v2789
    %v2799 = vrot.slane %v2791, 6
    %v2800 = vsel %vm1677, %v2799, %v2798
    %v2801 = vrot.slane %v2792, 5
    %v2802 = vsel %vm1680, %v2801, %v2800
    %v2803 = vrot.slane %v2793, 4
    %v2804 = vsel %vm1683, %v2803, %v2802
    %v2805 = vrot.slane %v2794, 3
    %v2806 = vsel %vm1686, %v2805, %v2804
    %v2807 = vrot.slane %v2795, 2
    %v2808 = vsel %vm1689, %v2807, %v2806
    %v2809 = vrot.slane %v2796, 1
    %v2810 = vsel %vm1692, %v2809, %v2808
    %v2811 = vpack.c.b16 %v2810, %v2810
    %v2813 = vsel %vm2529, %v2620, 0
    %v2816 = vsel %vm2660, %v2811, 0
    %2818 = vmatprep.subr.bf16.mxu0 0
    %2819 = vmatpush1.bf16.msra.mxu0 0
    %2820 = vmatprep.subr.bf16.mxu0 0
    %2821 = vmatpush1.bf16.msra.mxu0 0
    %2822 = vmatprep.subr.bf16.mxu0 0
    %2823 = vmatpush1.bf16.msra.mxu0 0
    %2824 = vmatprep.subr.bf16.mxu0 0
    %2825 = vmatpush1.bf16.msra.mxu0 0
    %2826 = vmatprep.subr.bf16.mxu0 0
    %2827 = vmatpush1.bf16.msra.mxu0 0
    %2828 = vmatprep.subr.bf16.mxu0 0
    %2829 = vmatpush1.bf16.msra.mxu0 0
    %2830 = vmatprep.subr.bf16.mxu0 0
    %2831 = vmatpush1.bf16.msra.mxu0 0
    %2832 = vmatprep.subr.bf16.mxu0 0
    %2833 = vmatpush1.bf16.msra.mxu0 %v2816
    %2834 = vmatprep.subr.bf16.mxu0 0
    %2835 = vmatpush2.bf16.msra.mxu0 0
    %2836 = vmatprep.subr.bf16.mxu0 0
    %2837 = vmatpush2.bf16.msra.mxu0 0
    %2838 = vmatprep.subr.bf16.mxu0 0
    %2839 = vmatpush2.bf16.msra.mxu0 0
    %2840 = vmatprep.subr.bf16.mxu0 0
    %2841 = vmatpush2.bf16.msra.mxu0 0
    %2842 = vmatprep.subr.bf16.mxu0 0
    %2843 = vmatpush2.bf16.msra.mxu0 0
    %2844 = vmatprep.subr.bf16.mxu0 0
    %2845 = vmatpush2.bf16.msra.mxu0 0
    %2846 = vmatprep.subr.bf16.mxu0 0
    %2847 = vmatpush2.bf16.msra.mxu0 0
    %2848 = vmatprep.subr.bf16.mxu0 0
    %2849 = vmatpush2.bf16.msra.mxu0 0
    %2850 = vmatprep.mubr.bf16.mxu0 0
    %2851 = vmatmul.mubr.bf16.gmra.mxu0 %v2813
    %v2852 = vpop.f32.mrf.mxu0
    %v2853 = vadd.f32 0.0, %v2852
    %v2854 = vpop.f32.mrf.mxu0
    %v2855 = vpop.f32.mrf.mxu0
    %v2856 = vpop.f32.mrf.mxu0
    %2857 = vdwg.mxu0
    %v2866 = vunpack.c.l.b16 %v1617
    %v2867 = vunpack.c.l.b16 %v1618
    %v2868 = vunpack.c.l.b16 %v1619
    %v2869 = vunpack.c.l.b16 %v1620
    %v2870 = vunpack.c.l.b16 %v1621
    %v2871 = vunpack.c.l.b16 %v1622
    %v2872 = vunpack.c.l.b16 %v1623
    %v2873 = vunpack.c.l.b16 %v1624
    %v2874 = vrot.slane %v2867, 7
    %v2875 = vsel %vm1674, %v2874, %v2866
    %v2876 = vrot.slane %v2868, 6
    %v2877 = vsel %vm1677, %v2876, %v2875
    %v2878 = vrot.slane %v2869, 5
    %v2879 = vsel %vm1680, %v2878, %v2877
    %v2880 = vrot.slane %v2870, 4
    %v2881 = vsel %vm1683, %v2880, %v2879
    %v2882 = vrot.slane %v2871, 3
    %v2883 = vsel %vm1686, %v2882, %v2881
    %v2884 = vrot.slane %v2872, 2
    %v2885 = vsel %vm1689, %v2884, %v2883
    %v2886 = vrot.slane %v2873, 1
    %v2887 = vsel %vm1692, %v2886, %v2885
    %v2888 = vpack.c.b16 %v2887, %v2887
    %v2890 = vsel %vm2529, %v2621, 0
    %v2893 = vsel %vm2660, %v2888, 0
    %2895 = vmatprep.subr.bf16.mxu0 0
    %2896 = vmatpush1.bf16.msra.mxu0 0
    %2897 = vmatprep.subr.bf16.mxu0 0
    %2898 = vmatpush1.bf16.msra.mxu0 0
    %2899 = vmatprep.subr.bf16.mxu0 0
    %2900 = vmatpush1.bf16.msra.mxu0 0
    %2901 = vmatprep.subr.bf16.mxu0 0
    %2902 = vmatpush1.bf16.msra.mxu0 0
    %2903 = vmatprep.subr.bf16.mxu0 0
    %2904 = vmatpush1.bf16.msra.mxu0 0
    %2905 = vmatprep.subr.bf16.mxu0 0
    %2906 = vmatpush1.bf16.msra.mxu0 0
    %2907 = vmatprep.subr.bf16.mxu0 0
    %2908 = vmatpush1.bf16.msra.mxu0 0
    %2909 = vmatprep.subr.bf16.mxu0 0
    %2910 = vmatpush1.bf16.msra.mxu0 %v2893
    %2911 = vmatprep.subr.bf16.mxu0 0
    %2912 = vmatpush2.bf16.msra.mxu0 0
    %2913 = vmatprep.subr.bf16.mxu0 0
    %2914 = vmatpush2.bf16.msra.mxu0 0
    %2915 = vmatprep.subr.bf16.mxu0 0
    %2916 = vmatpush2.bf16.msra.mxu0 0
    %2917 = vmatprep.subr.bf16.mxu0 0
    %2918 = vmatpush2.bf16.msra.mxu0 0
    %2919 = vmatprep.subr.bf16.mxu0 0
    %2920 = vmatpush2.bf16.msra.mxu0 0
    %2921 = vmatprep.subr.bf16.mxu0 0
    %2922 = vmatpush2.bf16.msra.mxu0 0
    %2923 = vmatprep.subr.bf16.mxu0 0
    %2924 = vmatpush2.bf16.msra.mxu0 0
    %2925 = vmatprep.subr.bf16.mxu0 0
    %2926 = vmatpush2.bf16.msra.mxu0 0
    %2927 = vmatprep.mubr.bf16.mxu0 0
    %2928 = vmatmul.mubr.bf16.gmra.mxu0 %v2890
    %v2929 = vpop.f32.mrf.mxu0
    %v2930 = vadd.f32 0.0, %v2929
    %v2931 = vpop.f32.mrf.mxu0
    %v2932 = vpop.f32.mrf.mxu0
    %v2933 = vpop.f32.mrf.mxu0
    %2934 = vdwg.mxu0
    %v2943 = vunpack.c.l.b16 %v1625
    %v2944 = vunpack.c.l.b16 %v1626
    %v2945 = vunpack.c.l.b16 %v1627
    %v2946 = vunpack.c.l.b16 %v1628
    %v2947 = vunpack.c.l.b16 %v1629
    %v2948 = vunpack.c.l.b16 %v1630
    %v2949 = vunpack.c.l.b16 %v1631
    %v2950 = vunpack.c.l.b16 %v1632
    %v2951 = vrot.slane %v2944, 7
    %v2952 = vsel %vm1674, %v2951, %v2943
    %v2953 = vrot.slane %v2945, 6
    %v2954 = vsel %vm1677, %v2953, %v2952
    %v2955 = vrot.slane %v2946, 5
    %v2956 = vsel %vm1680, %v2955, %v2954
    %v2957 = vrot.slane %v2947, 4
    %v2958 = vsel %vm1683, %v2957, %v2956
    %v2959 = vrot.slane %v2948, 3
    %v2960 = vsel %vm1686, %v2959, %v2958
    %v2961 = vrot.slane %v2949, 2
    %v2962 = vsel %vm1689, %v2961, %v2960
    %v2963 = vrot.slane %v2950, 1
    %v2964 = vsel %vm1692, %v2963, %v2962
    %v2965 = vpack.c.b16 %v2964, %v2964
    %v2967 = vsel %vm2529, %v2622, 0
    %v2970 = vsel %vm2660, %v2965, 0
    %2972 = vmatprep.subr.bf16.mxu0 0
    %2973 = vmatpush1.bf16.msra.mxu0 0
    %2974 = vmatprep.subr.bf16.mxu0 0
    %2975 = vmatpush1.bf16.msra.mxu0 0
    %2976 = vmatprep.subr.bf16.mxu0 0
    %2977 = vmatpush1.bf16.msra.mxu0 0
    %2978 = vmatprep.subr.bf16.mxu0 0
    %2979 = vmatpush1.bf16.msra.mxu0 0
    %2980 = vmatprep.subr.bf16.mxu0 0
    %2981 = vmatpush1.bf16.msra.mxu0 0
    %2982 = vmatprep.subr.bf16.mxu0 0
    %2983 = vmatpush1.bf16.msra.mxu0 0
    %2984 = vmatprep.subr.bf16.mxu0 0
    %2985 = vmatpush1.bf16.msra.mxu0 0
    %2986 = vmatprep.subr.bf16.mxu0 0
    %2987 = vmatpush1.bf16.msra.mxu0 %v2970
    %2988 = vmatprep.subr.bf16.mxu0 0
    %2989 = vmatpush2.bf16.msra.mxu0 0
    %2990 = vmatprep.subr.bf16.mxu0 0
    %2991 = vmatpush2.bf16.msra.mxu0 0
    %2992 = vmatprep.subr.bf16.mxu0 0
    %2993 = vmatpush2.bf16.msra.mxu0 0
    %2994 = vmatprep.subr.bf16.mxu0 0
    %2995 = vmatpush2.bf16.msra.mxu0 0
    %2996 = vmatprep.subr.bf16.mxu0 0
    %2997 = vmatpush2.bf16.msra.mxu0 0
    %2998 = vmatprep.subr.bf16.mxu0 0
    %2999 = vmatpush2.bf16.msra.mxu0 0
    %3000 = vmatprep.subr.bf16.mxu0 0
    %3001 = vmatpush2.bf16.msra.mxu0 0
    %3002 = vmatprep.subr.bf16.mxu0 0
    %3003 = vmatpush2.bf16.msra.mxu0 0
    %3004 = vmatprep.mubr.bf16.mxu0 0
    %3005 = vmatmul.mubr.bf16.gmra.mxu0 %v2967
    %v3006 = vpop.f32.mrf.mxu0
    %v3007 = vadd.f32 0.0, %v3006
    %v3008 = vpop.f32.mrf.mxu0
    %v3009 = vpop.f32.mrf.mxu0
    %v3010 = vpop.f32.mrf.mxu0
    %3011 = vdwg.mxu0
    %v3020 = vunpack.c.l.b16 %v1633
    %v3021 = vunpack.c.l.b16 %v1634
    %v3022 = vunpack.c.l.b16 %v1635
    %v3023 = vunpack.c.l.b16 %v1636
    %v3024 = vunpack.c.l.b16 %v1637
    %v3025 = vunpack.c.l.b16 %v1638
    %v3026 = vunpack.c.l.b16 %v1639
    %v3027 = vunpack.c.l.b16 %v1640
    %v3028 = vrot.slane %v3021, 7
    %v3029 = vsel %vm1674, %v3028, %v3020
    %v3030 = vrot.slane %v3022, 6
    %v3031 = vsel %vm1677, %v3030, %v3029
    %v3032 = vrot.slane %v3023, 5
    %v3033 = vsel %vm1680, %v3032, %v3031
    %v3034 = vrot.slane %v3024, 4
    %v3035 = vsel %vm1683, %v3034, %v3033
    %v3036 = vrot.slane %v3025, 3
    %v3037 = vsel %vm1686, %v3036, %v3035
    %v3038 = vrot.slane %v3026, 2
    %v3039 = vsel %vm1689, %v3038, %v3037
    %v3040 = vrot.slane %v3027, 1
    %v3041 = vsel %vm1692, %v3040, %v3039
    %v3042 = vpack.c.b16 %v3041, %v3041
    %v3044 = vsel %vm2529, %v2623, 0
    %v3047 = vsel %vm2660, %v3042, 0
    %3049 = vmatprep.subr.bf16.mxu0 0
    %3050 = vmatpush1.bf16.msra.mxu0 0
    %3051 = vmatprep.subr.bf16.mxu0 0
    %3052 = vmatpush1.bf16.msra.mxu0 0
    %3053 = vmatprep.subr.bf16.mxu0 0
    %3054 = vmatpush1.bf16.msra.mxu0 0
    %3055 = vmatprep.subr.bf16.mxu0 0
    %3056 = vmatpush1.bf16.msra.mxu0 0
    %3057 = vmatprep.subr.bf16.mxu0 0
    %3058 = vmatpush1.bf16.msra.mxu0 0
    %3059 = vmatprep.subr.bf16.mxu0 0
    %3060 = vmatpush1.bf16.msra.mxu0 0
    %3061 = vmatprep.subr.bf16.mxu0 0
    %3062 = vmatpush1.bf16.msra.mxu0 0
    %3063 = vmatprep.subr.bf16.mxu0 0
    %3064 = vmatpush1.bf16.msra.mxu0 %v3047
    %3065 = vmatprep.subr.bf16.mxu0 0
    %3066 = vmatpush2.bf16.msra.mxu0 0
    %3067 = vmatprep.subr.bf16.mxu0 0
    %3068 = vmatpush2.bf16.msra.mxu0 0
    %3069 = vmatprep.subr.bf16.mxu0 0
    %3070 = vmatpush2.bf16.msra.mxu0 0
    %3071 = vmatprep.subr.bf16.mxu0 0
    %3072 = vmatpush2.bf16.msra.mxu0 0
    %3073 = vmatprep.subr.bf16.mxu0 0
    %3074 = vmatpush2.bf16.msra.mxu0 0
    %3075 = vmatprep.subr.bf16.mxu0 0
    %3076 = vmatpush2.bf16.msra.mxu0 0
    %3077 = vmatprep.subr.bf16.mxu0 0
    %3078 = vmatpush2.bf16.msra.mxu0 0
    %3079 = vmatprep.subr.bf16.mxu0 0
    %3080 = vmatpush2.bf16.msra.mxu0 0
    %3081 = vmatprep.mubr.bf16.mxu0 0
    %3082 = vmatmul.mubr.bf16.gmra.mxu0 %v3044
    %v3083 = vpop.f32.mrf.mxu0
    %v3084 = vadd.f32 0.0, %v3083
    %v3085 = vpop.f32.mrf.mxu0
    %v3086 = vpop.f32.mrf.mxu0
    %v3087 = vpop.f32.mrf.mxu0
    %3088 = vdwg.mxu0
    %v3097 = vunpack.c.l.b16 %v1641
    %v3098 = vunpack.c.l.b16 %v1642
    %v3099 = vunpack.c.l.b16 %v1643
    %v3100 = vunpack.c.l.b16 %v1644
    %v3101 = vunpack.c.l.b16 %v1645
    %v3102 = vunpack.c.l.b16 %v1646
    %v3103 = vunpack.c.l.b16 %v1647
    %v3104 = vunpack.c.l.b16 %v1648
    %v3105 = vrot.slane %v3098, 7
    %v3106 = vsel %vm1674, %v3105, %v3097
    %v3107 = vrot.slane %v3099, 6
    %v3108 = vsel %vm1677, %v3107, %v3106
    %v3109 = vrot.slane %v3100, 5
    %v3110 = vsel %vm1680, %v3109, %v3108
    %v3111 = vrot.slane %v3101, 4
    %v3112 = vsel %vm1683, %v3111, %v3110
    %v3113 = vrot.slane %v3102, 3
    %v3114 = vsel %vm1686, %v3113, %v3112
    %v3115 = vrot.slane %v3103, 2
    %v3116 = vsel %vm1689, %v3115, %v3114
    %v3117 = vrot.slane %v3104, 1
    %v3118 = vsel %vm1692, %v3117, %v3116
    %v3119 = vpack.c.b16 %v3118, %v3118
    %v3121 = vsel %vm2529, %v2624, 0
    %v3124 = vsel %vm2660, %v3119, 0
    %3126 = vmatprep.subr.bf16.mxu0 0
    %3127 = vmatpush1.bf16.msra.mxu0 0
    %3128 = vmatprep.subr.bf16.mxu0 0
    %3129 = vmatpush1.bf16.msra.mxu0 0
    %3130 = vmatprep.subr.bf16.mxu0 0
    %3131 = vmatpush1.bf16.msra.mxu0 0
    %3132 = vmatprep.subr.bf16.mxu0 0
    %3133 = vmatpush1.bf16.msra.mxu0 0
    %3134 = vmatprep.subr.bf16.mxu0 0
    %3135 = vmatpush1.bf16.msra.mxu0 0
    %3136 = vmatprep.subr.bf16.mxu0 0
    %3137 = vmatpush1.bf16.msra.mxu0 0
    %3138 = vmatprep.subr.bf16.mxu0 0
    %3139 = vmatpush1.bf16.msra.mxu0 0
    %3140 = vmatprep.subr.bf16.mxu0 0
    %3141 = vmatpush1.bf16.msra.mxu0 %v3124
    %3142 = vmatprep.subr.bf16.mxu0 0
    %3143 = vmatpush2.bf16.msra.mxu0 0
    %3144 = vmatprep.subr.bf16.mxu0 0
    %3145 = vmatpush2.bf16.msra.mxu0 0
    %3146 = vmatprep.subr.bf16.mxu0 0
    %3147 = vmatpush2.bf16.msra.mxu0 0
    %3148 = vmatprep.subr.bf16.mxu0 0
    %3149 = vmatpush2.bf16.msra.mxu0 0
    %3150 = vmatprep.subr.bf16.mxu0 0
    %3151 = vmatpush2.bf16.msra.mxu0 0
    %3152 = vmatprep.subr.bf16.mxu0 0
    %3153 = vmatpush2.bf16.msra.mxu0 0
    %3154 = vmatprep.subr.bf16.mxu0 0
    %3155 = vmatpush2.bf16.msra.mxu0 0
    %3156 = vmatprep.subr.bf16.mxu0 0
    %3157 = vmatpush2.bf16.msra.mxu0 0
    %3158 = vmatprep.mubr.bf16.mxu0 0
    %3159 = vmatmul.mubr.bf16.gmra.mxu0 %v3121
    %v3160 = vpop.f32.mrf.mxu0
    %v3161 = vadd.f32 0.0, %v3160
    %v3162 = vpop.f32.mrf.mxu0
    %v3163 = vpop.f32.mrf.mxu0
    %v3164 = vpop.f32.mrf.mxu0
    %3165 = vdwg.mxu0
    %v3174 = vunpack.c.l.b16 %v1649
    %v3175 = vunpack.c.l.b16 %v1650
    %v3176 = vunpack.c.l.b16 %v1651
    %v3177 = vunpack.c.l.b16 %v1652
    %v3178 = vunpack.c.l.b16 %v1653
    %v3179 = vunpack.c.l.b16 %v1654
    %v3180 = vunpack.c.l.b16 %v1655
    %v3181 = vunpack.c.l.b16 %v1656
    %v3182 = vrot.slane %v3175, 7
    %v3183 = vsel %vm1674, %v3182, %v3174
    %v3184 = vrot.slane %v3176, 6
    %v3185 = vsel %vm1677, %v3184, %v3183
    %v3186 = vrot.slane %v3177, 5
    %v3187 = vsel %vm1680, %v3186, %v3185
    %v3188 = vrot.slane %v3178, 4
    %v3189 = vsel %vm1683, %v3188, %v3187
    %v3190 = vrot.slane %v3179, 3
    %v3191 = vsel %vm1686, %v3190, %v3189
    %v3192 = vrot.slane %v3180, 2
    %v3193 = vsel %vm1689, %v3192, %v3191
    %v3194 = vrot.slane %v3181, 1
    %v3195 = vsel %vm1692, %v3194, %v3193
    %v3196 = vpack.c.b16 %v3195, %v3195
    %v3198 = vsel %vm2529, %v2625, 0
    %v3201 = vsel %vm2660, %v3196, 0
    %3203 = vmatprep.subr.bf16.mxu0 0
    %3204 = vmatpush1.bf16.msra.mxu0 0
    %3205 = vmatprep.subr.bf16.mxu0 0
    %3206 = vmatpush1.bf16.msra.mxu0 0
    %3207 = vmatprep.subr.bf16.mxu0 0
    %3208 = vmatpush1.bf16.msra.mxu0 0
    %3209 = vmatprep.subr.bf16.mxu0 0
    %3210 = vmatpush1.bf16.msra.mxu0 0
    %3211 = vmatprep.subr.bf16.mxu0 0
    %3212 = vmatpush1.bf16.msra.mxu0 0
    %3213 = vmatprep.subr.bf16.mxu0 0
    %3214 = vmatpush1.bf16.msra.mxu0 0
    %3215 = vmatprep.subr.bf16.mxu0 0
    %3216 = vmatpush1.bf16.msra.mxu0 0
    %3217 = vmatprep.subr.bf16.mxu0 0
    %3218 = vmatpush1.bf16.msra.mxu0 %v3201
    %3219 = vmatprep.subr.bf16.mxu0 0
    %3220 = vmatpush2.bf16.msra.mxu0 0
    %3221 = vmatprep.subr.bf16.mxu0 0
    %3222 = vmatpush2.bf16.msra.mxu0 0
    %3223 = vmatprep.subr.bf16.mxu0 0
    %3224 = vmatpush2.bf16.msra.mxu0 0
    %3225 = vmatprep.subr.bf16.mxu0 0
    %3226 = vmatpush2.bf16.msra.mxu0 0
    %3227 = vmatprep.subr.bf16.mxu0 0
    %3228 = vmatpush2.bf16.msra.mxu0 0
    %3229 = vmatprep.subr.bf16.mxu0 0
    %3230 = vmatpush2.bf16.msra.mxu0 0
    %3231 = vmatprep.subr.bf16.mxu0 0
    %3232 = vmatpush2.bf16.msra.mxu0 0
    %3233 = vmatprep.subr.bf16.mxu0 0
    %3234 = vmatpush2.bf16.msra.mxu0 0
    %3235 = vmatprep.mubr.bf16.mxu0 0
    %3236 = vmatmul.mubr.bf16.gmra.mxu0 %v3198
    %v3237 = vpop.f32.mrf.mxu0
    %v3238 = vadd.f32 0.0, %v3237
    %v3239 = vpop.f32.mrf.mxu0
    %v3240 = vpop.f32.mrf.mxu0
    %v3241 = vpop.f32.mrf.mxu0
    %3242 = vdwg.mxu0
    %3244 = vrot.lane.b32.xlu0 %v2776, 32
    %v3245 = vpop.permute.xlu0 %3244
    %3248 = vrot.lane.b32.xlu0 %v2853, 64
    %v3249 = vpop.permute.xlu0 %3248
    %3252 = vrot.lane.b32.xlu0 %v2930, 96
    %v3253 = vpop.permute.xlu0 %3252
    %v3255 = vsel %vm1726, %v2699, %v3245
    %vm3256 = vcmask 523264
    %v3257 = vsel %vm3256, %v3255, %v3249
    %vm3258 = vcmask 785408
    %v3259 = vsel %vm3258, %v3257, %v3253
    %3261 = vrot.lane.b32.xlu0 %v3084, 32
    %v3262 = vpop.permute.xlu0 %3261
    %3265 = vrot.lane.b32.xlu0 %v3161, 64
    %v3266 = vpop.permute.xlu0 %3265
    %3269 = vrot.lane.b32.xlu0 %v3238, 96
    %v3270 = vpop.permute.xlu0 %3269
    %v3272 = vsel %vm1726, %v3007, %v3262
    %v3273 = vsel %vm3256, %v3272, %v3266
    %v3274 = vsel %vm3258, %v3273, %v3270
    %v3276 = vcombine.high %v3259, %v3259
    %v3278 = vunpack.c.l.s4 1966171168
    %v3279 = vunpack.c.0.s8 %v3278
    %v3280 = vlaneseq
    %v3281 = vshrl.u32 %v3280, 7
    %v3282 = vsub.s32 %v3279, %v3281
    %v3283 = vrot.slane %v3259, %v3282
    %v3285 = vunpack.c.l.s4 1966171168
    %v3286 = vunpack.c.0.s8 %v3285
    %v3287 = vlaneseq
    %v3288 = vshrl.u32 %v3287, 7
    %v3289 = vsub.s32 %v3286, %v3288
    %v3290 = vrot.slane %v3276, %v3289
    %v3291 = vcombine.high %v3283, %v3283
    %v3292 = vcombine.high %v3290, %v3290
    %v3294 = vunpack.c.l.s4 1966171168
    %v3295 = vunpack.c.0.s8 %v3294
    %v3296 = vlaneseq
    %v3297 = vshrl.u32 %v3296, 7
    %v3298 = vsub.s32 %v3295, %v3297
    %v3299 = vrot.slane %v3283, %v3298
    %v3301 = vunpack.c.l.s4 1966171168
    %v3302 = vunpack.c.0.s8 %v3301
    %v3303 = vlaneseq
    %v3304 = vshrl.u32 %v3303, 7
    %v3305 = vsub.s32 %v3302, %v3304
    %v3306 = vrot.slane %v3290, %v3305
    %v3308 = vunpack.c.l.s4 1966171168
    %v3309 = vunpack.c.0.s8 %v3308
    %v3310 = vlaneseq
    %v3311 = vshrl.u32 %v3310, 7
    %v3312 = vsub.s32 %v3309, %v3311
    %v3313 = vrot.slane %v3291, %v3312
    %v3315 = vunpack.c.l.s4 1966171168
    %v3316 = vunpack.c.0.s8 %v3315
    %v3317 = vlaneseq
    %v3318 = vshrl.u32 %v3317, 7
    %v3319 = vsub.s32 %v3316, %v3318
    %v3320 = vrot.slane %v3292, %v3319
    %v3321 = vcombine.high %v3299, %v3299
    %v3322 = vcombine.high %v3306, %v3306
    %v3323 = vcombine.high %v3313, %v3313
    %v3324 = vcombine.high %v3320, %v3320
    %v3334 = vcombine.high %v3274, %v3274
    %v3336 = vunpack.c.l.s4 1966171168
    %v3337 = vunpack.c.0.s8 %v3336
    %v3338 = vlaneseq
    %v3339 = vshrl.u32 %v3338, 7
    %v3340 = vsub.s32 %v3337, %v3339
    %v3341 = vrot.slane %v3274, %v3340
    %v3343 = vunpack.c.l.s4 1966171168
    %v3344 = vunpack.c.0.s8 %v3343
    %v3345 = vlaneseq
    %v3346 = vshrl.u32 %v3345, 7
    %v3347 = vsub.s32 %v3344, %v3346
    %v3348 = vrot.slane %v3334, %v3347
    %v3349 = vcombine.high %v3341, %v3341
    %v3350 = vcombine.high %v3348, %v3348
    %v3352 = vunpack.c.l.s4 1966171168
    %v3353 = vunpack.c.0.s8 %v3352
    %v3354 = vlaneseq
    %v3355 = vshrl.u32 %v3354, 7
    %v3356 = vsub.s32 %v3353, %v3355
    %v3357 = vrot.slane %v3341, %v3356
    %v3359 = vunpack.c.l.s4 1966171168
    %v3360 = vunpack.c.0.s8 %v3359
    %v3361 = vlaneseq
    %v3362 = vshrl.u32 %v3361, 7
    %v3363 = vsub.s32 %v3360, %v3362
    %v3364 = vrot.slane %v3348, %v3363
    %v3366 = vunpack.c.l.s4 1966171168
    %v3367 = vunpack.c.0.s8 %v3366
    %v3368 = vlaneseq
    %v3369 = vshrl.u32 %v3368, 7
    %v3370 = vsub.s32 %v3367, %v3369
    %v3371 = vrot.slane %v3349, %v3370
    %v3373 = vunpack.c.l.s4 1966171168
    %v3374 = vunpack.c.0.s8 %v3373
    %v3375 = vlaneseq
    %v3376 = vshrl.u32 %v3375, 7
    %v3377 = vsub.s32 %v3374, %v3376
    %v3378 = vrot.slane %v3350, %v3377
    %v3379 = vcombine.high %v3357, %v3357
    %v3380 = vcombine.high %v3364, %v3364
    %v3381 = vcombine.high %v3371, %v3371
    %v3382 = vcombine.high %v3378, %v3378
    %v3383 = vlaneseq
    %v3384 = vshrl.u32 %v3383, 7
    %v3385 = vsub.s32 0, %v3384
    %v3386 = vrot.slane %v3357, %v3385
    %v3387 = vlaneseq
    %v3388 = vshrl.u32 %v3387, 7
    %v3389 = vsub.s32 0, %v3388
    %v3390 = vrot.slane %v3371, %v3389
    %v3391 = vlaneseq
    %v3392 = vshrl.u32 %v3391, 7
    %v3393 = vsub.s32 0, %v3392
    %v3394 = vrot.slane %v3379, %v3393
    %v3395 = vlaneseq
    %v3396 = vshrl.u32 %v3395, 7
    %v3397 = vsub.s32 0, %v3396
    %v3398 = vrot.slane %v3381, %v3397
    %v3399 = vlaneseq
    %v3400 = vshrl.u32 %v3399, 7
    %v3401 = vsub.s32 0, %v3400
    %v3402 = vrot.slane %v3364, %v3401
    %v3403 = vlaneseq
    %v3404 = vshrl.u32 %v3403, 7
    %v3405 = vsub.s32 0, %v3404
    %v3406 = vrot.slane %v3378, %v3405
    %v3407 = vlaneseq
    %v3408 = vshrl.u32 %v3407, 7
    %v3409 = vsub.s32 0, %v3408
    %v3410 = vrot.slane %v3380, %v3409
    %v3411 = vlaneseq
    %v3412 = vshrl.u32 %v3411, 7
    %v3413 = vsub.s32 0, %v3412
    %v3414 = vrot.slane %v3382, %v3413
    %vm3423 = vcmask 1040384
    %v3424 = vsel %vm3423, %v3299, %v3386
    %v3425 = vsel %vm3423, %v3313, %v3390
    %v3426 = vsel %vm3423, %v3321, %v3394
    %v3427 = vsel %vm3423, %v3323, %v3398
    %v3428 = vsel %vm3423, %v3306, %v3402
    %v3429 = vsel %vm3423, %v3320, %v3406
    %v3430 = vsel %vm3423, %v3322, %v3410
    %v3431 = vsel %vm3423, %v3324, %v3414
    %v3440 = vcombine.low %v3424, %v3425
    %v3441 = vcombine.low %v3426, %v3427
    %v3443 = vunpack.c.l.s4 1983009808
    %v3444 = vunpack.c.0.s8 %v3443
    %v3445 = vlaneseq
    %v3446 = vshrl.u32 %v3445, 7
    %v3447 = vsub.s32 %v3444, %v3446
    %v3448 = vrot.slane %v3440, %v3447
    %v3450 = vunpack.c.l.s4 1983009808
    %v3451 = vunpack.c.0.s8 %v3450
    %v3452 = vlaneseq
    %v3453 = vshrl.u32 %v3452, 7
    %v3454 = vsub.s32 %v3451, %v3453
    %v3455 = vrot.slane %v3441, %v3454
    %v3456 = vcombine.low %v3448, %v3455
    %v3457 = vcombine.low %v3428, %v3429
    %v3458 = vcombine.low %v3430, %v3431
    %v3460 = vunpack.c.l.s4 1983009808
    %v3461 = vunpack.c.0.s8 %v3460
    %v3462 = vlaneseq
    %v3463 = vshrl.u32 %v3462, 7
    %v3464 = vsub.s32 %v3461, %v3463
    %v3465 = vrot.slane %v3457, %v3464
    %v3467 = vunpack.c.l.s4 1983009808
    %v3468 = vunpack.c.0.s8 %v3467
    %v3469 = vlaneseq
    %v3470 = vshrl.u32 %v3469, 7
    %v3471 = vsub.s32 %v3468, %v3470
    %v3472 = vrot.slane %v3458, %v3471
    %v3473 = vcombine.low %v3465, %v3472
    %v3476 = vpack.c.bf16 %v3473, %v3456
    %v3477 = vld [vmem:[#allocation10] sm:$0xf]
    %v3478 = vld [vmem:[#allocation10 + $0x4] sm:$0xf]
    %v3479 = vld [vmem:[#allocation10 + $0x8] sm:$0xf]
    %v3480 = vld [vmem:[#allocation10 + $0xc] sm:$0xf]
    %v3481 = vld [vmem:[#allocation10 + $0x10] sm:$0xf]
    %v3482 = vld [vmem:[#allocation10 + $0x14] sm:$0xf]
    %v3483 = vld [vmem:[#allocation10 + $0x18] sm:$0xf]
    %v3484 = vld [vmem:[#allocation10 + $0x1c] sm:$0xf]
    %v3485 = vld [vmem:[#allocation10 + $0x20] sm:$0xf]
    %v3486 = vld [vmem:[#allocation10 + $0x24] sm:$0xf]
    %v3487 = vld [vmem:[#allocation10 + $0x28] sm:$0xf]
    %v3488 = vld [vmem:[#allocation10 + $0x2c] sm:$0xf]
    %v3489 = vld [vmem:[#allocation10 + $0x30] sm:$0xf]
    %v3490 = vld [vmem:[#allocation10 + $0x34] sm:$0xf]
    %v3491 = vld [vmem:[#allocation10 + $0x38] sm:$0xf]
    %v3492 = vld [vmem:[#allocation10 + $0x3c] sm:$0xf]
    %v3493 = vld [vmem:[%s6] sm:$0x1]
    %v3495 = vlaneseq
    %v3496 = vshrl.u32 %v3495, 7
    %v3497 = vsub.s32 0, %v3496
    %v3498 = vrot.slane %v3493, %v3497
    %v3516 = vunpack.c.l.b16 %v3477
    %v3517 = vunpack.c.l.b16 %v3478
    %v3518 = vunpack.c.l.b16 %v3479
    %v3519 = vunpack.c.l.b16 %v3480
    %v3520 = vunpack.c.l.b16 %v3481
    %v3521 = vunpack.c.l.b16 %v3482
    %v3522 = vunpack.c.l.b16 %v3483
    %v3523 = vunpack.c.l.b16 %v3484
    %v3524 = vunpack.c.l.b16 %v3485
    %v3525 = vunpack.c.l.b16 %v3486
    %v3526 = vunpack.c.l.b16 %v3487
    %v3527 = vunpack.c.l.b16 %v3488
    %v3528 = vunpack.c.l.b16 %v3489
    %v3529 = vunpack.c.l.b16 %v3490
    %v3530 = vunpack.c.l.b16 %v3491
    %v3531 = vunpack.c.l.b16 %v3492
    %v3532 = vpack.c.b16 %v3517, %v3516
    %v3533 = vpack.c.b16 %v3519, %v3518
    %v3534 = vpack.c.b16 %v3521, %v3520
    %v3535 = vpack.c.b16 %v3523, %v3522
    %v3536 = vpack.c.b16 %v3525, %v3524
    %v3537 = vpack.c.b16 %v3527, %v3526
    %v3538 = vpack.c.b16 %v3529, %v3528
    %v3539 = vpack.c.b16 %v3531, %v3530
    %3548 = vmatprep.subr.bf16.mxu0 0
    %3549 = vmatpush1.bf16.msra.mxu0 %v3539
    %3550 = vmatprep.subr.bf16.mxu0 0
    %3551 = vmatpush1.bf16.msra.mxu0 %v3538
    %3552 = vmatprep.subr.bf16.mxu0 0
    %3553 = vmatpush1.bf16.msra.mxu0 %v3537
    %3554 = vmatprep.subr.bf16.mxu0 0
    %3555 = vmatpush1.bf16.msra.mxu0 %v3536
    %3556 = vmatprep.subr.bf16.mxu0 0
    %3557 = vmatpush1.bf16.msra.mxu0 %v3535
    %3558 = vmatprep.subr.bf16.mxu0 0
    %3559 = vmatpush1.bf16.msra.mxu0 %v3534
    %3560 = vmatprep.subr.bf16.mxu0 0
    %3561 = vmatpush1.bf16.msra.mxu0 %v3533
    %3562 = vmatprep.subr.bf16.mxu0 0
    %3563 = vmatpush1.bf16.msra.mxu0 %v3532
    %3564 = vmatprep.subr.bf16.mxu0 0
    %3565 = vmatpush2.bf16.msra.mxu0 0
    %3566 = vmatprep.subr.bf16.mxu0 0
    %3567 = vmatpush2.bf16.msra.mxu0 0
    %3568 = vmatprep.subr.bf16.mxu0 0
    %3569 = vmatpush2.bf16.msra.mxu0 0
    %3570 = vmatprep.subr.bf16.mxu0 0
    %3571 = vmatpush2.bf16.msra.mxu0 0
    %3572 = vmatprep.subr.bf16.mxu0 0
    %3573 = vmatpush2.bf16.msra.mxu0 0
    %3574 = vmatprep.subr.bf16.mxu0 0
    %3575 = vmatpush2.bf16.msra.mxu0 0
    %3576 = vmatprep.subr.bf16.mxu0 0
    %3577 = vmatpush2.bf16.msra.mxu0 0
    %3578 = vmatprep.subr.bf16.mxu0 0
    %3579 = vmatpush2.bf16.msra.mxu0 0
    %3580 = vmatprep.mubr.bf16.mxu0 0
    %3581 = vmatmul.mubr.bf16.gmra.mxu0 %v3476
    %v3582 = vpop.f32.mrf.mxu0
    %v3583 = vadd.f32 %v3498, %v3582
    %v3584 = vpop.f32.mrf.mxu0
    %v3585 = vpop.f32.mrf.mxu0
    %v3586 = vadd.f32 %v3498, %v3585
    %v3587 = vpop.f32.mrf.mxu0
    %3588 = vdwg.mxu0
    %v3591 = vcombine.high %v3583, %v3583
    %v3593 = vunpack.c.l.s4 1983009808
    %v3594 = vunpack.c.0.s8 %v3593
    %v3595 = vlaneseq
    %v3596 = vshrl.u32 %v3595, 7
    %v3597 = vsub.s32 %v3594, %v3596
    %v3598 = vrot.slane %v3583, %v3597
    %v3600 = vunpack.c.l.s4 1983009808
    %v3601 = vunpack.c.0.s8 %v3600
    %v3602 = vlaneseq
    %v3603 = vshrl.u32 %v3602, 7
    %v3604 = vsub.s32 %v3601, %v3603
    %v3605 = vrot.slane %v3591, %v3604
    %v3606 = vcombine.high %v3598, %v3598
    %v3607 = vcombine.high %v3605, %v3605
    %v3608 = vcombine.high %v3586, %v3586
    %v3610 = vunpack.c.l.s4 1983009808
    %v3611 = vunpack.c.0.s8 %v3610
    %v3612 = vlaneseq
    %v3613 = vshrl.u32 %v3612, 7
    %v3614 = vsub.s32 %v3611, %v3613
    %v3615 = vrot.slane %v3586, %v3614
    %v3617 = vunpack.c.l.s4 1983009808
    %v3618 = vunpack.c.0.s8 %v3617
    %v3619 = vlaneseq
    %v3620 = vshrl.u32 %v3619, 7
    %v3621 = vsub.s32 %v3618, %v3620
    %v3622 = vrot.slane %v3608, %v3621
    %v3623 = vcombine.high %v3615, %v3615
    %v3624 = vcombine.high %v3622, %v3622
    %v3633 = vadd.f32 %v182, %v3598
    %v3634 = vadd.f32 %v183, %v3606
    %v3635 = vadd.f32 %v184, %v3605
    %v3636 = vadd.f32 %v185, %v3607
    %v3637 = vadd.f32 %v186, %v3615
    %v3638 = vadd.f32 %v187, %v3623
    %v3639 = vadd.f32 %v188, %v3622
    %v3640 = vadd.f32 %v189, %v3624
    %v3649 = vcombine.low %v3633, %v3634
    %v3650 = vcombine.low %v3635, %v3636
    %v3652 = vunpack.c.l.s4 1983009808
    %v3653 = vunpack.c.0.s8 %v3652
    %v3654 = vlaneseq
    %v3655 = vshrl.u32 %v3654, 7
    %v3656 = vsub.s32 %v3653, %v3655
    %v3657 = vrot.slane %v3649, %v3656
    %v3659 = vunpack.c.l.s4 1983009808
    %v3660 = vunpack.c.0.s8 %v3659
    %v3661 = vlaneseq
    %v3662 = vshrl.u32 %v3661, 7
    %v3663 = vsub.s32 %v3660, %v3662
    %v3664 = vrot.slane %v3650, %v3663
    %v3665 = vcombine.low %v3657, %v3664
    %v3666 = vcombine.low %v3637, %v3638
    %v3667 = vcombine.low %v3639, %v3640
    %v3669 = vunpack.c.l.s4 1983009808
    %v3670 = vunpack.c.0.s8 %v3669
    %v3671 = vlaneseq
    %v3672 = vshrl.u32 %v3671, 7
    %v3673 = vsub.s32 %v3670, %v3672
    %v3674 = vrot.slane %v3666, %v3673
    %v3676 = vunpack.c.l.s4 1983009808
    %v3677 = vunpack.c.0.s8 %v3676
    %v3678 = vlaneseq
    %v3679 = vshrl.u32 %v3678, 7
    %v3680 = vsub.s32 %v3677, %v3679
    %v3681 = vrot.slane %v3667, %v3680
    %v3682 = vcombine.low %v3674, %v3681
    %3685 = vadd.xlane.f32.xlu0 %v3665
    %v3686 = vpop.xlane.xlu0 %3685
    %3687 = vadd.xlane.f32.xlu0 %v3682
    %v3688 = vpop.xlane.xlu0 %3687
    %v3689 = vmul.f32 %v3686, %v238
    %v3690 = vmul.f32 %v3688, %v238
    %v3694 = vunpack.c.l.s4 269488144
    %v3695 = vunpack.c.0.s8 %v3694
    %v3696 = vlaneseq
    %v3697 = vshrl.u32 %v3696, 7
    %v3698 = vsub.s32 %v3695, %v3697
    %v3699 = vrot.slane %v3689, %v3698
    %v3701 = vunpack.c.l.s4 842150450
    %v3702 = vunpack.c.0.s8 %v3701
    %v3703 = vlaneseq
    %v3704 = vshrl.u32 %v3703, 7
    %v3705 = vsub.s32 %v3702, %v3704
    %v3706 = vrot.slane %v3689, %v3705
    %v3708 = vunpack.c.l.s4 1414812756
    %v3709 = vunpack.c.0.s8 %v3708
    %v3710 = vlaneseq
    %v3711 = vshrl.u32 %v3710, 7
    %v3712 = vsub.s32 %v3709, %v3711
    %v3713 = vrot.slane %v3689, %v3712
    %v3715 = vunpack.c.l.s4 1987475062
    %v3716 = vunpack.c.0.s8 %v3715
    %v3717 = vlaneseq
    %v3718 = vshrl.u32 %v3717, 7
    %v3719 = vsub.s32 %v3716, %v3718
    %v3720 = vrot.slane %v3689, %v3719
    %v3722 = vunpack.c.l.s4 269488144
    %v3723 = vunpack.c.0.s8 %v3722
    %v3724 = vlaneseq
    %v3725 = vshrl.u32 %v3724, 7
    %v3726 = vsub.s32 %v3723, %v3725
    %v3727 = vrot.slane %v3690, %v3726
    %v3729 = vunpack.c.l.s4 842150450
    %v3730 = vunpack.c.0.s8 %v3729
    %v3731 = vlaneseq
    %v3732 = vshrl.u32 %v3731, 7
    %v3733 = vsub.s32 %v3730, %v3732
    %v3734 = vrot.slane %v3690, %v3733
    %v3736 = vunpack.c.l.s4 1414812756
    %v3737 = vunpack.c.0.s8 %v3736
    %v3738 = vlaneseq
    %v3739 = vshrl.u32 %v3738, 7
    %v3740 = vsub.s32 %v3737, %v3739
    %v3741 = vrot.slane %v3690, %v3740
    %v3743 = vunpack.c.l.s4 1987475062
    %v3744 = vunpack.c.0.s8 %v3743
    %v3745 = vlaneseq
    %v3746 = vshrl.u32 %v3745, 7
    %v3747 = vsub.s32 %v3744, %v3746
    %v3748 = vrot.slane %v3690, %v3747
    %v3757 = vsub.f32 %v3633, %v3699
    %v3758 = vsub.f32 %v3634, %v3706
    %v3759 = vsub.f32 %v3635, %v3713
    %v3760 = vsub.f32 %v3636, %v3720
    %v3761 = vsub.f32 %v3637, %v3727
    %v3762 = vsub.f32 %v3638, %v3734
    %v3763 = vsub.f32 %v3639, %v3741
    %v3764 = vsub.f32 %v3640, %v3748
    %v3765 = vmul.f32 %v3757, %v3757
    %v3766 = vmul.f32 %v3758, %v3758
    %v3767 = vmul.f32 %v3759, %v3759
    %v3768 = vmul.f32 %v3760, %v3760
    %v3769 = vmul.f32 %v3761, %v3761
    %v3770 = vmul.f32 %v3762, %v3762
    %v3771 = vmul.f32 %v3763, %v3763
    %v3772 = vmul.f32 %v3764, %v3764
    %v3781 = vcombine.low %v3765, %v3766
    %v3782 = vcombine.low %v3767, %v3768
    %v3784 = vunpack.c.l.s4 1983009808
    %v3785 = vunpack.c.0.s8 %v3784
    %v3786 = vlaneseq
    %v3787 = vshrl.u32 %v3786, 7
    %v3788 = vsub.s32 %v3785, %v3787
    %v3789 = vrot.slane %v3781, %v3788
    %v3791 = vunpack.c.l.s4 1983009808
    %v3792 = vunpack.c.0.s8 %v3791
    %v3793 = vlaneseq
    %v3794 = vshrl.u32 %v3793, 7
    %v3795 = vsub.s32 %v3792, %v3794
    %v3796 = vrot.slane %v3782, %v3795
    %v3797 = vcombine.low %v3789, %v3796
    %v3798 = vcombine.low %v3769, %v3770
    %v3799 = vcombine.low %v3771, %v3772
    %v3801 = vunpack.c.l.s4 1983009808
    %v3802 = vunpack.c.0.s8 %v3801
    %v3803 = vlaneseq
    %v3804 = vshrl.u32 %v3803, 7
    %v3805 = vsub.s32 %v3802, %v3804
    %v3806 = vrot.slane %v3798, %v3805
    %v3808 = vunpack.c.l.s4 1983009808
    %v3809 = vunpack.c.0.s8 %v3808
    %v3810 = vlaneseq
    %v3811 = vshrl.u32 %v3810, 7
    %v3812 = vsub.s32 %v3809, %v3811
    %v3813 = vrot.slane %v3799, %v3812
    %v3814 = vcombine.low %v3806, %v3813
    %3817 = vadd.xlane.f32.xlu0 %v3797
    %v3818 = vpop.xlane.xlu0 %3817
    %3819 = vadd.xlane.f32.xlu0 %v3814
    %v3820 = vpop.xlane.xlu0 %3819
    %v3821 = vmul.f32 %v3818, %v238
    %v3822 = vmul.f32 %v3820, %v238
    %v3823 = vadd.f32 %v3821, 1e-05
    %v3824 = vadd.f32 %v3822, 1e-05
    %v3825 = vrsqrt.pop %v3823
    %v3826 = vrsqrt.pop %v3824
    %v3830 = vunpack.c.l.s4 269488144
    %v3831 = vunpack.c.0.s8 %v3830
    %v3832 = vlaneseq
    %v3833 = vshrl.u32 %v3832, 7
    %v3834 = vsub.s32 %v3831, %v3833
    %v3835 = vrot.slane %v3825, %v3834
    %v3837 = vunpack.c.l.s4 842150450
    %v3838 = vunpack.c.0.s8 %v3837
    %v3839 = vlaneseq
    %v3840 = vshrl.u32 %v3839, 7
    %v3841 = vsub.s32 %v3838, %v3840
    %v3842 = vrot.slane %v3825, %v3841
    %v3844 = vunpack.c.l.s4 1414812756
    %v3845 = vunpack.c.0.s8 %v3844
    %v3846 = vlaneseq
    %v3847 = vshrl.u32 %v3846, 7
    %v3848 = vsub.s32 %v3845, %v3847
    %v3849 = vrot.slane %v3825, %v3848
    %v3851 = vunpack.c.l.s4 1987475062
    %v3852 = vunpack.c.0.s8 %v3851
    %v3853 = vlaneseq
    %v3854 = vshrl.u32 %v3853, 7
    %v3855 = vsub.s32 %v3852, %v3854
    %v3856 = vrot.slane %v3825, %v3855
    %v3858 = vunpack.c.l.s4 269488144
    %v3859 = vunpack.c.0.s8 %v3858
    %v3860 = vlaneseq
    %v3861 = vshrl.u32 %v3860, 7
    %v3862 = vsub.s32 %v3859, %v3861
    %v3863 = vrot.slane %v3826, %v3862
    %v3865 = vunpack.c.l.s4 842150450
    %v3866 = vunpack.c.0.s8 %v3865
    %v3867 = vlaneseq
    %v3868 = vshrl.u32 %v3867, 7
    %v3869 = vsub.s32 %v3866, %v3868
    %v3870 = vrot.slane %v3826, %v3869
    %v3872 = vunpack.c.l.s4 1414812756
    %v3873 = vunpack.c.0.s8 %v3872
    %v3874 = vlaneseq
    %v3875 = vshrl.u32 %v3874, 7
    %v3876 = vsub.s32 %v3873, %v3875
    %v3877 = vrot.slane %v3826, %v3876
    %v3879 = vunpack.c.l.s4 1987475062
    %v3880 = vunpack.c.0.s8 %v3879
    %v3881 = vlaneseq
    %v3882 = vshrl.u32 %v3881, 7
    %v3883 = vsub.s32 %v3880, %v3882
    %v3884 = vrot.slane %v3826, %v3883
    %v3893 = vmul.f32 %v3757, %v3835
    %v3894 = vmul.f32 %v3758, %v3842
    %v3895 = vmul.f32 %v3759, %v3849
    %v3896 = vmul.f32 %v3760, %v3856
    %v3897 = vmul.f32 %v3761, %v3863
    %v3898 = vmul.f32 %v3762, %v3870
    %v3899 = vmul.f32 %v3763, %v3877
    %v3900 = vmul.f32 %v3764, %v3884
    %v3901 = vld [vmem:[%s7] sm:$0x1]
    %v3903 = vlaneseq
    %v3904 = vshrl.u32 %v3903, 7
    %v3905 = vsub.s32 0, %v3904
    %v3906 = vrot.slane %v3901, %v3905
    %v3907 = vcombine.high %v3906, %v3906
    %v3909 = vunpack.c.l.s4 1983009808
    %v3910 = vunpack.c.0.s8 %v3909
    %v3911 = vlaneseq
    %v3912 = vshrl.u32 %v3911, 7
    %v3913 = vsub.s32 %v3910, %v3912
    %v3914 = vrot.slane %v3906, %v3913
    %v3916 = vunpack.c.l.s4 1983009808
    %v3917 = vunpack.c.0.s8 %v3916
    %v3918 = vlaneseq
    %v3919 = vshrl.u32 %v3918, 7
    %v3920 = vsub.s32 %v3917, %v3919
    %v3921 = vrot.slane %v3907, %v3920
    %v3922 = vcombine.high %v3914, %v3914
    %v3923 = vcombine.high %v3921, %v3921
    %v3928 = vmul.f32 %v3893, %v3914
    %v3929 = vmul.f32 %v3894, %v3922
    %v3930 = vmul.f32 %v3895, %v3921
    %v3931 = vmul.f32 %v3896, %v3923
    %v3932 = vmul.f32 %v3897, %v3914
    %v3933 = vmul.f32 %v3898, %v3922
    %v3934 = vmul.f32 %v3899, %v3921
    %v3935 = vmul.f32 %v3900, %v3923
    %v3936 = vld [vmem:[%s8] sm:$0x1]
    %v3938 = vlaneseq
    %v3939 = vshrl.u32 %v3938, 7
    %v3940 = vsub.s32 0, %v3939
    %v3941 = vrot.slane %v3936, %v3940
    %v3942 = vcombine.high %v3941, %v3941
    %v3944 = vunpack.c.l.s4 1983009808
    %v3945 = vunpack.c.0.s8 %v3944
    %v3946 = vlaneseq
    %v3947 = vshrl.u32 %v3946, 7
    %v3948 = vsub.s32 %v3945, %v3947
    %v3949 = vrot.slane %v3941, %v3948
    %v3951 = vunpack.c.l.s4 1983009808
    %v3952 = vunpack.c.0.s8 %v3951
    %v3953 = vlaneseq
    %v3954 = vshrl.u32 %v3953, 7
    %v3955 = vsub.s32 %v3952, %v3954
    %v3956 = vrot.slane %v3942, %v3955
    %v3957 = vcombine.high %v3949, %v3949
    %v3958 = vcombine.high %v3956, %v3956
    %v3963 = vadd.f32 %v3928, %v3949
    %v3964 = vadd.f32 %v3929, %v3957
    %v3965 = vadd.f32 %v3930, %v3956
    %v3966 = vadd.f32 %v3931, %v3958
    %v3967 = vadd.f32 %v3932, %v3949
    %v3968 = vadd.f32 %v3933, %v3957
    %v3969 = vadd.f32 %v3934, %v3956
    %v3970 = vadd.f32 %v3935, %v3958
    %v3979 = vcombine.low %v3963, %v3964
    %v3980 = vcombine.low %v3965, %v3966
    %v3982 = vunpack.c.l.s4 1983009808
    %v3983 = vunpack.c.0.s8 %v3982
    %v3984 = vlaneseq
    %v3985 = vshrl.u32 %v3984, 7
    %v3986 = vsub.s32 %v3983, %v3985
    %v3987 = vrot.slane %v3979, %v3986
    %v3989 = vunpack.c.l.s4 1983009808
    %v3990 = vunpack.c.0.s8 %v3989
    %v3991 = vlaneseq
    %v3992 = vshrl.u32 %v3991, 7
    %v3993 = vsub.s32 %v3990, %v3992
    %v3994 = vrot.slane %v3980, %v3993
    %v3995 = vcombine.low %v3987, %v3994
    %v3996 = vcombine.low %v3967, %v3968
    %v3997 = vcombine.low %v3969, %v3970
    %v3999 = vunpack.c.l.s4 1983009808
    %v4000 = vunpack.c.0.s8 %v3999
    %v4001 = vlaneseq
    %v4002 = vshrl.u32 %v4001, 7
    %v4003 = vsub.s32 %v4000, %v4002
    %v4004 = vrot.slane %v3996, %v4003
    %v4006 = vunpack.c.l.s4 1983009808
    %v4007 = vunpack.c.0.s8 %v4006
    %v4008 = vlaneseq
    %v4009 = vshrl.u32 %v4008, 7
    %v4010 = vsub.s32 %v4007, %v4009
    %v4011 = vrot.slane %v3997, %v4010
    %v4012 = vcombine.low %v4004, %v4011
    %v4015 = vpack.c.bf16 %v4012, %v3995
    %v4016 = vld [vmem:[#allocation11] sm:$0xff]
    %v4017 = vld [vmem:[#allocation11 + $0x8] sm:$0xff]
    %v4018 = vld [vmem:[#allocation11 + $0x10] sm:$0xff]
    %v4019 = vld [vmem:[#allocation11 + $0x18] sm:$0xff]
    %v4020 = vld [vmem:[#allocation11 + $0x20] sm:$0xff]
    %v4021 = vld [vmem:[#allocation11 + $0x28] sm:$0xff]
    %v4022 = vld [vmem:[#allocation11 + $0x30] sm:$0xff]
    %v4023 = vld [vmem:[#allocation11 + $0x38] sm:$0xff]
    %v4024 = vld [vmem:[#allocation11 + $0x40] sm:$0xff]
    %v4025 = vld [vmem:[#allocation11 + $0x48] sm:$0xff]
    %v4026 = vld [vmem:[#allocation11 + $0x50] sm:$0xff]
    %v4027 = vld [vmem:[#allocation11 + $0x58] sm:$0xff]
    %v4028 = vld [vmem:[#allocation11 + $0x60] sm:$0xff]
    %v4029 = vld [vmem:[#allocation11 + $0x68] sm:$0xff]
    %v4030 = vld [vmem:[#allocation11 + $0x70] sm:$0xff]
    %v4031 = vld [vmem:[#allocation11 + $0x78] sm:$0xff]
    %v4032 = vld [vmem:[#allocation11 + $0x80] sm:$0xff]
    %v4033 = vld [vmem:[#allocation11 + $0x88] sm:$0xff]
    %v4034 = vld [vmem:[#allocation11 + $0x90] sm:$0xff]
    %v4035 = vld [vmem:[#allocation11 + $0x98] sm:$0xff]
    %v4036 = vld [vmem:[#allocation11 + $0xa0] sm:$0xff]
    %v4037 = vld [vmem:[#allocation11 + $0xa8] sm:$0xff]
    %v4038 = vld [vmem:[#allocation11 + $0xb0] sm:$0xff]
    %v4039 = vld [vmem:[#allocation11 + $0xb8] sm:$0xff]
    %v4040 = vld [vmem:[#allocation11 + $0xc0] sm:$0xff]
    %v4041 = vld [vmem:[#allocation11 + $0xc8] sm:$0xff]
    %v4042 = vld [vmem:[#allocation11 + $0xd0] sm:$0xff]
    %v4043 = vld [vmem:[#allocation11 + $0xd8] sm:$0xff]
    %v4044 = vld [vmem:[#allocation11 + $0xe0] sm:$0xff]
    %v4045 = vld [vmem:[#allocation11 + $0xe8] sm:$0xff]
    %v4046 = vld [vmem:[#allocation11 + $0xf0] sm:$0xff]
    %v4047 = vld [vmem:[#allocation11 + $0xf8] sm:$0xff]
    %v4048 = vld [vmem:[%s10] sm:$0xf]
    %v4050 = vlaneseq
    %v4051 = vshrl.u32 %v4050, 7
    %v4052 = vsub.s32 0, %v4051
    %v4053 = vrot.slane %v4048, %v4052
    %v4054 = vlaneseq
    %v4055 = vshrl.u32 %v4054, 7
    %v4056 = vsub.s32 1, %v4055
    %v4057 = vrot.slane %v4048, %v4056
    %v4058 = vlaneseq
    %v4059 = vshrl.u32 %v4058, 7
    %v4060 = vsub.s32 2, %v4059
    %v4061 = vrot.slane %v4048, %v4060
    %v4062 = vlaneseq
    %v4063 = vshrl.u32 %v4062, 7
    %v4064 = vsub.s32 3, %v4063
    %v4065 = vrot.slane %v4048, %v4064
    %v4102 = vunpack.c.l.b16 %v4016
    %v4103 = vunpack.c.h.b16 %v4016
    %v4104 = vunpack.c.l.b16 %v4017
    %v4105 = vunpack.c.h.b16 %v4017
    %v4106 = vunpack.c.l.b16 %v4018
    %v4107 = vunpack.c.h.b16 %v4018
    %v4108 = vunpack.c.l.b16 %v4019
    %v4109 = vunpack.c.h.b16 %v4019
    %v4110 = vunpack.c.l.b16 %v4020
    %v4111 = vunpack.c.h.b16 %v4020
    %v4112 = vunpack.c.l.b16 %v4021
    %v4113 = vunpack.c.h.b16 %v4021
    %v4114 = vunpack.c.l.b16 %v4022
    %v4115 = vunpack.c.h.b16 %v4022
    %v4116 = vunpack.c.l.b16 %v4023
    %v4117 = vunpack.c.h.b16 %v4023
    %v4118 = vunpack.c.l.b16 %v4024
    %v4119 = vunpack.c.h.b16 %v4024
    %v4120 = vunpack.c.l.b16 %v4025
    %v4121 = vunpack.c.h.b16 %v4025
    %v4122 = vunpack.c.l.b16 %v4026
    %v4123 = vunpack.c.h.b16 %v4026
    %v4124 = vunpack.c.l.b16 %v4027
    %v4125 = vunpack.c.h.b16 %v4027
    %v4126 = vunpack.c.l.b16 %v4028
    %v4127 = vunpack.c.h.b16 %v4028
    %v4128 = vunpack.c.l.b16 %v4029
    %v4129 = vunpack.c.h.b16 %v4029
    %v4130 = vunpack.c.l.b16 %v4030
    %v4131 = vunpack.c.h.b16 %v4030
    %v4132 = vunpack.c.l.b16 %v4031
    %v4133 = vunpack.c.h.b16 %v4031
    %v4134 = vunpack.c.l.b16 %v4032
    %v4135 = vunpack.c.h.b16 %v4032
    %v4136 = vunpack.c.l.b16 %v4033
    %v4137 = vunpack.c.h.b16 %v4033
    %v4138 = vunpack.c.l.b16 %v4034
    %v4139 = vunpack.c.h.b16 %v4034
    %v4140 = vunpack.c.l.b16 %v4035
    %v4141 = vunpack.c.h.b16 %v4035
    %v4142 = vunpack.c.l.b16 %v4036
    %v4143 = vunpack.c.h.b16 %v4036
    %v4144 = vunpack.c.l.b16 %v4037
    %v4145 = vunpack.c.h.b16 %v4037
    %v4146 = vunpack.c.l.b16 %v4038
    %v4147 = vunpack.c.h.b16 %v4038
    %v4148 = vunpack.c.l.b16 %v4039
    %v4149 = vunpack.c.h.b16 %v4039
    %v4150 = vunpack.c.l.b16 %v4040
    %v4151 = vunpack.c.h.b16 %v4040
    %v4152 = vunpack.c.l.b16 %v4041
    %v4153 = vunpack.c.h.b16 %v4041
    %v4154 = vunpack.c.l.b16 %v4042
    %v4155 = vunpack.c.h.b16 %v4042
    %v4156 = vunpack.c.l.b16 %v4043
    %v4157 = vunpack.c.h.b16 %v4043
    %v4158 = vunpack.c.l.b16 %v4044
    %v4159 = vunpack.c.h.b16 %v4044
    %v4160 = vunpack.c.l.b16 %v4045
    %v4161 = vunpack.c.h.b16 %v4045
    %v4162 = vunpack.c.l.b16 %v4046
    %v4163 = vunpack.c.h.b16 %v4046
    %v4164 = vunpack.c.l.b16 %v4047
    %v4165 = vunpack.c.h.b16 %v4047
    %v4166 = vpack.c.b16 %v4106, %v4102
    %v4167 = vpack.c.b16 %v4107, %v4103
    %v4168 = vpack.c.b16 %v4108, %v4104
    %v4169 = vpack.c.b16 %v4109, %v4105
    %v4170 = vpack.c.b16 %v4114, %v4110
    %v4171 = vpack.c.b16 %v4115, %v4111
    %v4172 = vpack.c.b16 %v4116, %v4112
    %v4173 = vpack.c.b16 %v4117, %v4113
    %v4174 = vpack.c.b16 %v4122, %v4118
    %v4175 = vpack.c.b16 %v4123, %v4119
    %v4176 = vpack.c.b16 %v4124, %v4120
    %v4177 = vpack.c.b16 %v4125, %v4121
    %v4178 = vpack.c.b16 %v4130, %v4126
    %v4179 = vpack.c.b16 %v4131, %v4127
    %v4180 = vpack.c.b16 %v4132, %v4128
    %v4181 = vpack.c.b16 %v4133, %v4129
    %v4182 = vpack.c.b16 %v4138, %v4134
    %v4183 = vpack.c.b16 %v4139, %v4135
    %v4184 = vpack.c.b16 %v4140, %v4136
    %v4185 = vpack.c.b16 %v4141, %v4137
    %v4186 = vpack.c.b16 %v4146, %v4142
    %v4187 = vpack.c.b16 %v4147, %v4143
    %v4188 = vpack.c.b16 %v4148, %v4144
    %v4189 = vpack.c.b16 %v4149, %v4145
    %v4190 = vpack.c.b16 %v4154, %v4150
    %v4191 = vpack.c.b16 %v4155, %v4151
    %v4192 = vpack.c.b16 %v4156, %v4152
    %v4193 = vpack.c.b16 %v4157, %v4153
    %v4194 = vpack.c.b16 %v4162, %v4158
    %v4195 = vpack.c.b16 %v4163, %v4159
    %v4196 = vpack.c.b16 %v4164, %v4160
    %v4197 = vpack.c.b16 %v4165, %v4161
    %4230 = vmatprep.subr.bf16.mxu0 %v4195
    %4231 = vmatpush1.bf16.msra.mxu0 %v4194
    %4232 = vmatprep.subr.bf16.mxu0 %v4191
    %4233 = vmatpush1.bf16.msra.mxu0 %v4190
    %4234 = vmatprep.subr.bf16.mxu0 %v4187
    %4235 = vmatpush1.bf16.msra.mxu0 %v4186
    %4236 = vmatprep.subr.bf16.mxu0 %v4183
    %4237 = vmatpush1.bf16.msra.mxu0 %v4182
    %4238 = vmatprep.subr.bf16.mxu0 %v4179
    %4239 = vmatpush1.bf16.msra.mxu0 %v4178
    %4240 = vmatprep.subr.bf16.mxu0 %v4175
    %4241 = vmatpush1.bf16.msra.mxu0 %v4174
    %4242 = vmatprep.subr.bf16.mxu0 %v4171
    %4243 = vmatpush1.bf16.msra.mxu0 %v4170
    %4244 = vmatprep.subr.bf16.mxu0 %v4167
    %4245 = vmatpush1.bf16.msra.mxu0 %v4166
    %4246 = vmatprep.subr.bf16.mxu0 0
    %4247 = vmatpush2.bf16.msra.mxu0 0
    %4248 = vmatprep.subr.bf16.mxu0 0
    %4249 = vmatpush2.bf16.msra.mxu0 0
    %4250 = vmatprep.subr.bf16.mxu0 0
    %4251 = vmatpush2.bf16.msra.mxu0 0
    %4252 = vmatprep.subr.bf16.mxu0 0
    %4253 = vmatpush2.bf16.msra.mxu0 0
    %4254 = vmatprep.subr.bf16.mxu0 0
    %4255 = vmatpush2.bf16.msra.mxu0 0
    %4256 = vmatprep.subr.bf16.mxu0 0
    %4257 = vmatpush2.bf16.msra.mxu0 0
    %4258 = vmatprep.subr.bf16.mxu0 0
    %4259 = vmatpush2.bf16.msra.mxu0 0
    %4260 = vmatprep.subr.bf16.mxu0 0
    %4261 = vmatpush2.bf16.msra.mxu0 0
    %4262 = vmatprep.mubr.bf16.mxu0 0
    %4263 = vmatmul.mubr.bf16.gmra.mxu0 %v4015
    %v4264 = vpop.f32.mrf.mxu0
    %v4265 = vadd.f32 %v4053, %v4264
    %v4266 = vpop.f32.mrf.mxu0
    %v4267 = vadd.f32 %v4057, %v4266
    %v4268 = vpop.f32.mrf.mxu0
    %v4269 = vadd.f32 %v4053, %v4268
    %v4270 = vpop.f32.mrf.mxu0
    %v4271 = vadd.f32 %v4057, %v4270
    %4272 = vdwg.mxu0
    %4273 = vmatprep.subr.bf16.mxu0 %v4197
    %4274 = vmatpush1.bf16.msra.mxu0 %v4196
    %4275 = vmatprep.subr.bf16.mxu0 %v4193
    %4276 = vmatpush1.bf16.msra.mxu0 %v4192
    %4277 = vmatprep.subr.bf16.mxu0 %v4189
    %4278 = vmatpush1.bf16.msra.mxu0 %v4188
    %4279 = vmatprep.subr.bf16.mxu0 %v4185
    %4280 = vmatpush1.bf16.msra.mxu0 %v4184
    %4281 = vmatprep.subr.bf16.mxu0 %v4181
    %4282 = vmatpush1.bf16.msra.mxu0 %v4180
    %4283 = vmatprep.subr.bf16.mxu0 %v4177
    %4284 = vmatpush1.bf16.msra.mxu0 %v4176
    %4285 = vmatprep.subr.bf16.mxu0 %v4173
    %4286 = vmatpush1.bf16.msra.mxu0 %v4172
    %4287 = vmatprep.subr.bf16.mxu0 %v4169
    %4288 = vmatpush1.bf16.msra.mxu0 %v4168
    %4289 = vmatprep.subr.bf16.mxu0 0
    %4290 = vmatpush2.bf16.msra.mxu0 0
    %4291 = vmatprep.subr.bf16.mxu0 0
    %4292 = vmatpush2.bf16.msra.mxu0 0
    %4293 = vmatprep.subr.bf16.mxu0 0
    %4294 = vmatpush2.bf16.msra.mxu0 0
    %4295 = vmatprep.subr.bf16.mxu0 0
    %4296 = vmatpush2.bf16.msra.mxu0 0
    %4297 = vmatprep.subr.bf16.mxu0 0
    %4298 = vmatpush2.bf16.msra.mxu0 0
    %4299 = vmatprep.subr.bf16.mxu0 0
    %4300 = vmatpush2.bf16.msra.mxu0 0
    %4301 = vmatprep.subr.bf16.mxu0 0
    %4302 = vmatpush2.bf16.msra.mxu0 0
    %4303 = vmatprep.subr.bf16.mxu0 0
    %4304 = vmatpush2.bf16.msra.mxu0 0
    %4305 = vmatprep.mubr.bf16.mxu0 0
    %4306 = vmatmul.mubr.bf16.gmra.mxu0 %v4015
    %v4307 = vpop.f32.mrf.mxu0
    %v4308 = vadd.f32 %v4061, %v4307
    %v4309 = vpop.f32.mrf.mxu0
    %v4310 = vadd.f32 %v4065, %v4309
    %v4311 = vpop.f32.mrf.mxu0
    %v4312 = vadd.f32 %v4061, %v4311
    %v4313 = vpop.f32.mrf.mxu0
    %v4314 = vadd.f32 %v4065, %v4313
    %4315 = vdwg.mxu0
    %v4316 = vmul.f32 %v4265, 1.702
    %v4317 = vmul.f32 %v4267, 1.702
    %v4318 = vmul.f32 %v4308, 1.702
    %v4319 = vmul.f32 %v4310, 1.702
    %v4320 = vmul.f32 %v4269, 1.702
    %v4321 = vmul.f32 %v4271, 1.702
    %v4322 = vmul.f32 %v4312, 1.702
    %v4323 = vmul.f32 %v4314, 1.702
    %v4324 = vxor.u32 %v4316, 2147483648
    %v4325 = vxor.u32 %v4317, 2147483648
    %v4326 = vxor.u32 %v4318, 2147483648
    %v4327 = vxor.u32 %v4319, 2147483648
    %v4328 = vxor.u32 %v4320, 2147483648
    %v4329 = vxor.u32 %v4321, 2147483648
    %v4330 = vxor.u32 %v4322, 2147483648
    %v4331 = vxor.u32 %v4323, 2147483648
    %v4332 = vmul.f32 %v4324, 1.442695
    %v4333 = vpow.pop %v4332
    %v4334 = vmul.f32 %v4325, 1.442695
    %v4335 = vpow.pop %v4334
    %v4336 = vmul.f32 %v4326, 1.442695
    %v4337 = vpow.pop %v4336
    %v4338 = vmul.f32 %v4327, 1.442695
    %v4339 = vpow.pop %v4338
    %v4340 = vmul.f32 %v4328, 1.442695
    %v4341 = vpow.pop %v4340
    %v4342 = vmul.f32 %v4329, 1.442695
    %v4343 = vpow.pop %v4342
    %v4344 = vmul.f32 %v4330, 1.442695
    %v4345 = vpow.pop %v4344
    %v4346 = vmul.f32 %v4331, 1.442695
    %v4347 = vpow.pop %v4346
    %v4348 = vadd.f32 %v4333, 1.0
    %v4349 = vadd.f32 %v4335, 1.0
    %v4350 = vadd.f32 %v4337, 1.0
    %v4351 = vadd.f32 %v4339, 1.0
    %v4352 = vadd.f32 %v4341, 1.0
    %v4353 = vadd.f32 %v4343, 1.0
    %v4354 = vadd.f32 %v4345, 1.0
    %v4355 = vadd.f32 %v4347, 1.0
    %v4356 = vrcp.pop %v4348
    %v4357 = vmul.f32 1.0, %v4356
    %v4358 = vrcp.pop %v4349
    %v4359 = vmul.f32 1.0, %v4358
    %v4360 = vrcp.pop %v4350
    %v4361 = vmul.f32 1.0, %v4360
    %v4362 = vrcp.pop %v4351
    %v4363 = vmul.f32 1.0, %v4362
    %v4364 = vrcp.pop %v4352
    %v4365 = vmul.f32 1.0, %v4364
    %v4366 = vrcp.pop %v4353
    %v4367 = vmul.f32 1.0, %v4366
    %v4368 = vrcp.pop %v4354
    %v4369 = vmul.f32 1.0, %v4368
    %v4370 = vrcp.pop %v4355
    %v4371 = vmul.f32 1.0, %v4370
    %v4372 = vmul.f32 %v4265, %v4357
    %v4373 = vmul.f32 %v4267, %v4359
    %v4374 = vmul.f32 %v4308, %v4361
    %v4375 = vmul.f32 %v4310, %v4363
    %v4376 = vmul.f32 %v4269, %v4365
    %v4377 = vmul.f32 %v4271, %v4367
    %v4378 = vmul.f32 %v4312, %v4369
    %v4379 = vmul.f32 %v4314, %v4371
    %v4380 = vpack.c.bf16 %v4376, %v4372
    %v4381 = vpack.c.bf16 %v4377, %v4373
    %v4382 = vpack.c.bf16 %v4378, %v4374
    %v4383 = vpack.c.bf16 %v4379, %v4375
    %v4384 = vld [vmem:[#allocation13] sm:$0xf]
    %v4385 = vld [vmem:[#allocation13 + $0x4] sm:$0xf]
    %v4386 = vld [vmem:[#allocation13 + $0x8] sm:$0xf]
    %v4387 = vld [vmem:[#allocation13 + $0xc] sm:$0xf]
    %v4388 = vld [vmem:[#allocation13 + $0x10] sm:$0xf]
    %v4389 = vld [vmem:[#allocation13 + $0x14] sm:$0xf]
    %v4390 = vld [vmem:[#allocation13 + $0x18] sm:$0xf]
    %v4391 = vld [vmem:[#allocation13 + $0x1c] sm:$0xf]
    %v4392 = vld [vmem:[#allocation13 + $0x20] sm:$0xf]
    %v4393 = vld [vmem:[#allocation13 + $0x24] sm:$0xf]
    %v4394 = vld [vmem:[#allocation13 + $0x28] sm:$0xf]
    %v4395 = vld [vmem:[#allocation13 + $0x2c] sm:$0xf]
    %v4396 = vld [vmem:[#allocation13 + $0x30] sm:$0xf]
    %v4397 = vld [vmem:[#allocation13 + $0x34] sm:$0xf]
    %v4398 = vld [vmem:[#allocation13 + $0x38] sm:$0xf]
    %v4399 = vld [vmem:[#allocation13 + $0x3c] sm:$0xf]
    %v4400 = vld [vmem:[#allocation13 + $0x40] sm:$0xf]
    %v4401 = vld [vmem:[#allocation13 + $0x44] sm:$0xf]
    %v4402 = vld [vmem:[#allocation13 + $0x48] sm:$0xf]
    %v4403 = vld [vmem:[#allocation13 + $0x4c] sm:$0xf]
    %v4404 = vld [vmem:[#allocation13 + $0x50] sm:$0xf]
    %v4405 = vld [vmem:[#allocation13 + $0x54] sm:$0xf]
    %v4406 = vld [vmem:[#allocation13 + $0x58] sm:$0xf]
    %v4407 = vld [vmem:[#allocation13 + $0x5c] sm:$0xf]
    %v4408 = vld [vmem:[#allocation13 + $0x60] sm:$0xf]
    %v4409 = vld [vmem:[#allocation13 + $0x64] sm:$0xf]
    %v4410 = vld [vmem:[#allocation13 + $0x68] sm:$0xf]
    %v4411 = vld [vmem:[#allocation13 + $0x6c] sm:$0xf]
    %v4412 = vld [vmem:[#allocation13 + $0x70] sm:$0xf]
    %v4413 = vld [vmem:[#allocation13 + $0x74] sm:$0xf]
    %v4414 = vld [vmem:[#allocation13 + $0x78] sm:$0xf]
    %v4415 = vld [vmem:[#allocation13 + $0x7c] sm:$0xf]
    %v4416 = vld [vmem:[#allocation13 + $0x80] sm:$0xf]
    %v4417 = vld [vmem:[#allocation13 + $0x84] sm:$0xf]
    %v4418 = vld [vmem:[#allocation13 + $0x88] sm:$0xf]
    %v4419 = vld [vmem:[#allocation13 + $0x8c] sm:$0xf]
    %v4420 = vld [vmem:[#allocation13 + $0x90] sm:$0xf]
    %v4421 = vld [vmem:[#allocation13 + $0x94] sm:$0xf]
    %v4422 = vld [vmem:[#allocation13 + $0x98] sm:$0xf]
    %v4423 = vld [vmem:[#allocation13 + $0x9c] sm:$0xf]
    %v4424 = vld [vmem:[#allocation13 + $0xa0] sm:$0xf]
    %v4425 = vld [vmem:[#allocation13 + $0xa4] sm:$0xf]
    %v4426 = vld [vmem:[#allocation13 + $0xa8] sm:$0xf]
    %v4427 = vld [vmem:[#allocation13 + $0xac] sm:$0xf]
    %v4428 = vld [vmem:[#allocation13 + $0xb0] sm:$0xf]
    %v4429 = vld [vmem:[#allocation13 + $0xb4] sm:$0xf]
    %v4430 = vld [vmem:[#allocation13 + $0xb8] sm:$0xf]
    %v4431 = vld [vmem:[#allocation13 + $0xbc] sm:$0xf]
    %v4432 = vld [vmem:[#allocation13 + $0xc0] sm:$0xf]
    %v4433 = vld [vmem:[#allocation13 + $0xc4] sm:$0xf]
    %v4434 = vld [vmem:[#allocation13 + $0xc8] sm:$0xf]
    %v4435 = vld [vmem:[#allocation13 + $0xcc] sm:$0xf]
    %v4436 = vld [vmem:[#allocation13 + $0xd0] sm:$0xf]
    %v4437 = vld [vmem:[#allocation13 + $0xd4] sm:$0xf]
    %v4438 = vld [vmem:[#allocation13 + $0xd8] sm:$0xf]
    %v4439 = vld [vmem:[#allocation13 + $0xdc] sm:$0xf]
    %v4440 = vld [vmem:[#allocation13 + $0xe0] sm:$0xf]
    %v4441 = vld [vmem:[#allocation13 + $0xe4] sm:$0xf]
    %v4442 = vld [vmem:[#allocation13 + $0xe8] sm:$0xf]
    %v4443 = vld [vmem:[#allocation13 + $0xec] sm:$0xf]
    %v4444 = vld [vmem:[#allocation13 + $0xf0] sm:$0xf]
    %v4445 = vld [vmem:[#allocation13 + $0xf4] sm:$0xf]
    %v4446 = vld [vmem:[#allocation13 + $0xf8] sm:$0xf]
    %v4447 = vld [vmem:[#allocation13 + $0xfc] sm:$0xf]
    %v4448 = vld [vmem:[%s12] sm:$0x1]
    %v4450 = vlaneseq
    %v4451 = vshrl.u32 %v4450, 7
    %v4452 = vsub.s32 0, %v4451
    %v4453 = vrot.slane %v4448, %v4452
    %v4519 = vunpack.c.l.b16 %v4384
    %v4520 = vunpack.c.l.b16 %v4385
    %v4521 = vunpack.c.l.b16 %v4386
    %v4522 = vunpack.c.l.b16 %v4387
    %v4523 = vunpack.c.l.b16 %v4388
    %v4524 = vunpack.c.l.b16 %v4389
    %v4525 = vunpack.c.l.b16 %v4390
    %v4526 = vunpack.c.l.b16 %v4391
    %v4527 = vunpack.c.l.b16 %v4392
    %v4528 = vunpack.c.l.b16 %v4393
    %v4529 = vunpack.c.l.b16 %v4394
    %v4530 = vunpack.c.l.b16 %v4395
    %v4531 = vunpack.c.l.b16 %v4396
    %v4532 = vunpack.c.l.b16 %v4397
    %v4533 = vunpack.c.l.b16 %v4398
    %v4534 = vunpack.c.l.b16 %v4399
    %v4535 = vunpack.c.l.b16 %v4400
    %v4536 = vunpack.c.l.b16 %v4401
    %v4537 = vunpack.c.l.b16 %v4402
    %v4538 = vunpack.c.l.b16 %v4403
    %v4539 = vunpack.c.l.b16 %v4404
    %v4540 = vunpack.c.l.b16 %v4405
    %v4541 = vunpack.c.l.b16 %v4406
    %v4542 = vunpack.c.l.b16 %v4407
    %v4543 = vunpack.c.l.b16 %v4408
    %v4544 = vunpack.c.l.b16 %v4409
    %v4545 = vunpack.c.l.b16 %v4410
    %v4546 = vunpack.c.l.b16 %v4411
    %v4547 = vunpack.c.l.b16 %v4412
    %v4548 = vunpack.c.l.b16 %v4413
    %v4549 = vunpack.c.l.b16 %v4414
    %v4550 = vunpack.c.l.b16 %v4415
    %v4551 = vunpack.c.l.b16 %v4416
    %v4552 = vunpack.c.l.b16 %v4417
    %v4553 = vunpack.c.l.b16 %v4418
    %v4554 = vunpack.c.l.b16 %v4419
    %v4555 = vunpack.c.l.b16 %v4420
    %v4556 = vunpack.c.l.b16 %v4421
    %v4557 = vunpack.c.l.b16 %v4422
    %v4558 = vunpack.c.l.b16 %v4423
    %v4559 = vunpack.c.l.b16 %v4424
    %v4560 = vunpack.c.l.b16 %v4425
    %v4561 = vunpack.c.l.b16 %v4426
    %v4562 = vunpack.c.l.b16 %v4427
    %v4563 = vunpack.c.l.b16 %v4428
    %v4564 = vunpack.c.l.b16 %v4429
    %v4565 = vunpack.c.l.b16 %v4430
    %v4566 = vunpack.c.l.b16 %v4431
    %v4567 = vunpack.c.l.b16 %v4432
    %v4568 = vunpack.c.l.b16 %v4433
    %v4569 = vunpack.c.l.b16 %v4434
    %v4570 = vunpack.c.l.b16 %v4435
    %v4571 = vunpack.c.l.b16 %v4436
    %v4572 = vunpack.c.l.b16 %v4437
    %v4573 = vunpack.c.l.b16 %v4438
    %v4574 = vunpack.c.l.b16 %v4439
    %v4575 = vunpack.c.l.b16 %v4440
    %v4576 = vunpack.c.l.b16 %v4441
    %v4577 = vunpack.c.l.b16 %v4442
    %v4578 = vunpack.c.l.b16 %v4443
    %v4579 = vunpack.c.l.b16 %v4444
    %v4580 = vunpack.c.l.b16 %v4445
    %v4581 = vunpack.c.l.b16 %v4446
    %v4582 = vunpack.c.l.b16 %v4447
    %v4583 = vpack.c.b16 %v4520, %v4519
    %v4584 = vpack.c.b16 %v4522, %v4521
    %v4585 = vpack.c.b16 %v4524, %v4523
    %v4586 = vpack.c.b16 %v4526, %v4525
    %v4587 = vpack.c.b16 %v4528, %v4527
    %v4588 = vpack.c.b16 %v4530, %v4529
    %v4589 = vpack.c.b16 %v4532, %v4531
    %v4590 = vpack.c.b16 %v4534, %v4533
    %v4591 = vpack.c.b16 %v4536, %v4535
    %v4592 = vpack.c.b16 %v4538, %v4537
    %v4593 = vpack.c.b16 %v4540, %v4539
    %v4594 = vpack.c.b16 %v4542, %v4541
    %v4595 = vpack.c.b16 %v4544, %v4543
    %v4596 = vpack.c.b16 %v4546, %v4545
    %v4597 = vpack.c.b16 %v4548, %v4547
    %v4598 = vpack.c.b16 %v4550, %v4549
    %v4599 = vpack.c.b16 %v4552, %v4551
    %v4600 = vpack.c.b16 %v4554, %v4553
    %v4601 = vpack.c.b16 %v4556, %v4555
    %v4602 = vpack.c.b16 %v4558, %v4557
    %v4603 = vpack.c.b16 %v4560, %v4559
    %v4604 = vpack.c.b16 %v4562, %v4561
    %v4605 = vpack.c.b16 %v4564, %v4563
    %v4606 = vpack.c.b16 %v4566, %v4565
    %v4607 = vpack.c.b16 %v4568, %v4567
    %v4608 = vpack.c.b16 %v4570, %v4569
    %v4609 = vpack.c.b16 %v4572, %v4571
    %v4610 = vpack.c.b16 %v4574, %v4573
    %v4611 = vpack.c.b16 %v4576, %v4575
    %v4612 = vpack.c.b16 %v4578, %v4577
    %v4613 = vpack.c.b16 %v4580, %v4579
    %v4614 = vpack.c.b16 %v4582, %v4581
    %4647 = vmatprep.subr.bf16.mxu0 0
    %4648 = vmatpush1.bf16.msra.mxu0 %v4590
    %4649 = vmatprep.subr.bf16.mxu0 0
    %4650 = vmatpush1.bf16.msra.mxu0 %v4589
    %4651 = vmatprep.subr.bf16.mxu0 0
    %4652 = vmatpush1.bf16.msra.mxu0 %v4588
    %4653 = vmatprep.subr.bf16.mxu0 0
    %4654 = vmatpush1.bf16.msra.mxu0 %v4587
    %4655 = vmatprep.subr.bf16.mxu0 0
    %4656 = vmatpush1.bf16.msra.mxu0 %v4586
    %4657 = vmatprep.subr.bf16.mxu0 0
    %4658 = vmatpush1.bf16.msra.mxu0 %v4585
    %4659 = vmatprep.subr.bf16.mxu0 0
    %4660 = vmatpush1.bf16.msra.mxu0 %v4584
    %4661 = vmatprep.subr.bf16.mxu0 0
    %4662 = vmatpush1.bf16.msra.mxu0 %v4583
    %4663 = vmatprep.subr.bf16.mxu0 0
    %4664 = vmatpush2.bf16.msra.mxu0 %v4598
    %4665 = vmatprep.subr.bf16.mxu0 0
    %4666 = vmatpush2.bf16.msra.mxu0 %v4597
    %4667 = vmatprep.subr.bf16.mxu0 0
    %4668 = vmatpush2.bf16.msra.mxu0 %v4596
    %4669 = vmatprep.subr.bf16.mxu0 0
    %4670 = vmatpush2.bf16.msra.mxu0 %v4595
    %4671 = vmatprep.subr.bf16.mxu0 0
    %4672 = vmatpush2.bf16.msra.mxu0 %v4594
    %4673 = vmatprep.subr.bf16.mxu0 0
    %4674 = vmatpush2.bf16.msra.mxu0 %v4593
    %4675 = vmatprep.subr.bf16.mxu0 0
    %4676 = vmatpush2.bf16.msra.mxu0 %v4592
    %4677 = vmatprep.subr.bf16.mxu0 0
    %4678 = vmatpush2.bf16.msra.mxu0 %v4591
    %4679 = vmatprep.mubr.bf16.mxu0 %v4381
    %4680 = vmatmul.mubr.bf16.gmra.mxu0 %v4380
    %v4681 = vpop.f32.mrf.mxu0
    %v4682 = vadd.f32 %v4453, %v4681
    %v4683 = vpop.f32.mrf.mxu0
    %v4684 = vpop.f32.mrf.mxu0
    %v4685 = vadd.f32 %v4453, %v4684
    %v4686 = vpop.f32.mrf.mxu0
    %4687 = vdwg.mxu0
    %4688 = vmatprep.subr.bf16.mxu0 0
    %4689 = vmatpush1.bf16.msra.mxu0 %v4606
    %4690 = vmatprep.subr.bf16.mxu0 0
    %4691 = vmatpush1.bf16.msra.mxu0 %v4605
    %4692 = vmatprep.subr.bf16.mxu0 0
    %4693 = vmatpush1.bf16.msra.mxu0 %v4604
    %4694 = vmatprep.subr.bf16.mxu0 0
    %4695 = vmatpush1.bf16.msra.mxu0 %v4603
    %4696 = vmatprep.subr.bf16.mxu0 0
    %4697 = vmatpush1.bf16.msra.mxu0 %v4602
    %4698 = vmatprep.subr.bf16.mxu0 0
    %4699 = vmatpush1.bf16.msra.mxu0 %v4601
    %4700 = vmatprep.subr.bf16.mxu0 0
    %4701 = vmatpush1.bf16.msra.mxu0 %v4600
    %4702 = vmatprep.subr.bf16.mxu0 0
    %4703 = vmatpush1.bf16.msra.mxu0 %v4599
    %4704 = vmatprep.subr.bf16.mxu0 0
    %4705 = vmatpush2.bf16.msra.mxu0 %v4614
    %4706 = vmatprep.subr.bf16.mxu0 0
    %4707 = vmatpush2.bf16.msra.mxu0 %v4613
    %4708 = vmatprep.subr.bf16.mxu0 0
    %4709 = vmatpush2.bf16.msra.mxu0 %v4612
    %4710 = vmatprep.subr.bf16.mxu0 0
    %4711 = vmatpush2.bf16.msra.mxu0 %v4611
    %4712 = vmatprep.subr.bf16.mxu0 0
    %4713 = vmatpush2.bf16.msra.mxu0 %v4610
    %4714 = vmatprep.subr.bf16.mxu0 0
    %4715 = vmatpush2.bf16.msra.mxu0 %v4609
    %4716 = vmatprep.subr.bf16.mxu0 0
    %4717 = vmatpush2.bf16.msra.mxu0 %v4608
    %4718 = vmatprep.subr.bf16.mxu0 0
    %4719 = vmatpush2.bf16.msra.mxu0 %v4607
    %4720 = vmatprep.mubr.bf16.mxu0 %v4383
    %4721 = vmatmul.mubr.bf16.gmra.mxu0 %v4382
    %v4722 = vpop.f32.mrf.mxu0
    %v4723 = vadd.f32 %v4682, %v4722
    %v4724 = vpop.f32.mrf.mxu0
    %v4725 = vpop.f32.mrf.mxu0
    %v4726 = vadd.f32 %v4685, %v4725
    %v4727 = vpop.f32.mrf.mxu0
    %4728 = vdwg.mxu0
    %v4731 = vcombine.high %v4723, %v4723
    %v4733 = vunpack.c.l.s4 1983009808
    %v4734 = vunpack.c.0.s8 %v4733
    %v4735 = vlaneseq
    %v4736 = vshrl.u32 %v4735, 7
    %v4737 = vsub.s32 %v4734, %v4736
    %v4738 = vrot.slane %v4723, %v4737
    %v4740 = vunpack.c.l.s4 1983009808
    %v4741 = vunpack.c.0.s8 %v4740
    %v4742 = vlaneseq
    %v4743 = vshrl.u32 %v4742, 7
    %v4744 = vsub.s32 %v4741, %v4743
    %v4745 = vrot.slane %v4731, %v4744
    %v4746 = vcombine.high %v4738, %v4738
    %v4747 = vcombine.high %v4745, %v4745
    %v4748 = vcombine.high %v4726, %v4726
    %v4750 = vunpack.c.l.s4 1983009808
    %v4751 = vunpack.c.0.s8 %v4750
    %v4752 = vlaneseq
    %v4753 = vshrl.u32 %v4752, 7
    %v4754 = vsub.s32 %v4751, %v4753
    %v4755 = vrot.slane %v4726, %v4754
    %v4757 = vunpack.c.l.s4 1983009808
    %v4758 = vunpack.c.0.s8 %v4757
    %v4759 = vlaneseq
    %v4760 = vshrl.u32 %v4759, 7
    %v4761 = vsub.s32 %v4758, %v4760
    %v4762 = vrot.slane %v4748, %v4761
    %v4763 = vcombine.high %v4755, %v4755
    %v4764 = vcombine.high %v4762, %v4762
    %v4773 = vadd.f32 %v3633, %v4738
    %v4774 = vadd.f32 %v3634, %v4746
    %v4775 = vadd.f32 %v3635, %v4745
    %v4776 = vadd.f32 %v3636, %v4747
    %v4777 = vadd.f32 %v3637, %v4755
    %v4778 = vadd.f32 %v3638, %v4763
    %v4779 = vadd.f32 %v3639, %v4762
    %v4780 = vadd.f32 %v3640, %v4764
    %v4789 = vcombine.low %v4773, %v4774
    %v4790 = vcombine.low %v4775, %v4776
    %v4792 = vunpack.c.l.s4 1983009808
    %v4793 = vunpack.c.0.s8 %v4792
    %v4794 = vlaneseq
    %v4795 = vshrl.u32 %v4794, 7
    %v4796 = vsub.s32 %v4793, %v4795
    %v4797 = vrot.slane %v4789, %v4796
    %v4799 = vunpack.c.l.s4 1983009808
    %v4800 = vunpack.c.0.s8 %v4799
    %v4801 = vlaneseq
    %v4802 = vshrl.u32 %v4801, 7
    %v4803 = vsub.s32 %v4800, %v4802
    %v4804 = vrot.slane %v4790, %v4803
    %v4805 = vcombine.low %v4797, %v4804
    %v4806 = vcombine.low %v4777, %v4778
    %v4807 = vcombine.low %v4779, %v4780
    %v4809 = vunpack.c.l.s4 1983009808
    %v4810 = vunpack.c.0.s8 %v4809
    %v4811 = vlaneseq
    %v4812 = vshrl.u32 %v4811, 7
    %v4813 = vsub.s32 %v4810, %v4812
    %v4814 = vrot.slane %v4806, %v4813
    %v4816 = vunpack.c.l.s4 1983009808
    %v4817 = vunpack.c.0.s8 %v4816
    %v4818 = vlaneseq
    %v4819 = vshrl.u32 %v4818, 7
    %v4820 = vsub.s32 %v4817, %v4819
    %v4821 = vrot.slane %v4807, %v4820
    %v4822 = vcombine.low %v4814, %v4821
    %4825 = vadd.xlane.f32.xlu0 %v4805
    %v4826 = vpop.xlane.xlu0 %4825
    %4827 = vadd.xlane.f32.xlu0 %v4822
    %v4828 = vpop.xlane.xlu0 %4827
    %v4829 = vmul.f32 %v4826, %v238
    %v4830 = vmul.f32 %v4828, %v238
    %v4834 = vunpack.c.l.s4 269488144
    %v4835 = vunpack.c.0.s8 %v4834
    %v4836 = vlaneseq
    %v4837 = vshrl.u32 %v4836, 7
    %v4838 = vsub.s32 %v4835, %v4837
    %v4839 = vrot.slane %v4829, %v4838
    %v4841 = vunpack.c.l.s4 842150450
    %v4842 = vunpack.c.0.s8 %v4841
    %v4843 = vlaneseq
    %v4844 = vshrl.u32 %v4843, 7
    %v4845 = vsub.s32 %v4842, %v4844
    %v4846 = vrot.slane %v4829, %v4845
    %v4848 = vunpack.c.l.s4 1414812756
    %v4849 = vunpack.c.0.s8 %v4848
    %v4850 = vlaneseq
    %v4851 = vshrl.u32 %v4850, 7
    %v4852 = vsub.s32 %v4849, %v4851
    %v4853 = vrot.slane %v4829, %v4852
    %v4855 = vunpack.c.l.s4 1987475062
    %v4856 = vunpack.c.0.s8 %v4855
    %v4857 = vlaneseq
    %v4858 = vshrl.u32 %v4857, 7
    %v4859 = vsub.s32 %v4856, %v4858
    %v4860 = vrot.slane %v4829, %v4859
    %v4862 = vunpack.c.l.s4 269488144
    %v4863 = vunpack.c.0.s8 %v4862
    %v4864 = vlaneseq
    %v4865 = vshrl.u32 %v4864, 7
    %v4866 = vsub.s32 %v4863, %v4865
    %v4867 = vrot.slane %v4830, %v4866
    %v4869 = vunpack.c.l.s4 842150450
    %v4870 = vunpack.c.0.s8 %v4869
    %v4871 = vlaneseq
    %v4872 = vshrl.u32 %v4871, 7
    %v4873 = vsub.s32 %v4870, %v4872
    %v4874 = vrot.slane %v4830, %v4873
    %v4876 = vunpack.c.l.s4 1414812756
    %v4877 = vunpack.c.0.s8 %v4876
    %v4878 = vlaneseq
    %v4879 = vshrl.u32 %v4878, 7
    %v4880 = vsub.s32 %v4877, %v4879
    %v4881 = vrot.slane %v4830, %v4880
    %v4883 = vunpack.c.l.s4 1987475062
    %v4884 = vunpack.c.0.s8 %v4883
    %v4885 = vlaneseq
    %v4886 = vshrl.u32 %v4885, 7
    %v4887 = vsub.s32 %v4884, %v4886
    %v4888 = vrot.slane %v4830, %v4887
    %v4897 = vsub.f32 %v4773, %v4839
    %v4898 = vsub.f32 %v4774, %v4846
    %v4899 = vsub.f32 %v4775, %v4853
    %v4900 = vsub.f32 %v4776, %v4860
    %v4901 = vsub.f32 %v4777, %v4867
    %v4902 = vsub.f32 %v4778, %v4874
    %v4903 = vsub.f32 %v4779, %v4881
    %v4904 = vsub.f32 %v4780, %v4888
    %v4905 = vmul.f32 %v4897, %v4897
    %v4906 = vmul.f32 %v4898, %v4898
    %v4907 = vmul.f32 %v4899, %v4899
    %v4908 = vmul.f32 %v4900, %v4900
    %v4909 = vmul.f32 %v4901, %v4901
    %v4910 = vmul.f32 %v4902, %v4902
    %v4911 = vmul.f32 %v4903, %v4903
    %v4912 = vmul.f32 %v4904, %v4904
    %v4921 = vcombine.low %v4905, %v4906
    %v4922 = vcombine.low %v4907, %v4908
    %v4924 = vunpack.c.l.s4 1983009808
    %v4925 = vunpack.c.0.s8 %v4924
    %v4926 = vlaneseq
    %v4927 = vshrl.u32 %v4926, 7
    %v4928 = vsub.s32 %v4925, %v4927
    %v4929 = vrot.slane %v4921, %v4928
    %v4931 = vunpack.c.l.s4 1983009808
    %v4932 = vunpack.c.0.s8 %v4931
    %v4933 = vlaneseq
    %v4934 = vshrl.u32 %v4933, 7
    %v4935 = vsub.s32 %v4932, %v4934
    %v4936 = vrot.slane %v4922, %v4935
    %v4937 = vcombine.low %v4929, %v4936
    %v4938 = vcombine.low %v4909, %v4910
    %v4939 = vcombine.low %v4911, %v4912
    %v4941 = vunpack.c.l.s4 1983009808
    %v4942 = vunpack.c.0.s8 %v4941
    %v4943 = vlaneseq
    %v4944 = vshrl.u32 %v4943, 7
    %v4945 = vsub.s32 %v4942, %v4944
    %v4946 = vrot.slane %v4938, %v4945
    %v4948 = vunpack.c.l.s4 1983009808
    %v4949 = vunpack.c.0.s8 %v4948
    %v4950 = vlaneseq
    %v4951 = vshrl.u32 %v4950, 7
    %v4952 = vsub.s32 %v4949, %v4951
    %v4953 = vrot.slane %v4939, %v4952
    %v4954 = vcombine.low %v4946, %v4953
    %4957 = vadd.xlane.f32.xlu0 %v4937
    %v4958 = vpop.xlane.xlu0 %4957
    %4959 = vadd.xlane.f32.xlu0 %v4954
    %v4960 = vpop.xlane.xlu0 %4959
    %v4961 = vmul.f32 %v4958, %v238
    %v4962 = vmul.f32 %v4960, %v238
    %v4963 = vadd.f32 %v4961, 1e-05
    %v4964 = vadd.f32 %v4962, 1e-05
    %v4965 = vrsqrt.pop %v4963
    %v4966 = vrsqrt.pop %v4964
    %v4970 = vunpack.c.l.s4 269488144
    %v4971 = vunpack.c.0.s8 %v4970
    %v4972 = vlaneseq
    %v4973 = vshrl.u32 %v4972, 7
    %v4974 = vsub.s32 %v4971, %v4973
    %v4975 = vrot.slane %v4965, %v4974
    %v4977 = vunpack.c.l.s4 842150450
    %v4978 = vunpack.c.0.s8 %v4977
    %v4979 = vlaneseq
    %v4980 = vshrl.u32 %v4979, 7
    %v4981 = vsub.s32 %v4978, %v4980
    %v4982 = vrot.slane %v4965, %v4981
    %v4984 = vunpack.c.l.s4 1414812756
    %v4985 = vunpack.c.0.s8 %v4984
    %v4986 = vlaneseq
    %v4987 = vshrl.u32 %v4986, 7
    %v4988 = vsub.s32 %v4985, %v4987
    %v4989 = vrot.slane %v4965, %v4988
    %v4991 = vunpack.c.l.s4 1987475062
    %v4992 = vunpack.c.0.s8 %v4991
    %v4993 = vlaneseq
    %v4994 = vshrl.u32 %v4993, 7
    %v4995 = vsub.s32 %v4992, %v4994
    %v4996 = vrot.slane %v4965, %v4995
    %v4998 = vunpack.c.l.s4 269488144
    %v4999 = vunpack.c.0.s8 %v4998
    %v5000 = vlaneseq
    %v5001 = vshrl.u32 %v5000, 7
    %v5002 = vsub.s32 %v4999, %v5001
    %v5003 = vrot.slane %v4966, %v5002
    %v5005 = vunpack.c.l.s4 842150450
    %v5006 = vunpack.c.0.s8 %v5005
    %v5007 = vlaneseq
    %v5008 = vshrl.u32 %v5007, 7
    %v5009 = vsub.s32 %v5006, %v5008
    %v5010 = vrot.slane %v4966, %v5009
    %v5012 = vunpack.c.l.s4 1414812756
    %v5013 = vunpack.c.0.s8 %v5012
    %v5014 = vlaneseq
    %v5015 = vshrl.u32 %v5014, 7
    %v5016 = vsub.s32 %v5013, %v5015
    %v5017 = vrot.slane %v4966, %v5016
    %v5019 = vunpack.c.l.s4 1987475062
    %v5020 = vunpack.c.0.s8 %v5019
    %v5021 = vlaneseq
    %v5022 = vshrl.u32 %v5021, 7
    %v5023 = vsub.s32 %v5020, %v5022
    %v5024 = vrot.slane %v4966, %v5023
    %v5033 = vmul.f32 %v4897, %v4975
    %v5034 = vmul.f32 %v4898, %v4982
    %v5035 = vmul.f32 %v4899, %v4989
    %v5036 = vmul.f32 %v4900, %v4996
    %v5037 = vmul.f32 %v4901, %v5003
    %v5038 = vmul.f32 %v4902, %v5010
    %v5039 = vmul.f32 %v4903, %v5017
    %v5040 = vmul.f32 %v4904, %v5024
    %v5041 = vld [vmem:[%s13] sm:$0x1]
    %v5043 = vlaneseq
    %v5044 = vshrl.u32 %v5043, 7
    %v5045 = vsub.s32 0, %v5044
    %v5046 = vrot.slane %v5041, %v5045
    %v5047 = vcombine.high %v5046, %v5046
    %v5049 = vunpack.c.l.s4 1983009808
    %v5050 = vunpack.c.0.s8 %v5049
    %v5051 = vlaneseq
    %v5052 = vshrl.u32 %v5051, 7
    %v5053 = vsub.s32 %v5050, %v5052
    %v5054 = vrot.slane %v5046, %v5053
    %v5056 = vunpack.c.l.s4 1983009808
    %v5057 = vunpack.c.0.s8 %v5056
    %v5058 = vlaneseq
    %v5059 = vshrl.u32 %v5058, 7
    %v5060 = vsub.s32 %v5057, %v5059
    %v5061 = vrot.slane %v5047, %v5060
    %v5062 = vcombine.high %v5054, %v5054
    %v5063 = vcombine.high %v5061, %v5061
    %v5068 = vmul.f32 %v5033, %v5054
    %v5069 = vmul.f32 %v5034, %v5062
    %v5070 = vmul.f32 %v5035, %v5061
    %v5071 = vmul.f32 %v5036, %v5063
    %v5072 = vmul.f32 %v5037, %v5054
    %v5073 = vmul.f32 %v5038, %v5062
    %v5074 = vmul.f32 %v5039, %v5061
    %v5075 = vmul.f32 %v5040, %v5063
    %v5076 = vld [vmem:[%s14] sm:$0x1]
    %v5078 = vlaneseq
    %v5079 = vshrl.u32 %v5078, 7
    %v5080 = vsub.s32 0, %v5079
    %v5081 = vrot.slane %v5076, %v5080
    %v5082 = vcombine.high %v5081, %v5081
    %v5084 = vunpack.c.l.s4 1983009808
    %v5085 = vunpack.c.0.s8 %v5084
    %v5086 = vlaneseq
    %v5087 = vshrl.u32 %v5086, 7
    %v5088 = vsub.s32 %v5085, %v5087
    %v5089 = vrot.slane %v5081, %v5088
    %v5091 = vunpack.c.l.s4 1983009808
    %v5092 = vunpack.c.0.s8 %v5091
    %v5093 = vlaneseq
    %v5094 = vshrl.u32 %v5093, 7
    %v5095 = vsub.s32 %v5092, %v5094
    %v5096 = vrot.slane %v5082, %v5095
    %v5097 = vcombine.high %v5089, %v5089
    %v5098 = vcombine.high %v5096, %v5096
    %v5103 = vadd.f32 %v5068, %v5089
    %v5104 = vadd.f32 %v5069, %v5097
    %v5105 = vadd.f32 %v5070, %v5096
    %v5106 = vadd.f32 %v5071, %v5098
    %v5107 = vadd.f32 %v5072, %v5089
    %v5108 = vadd.f32 %v5073, %v5097
    %v5109 = vadd.f32 %v5074, %v5096
    %v5110 = vadd.f32 %v5075, %v5098
    %v5119 = vcombine.low %v5103, %v5104
    %v5120 = vcombine.low %v5105, %v5106
    %v5122 = vunpack.c.l.s4 1983009808
    %v5123 = vunpack.c.0.s8 %v5122
    %v5124 = vlaneseq
    %v5125 = vshrl.u32 %v5124, 7
    %v5126 = vsub.s32 %v5123, %v5125
    %v5127 = vrot.slane %v5119, %v5126
    %v5129 = vunpack.c.l.s4 1983009808
    %v5130 = vunpack.c.0.s8 %v5129
    %v5131 = vlaneseq
    %v5132 = vshrl.u32 %v5131, 7
    %v5133 = vsub.s32 %v5130, %v5132
    %v5134 = vrot.slane %v5120, %v5133
    %v5135 = vcombine.low %v5127, %v5134
    %v5136 = vcombine.low %v5107, %v5108
    %v5137 = vcombine.low %v5109, %v5110
    %v5139 = vunpack.c.l.s4 1983009808
    %v5140 = vunpack.c.0.s8 %v5139
    %v5141 = vlaneseq
    %v5142 = vshrl.u32 %v5141, 7
    %v5143 = vsub.s32 %v5140, %v5142
    %v5144 = vrot.slane %v5136, %v5143
    %v5146 = vunpack.c.l.s4 1983009808
    %v5147 = vunpack.c.0.s8 %v5146
    %v5148 = vlaneseq
    %v5149 = vshrl.u32 %v5148, 7
    %v5150 = vsub.s32 %v5147, %v5149
    %v5151 = vrot.slane %v5137, %v5150
    %v5152 = vcombine.low %v5144, %v5151
    %v5155 = vpack.c.bf16 %v5152, %v5135
    %v5156 = vld [vmem:[#allocation14] sm:$0xf]
    %v5157 = vld [vmem:[#allocation14 + $0x4] sm:$0xf]
    %v5158 = vld [vmem:[#allocation14 + $0x8] sm:$0xf]
    %v5159 = vld [vmem:[#allocation14 + $0xc] sm:$0xf]
    %v5160 = vld [vmem:[#allocation14 + $0x10] sm:$0xf]
    %v5161 = vld [vmem:[#allocation14 + $0x14] sm:$0xf]
    %v5162 = vld [vmem:[#allocation14 + $0x18] sm:$0xf]
    %v5163 = vld [vmem:[#allocation14 + $0x1c] sm:$0xf]
    %v5164 = vld [vmem:[#allocation14 + $0x20] sm:$0xf]
    %v5165 = vld [vmem:[#allocation14 + $0x24] sm:$0xf]
    %v5166 = vld [vmem:[#allocation14 + $0x28] sm:$0xf]
    %v5167 = vld [vmem:[#allocation14 + $0x2c] sm:$0xf]
    %v5168 = vld [vmem:[#allocation14 + $0x30] sm:$0xf]
    %v5169 = vld [vmem:[#allocation14 + $0x34] sm:$0xf]
    %v5170 = vld [vmem:[#allocation14 + $0x38] sm:$0xf]
    %v5171 = vld [vmem:[#allocation14 + $0x3c] sm:$0xf]
    %v5172 = vld [vmem:[%s16] sm:$0x1]
    %v5174 = vlaneseq
    %v5175 = vshrl.u32 %v5174, 7
    %v5176 = vsub.s32 0, %v5175
    %v5177 = vrot.slane %v5172, %v5176
    %v5195 = vunpack.c.l.b16 %v5156
    %v5196 = vunpack.c.l.b16 %v5157
    %v5197 = vunpack.c.l.b16 %v5158
    %v5198 = vunpack.c.l.b16 %v5159
    %v5199 = vunpack.c.l.b16 %v5160
    %v5200 = vunpack.c.l.b16 %v5161
    %v5201 = vunpack.c.l.b16 %v5162
    %v5202 = vunpack.c.l.b16 %v5163
    %v5203 = vunpack.c.l.b16 %v5164
    %v5204 = vunpack.c.l.b16 %v5165
    %v5205 = vunpack.c.l.b16 %v5166
    %v5206 = vunpack.c.l.b16 %v5167
    %v5207 = vunpack.c.l.b16 %v5168
    %v5208 = vunpack.c.l.b16 %v5169
    %v5209 = vunpack.c.l.b16 %v5170
    %v5210 = vunpack.c.l.b16 %v5171
    %v5211 = vpack.c.b16 %v5196, %v5195
    %v5212 = vpack.c.b16 %v5198, %v5197
    %v5213 = vpack.c.b16 %v5200, %v5199
    %v5214 = vpack.c.b16 %v5202, %v5201
    %v5215 = vpack.c.b16 %v5204, %v5203
    %v5216 = vpack.c.b16 %v5206, %v5205
    %v5217 = vpack.c.b16 %v5208, %v5207
    %v5218 = vpack.c.b16 %v5210, %v5209
    %5227 = vmatprep.subr.bf16.mxu0 0
    %5228 = vmatpush1.bf16.msra.mxu0 %v5218
    %5229 = vmatprep.subr.bf16.mxu0 0
    %5230 = vmatpush1.bf16.msra.mxu0 %v5217
    %5231 = vmatprep.subr.bf16.mxu0 0
    %5232 = vmatpush1.bf16.msra.mxu0 %v5216
    %5233 = vmatprep.subr.bf16.mxu0 0
    %5234 = vmatpush1.bf16.msra.mxu0 %v5215
    %5235 = vmatprep.subr.bf16.mxu0 0
    %5236 = vmatpush1.bf16.msra.mxu0 %v5214
    %5237 = vmatprep.subr.bf16.mxu0 0
    %5238 = vmatpush1.bf16.msra.mxu0 %v5213
    %5239 = vmatprep.subr.bf16.mxu0 0
    %5240 = vmatpush1.bf16.msra.mxu0 %v5212
    %5241 = vmatprep.subr.bf16.mxu0 0
    %5242 = vmatpush1.bf16.msra.mxu0 %v5211
    %5243 = vmatprep.subr.bf16.mxu0 0
    %5244 = vmatpush2.bf16.msra.mxu0 0
    %5245 = vmatprep.subr.bf16.mxu0 0
    %5246 = vmatpush2.bf16.msra.mxu0 0
    %5247 = vmatprep.subr.bf16.mxu0 0
    %5248 = vmatpush2.bf16.msra.mxu0 0
    %5249 = vmatprep.subr.bf16.mxu0 0
    %5250 = vmatpush2.bf16.msra.mxu0 0
    %5251 = vmatprep.subr.bf16.mxu0 0
    %5252 = vmatpush2.bf16.msra.mxu0 0
    %5253 = vmatprep.subr.bf16.mxu0 0
    %5254 = vmatpush2.bf16.msra.mxu0 0
    %5255 = vmatprep.subr.bf16.mxu0 0
    %5256 = vmatpush2.bf16.msra.mxu0 0
    %5257 = vmatprep.subr.bf16.mxu0 0
    %5258 = vmatpush2.bf16.msra.mxu0 0
    %5259 = vmatprep.mubr.bf16.mxu0 0
    %5260 = vmatmul.mubr.bf16.gmra.mxu0 %v5155
    %v5261 = vpop.f32.mrf.mxu0
    %v5262 = vadd.f32 %v5177, %v5261
    %v5263 = vpop.f32.mrf.mxu0
    %v5264 = vpop.f32.mrf.mxu0
    %v5265 = vadd.f32 %v5177, %v5264
    %v5266 = vpop.f32.mrf.mxu0
    %5267 = vdwg.mxu0
    %v5268 = vmax.f32 %v5262, 0.0
    %v5269 = vmax.f32 %v5265, 0.0
    %v5270 = vpack.c.bf16 %v5269, %v5268
    %v5271 = vld [vmem:[#allocation16] sm:$0xf]
    %v5272 = vld [vmem:[#allocation16 + $0x4] sm:$0xf]
    %v5273 = vld [vmem:[#allocation16 + $0x8] sm:$0xf]
    %v5274 = vld [vmem:[#allocation16 + $0xc] sm:$0xf]
    %v5275 = vld [vmem:[#allocation16 + $0x10] sm:$0xf]
    %v5276 = vld [vmem:[#allocation16 + $0x14] sm:$0xf]
    %v5277 = vld [vmem:[#allocation16 + $0x18] sm:$0xf]
    %v5278 = vld [vmem:[#allocation16 + $0x1c] sm:$0xf]
    %v5279 = vld [vmem:[#allocation16 + $0x20] sm:$0xf]
    %v5280 = vld [vmem:[#allocation16 + $0x24] sm:$0xf]
    %v5281 = vld [vmem:[#allocation16 + $0x28] sm:$0xf]
    %v5282 = vld [vmem:[#allocation16 + $0x2c] sm:$0xf]
    %v5283 = vld [vmem:[#allocation16 + $0x30] sm:$0xf]
    %v5284 = vld [vmem:[#allocation16 + $0x34] sm:$0xf]
    %v5285 = vld [vmem:[#allocation16 + $0x38] sm:$0xf]
    %v5286 = vld [vmem:[#allocation16 + $0x3c] sm:$0xf]
    %v5287 = vld [vmem:[%s18] sm:$0x1]
    %v5289 = vlaneseq
    %v5290 = vshrl.u32 %v5289, 7
    %v5291 = vsub.s32 0, %v5290
    %v5292 = vrot.slane %v5287, %v5291
    %v5310 = vunpack.c.l.b16 %v5271
    %v5311 = vunpack.c.l.b16 %v5272
    %v5312 = vunpack.c.l.b16 %v5273
    %v5313 = vunpack.c.l.b16 %v5274
    %v5314 = vunpack.c.l.b16 %v5275
    %v5315 = vunpack.c.l.b16 %v5276
    %v5316 = vunpack.c.l.b16 %v5277
    %v5317 = vunpack.c.l.b16 %v5278
    %v5318 = vunpack.c.l.b16 %v5279
    %v5319 = vunpack.c.l.b16 %v5280
    %v5320 = vunpack.c.l.b16 %v5281
    %v5321 = vunpack.c.l.b16 %v5282
    %v5322 = vunpack.c.l.b16 %v5283
    %v5323 = vunpack.c.l.b16 %v5284
    %v5324 = vunpack.c.l.b16 %v5285
    %v5325 = vunpack.c.l.b16 %v5286
    %v5326 = vpack.c.b16 %v5311, %v5310
    %v5327 = vpack.c.b16 %v5313, %v5312
    %v5328 = vpack.c.b16 %v5315, %v5314
    %v5329 = vpack.c.b16 %v5317, %v5316
    %v5330 = vpack.c.b16 %v5319, %v5318
    %v5331 = vpack.c.b16 %v5321, %v5320
    %v5332 = vpack.c.b16 %v5323, %v5322
    %v5333 = vpack.c.b16 %v5325, %v5324
    %5342 = vmatprep.subr.bf16.mxu0 0
    %5343 = vmatpush1.bf16.msra.mxu0 %v5333
    %5344 = vmatprep.subr.bf16.mxu0 0
    %5345 = vmatpush1.bf16.msra.mxu0 %v5332
    %5346 = vmatprep.subr.bf16.mxu0 0
    %5347 = vmatpush1.bf16.msra.mxu0 %v5331
    %5348 = vmatprep.subr.bf16.mxu0 0
    %5349 = vmatpush1.bf16.msra.mxu0 %v5330
    %5350 = vmatprep.subr.bf16.mxu0 0
    %5351 = vmatpush1.bf16.msra.mxu0 %v5329
    %5352 = vmatprep.subr.bf16.mxu0 0
    %5353 = vmatpush1.bf16.msra.mxu0 %v5328
    %5354 = vmatprep.subr.bf16.mxu0 0
    %5355 = vmatpush1.bf16.msra.mxu0 %v5327
    %5356 = vmatprep.subr.bf16.mxu0 0
    %5357 = vmatpush1.bf16.msra.mxu0 %v5326
    %5358 = vmatprep.subr.bf16.mxu0 0
    %5359 = vmatpush2.bf16.msra.mxu0 0
    %5360 = vmatprep.subr.bf16.mxu0 0
    %5361 = vmatpush2.bf16.msra.mxu0 0
    %5362 = vmatprep.subr.bf16.mxu0 0
    %5363 = vmatpush2.bf16.msra.mxu0 0
    %5364 = vmatprep.subr.bf16.mxu0 0
    %5365 = vmatpush2.bf16.msra.mxu0 0
    %5366 = vmatprep.subr.bf16.mxu0 0
    %5367 = vmatpush2.bf16.msra.mxu0 0
    %5368 = vmatprep.subr.bf16.mxu0 0
    %5369 = vmatpush2.bf16.msra.mxu0 0
    %5370 = vmatprep.subr.bf16.mxu0 0
    %5371 = vmatpush2.bf16.msra.mxu0 0
    %5372 = vmatprep.subr.bf16.mxu0 0
    %5373 = vmatpush2.bf16.msra.mxu0 0
    %5374 = vmatprep.mubr.bf16.mxu0 0
    %5375 = vmatmul.mubr.bf16.gmra.mxu0 %v5270
    %v5376 = vpop.f32.mrf.mxu0
    %v5377 = vadd.f32 %v5292, %v5376
    %v5378 = vpop.f32.mrf.mxu0
    %v5379 = vpop.f32.mrf.mxu0
    %v5380 = vadd.f32 %v5292, %v5379
    %v5381 = vpop.f32.mrf.mxu0
    %5382 = vdwg.mxu0
    %v5385 = vcombine.high %v5377, %v5377
    %v5387 = vunpack.c.l.s4 1983009808
    %v5388 = vunpack.c.0.s8 %v5387
    %v5389 = vlaneseq
    %v5390 = vshrl.u32 %v5389, 7
    %v5391 = vsub.s32 %v5388, %v5390
    %v5392 = vrot.slane %v5377, %v5391
    %v5394 = vunpack.c.l.s4 1983009808
    %v5395 = vunpack.c.0.s8 %v5394
    %v5396 = vlaneseq
    %v5397 = vshrl.u32 %v5396, 7
    %v5398 = vsub.s32 %v5395, %v5397
    %v5399 = vrot.slane %v5385, %v5398
    %v5400 = vcombine.high %v5392, %v5392
    %v5401 = vcombine.high %v5399, %v5399
    %v5402 = vcombine.high %v5380, %v5380
    %v5404 = vunpack.c.l.s4 1983009808
    %v5405 = vunpack.c.0.s8 %v5404
    %v5406 = vlaneseq
    %v5407 = vshrl.u32 %v5406, 7
    %v5408 = vsub.s32 %v5405, %v5407
    %v5409 = vrot.slane %v5380, %v5408
    %v5411 = vunpack.c.l.s4 1983009808
    %v5412 = vunpack.c.0.s8 %v5411
    %v5413 = vlaneseq
    %v5414 = vshrl.u32 %v5413, 7
    %v5415 = vsub.s32 %v5412, %v5414
    %v5416 = vrot.slane %v5402, %v5415
    %v5417 = vcombine.high %v5409, %v5409
    %v5418 = vcombine.high %v5416, %v5416
    %v5427 = vadd.f32 %v3633, %v5392
    %v5428 = vadd.f32 %v3634, %v5400
    %v5429 = vadd.f32 %v3635, %v5399
    %v5430 = vadd.f32 %v3636, %v5401
    %v5431 = vadd.f32 %v3637, %v5409
    %v5432 = vadd.f32 %v3638, %v5417
    %v5433 = vadd.f32 %v3639, %v5416
    %v5434 = vadd.f32 %v3640, %v5418
    %v5435 = vadd.f32 %v5427, %v4738
    %v5436 = vadd.f32 %v5428, %v4746
    %v5437 = vadd.f32 %v5429, %v4745
    %v5438 = vadd.f32 %v5430, %v4747
    %v5439 = vadd.f32 %v5431, %v4755
    %v5440 = vadd.f32 %v5432, %v4763
    %v5441 = vadd.f32 %v5433, %v4762
    %v5442 = vadd.f32 %v5434, %v4764
    %5443 = vst [vmem:[#allocation17] sm:$0x3] %v5435
    %5444 = vst [vmem:[#allocation17 + $0x2] sm:$0x3] %v5436
    %5445 = vst [vmem:[#allocation17 + $0x4] sm:$0x3] %v5437
    %5446 = vst [vmem:[#allocation17 + $0x6] sm:$0x3] %v5438
    %5447 = vst [vmem:[#allocation17 + $0x8] sm:$0x3] %v5439
    %5448 = vst [vmem:[#allocation17 + $0xa] sm:$0x3] %v5440
    %5449 = vst [vmem:[#allocation17 + $0xc] sm:$0x3] %v5441
    %5450 = vst [vmem:[#allocation17 + $0xe] sm:$0x3] %v5442
    // Predicated region
    $region114: #{tpu_custom_call.1} parent=1 // pred_check
      _
    $region115: #{tpu_custom_call.1} parent=1 // pred_check_branch
      %5452 = sbr.rel (0) target = $region117
    $region116: #{tpu_custom_call.1} parent=1 // pred_region
      %s5454 = ssub.s32 256, 256
      %5455 = vsyncadd [#allocation4], %s5454
      %s5456 = sshll.u32 [#allocation17], 4
      %s5457 = int_to_ptr.vmem [resolvable:$true] %s5456
      %5462 = dma.vmem_to_hbm [thread:$0]  %s5457, 256, %s19, [#allocation4], 32, 32, 2
    $region117: #{tpu_custom_call.1} parent=1 // pred_fallthru
      _
    // Predicated region
    $region118: #{tpu_custom_call.1} parent=1 // pred_check
      _
    $region119: #{tpu_custom_call.1} parent=1 // pred_check_branch
      %5464 = sbr.rel (0) target = $region121
    $region120: #{tpu_custom_call.1} parent=1 // pred_region
      %5465 = dma.done [#allocation4], 256
    $region121: #{tpu_custom_call.1} parent=1 // pred_fallthru
      _
    %5466 = vsyncpa [#allocation3], 1
    %5467 = vsyncpa [#allocation6], 1
    %5468 = vsyncpa [#allocation9], 1
    %5469 = vsyncpa [#allocation12], 1
    %5470 = vsyncpa [#allocation15], 1
    %5471 = vsyncpa [#allocation4], 1

</llo_original>
